<compile_context>
chip_gen: v5e
topology: v5e:2x2
jax: 0.10.0
libtpu: 0.0.40
codegen_flags: <defaults>
</compile_context>

<pallas_src>
import functools
import math

import jax
import jax.numpy as jnp
from jax.experimental import pallas as pl
from jax.experimental.pallas import tpu as pltpu


# ----------------------------------------------------------------------------- config
HIDDEN_NF = 32
N_LAYERS = 3
INV_SUBLAYERS = 2
EDGE_FEAT_NF = 2
NORMALIZATION_FACTOR = 100.0
NORM_CONSTANT = 1.0

# ----------------------------------------------------------------------------- packed-parameter layout
# (H,H) weights per GCL: edge.W1_row, edge.W1_col, edge.W2, node.W1_h, node.W1_agg, node.W2
WHH_PER_GCL = 6
WHH_PER_BLOCK = INV_SUBLAYERS * WHH_PER_GCL + 3          # + equiv W1_row, W1_col, W2
# (H,) vectors per GCL: edge.b1, edge.ln_g, edge.ln_b, edge.b2, node.b1, node.ln_g, node.ln_b, node.b2
VEC_PER_GCL = 8
VEC_PER_BLOCK = INV_SUBLAYERS * VEC_PER_GCL + 6          # + equiv b1, g1, be1, b2, g2, be2
W2H_PER_BLOCK = INV_SUBLAYERS + 1                        # edge-attr weight rows (2,H)

N_WHH = N_LAYERS * WHH_PER_BLOCK                         # 45
N_VEC = N_LAYERS * VEC_PER_BLOCK + 1                     # 67 (+1 = embedding bias)
N_W2H = N_LAYERS * W2H_PER_BLOCK                         # 9
EMB_B_IDX = N_LAYERS * VEC_PER_BLOCK                     # 66


# ----------------------------------------------------------------------------- in-kernel helpers
def _silu(x):
    return x * jax.nn.sigmoid(x)


def _layernorm(x, gamma, beta, eps=1e-5):
    # torch.nn.LayerNorm: mean/biased-var over last dim, eps=1e-5, affine.
    mean = jnp.mean(x, axis=-1, keepdims=True)
    var = jnp.mean((x - mean) ** 2, axis=-1, keepdims=True)
    return (x - mean) * jax.lax.rsqrt(var + eps) * gamma + beta


# ----------------------------------------------------------------------------- fused kernel
def egnn_fused_kernel(h_ref, x_ref, selr_ref, selc_ref, seg_ref,
                      embw_ref, embow_ref, embob_ref,
                      whh_ref, vec_ref, w2h_ref, w3_ref,
                      h_out_ref, x_out_ref):
    dot = functools.partial(jnp.dot, preferred_element_type=jnp.float32)

    sel_row = selr_ref[...]                 # (E, N) one-hot of row
    sel_col = selc_ref[...]                 # (E, N) one-hot of col
    seg = seg_ref[...]                      # (N, E) one-hot.T / normalization_factor
    diff_mat = sel_row - sel_col            # (diff_mat @ x)[e] = x[row[e]] - x[col[e]]

    x = x_ref[...]                          # (N, 3)

    # top-level distances: coord2diff(x, edge_index) before the embedding
    d0 = dot(diff_mat, x)                                    # (E, 3)
    dist0 = jnp.sum(d0 * d0, axis=-1, keepdims=True)         # (E, 1)

    # node embedding
    h = dot(h_ref[...], embw_ref[...]) + vec_ref[EMB_B_IDX:EMB_B_IDX + 1, :]

    for b in range(N_LAYERS):
        whh0 = b * WHH_PER_BLOCK
        vec0 = b * VEC_PER_BLOCK
        w2h0 = b * W2H_PER_BLOCK

        # EquivariantBlock: coord2diff with the current x (norm_constant=1)
        cd = dot(diff_mat, x)                                # (E, 3)
        radial = jnp.sum(cd * cd, axis=-1, keepdims=True)    # (E, 1)
        coord_diff = cd / (jnp.sqrt(radial + 1e-8) + NORM_CONSTANT)

        def edge_attr_term(w2h_idx):
            # edge_attr = cat([radial, dist0], -1); its K=2 contraction with
            # the (2,H) weight block is done as two broadcast-multiplies.
            we = w2h_ref[w2h_idx]                            # (2, H)
            return radial * we[0:1, :] + dist0 * we[1:2, :]  # (E, H)

        # ---------------- GCL sublayers ----------------
        for g in range(INV_SUBLAYERS):
            wg = whh0 + g * WHH_PER_GCL
            vg = vec0 + g * VEC_PER_GCL

            h_row = dot(sel_row, h)                          # (E, H) = h[row]
            h_col = dot(sel_col, h)                          # (E, H) = h[col]

            # edge_mlp: Linear -> LayerNorm -> SiLU -> Linear -> SiLU
            t = (dot(h_row, whh_ref[wg + 0]) + dot(h_col, whh_ref[wg + 1])
                 + edge_attr_term(w2h0 + g) + vec_ref[vg + 0:vg + 1, :])
            t = _silu(_layernorm(t, vec_ref[vg + 1:vg + 2, :], vec_ref[vg + 2:vg + 3, :]))
            mij = _silu(dot(t, whh_ref[wg + 2]) + vec_ref[vg + 3:vg + 4, :])

            # node model: segment-sum (already /norm_factor) + residual MLP
            agg = dot(seg, mij)                              # (N, H)
            t = (dot(h, whh_ref[wg + 3]) + dot(agg, whh_ref[wg + 4])
                 + vec_ref[vg + 4:vg + 5, :])
            t = _silu(_layernorm(t, vec_ref[vg + 5:vg + 6, :], vec_ref[vg + 6:vg + 7, :]))
            h = h + dot(t, whh_ref[wg + 5]) + vec_ref[vg + 7:vg + 8, :]

        # ---------------- EquivariantUpdate (coord model) ----------------
        we_i = whh0 + INV_SUBLAYERS * WHH_PER_GCL
        ve = vec0 + INV_SUBLAYERS * VEC_PER_GCL
        h_row = dot(sel_row, h)
        h_col = dot(sel_col, h)
        t = (dot(h_row, whh_ref[we_i + 0]) + dot(h_col, whh_ref[we_i + 1])
             + edge_attr_term(w2h0 + INV_SUBLAYERS) + vec_ref[ve + 0:ve + 1, :])
        t = _silu(_layernorm(t, vec_ref[ve + 1:ve + 2, :], vec_ref[ve + 2:ve + 3, :]))
        t = dot(t, whh_ref[we_i + 2]) + vec_ref[ve + 3:ve + 4, :]
        t = _silu(_layernorm(t, vec_ref[ve + 4:ve + 5, :], vec_ref[ve + 5:ve + 6, :]))
        phi = dot(t, w3_ref[...][:, b:b + 1])                # (E, 1)   (tanh=False path)
        trans = coord_diff * phi                             # (E, 3)
        x = x + dot(seg, trans)                              # (N, 3)

    # output embedding
    h_out_ref[...] = dot(h, embow_ref[...]) + embob_ref[...]
    x_out_ref[...] = x


# ----------------------------------------------------------------------------- forward wrapper (single pallas_call)
def egnn_forward(params, h, x, edge_index):
    row, col = edge_index[0], edge_index[1]
    n_nodes, _ = h.shape
    f_out = params["emb_out_w"].shape[1]

    node_ids = jnp.arange(n_nodes, dtype=row.dtype)
    sel_row = (row[:, None] == node_ids[None, :]).astype(jnp.float32)   # (E, N)
    sel_col = (col[:, None] == node_ids[None, :]).astype(jnp.float32)   # (E, N)
    seg = jnp.transpose(sel_row) * (1.0 / NORMALIZATION_FACTOR)         # (N, E)

    vspec = pl.BlockSpec(memory_space=pltpu.MemorySpace.VMEM)
    args = (h, x, sel_row, sel_col, seg,
            params["emb_w"], params["emb_out_w"], params["emb_out_b"],
            params["whh"], params["vec"], params["w2h"], params["w3"])

    h_out, x_out = pl.pallas_call(
        egnn_fused_kernel,
        out_shape=(jax.ShapeDtypeStruct((n_nodes, f_out), jnp.float32),
                   jax.ShapeDtypeStruct((n_nodes, 3), jnp.float32)),
        in_specs=[vspec] * len(args),
        out_specs=(vspec, vspec),
    )(*args)
    return h_out, x_out


egnn_forward_jit = jax.jit(egnn_forward)


# ----------------------------------------------------------------------------- parameter init (torch-default semantics, packed)
def _uniform(key, shape, bound):
    return jax.random.uniform(key, shape, jnp.float32, -bound, bound)


def init_params(key, in_node_nf, hidden_nf, out_node_nf):
    H = hidden_nf
    keys = iter(jax.random.split(key, 256))

    whh, vecs, w2h, w3_cols = [], [], [], []
    ones, zeros = jnp.ones((H,), jnp.float32), jnp.zeros((H,), jnp.float32)

    def lin_bound(fan_in):
        return 1.0 / math.sqrt(fan_in)

    for _b in range(N_LAYERS):
        # ---- GCL sublayers ----
        for _g in range(INV_SUBLAYERS):
            bnd_e = lin_bound(2 * H + EDGE_FEAT_NF)          # edge_mlp Linear(2H+2 -> H)
            whh.append(_uniform(next(keys), (H, H), bnd_e))              # edge.W1_row
            whh.append(_uniform(next(keys), (H, H), bnd_e))              # edge.W1_col
            w2h.append(_uniform(next(keys), (EDGE_FEAT_NF, H), bnd_e))   # edge.W1_e
            vecs.append(_uniform(next(keys), (H,), bnd_e))               # edge.b1
            vecs.append(ones); vecs.append(zeros)                        # edge LN gamma/beta
            bnd_h = lin_bound(H)                              # edge_mlp Linear(H -> H)
            whh.append(_uniform(next(keys), (H, H), bnd_h))              # edge.W2
            vecs.append(_uniform(next(keys), (H,), bnd_h))               # edge.b2

            bnd_n = lin_bound(2 * H)                          # node_mlp Linear(2H -> H)
            whh.append(_uniform(next(keys), (H, H), bnd_n))              # node.W1_h
            whh.append(_uniform(next(keys), (H, H), bnd_n))              # node.W1_agg
            vecs.append(_uniform(next(keys), (H,), bnd_n))               # node.b1
            vecs.append(ones); vecs.append(zeros)                        # node LN gamma/beta
            whh.append(_uniform(next(keys), (H, H), bnd_h))              # node.W2
            vecs.append(_uniform(next(keys), (H,), bnd_h))               # node.b2

        # ---- EquivariantUpdate ----
        bnd_e = lin_bound(2 * H + EDGE_FEAT_NF)
        whh.append(_uniform(next(keys), (H, H), bnd_e))                  # equiv.W1_row
        whh.append(_uniform(next(keys), (H, H), bnd_e))                  # equiv.W1_col
        w2h.append(_uniform(next(keys), (EDGE_FEAT_NF, H), bnd_e))       # equiv.W1_e
        vecs.append(_uniform(next(keys), (H,), bnd_e))                   # equiv.b1
        vecs.append(ones); vecs.append(zeros)                            # LN1 gamma/beta
        bnd_h = lin_bound(H)
        whh.append(_uniform(next(keys), (H, H), bnd_h))                  # equiv.W2
        vecs.append(_uniform(next(keys), (H,), bnd_h))                   # equiv.b2
        vecs.append(ones); vecs.append(zeros)                            # LN2 gamma/beta
        xav = 0.001 * math.sqrt(6.0 / (H + 1))                           # xavier, gain=0.001
        w3_cols.append(_uniform(next(keys), (H,), xav))                  # equiv.W3 (H -> 1, no bias)

    # embedding / embedding_out
    bnd_in = lin_bound(in_node_nf)
    emb_w = _uniform(next(keys), (in_node_nf, H), bnd_in)
    vecs.append(_uniform(next(keys), (H,), bnd_in))                      # embedding bias (EMB_B_IDX)
    bnd_o = lin_bound(H)
    emb_out_w = _uniform(next(keys), (H, out_node_nf), bnd_o)
    emb_out_b = _uniform(next(keys), (1, out_node_nf), bnd_o)

    assert len(whh) == N_WHH and len(vecs) == N_VEC and len(w2h) == N_W2H
    return {
        "whh": jnp.stack(whh, axis=0),        # (45, H, H)
        "vec": jnp.stack(vecs, axis=0),       # (67, H)
        "w2h": jnp.stack(w2h, axis=0),        # (9, 2, H)
        "w3": jnp.stack(w3_cols, axis=1),     # (H, 3) — column b is block b's W3
        "emb_w": emb_w,
        "emb_out_w": emb_out_w,
        "emb_out_b": emb_out_b,
    }


# ----------------------------------------------------------------------------- main
if __name__ == "__main__":
    key = jax.random.PRNGKey(0)
    k_param, k_h, k_x = jax.random.split(key, 3)

    N = 8             # nodes
    IN_NODE_NF = 6    # input node feature dim
    OUT_NODE_NF = IN_NODE_NF

    # fully connected graph without self loops -> E = N*(N-1) = 56
    ii, jj = jnp.meshgrid(jnp.arange(N), jnp.arange(N), indexing="ij")
    mask = ii != jj
    row = ii[mask].astype(jnp.int32)
    col = jj[mask].astype(jnp.int32)
    edge_index = jnp.stack([row, col], axis=0)     # (2, 56)

    h = jax.random.normal(k_h, (N, IN_NODE_NF), jnp.float32)
    x = jax.random.normal(k_x, (N, 3), jnp.float32)

    params = init_params(k_param, IN_NODE_NF, HIDDEN_NF, OUT_NODE_NF)

    h_out, x_out = egnn_forward_jit(params, h, x, edge_index)
    jax.block_until_ready(h_out)
    jax.block_until_ready(x_out)

    assert h_out.shape == (N, OUT_NODE_NF)
    assert x_out.shape == (N, 3)
    # TODO(synk): for large graphs, tile the one-hot gather/segment matmuls over
    # an edge grid with a VMEM accumulator instead of keeping (E,N)/(N,E) dense.
    print("KERNEL_OK")
</pallas_src>

<mosaic_0001>
module attributes {stable_mosaic.version = 11 : i64} {
  func.func @egnn_fused_kernel(%arg0: memref<8x6xf32, #tpu.memory_space<vmem>>, %arg1: memref<8x3xf32, #tpu.memory_space<vmem>>, %arg2: memref<56x8xf32, #tpu.memory_space<vmem>>, %arg3: memref<56x8xf32, #tpu.memory_space<vmem>>, %arg4: memref<8x56xf32, #tpu.memory_space<vmem>>, %arg5: memref<6x32xf32, #tpu.memory_space<vmem>>, %arg6: memref<32x6xf32, #tpu.memory_space<vmem>>, %arg7: memref<1x6xf32, #tpu.memory_space<vmem>>, %arg8: memref<45x32x32xf32, #tpu.memory_space<vmem>>, %arg9: memref<67x32xf32, #tpu.memory_space<vmem>>, %arg10: memref<9x2x32xf32, #tpu.memory_space<vmem>>, %arg11: memref<32x3xf32, #tpu.memory_space<vmem>>, %arg12: memref<8x6xf32, #tpu.memory_space<vmem>>, %arg13: memref<8x3xf32, #tpu.memory_space<vmem>>) attributes {dimension_semantics = [], scalar_prefetch = 0 : i64, scratch_operands = 0 : i64, tpu.core_type = #tpu.core_type<tc>} {
    %c0 = arith.constant 0 : index
    %c0_0 = arith.constant 0 : index
    %0 = vector.load %arg2[%c0, %c0_0] : memref<56x8xf32, #tpu.memory_space<vmem>>, vector<56x8xf32>
    %c0_1 = arith.constant 0 : index
    %c0_2 = arith.constant 0 : index
    %1 = vector.load %arg3[%c0_1, %c0_2] : memref<56x8xf32, #tpu.memory_space<vmem>>, vector<56x8xf32>
    %c0_3 = arith.constant 0 : index
    %c0_4 = arith.constant 0 : index
    %2 = vector.load %arg4[%c0_3, %c0_4] : memref<8x56xf32, #tpu.memory_space<vmem>>, vector<8x56xf32>
    %3 = arith.subf %0, %1 : vector<56x8xf32>
    %c0_5 = arith.constant 0 : index
    %c0_6 = arith.constant 0 : index
    %4 = vector.load %arg1[%c0_5, %c0_6] : memref<8x3xf32, #tpu.memory_space<vmem>>, vector<8x3xf32>
    %cst = arith.constant dense<0.000000e+00> : vector<56x3xf32>
    %5 = tpu.matmul %3, %4, %cst {dimension_numbers = #tpu.dot_dimension_numbers<[1], [0], [0], [1], [0, 0, 1, 1], [], []>} : vector<56x8xf32>, vector<8x3xf32>, vector<56x3xf32> -> vector<56x3xf32>
    %6 = arith.mulf %5, %5 : vector<56x3xf32>
    %cst_7 = arith.constant dense<0.000000e+00> : vector<56xf32>
    %7 = vector.multi_reduction <add>, %6, %cst_7 [1] : vector<56x3xf32> to vector<56xf32>
    %8 = vector.shape_cast %7 : vector<56xf32> to vector<56x1xf32>
    %c0_8 = arith.constant 0 : index
    %c0_9 = arith.constant 0 : index
    %9 = vector.load %arg0[%c0_8, %c0_9] : memref<8x6xf32, #tpu.memory_space<vmem>>, vector<8x6xf32>
    %c0_10 = arith.constant 0 : index
    %c0_11 = arith.constant 0 : index
    %10 = vector.load %arg5[%c0_10, %c0_11] : memref<6x32xf32, #tpu.memory_space<vmem>>, vector<6x32xf32>
    %cst_12 = arith.constant dense<0.000000e+00> : vector<8x32xf32>
    %11 = tpu.matmul %9, %10, %cst_12 {dimension_numbers = #tpu.dot_dimension_numbers<[1], [0], [0], [1], [0, 0, 1, 1], [], []>} : vector<8x6xf32>, vector<6x32xf32>, vector<8x32xf32> -> vector<8x32xf32>
    %c66 = arith.constant 66 : index
    %c0_13 = arith.constant 0 : index
    %12 = vector.load %arg9[%c66, %c0_13] : memref<67x32xf32, #tpu.memory_space<vmem>>, vector<1x32xf32>
    %13 = vector.broadcast %12 : vector<1x32xf32> to vector<8x32xf32>
    %14 = arith.addf %11, %13 : vector<8x32xf32>
    %cst_14 = arith.constant dense<0.000000e+00> : vector<56x3xf32>
    %15 = tpu.matmul %3, %4, %cst_14 {dimension_numbers = #tpu.dot_dimension_numbers<[1], [0], [0], [1], [0, 0, 1, 1], [], []>} : vector<56x8xf32>, vector<8x3xf32>, vector<56x3xf32> -> vector<56x3xf32>
    %16 = arith.mulf %15, %15 : vector<56x3xf32>
    %cst_15 = arith.constant dense<0.000000e+00> : vector<56xf32>
    %17 = vector.multi_reduction <add>, %16, %cst_15 [1] : vector<56x3xf32> to vector<56xf32>
    %18 = vector.shape_cast %17 : vector<56xf32> to vector<56x1xf32>
    %cst_16 = arith.constant 9.99999993E-9 : f32
    %19 = vector.broadcast %cst_16 : f32 to vector<56x1xf32>
    %20 = arith.addf %18, %19 : vector<56x1xf32>
    %21 = math.sqrt %20 : vector<56x1xf32>
    %cst_17 = arith.constant 1.000000e+00 : f32
    %22 = vector.broadcast %cst_17 : f32 to vector<56x1xf32>
    %23 = arith.addf %21, %22 : vector<56x1xf32>
    %24 = vector.broadcast %23 : vector<56x1xf32> to vector<56x3xf32>
    %25 = arith.divf %15, %24 : vector<56x3xf32>
    %cst_18 = arith.constant dense<0.000000e+00> : vector<56x32xf32>
    %26 = tpu.matmul %0, %14, %cst_18 {dimension_numbers = #tpu.dot_dimension_numbers<[1], [0], [0], [1], [0, 0, 1, 1], [], []>} : vector<56x8xf32>, vector<8x32xf32>, vector<56x32xf32> -> vector<56x32xf32>
    %cst_19 = arith.constant dense<0.000000e+00> : vector<56x32xf32>
    %27 = tpu.matmul %1, %14, %cst_19 {dimension_numbers = #tpu.dot_dimension_numbers<[1], [0], [0], [1], [0, 0, 1, 1], [], []>} : vector<56x8xf32>, vector<8x32xf32>, vector<56x32xf32> -> vector<56x32xf32>
    %c0_20 = arith.constant 0 : index
    %c0_21 = arith.constant 0 : index
    %c0_22 = arith.constant 0 : index
    %28 = vector.load %arg8[%c0_20, %c0_21, %c0_22] : memref<45x32x32xf32, #tpu.memory_space<vmem>>, vector<1x32x32xf32>
    %29 = vector.shape_cast %28 : vector<1x32x32xf32> to vector<32x32xf32>
    %cst_23 = arith.constant dense<0.000000e+00> : vector<56x32xf32>
    %30 = tpu.matmul %26, %29, %cst_23 {dimension_numbers = #tpu.dot_dimension_numbers<[1], [0], [0], [1], [0, 0, 1, 1], [], []>} : vector<56x32xf32>, vector<32x32xf32>, vector<56x32xf32> -> vector<56x32xf32>
    %c1 = arith.constant 1 : index
    %c0_24 = arith.constant 0 : index
    %c0_25 = arith.constant 0 : index
    %31 = vector.load %arg8[%c1, %c0_24, %c0_25] : memref<45x32x32xf32, #tpu.memory_space<vmem>>, vector<1x32x32xf32>
    %32 = vector.shape_cast %31 : vector<1x32x32xf32> to vector<32x32xf32>
    %cst_26 = arith.constant dense<0.000000e+00> : vector<56x32xf32>
    %33 = tpu.matmul %27, %32, %cst_26 {dimension_numbers = #tpu.dot_dimension_numbers<[1], [0], [0], [1], [0, 0, 1, 1], [], []>} : vector<56x32xf32>, vector<32x32xf32>, vector<56x32xf32> -> vector<56x32xf32>
    %34 = arith.addf %30, %33 : vector<56x32xf32>
    %c0_27 = arith.constant 0 : index
    %c0_28 = arith.constant 0 : index
    %c0_29 = arith.constant 0 : index
    %35 = vector.load %arg10[%c0_27, %c0_28, %c0_29] : memref<9x2x32xf32, #tpu.memory_space<vmem>>, vector<1x2x32xf32>
    %36 = vector.shape_cast %35 : vector<1x2x32xf32> to vector<2x32xf32>
    %37 = vector.extract_strided_slice %36 {offsets = [0, 0], sizes = [1, 32], strides = [1, 1]} : vector<2x32xf32> to vector<1x32xf32>
    %38 = vector.broadcast %18 : vector<56x1xf32> to vector<56x32xf32>
    %39 = vector.broadcast %37 : vector<1x32xf32> to vector<56x32xf32>
    %40 = arith.mulf %38, %39 : vector<56x32xf32>
    %41 = vector.extract_strided_slice %36 {offsets = [1, 0], sizes = [1, 32], strides = [1, 1]} : vector<2x32xf32> to vector<1x32xf32>
    %42 = vector.broadcast %8 : vector<56x1xf32> to vector<56x32xf32>
    %43 = vector.broadcast %41 : vector<1x32xf32> to vector<56x32xf32>
    %44 = arith.mulf %42, %43 : vector<56x32xf32>
    %45 = arith.addf %40, %44 : vector<56x32xf32>
    %46 = arith.addf %34, %45 : vector<56x32xf32>
    %c0_30 = arith.constant 0 : index
    %c0_31 = arith.constant 0 : index
    %47 = vector.load %arg9[%c0_30, %c0_31] : memref<67x32xf32, #tpu.memory_space<vmem>>, vector<1x32xf32>
    %48 = vector.broadcast %47 : vector<1x32xf32> to vector<56x32xf32>
    %49 = arith.addf %46, %48 : vector<56x32xf32>
    %c1_32 = arith.constant 1 : index
    %c0_33 = arith.constant 0 : index
    %50 = vector.load %arg9[%c1_32, %c0_33] : memref<67x32xf32, #tpu.memory_space<vmem>>, vector<1x32xf32>
    %c2 = arith.constant 2 : index
    %c0_34 = arith.constant 0 : index
    %51 = vector.load %arg9[%c2, %c0_34] : memref<67x32xf32, #tpu.memory_space<vmem>>, vector<1x32xf32>
    %cst_35 = arith.constant dense<0.000000e+00> : vector<56xf32>
    %52 = vector.multi_reduction <add>, %49, %cst_35 [1] : vector<56x32xf32> to vector<56xf32>
    %53 = vector.shape_cast %52 : vector<56xf32> to vector<56x1xf32>
    %cst_36 = arith.constant 3.200000e+01 : f32
    %54 = vector.broadcast %cst_36 : f32 to vector<56x1xf32>
    %55 = arith.divf %53, %54 : vector<56x1xf32>
    %56 = vector.broadcast %55 : vector<56x1xf32> to vector<56x32xf32>
    %57 = arith.subf %49, %56 : vector<56x32xf32>
    %58 = arith.mulf %57, %57 : vector<56x32xf32>
    %cst_37 = arith.constant dense<0.000000e+00> : vector<56xf32>
    %59 = vector.multi_reduction <add>, %58, %cst_37 [1] : vector<56x32xf32> to vector<56xf32>
    %60 = vector.shape_cast %59 : vector<56xf32> to vector<56x1xf32>
    %cst_38 = arith.constant 3.200000e+01 : f32
    %61 = vector.broadcast %cst_38 : f32 to vector<56x1xf32>
    %62 = arith.divf %60, %61 : vector<56x1xf32>
    %63 = vector.broadcast %55 : vector<56x1xf32> to vector<56x32xf32>
    %64 = arith.subf %49, %63 : vector<56x32xf32>
    %cst_39 = arith.constant 9.99999974E-6 : f32
    %65 = vector.broadcast %cst_39 : f32 to vector<56x1xf32>
    %66 = arith.addf %62, %65 : vector<56x1xf32>
    %67 = math.rsqrt %66 : vector<56x1xf32>
    %68 = vector.broadcast %67 : vector<56x1xf32> to vector<56x32xf32>
    %69 = arith.mulf %64, %68 : vector<56x32xf32>
    %70 = vector.broadcast %50 : vector<1x32xf32> to vector<56x32xf32>
    %71 = arith.mulf %69, %70 : vector<56x32xf32>
    %72 = vector.broadcast %51 : vector<1x32xf32> to vector<56x32xf32>
    %73 = arith.addf %71, %72 : vector<56x32xf32>
    %74 = arith.negf %73 : vector<56x32xf32>
    %75 = math.exp %74 : vector<56x32xf32>
    %cst_40 = arith.constant 1.000000e+00 : f32
    %76 = vector.broadcast %cst_40 : f32 to vector<56x32xf32>
    %77 = arith.addf %76, %75 : vector<56x32xf32>
    %78 = arith.divf %76, %77 : vector<56x32xf32>
    %79 = arith.mulf %73, %78 : vector<56x32xf32>
    %c2_41 = arith.constant 2 : index
    %c0_42 = arith.constant 0 : index
    %c0_43 = arith.constant 0 : index
    %80 = vector.load %arg8[%c2_41, %c0_42, %c0_43] : memref<45x32x32xf32, #tpu.memory_space<vmem>>, vector<1x32x32xf32>
    %81 = vector.shape_cast %80 : vector<1x32x32xf32> to vector<32x32xf32>
    %cst_44 = arith.constant dense<0.000000e+00> : vector<56x32xf32>
    %82 = tpu.matmul %79, %81, %cst_44 {dimension_numbers = #tpu.dot_dimension_numbers<[1], [0], [0], [1], [0, 0, 1, 1], [], []>} : vector<56x32xf32>, vector<32x32xf32>, vector<56x32xf32> -> vector<56x32xf32>
    %c3 = arith.constant 3 : index
    %c0_45 = arith.constant 0 : index
    %83 = vector.load %arg9[%c3, %c0_45] : memref<67x32xf32, #tpu.memory_space<vmem>>, vector<1x32xf32>
    %84 = vector.broadcast %83 : vector<1x32xf32> to vector<56x32xf32>
    %85 = arith.addf %82, %84 : vector<56x32xf32>
    %86 = arith.negf %85 : vector<56x32xf32>
    %87 = math.exp %86 : vector<56x32xf32>
    %cst_46 = arith.constant 1.000000e+00 : f32
    %88 = vector.broadcast %cst_46 : f32 to vector<56x32xf32>
    %89 = arith.addf %88, %87 : vector<56x32xf32>
    %90 = arith.divf %88, %89 : vector<56x32xf32>
    %91 = arith.mulf %85, %90 : vector<56x32xf32>
    %cst_47 = arith.constant dense<0.000000e+00> : vector<8x32xf32>
    %92 = tpu.matmul %2, %91, %cst_47 {dimension_numbers = #tpu.dot_dimension_numbers<[1], [0], [0], [1], [0, 0, 1, 1], [], []>} : vector<8x56xf32>, vector<56x32xf32>, vector<8x32xf32> -> vector<8x32xf32>
    %c3_48 = arith.constant 3 : index
    %c0_49 = arith.constant 0 : index
    %c0_50 = arith.constant 0 : index
    %93 = vector.load %arg8[%c3_48, %c0_49, %c0_50] : memref<45x32x32xf32, #tpu.memory_space<vmem>>, vector<1x32x32xf32>
    %94 = vector.shape_cast %93 : vector<1x32x32xf32> to vector<32x32xf32>
    %cst_51 = arith.constant dense<0.000000e+00> : vector<8x32xf32>
    %95 = tpu.matmul %14, %94, %cst_51 {dimension_numbers = #tpu.dot_dimension_numbers<[1], [0], [0], [1], [0, 0, 1, 1], [], []>} : vector<8x32xf32>, vector<32x32xf32>, vector<8x32xf32> -> vector<8x32xf32>
    %c4 = arith.constant 4 : index
    %c0_52 = arith.constant 0 : index
    %c0_53 = arith.constant 0 : index
    %96 = vector.load %arg8[%c4, %c0_52, %c0_53] : memref<45x32x32xf32, #tpu.memory_space<vmem>>, vector<1x32x32xf32>
    %97 = vector.shape_cast %96 : vector<1x32x32xf32> to vector<32x32xf32>
    %cst_54 = arith.constant dense<0.000000e+00> : vector<8x32xf32>
    %98 = tpu.matmul %92, %97, %cst_54 {dimension_numbers = #tpu.dot_dimension_numbers<[1], [0], [0], [1], [0, 0, 1, 1], [], []>} : vector<8x32xf32>, vector<32x32xf32>, vector<8x32xf32> -> vector<8x32xf32>
    %99 = arith.addf %95, %98 : vector<8x32xf32>
    %c4_55 = arith.constant 4 : index
    %c0_56 = arith.constant 0 : index
    %100 = vector.load %arg9[%c4_55, %c0_56] : memref<67x32xf32, #tpu.memory_space<vmem>>, vector<1x32xf32>
    %101 = vector.broadcast %100 : vector<1x32xf32> to vector<8x32xf32>
    %102 = arith.addf %99, %101 : vector<8x32xf32>
    %c5 = arith.constant 5 : index
    %c0_57 = arith.constant 0 : index
    %103 = vector.load %arg9[%c5, %c0_57] : memref<67x32xf32, #tpu.memory_space<vmem>>, vector<1x32xf32>
    %c6 = arith.constant 6 : index
    %c0_58 = arith.constant 0 : index
    %104 = vector.load %arg9[%c6, %c0_58] : memref<67x32xf32, #tpu.memory_space<vmem>>, vector<1x32xf32>
    %cst_59 = arith.constant dense<0.000000e+00> : vector<8xf32>
    %105 = vector.multi_reduction <add>, %102, %cst_59 [1] : vector<8x32xf32> to vector<8xf32>
    %106 = vector.shape_cast %105 : vector<8xf32> to vector<8x1xf32>
    %cst_60 = arith.constant 3.200000e+01 : f32
    %107 = vector.broadcast %cst_60 : f32 to vector<8x1xf32>
    %108 = arith.divf %106, %107 : vector<8x1xf32>
    %109 = vector.broadcast %108 : vector<8x1xf32> to vector<8x32xf32>
    %110 = arith.subf %102, %109 : vector<8x32xf32>
    %111 = arith.mulf %110, %110 : vector<8x32xf32>
    %cst_61 = arith.constant dense<0.000000e+00> : vector<8xf32>
    %112 = vector.multi_reduction <add>, %111, %cst_61 [1] : vector<8x32xf32> to vector<8xf32>
    %113 = vector.shape_cast %112 : vector<8xf32> to vector<8x1xf32>
    %cst_62 = arith.constant 3.200000e+01 : f32
    %114 = vector.broadcast %cst_62 : f32 to vector<8x1xf32>
    %115 = arith.divf %113, %114 : vector<8x1xf32>
    %116 = vector.broadcast %108 : vector<8x1xf32> to vector<8x32xf32>
    %117 = arith.subf %102, %116 : vector<8x32xf32>
    %cst_63 = arith.constant 9.99999974E-6 : f32
    %118 = vector.broadcast %cst_63 : f32 to vector<8x1xf32>
    %119 = arith.addf %115, %118 : vector<8x1xf32>
    %120 = math.rsqrt %119 : vector<8x1xf32>
    %121 = vector.broadcast %120 : vector<8x1xf32> to vector<8x32xf32>
    %122 = arith.mulf %117, %121 : vector<8x32xf32>
    %123 = vector.broadcast %103 : vector<1x32xf32> to vector<8x32xf32>
    %124 = arith.mulf %122, %123 : vector<8x32xf32>
    %125 = vector.broadcast %104 : vector<1x32xf32> to vector<8x32xf32>
    %126 = arith.addf %124, %125 : vector<8x32xf32>
    %127 = arith.negf %126 : vector<8x32xf32>
    %128 = math.exp %127 : vector<8x32xf32>
    %cst_64 = arith.constant 1.000000e+00 : f32
    %129 = vector.broadcast %cst_64 : f32 to vector<8x32xf32>
    %130 = arith.addf %129, %128 : vector<8x32xf32>
    %131 = arith.divf %129, %130 : vector<8x32xf32>
    %132 = arith.mulf %126, %131 : vector<8x32xf32>
    %c5_65 = arith.constant 5 : index
    %c0_66 = arith.constant 0 : index
    %c0_67 = arith.constant 0 : index
    %133 = vector.load %arg8[%c5_65, %c0_66, %c0_67] : memref<45x32x32xf32, #tpu.memory_space<vmem>>, vector<1x32x32xf32>
    %134 = vector.shape_cast %133 : vector<1x32x32xf32> to vector<32x32xf32>
    %cst_68 = arith.constant dense<0.000000e+00> : vector<8x32xf32>
    %135 = tpu.matmul %132, %134, %cst_68 {dimension_numbers = #tpu.dot_dimension_numbers<[1], [0], [0], [1], [0, 0, 1, 1], [], []>} : vector<8x32xf32>, vector<32x32xf32>, vector<8x32xf32> -> vector<8x32xf32>
    %136 = arith.addf %14, %135 : vector<8x32xf32>
    %c7 = arith.constant 7 : index
    %c0_69 = arith.constant 0 : index
    %137 = vector.load %arg9[%c7, %c0_69] : memref<67x32xf32, #tpu.memory_space<vmem>>, vector<1x32xf32>
    %138 = vector.broadcast %137 : vector<1x32xf32> to vector<8x32xf32>
    %139 = arith.addf %136, %138 : vector<8x32xf32>
    %cst_70 = arith.constant dense<0.000000e+00> : vector<56x32xf32>
    %140 = tpu.matmul %0, %139, %cst_70 {dimension_numbers = #tpu.dot_dimension_numbers<[1], [0], [0], [1], [0, 0, 1, 1], [], []>} : vector<56x8xf32>, vector<8x32xf32>, vector<56x32xf32> -> vector<56x32xf32>
    %cst_71 = arith.constant dense<0.000000e+00> : vector<56x32xf32>
    %141 = tpu.matmul %1, %139, %cst_71 {dimension_numbers = #tpu.dot_dimension_numbers<[1], [0], [0], [1], [0, 0, 1, 1], [], []>} : vector<56x8xf32>, vector<8x32xf32>, vector<56x32xf32> -> vector<56x32xf32>
    %c6_72 = arith.constant 6 : index
    %c0_73 = arith.constant 0 : index
    %c0_74 = arith.constant 0 : index
    %142 = vector.load %arg8[%c6_72, %c0_73, %c0_74] : memref<45x32x32xf32, #tpu.memory_space<vmem>>, vector<1x32x32xf32>
    %143 = vector.shape_cast %142 : vector<1x32x32xf32> to vector<32x32xf32>
    %cst_75 = arith.constant dense<0.000000e+00> : vector<56x32xf32>
    %144 = tpu.matmul %140, %143, %cst_75 {dimension_numbers = #tpu.dot_dimension_numbers<[1], [0], [0], [1], [0, 0, 1, 1], [], []>} : vector<56x32xf32>, vector<32x32xf32>, vector<56x32xf32> -> vector<56x32xf32>
    %c7_76 = arith.constant 7 : index
    %c0_77 = arith.constant 0 : index
    %c0_78 = arith.constant 0 : index
    %145 = vector.load %arg8[%c7_76, %c0_77, %c0_78] : memref<45x32x32xf32, #tpu.memory_space<vmem>>, vector<1x32x32xf32>
    %146 = vector.shape_cast %145 : vector<1x32x32xf32> to vector<32x32xf32>
    %cst_79 = arith.constant dense<0.000000e+00> : vector<56x32xf32>
    %147 = tpu.matmul %141, %146, %cst_79 {dimension_numbers = #tpu.dot_dimension_numbers<[1], [0], [0], [1], [0, 0, 1, 1], [], []>} : vector<56x32xf32>, vector<32x32xf32>, vector<56x32xf32> -> vector<56x32xf32>
    %148 = arith.addf %144, %147 : vector<56x32xf32>
    %c1_80 = arith.constant 1 : index
    %c0_81 = arith.constant 0 : index
    %c0_82 = arith.constant 0 : index
    %149 = vector.load %arg10[%c1_80, %c0_81, %c0_82] : memref<9x2x32xf32, #tpu.memory_space<vmem>>, vector<1x2x32xf32>
    %150 = vector.shape_cast %149 : vector<1x2x32xf32> to vector<2x32xf32>
    %151 = vector.extract_strided_slice %150 {offsets = [0, 0], sizes = [1, 32], strides = [1, 1]} : vector<2x32xf32> to vector<1x32xf32>
    %152 = vector.broadcast %18 : vector<56x1xf32> to vector<56x32xf32>
    %153 = vector.broadcast %151 : vector<1x32xf32> to vector<56x32xf32>
    %154 = arith.mulf %152, %153 : vector<56x32xf32>
    %155 = vector.extract_strided_slice %150 {offsets = [1, 0], sizes = [1, 32], strides = [1, 1]} : vector<2x32xf32> to vector<1x32xf32>
    %156 = vector.broadcast %8 : vector<56x1xf32> to vector<56x32xf32>
    %157 = vector.broadcast %155 : vector<1x32xf32> to vector<56x32xf32>
    %158 = arith.mulf %156, %157 : vector<56x32xf32>
    %159 = arith.addf %154, %158 : vector<56x32xf32>
    %160 = arith.addf %148, %159 : vector<56x32xf32>
    %c8 = arith.constant 8 : index
    %c0_83 = arith.constant 0 : index
    %161 = vector.load %arg9[%c8, %c0_83] : memref<67x32xf32, #tpu.memory_space<vmem>>, vector<1x32xf32>
    %162 = vector.broadcast %161 : vector<1x32xf32> to vector<56x32xf32>
    %163 = arith.addf %160, %162 : vector<56x32xf32>
    %c9 = arith.constant 9 : index
    %c0_84 = arith.constant 0 : index
    %164 = vector.load %arg9[%c9, %c0_84] : memref<67x32xf32, #tpu.memory_space<vmem>>, vector<1x32xf32>
    %c10 = arith.constant 10 : index
    %c0_85 = arith.constant 0 : index
    %165 = vector.load %arg9[%c10, %c0_85] : memref<67x32xf32, #tpu.memory_space<vmem>>, vector<1x32xf32>
    %cst_86 = arith.constant dense<0.000000e+00> : vector<56xf32>
    %166 = vector.multi_reduction <add>, %163, %cst_86 [1] : vector<56x32xf32> to vector<56xf32>
    %167 = vector.shape_cast %166 : vector<56xf32> to vector<56x1xf32>
    %cst_87 = arith.constant 3.200000e+01 : f32
    %168 = vector.broadcast %cst_87 : f32 to vector<56x1xf32>
    %169 = arith.divf %167, %168 : vector<56x1xf32>
    %170 = vector.broadcast %169 : vector<56x1xf32> to vector<56x32xf32>
    %171 = arith.subf %163, %170 : vector<56x32xf32>
    %172 = arith.mulf %171, %171 : vector<56x32xf32>
    %cst_88 = arith.constant dense<0.000000e+00> : vector<56xf32>
    %173 = vector.multi_reduction <add>, %172, %cst_88 [1] : vector<56x32xf32> to vector<56xf32>
    %174 = vector.shape_cast %173 : vector<56xf32> to vector<56x1xf32>
    %cst_89 = arith.constant 3.200000e+01 : f32
    %175 = vector.broadcast %cst_89 : f32 to vector<56x1xf32>
    %176 = arith.divf %174, %175 : vector<56x1xf32>
    %177 = vector.broadcast %169 : vector<56x1xf32> to vector<56x32xf32>
    %178 = arith.subf %163, %177 : vector<56x32xf32>
    %cst_90 = arith.constant 9.99999974E-6 : f32
    %179 = vector.broadcast %cst_90 : f32 to vector<56x1xf32>
    %180 = arith.addf %176, %179 : vector<56x1xf32>
    %181 = math.rsqrt %180 : vector<56x1xf32>
    %182 = vector.broadcast %181 : vector<56x1xf32> to vector<56x32xf32>
    %183 = arith.mulf %178, %182 : vector<56x32xf32>
    %184 = vector.broadcast %164 : vector<1x32xf32> to vector<56x32xf32>
    %185 = arith.mulf %183, %184 : vector<56x32xf32>
    %186 = vector.broadcast %165 : vector<1x32xf32> to vector<56x32xf32>
    %187 = arith.addf %185, %186 : vector<56x32xf32>
    %188 = arith.negf %187 : vector<56x32xf32>
    %189 = math.exp %188 : vector<56x32xf32>
    %cst_91 = arith.constant 1.000000e+00 : f32
    %190 = vector.broadcast %cst_91 : f32 to vector<56x32xf32>
    %191 = arith.addf %190, %189 : vector<56x32xf32>
    %192 = arith.divf %190, %191 : vector<56x32xf32>
    %193 = arith.mulf %187, %192 : vector<56x32xf32>
    %c8_92 = arith.constant 8 : index
    %c0_93 = arith.constant 0 : index
    %c0_94 = arith.constant 0 : index
    %194 = vector.load %arg8[%c8_92, %c0_93, %c0_94] : memref<45x32x32xf32, #tpu.memory_space<vmem>>, vector<1x32x32xf32>
    %195 = vector.shape_cast %194 : vector<1x32x32xf32> to vector<32x32xf32>
    %cst_95 = arith.constant dense<0.000000e+00> : vector<56x32xf32>
    %196 = tpu.matmul %193, %195, %cst_95 {dimension_numbers = #tpu.dot_dimension_numbers<[1], [0], [0], [1], [0, 0, 1, 1], [], []>} : vector<56x32xf32>, vector<32x32xf32>, vector<56x32xf32> -> vector<56x32xf32>
    %c11 = arith.constant 11 : index
    %c0_96 = arith.constant 0 : index
    %197 = vector.load %arg9[%c11, %c0_96] : memref<67x32xf32, #tpu.memory_space<vmem>>, vector<1x32xf32>
    %198 = vector.broadcast %197 : vector<1x32xf32> to vector<56x32xf32>
    %199 = arith.addf %196, %198 : vector<56x32xf32>
    %200 = arith.negf %199 : vector<56x32xf32>
    %201 = math.exp %200 : vector<56x32xf32>
    %cst_97 = arith.constant 1.000000e+00 : f32
    %202 = vector.broadcast %cst_97 : f32 to vector<56x32xf32>
    %203 = arith.addf %202, %201 : vector<56x32xf32>
    %204 = arith.divf %202, %203 : vector<56x32xf32>
    %205 = arith.mulf %199, %204 : vector<56x32xf32>
    %cst_98 = arith.constant dense<0.000000e+00> : vector<8x32xf32>
    %206 = tpu.matmul %2, %205, %cst_98 {dimension_numbers = #tpu.dot_dimension_numbers<[1], [0], [0], [1], [0, 0, 1, 1], [], []>} : vector<8x56xf32>, vector<56x32xf32>, vector<8x32xf32> -> vector<8x32xf32>
    %c9_99 = arith.constant 9 : index
    %c0_100 = arith.constant 0 : index
    %c0_101 = arith.constant 0 : index
    %207 = vector.load %arg8[%c9_99, %c0_100, %c0_101] : memref<45x32x32xf32, #tpu.memory_space<vmem>>, vector<1x32x32xf32>
    %208 = vector.shape_cast %207 : vector<1x32x32xf32> to vector<32x32xf32>
    %cst_102 = arith.constant dense<0.000000e+00> : vector<8x32xf32>
    %209 = tpu.matmul %139, %208, %cst_102 {dimension_numbers = #tpu.dot_dimension_numbers<[1], [0], [0], [1], [0, 0, 1, 1], [], []>} : vector<8x32xf32>, vector<32x32xf32>, vector<8x32xf32> -> vector<8x32xf32>
    %c10_103 = arith.constant 10 : index
    %c0_104 = arith.constant 0 : index
    %c0_105 = arith.constant 0 : index
    %210 = vector.load %arg8[%c10_103, %c0_104, %c0_105] : memref<45x32x32xf32, #tpu.memory_space<vmem>>, vector<1x32x32xf32>
    %211 = vector.shape_cast %210 : vector<1x32x32xf32> to vector<32x32xf32>
    %cst_106 = arith.constant dense<0.000000e+00> : vector<8x32xf32>
    %212 = tpu.matmul %206, %211, %cst_106 {dimension_numbers = #tpu.dot_dimension_numbers<[1], [0], [0], [1], [0, 0, 1, 1], [], []>} : vector<8x32xf32>, vector<32x32xf32>, vector<8x32xf32> -> vector<8x32xf32>
    %213 = arith.addf %209, %212 : vector<8x32xf32>
    %c12 = arith.constant 12 : index
    %c0_107 = arith.constant 0 : index
    %214 = vector.load %arg9[%c12, %c0_107] : memref<67x32xf32, #tpu.memory_space<vmem>>, vector<1x32xf32>
    %215 = vector.broadcast %214 : vector<1x32xf32> to vector<8x32xf32>
    %216 = arith.addf %213, %215 : vector<8x32xf32>
    %c13 = arith.constant 13 : index
    %c0_108 = arith.constant 0 : index
    %217 = vector.load %arg9[%c13, %c0_108] : memref<67x32xf32, #tpu.memory_space<vmem>>, vector<1x32xf32>
    %c14 = arith.constant 14 : index
    %c0_109 = arith.constant 0 : index
    %218 = vector.load %arg9[%c14, %c0_109] : memref<67x32xf32, #tpu.memory_space<vmem>>, vector<1x32xf32>
    %cst_110 = arith.constant dense<0.000000e+00> : vector<8xf32>
    %219 = vector.multi_reduction <add>, %216, %cst_110 [1] : vector<8x32xf32> to vector<8xf32>
    %220 = vector.shape_cast %219 : vector<8xf32> to vector<8x1xf32>
    %cst_111 = arith.constant 3.200000e+01 : f32
    %221 = vector.broadcast %cst_111 : f32 to vector<8x1xf32>
    %222 = arith.divf %220, %221 : vector<8x1xf32>
    %223 = vector.broadcast %222 : vector<8x1xf32> to vector<8x32xf32>
    %224 = arith.subf %216, %223 : vector<8x32xf32>
    %225 = arith.mulf %224, %224 : vector<8x32xf32>
    %cst_112 = arith.constant dense<0.000000e+00> : vector<8xf32>
    %226 = vector.multi_reduction <add>, %225, %cst_112 [1] : vector<8x32xf32> to vector<8xf32>
    %227 = vector.shape_cast %226 : vector<8xf32> to vector<8x1xf32>
    %cst_113 = arith.constant 3.200000e+01 : f32
    %228 = vector.broadcast %cst_113 : f32 to vector<8x1xf32>
    %229 = arith.divf %227, %228 : vector<8x1xf32>
    %230 = vector.broadcast %222 : vector<8x1xf32> to vector<8x32xf32>
    %231 = arith.subf %216, %230 : vector<8x32xf32>
    %cst_114 = arith.constant 9.99999974E-6 : f32
    %232 = vector.broadcast %cst_114 : f32 to vector<8x1xf32>
    %233 = arith.addf %229, %232 : vector<8x1xf32>
    %234 = math.rsqrt %233 : vector<8x1xf32>
    %235 = vector.broadcast %234 : vector<8x1xf32> to vector<8x32xf32>
    %236 = arith.mulf %231, %235 : vector<8x32xf32>
    %237 = vector.broadcast %217 : vector<1x32xf32> to vector<8x32xf32>
    %238 = arith.mulf %236, %237 : vector<8x32xf32>
    %239 = vector.broadcast %218 : vector<1x32xf32> to vector<8x32xf32>
    %240 = arith.addf %238, %239 : vector<8x32xf32>
    %241 = arith.negf %240 : vector<8x32xf32>
    %242 = math.exp %241 : vector<8x32xf32>
    %cst_115 = arith.constant 1.000000e+00 : f32
    %243 = vector.broadcast %cst_115 : f32 to vector<8x32xf32>
    %244 = arith.addf %243, %242 : vector<8x32xf32>
    %245 = arith.divf %243, %244 : vector<8x32xf32>
    %246 = arith.mulf %240, %245 : vector<8x32xf32>
    %c11_116 = arith.constant 11 : index
    %c0_117 = arith.constant 0 : index
    %c0_118 = arith.constant 0 : index
    %247 = vector.load %arg8[%c11_116, %c0_117, %c0_118] : memref<45x32x32xf32, #tpu.memory_space<vmem>>, vector<1x32x32xf32>
    %248 = vector.shape_cast %247 : vector<1x32x32xf32> to vector<32x32xf32>
    %cst_119 = arith.constant dense<0.000000e+00> : vector<8x32xf32>
    %249 = tpu.matmul %246, %248, %cst_119 {dimension_numbers = #tpu.dot_dimension_numbers<[1], [0], [0], [1], [0, 0, 1, 1], [], []>} : vector<8x32xf32>, vector<32x32xf32>, vector<8x32xf32> -> vector<8x32xf32>
    %250 = arith.addf %139, %249 : vector<8x32xf32>
    %c15 = arith.constant 15 : index
    %c0_120 = arith.constant 0 : index
    %251 = vector.load %arg9[%c15, %c0_120] : memref<67x32xf32, #tpu.memory_space<vmem>>, vector<1x32xf32>
    %252 = vector.broadcast %251 : vector<1x32xf32> to vector<8x32xf32>
    %253 = arith.addf %250, %252 : vector<8x32xf32>
    %cst_121 = arith.constant dense<0.000000e+00> : vector<56x32xf32>
    %254 = tpu.matmul %0, %253, %cst_121 {dimension_numbers = #tpu.dot_dimension_numbers<[1], [0], [0], [1], [0, 0, 1, 1], [], []>} : vector<56x8xf32>, vector<8x32xf32>, vector<56x32xf32> -> vector<56x32xf32>
    %cst_122 = arith.constant dense<0.000000e+00> : vector<56x32xf32>
    %255 = tpu.matmul %1, %253, %cst_122 {dimension_numbers = #tpu.dot_dimension_numbers<[1], [0], [0], [1], [0, 0, 1, 1], [], []>} : vector<56x8xf32>, vector<8x32xf32>, vector<56x32xf32> -> vector<56x32xf32>
    %c12_123 = arith.constant 12 : index
    %c0_124 = arith.constant 0 : index
    %c0_125 = arith.constant 0 : index
    %256 = vector.load %arg8[%c12_123, %c0_124, %c0_125] : memref<45x32x32xf32, #tpu.memory_space<vmem>>, vector<1x32x32xf32>
    %257 = vector.shape_cast %256 : vector<1x32x32xf32> to vector<32x32xf32>
    %cst_126 = arith.constant dense<0.000000e+00> : vector<56x32xf32>
    %258 = tpu.matmul %254, %257, %cst_126 {dimension_numbers = #tpu.dot_dimension_numbers<[1], [0], [0], [1], [0, 0, 1, 1], [], []>} : vector<56x32xf32>, vector<32x32xf32>, vector<56x32xf32> -> vector<56x32xf32>
    %c13_127 = arith.constant 13 : index
    %c0_128 = arith.constant 0 : index
    %c0_129 = arith.constant 0 : index
    %259 = vector.load %arg8[%c13_127, %c0_128, %c0_129] : memref<45x32x32xf32, #tpu.memory_space<vmem>>, vector<1x32x32xf32>
    %260 = vector.shape_cast %259 : vector<1x32x32xf32> to vector<32x32xf32>
    %cst_130 = arith.constant dense<0.000000e+00> : vector<56x32xf32>
    %261 = tpu.matmul %255, %260, %cst_130 {dimension_numbers = #tpu.dot_dimension_numbers<[1], [0], [0], [1], [0, 0, 1, 1], [], []>} : vector<56x32xf32>, vector<32x32xf32>, vector<56x32xf32> -> vector<56x32xf32>
    %262 = arith.addf %258, %261 : vector<56x32xf32>
    %c2_131 = arith.constant 2 : index
    %c0_132 = arith.constant 0 : index
    %c0_133 = arith.constant 0 : index
    %263 = vector.load %arg10[%c2_131, %c0_132, %c0_133] : memref<9x2x32xf32, #tpu.memory_space<vmem>>, vector<1x2x32xf32>
    %264 = vector.shape_cast %263 : vector<1x2x32xf32> to vector<2x32xf32>
    %265 = vector.extract_strided_slice %264 {offsets = [0, 0], sizes = [1, 32], strides = [1, 1]} : vector<2x32xf32> to vector<1x32xf32>
    %266 = vector.broadcast %18 : vector<56x1xf32> to vector<56x32xf32>
    %267 = vector.broadcast %265 : vector<1x32xf32> to vector<56x32xf32>
    %268 = arith.mulf %266, %267 : vector<56x32xf32>
    %269 = vector.extract_strided_slice %264 {offsets = [1, 0], sizes = [1, 32], strides = [1, 1]} : vector<2x32xf32> to vector<1x32xf32>
    %270 = vector.broadcast %8 : vector<56x1xf32> to vector<56x32xf32>
    %271 = vector.broadcast %269 : vector<1x32xf32> to vector<56x32xf32>
    %272 = arith.mulf %270, %271 : vector<56x32xf32>
    %273 = arith.addf %268, %272 : vector<56x32xf32>
    %274 = arith.addf %262, %273 : vector<56x32xf32>
    %c16 = arith.constant 16 : index
    %c0_134 = arith.constant 0 : index
    %275 = vector.load %arg9[%c16, %c0_134] : memref<67x32xf32, #tpu.memory_space<vmem>>, vector<1x32xf32>
    %276 = vector.broadcast %275 : vector<1x32xf32> to vector<56x32xf32>
    %277 = arith.addf %274, %276 : vector<56x32xf32>
    %c17 = arith.constant 17 : index
    %c0_135 = arith.constant 0 : index
    %278 = vector.load %arg9[%c17, %c0_135] : memref<67x32xf32, #tpu.memory_space<vmem>>, vector<1x32xf32>
    %c18 = arith.constant 18 : index
    %c0_136 = arith.constant 0 : index
    %279 = vector.load %arg9[%c18, %c0_136] : memref<67x32xf32, #tpu.memory_space<vmem>>, vector<1x32xf32>
    %cst_137 = arith.constant dense<0.000000e+00> : vector<56xf32>
    %280 = vector.multi_reduction <add>, %277, %cst_137 [1] : vector<56x32xf32> to vector<56xf32>
    %281 = vector.shape_cast %280 : vector<56xf32> to vector<56x1xf32>
    %cst_138 = arith.constant 3.200000e+01 : f32
    %282 = vector.broadcast %cst_138 : f32 to vector<56x1xf32>
    %283 = arith.divf %281, %282 : vector<56x1xf32>
    %284 = vector.broadcast %283 : vector<56x1xf32> to vector<56x32xf32>
    %285 = arith.subf %277, %284 : vector<56x32xf32>
    %286 = arith.mulf %285, %285 : vector<56x32xf32>
    %cst_139 = arith.constant dense<0.000000e+00> : vector<56xf32>
    %287 = vector.multi_reduction <add>, %286, %cst_139 [1] : vector<56x32xf32> to vector<56xf32>
    %288 = vector.shape_cast %287 : vector<56xf32> to vector<56x1xf32>
    %cst_140 = arith.constant 3.200000e+01 : f32
    %289 = vector.broadcast %cst_140 : f32 to vector<56x1xf32>
    %290 = arith.divf %288, %289 : vector<56x1xf32>
    %291 = vector.broadcast %283 : vector<56x1xf32> to vector<56x32xf32>
    %292 = arith.subf %277, %291 : vector<56x32xf32>
    %cst_141 = arith.constant 9.99999974E-6 : f32
    %293 = vector.broadcast %cst_141 : f32 to vector<56x1xf32>
    %294 = arith.addf %290, %293 : vector<56x1xf32>
    %295 = math.rsqrt %294 : vector<56x1xf32>
    %296 = vector.broadcast %295 : vector<56x1xf32> to vector<56x32xf32>
    %297 = arith.mulf %292, %296 : vector<56x32xf32>
    %298 = vector.broadcast %278 : vector<1x32xf32> to vector<56x32xf32>
    %299 = arith.mulf %297, %298 : vector<56x32xf32>
    %300 = vector.broadcast %279 : vector<1x32xf32> to vector<56x32xf32>
    %301 = arith.addf %299, %300 : vector<56x32xf32>
    %302 = arith.negf %301 : vector<56x32xf32>
    %303 = math.exp %302 : vector<56x32xf32>
    %cst_142 = arith.constant 1.000000e+00 : f32
    %304 = vector.broadcast %cst_142 : f32 to vector<56x32xf32>
    %305 = arith.addf %304, %303 : vector<56x32xf32>
    %306 = arith.divf %304, %305 : vector<56x32xf32>
    %307 = arith.mulf %301, %306 : vector<56x32xf32>
    %c14_143 = arith.constant 14 : index
    %c0_144 = arith.constant 0 : index
    %c0_145 = arith.constant 0 : index
    %308 = vector.load %arg8[%c14_143, %c0_144, %c0_145] : memref<45x32x32xf32, #tpu.memory_space<vmem>>, vector<1x32x32xf32>
    %309 = vector.shape_cast %308 : vector<1x32x32xf32> to vector<32x32xf32>
    %cst_146 = arith.constant dense<0.000000e+00> : vector<56x32xf32>
    %310 = tpu.matmul %307, %309, %cst_146 {dimension_numbers = #tpu.dot_dimension_numbers<[1], [0], [0], [1], [0, 0, 1, 1], [], []>} : vector<56x32xf32>, vector<32x32xf32>, vector<56x32xf32> -> vector<56x32xf32>
    %c19 = arith.constant 19 : index
    %c0_147 = arith.constant 0 : index
    %311 = vector.load %arg9[%c19, %c0_147] : memref<67x32xf32, #tpu.memory_space<vmem>>, vector<1x32xf32>
    %312 = vector.broadcast %311 : vector<1x32xf32> to vector<56x32xf32>
    %313 = arith.addf %310, %312 : vector<56x32xf32>
    %c20 = arith.constant 20 : index
    %c0_148 = arith.constant 0 : index
    %314 = vector.load %arg9[%c20, %c0_148] : memref<67x32xf32, #tpu.memory_space<vmem>>, vector<1x32xf32>
    %c21 = arith.constant 21 : index
    %c0_149 = arith.constant 0 : index
    %315 = vector.load %arg9[%c21, %c0_149] : memref<67x32xf32, #tpu.memory_space<vmem>>, vector<1x32xf32>
    %cst_150 = arith.constant dense<0.000000e+00> : vector<56xf32>
    %316 = vector.multi_reduction <add>, %313, %cst_150 [1] : vector<56x32xf32> to vector<56xf32>
    %317 = vector.shape_cast %316 : vector<56xf32> to vector<56x1xf32>
    %cst_151 = arith.constant 3.200000e+01 : f32
    %318 = vector.broadcast %cst_151 : f32 to vector<56x1xf32>
    %319 = arith.divf %317, %318 : vector<56x1xf32>
    %320 = vector.broadcast %319 : vector<56x1xf32> to vector<56x32xf32>
    %321 = arith.subf %313, %320 : vector<56x32xf32>
    %322 = arith.mulf %321, %321 : vector<56x32xf32>
    %cst_152 = arith.constant dense<0.000000e+00> : vector<56xf32>
    %323 = vector.multi_reduction <add>, %322, %cst_152 [1] : vector<56x32xf32> to vector<56xf32>
    %324 = vector.shape_cast %323 : vector<56xf32> to vector<56x1xf32>
    %cst_153 = arith.constant 3.200000e+01 : f32
    %325 = vector.broadcast %cst_153 : f32 to vector<56x1xf32>
    %326 = arith.divf %324, %325 : vector<56x1xf32>
    %327 = vector.broadcast %319 : vector<56x1xf32> to vector<56x32xf32>
    %328 = arith.subf %313, %327 : vector<56x32xf32>
    %cst_154 = arith.constant 9.99999974E-6 : f32
    %329 = vector.broadcast %cst_154 : f32 to vector<56x1xf32>
    %330 = arith.addf %326, %329 : vector<56x1xf32>
    %331 = math.rsqrt %330 : vector<56x1xf32>
    %332 = vector.broadcast %331 : vector<56x1xf32> to vector<56x32xf32>
    %333 = arith.mulf %328, %332 : vector<56x32xf32>
    %334 = vector.broadcast %314 : vector<1x32xf32> to vector<56x32xf32>
    %335 = arith.mulf %333, %334 : vector<56x32xf32>
    %336 = vector.broadcast %315 : vector<1x32xf32> to vector<56x32xf32>
    %337 = arith.addf %335, %336 : vector<56x32xf32>
    %338 = arith.negf %337 : vector<56x32xf32>
    %339 = math.exp %338 : vector<56x32xf32>
    %cst_155 = arith.constant 1.000000e+00 : f32
    %340 = vector.broadcast %cst_155 : f32 to vector<56x32xf32>
    %341 = arith.addf %340, %339 : vector<56x32xf32>
    %342 = arith.divf %340, %341 : vector<56x32xf32>
    %343 = arith.mulf %337, %342 : vector<56x32xf32>
    %c0_156 = arith.constant 0 : index
    %c0_157 = arith.constant 0 : index
    %344 = vector.load %arg11[%c0_156, %c0_157] : memref<32x3xf32, #tpu.memory_space<vmem>>, vector<32x3xf32>
    %345 = vector.extract_strided_slice %344 {offsets = [0, 0], sizes = [32, 1], strides = [1, 1]} : vector<32x3xf32> to vector<32x1xf32>
    %cst_158 = arith.constant dense<0.000000e+00> : vector<56x1xf32>
    %346 = tpu.matmul %343, %345, %cst_158 {dimension_numbers = #tpu.dot_dimension_numbers<[1], [0], [0], [1], [0, 0, 1, 1], [], []>} : vector<56x32xf32>, vector<32x1xf32>, vector<56x1xf32> -> vector<56x1xf32>
    %347 = vector.broadcast %346 : vector<56x1xf32> to vector<56x3xf32>
    %348 = arith.mulf %25, %347 : vector<56x3xf32>
    %cst_159 = arith.constant dense<0.000000e+00> : vector<8x3xf32>
    %349 = tpu.matmul %2, %348, %cst_159 {dimension_numbers = #tpu.dot_dimension_numbers<[1], [0], [0], [1], [0, 0, 1, 1], [], []>} : vector<8x56xf32>, vector<56x3xf32>, vector<8x3xf32> -> vector<8x3xf32>
    %350 = arith.addf %4, %349 : vector<8x3xf32>
    %cst_160 = arith.constant dense<0.000000e+00> : vector<56x3xf32>
    %351 = tpu.matmul %3, %350, %cst_160 {dimension_numbers = #tpu.dot_dimension_numbers<[1], [0], [0], [1], [0, 0, 1, 1], [], []>} : vector<56x8xf32>, vector<8x3xf32>, vector<56x3xf32> -> vector<56x3xf32>
    %352 = arith.mulf %351, %351 : vector<56x3xf32>
    %cst_161 = arith.constant dense<0.000000e+00> : vector<56xf32>
    %353 = vector.multi_reduction <add>, %352, %cst_161 [1] : vector<56x3xf32> to vector<56xf32>
    %354 = vector.shape_cast %353 : vector<56xf32> to vector<56x1xf32>
    %cst_162 = arith.constant 9.99999993E-9 : f32
    %355 = vector.broadcast %cst_162 : f32 to vector<56x1xf32>
    %356 = arith.addf %354, %355 : vector<56x1xf32>
    %357 = math.sqrt %356 : vector<56x1xf32>
    %cst_163 = arith.constant 1.000000e+00 : f32
    %358 = vector.broadcast %cst_163 : f32 to vector<56x1xf32>
    %359 = arith.addf %357, %358 : vector<56x1xf32>
    %360 = vector.broadcast %359 : vector<56x1xf32> to vector<56x3xf32>
    %361 = arith.divf %351, %360 : vector<56x3xf32>
    %cst_164 = arith.constant dense<0.000000e+00> : vector<56x32xf32>
    %362 = tpu.matmul %0, %253, %cst_164 {dimension_numbers = #tpu.dot_dimension_numbers<[1], [0], [0], [1], [0, 0, 1, 1], [], []>} : vector<56x8xf32>, vector<8x32xf32>, vector<56x32xf32> -> vector<56x32xf32>
    %cst_165 = arith.constant dense<0.000000e+00> : vector<56x32xf32>
    %363 = tpu.matmul %1, %253, %cst_165 {dimension_numbers = #tpu.dot_dimension_numbers<[1], [0], [0], [1], [0, 0, 1, 1], [], []>} : vector<56x8xf32>, vector<8x32xf32>, vector<56x32xf32> -> vector<56x32xf32>
    %c15_166 = arith.constant 15 : index
    %c0_167 = arith.constant 0 : index
    %c0_168 = arith.constant 0 : index
    %364 = vector.load %arg8[%c15_166, %c0_167, %c0_168] : memref<45x32x32xf32, #tpu.memory_space<vmem>>, vector<1x32x32xf32>
    %365 = vector.shape_cast %364 : vector<1x32x32xf32> to vector<32x32xf32>
    %cst_169 = arith.constant dense<0.000000e+00> : vector<56x32xf32>
    %366 = tpu.matmul %362, %365, %cst_169 {dimension_numbers = #tpu.dot_dimension_numbers<[1], [0], [0], [1], [0, 0, 1, 1], [], []>} : vector<56x32xf32>, vector<32x32xf32>, vector<56x32xf32> -> vector<56x32xf32>
    %c16_170 = arith.constant 16 : index
    %c0_171 = arith.constant 0 : index
    %c0_172 = arith.constant 0 : index
    %367 = vector.load %arg8[%c16_170, %c0_171, %c0_172] : memref<45x32x32xf32, #tpu.memory_space<vmem>>, vector<1x32x32xf32>
    %368 = vector.shape_cast %367 : vector<1x32x32xf32> to vector<32x32xf32>
    %cst_173 = arith.constant dense<0.000000e+00> : vector<56x32xf32>
    %369 = tpu.matmul %363, %368, %cst_173 {dimension_numbers = #tpu.dot_dimension_numbers<[1], [0], [0], [1], [0, 0, 1, 1], [], []>} : vector<56x32xf32>, vector<32x32xf32>, vector<56x32xf32> -> vector<56x32xf32>
    %370 = arith.addf %366, %369 : vector<56x32xf32>
    %c3_174 = arith.constant 3 : index
    %c0_175 = arith.constant 0 : index
    %c0_176 = arith.constant 0 : index
    %371 = vector.load %arg10[%c3_174, %c0_175, %c0_176] : memref<9x2x32xf32, #tpu.memory_space<vmem>>, vector<1x2x32xf32>
    %372 = vector.shape_cast %371 : vector<1x2x32xf32> to vector<2x32xf32>
    %373 = vector.extract_strided_slice %372 {offsets = [0, 0], sizes = [1, 32], strides = [1, 1]} : vector<2x32xf32> to vector<1x32xf32>
    %374 = vector.broadcast %354 : vector<56x1xf32> to vector<56x32xf32>
    %375 = vector.broadcast %373 : vector<1x32xf32> to vector<56x32xf32>
    %376 = arith.mulf %374, %375 : vector<56x32xf32>
    %377 = vector.extract_strided_slice %372 {offsets = [1, 0], sizes = [1, 32], strides = [1, 1]} : vector<2x32xf32> to vector<1x32xf32>
    %378 = vector.broadcast %8 : vector<56x1xf32> to vector<56x32xf32>
    %379 = vector.broadcast %377 : vector<1x32xf32> to vector<56x32xf32>
    %380 = arith.mulf %378, %379 : vector<56x32xf32>
    %381 = arith.addf %376, %380 : vector<56x32xf32>
    %382 = arith.addf %370, %381 : vector<56x32xf32>
    %c22 = arith.constant 22 : index
    %c0_177 = arith.constant 0 : index
    %383 = vector.load %arg9[%c22, %c0_177] : memref<67x32xf32, #tpu.memory_space<vmem>>, vector<1x32xf32>
    %384 = vector.broadcast %383 : vector<1x32xf32> to vector<56x32xf32>
    %385 = arith.addf %382, %384 : vector<56x32xf32>
    %c23 = arith.constant 23 : index
    %c0_178 = arith.constant 0 : index
    %386 = vector.load %arg9[%c23, %c0_178] : memref<67x32xf32, #tpu.memory_space<vmem>>, vector<1x32xf32>
    %c24 = arith.constant 24 : index
    %c0_179 = arith.constant 0 : index
    %387 = vector.load %arg9[%c24, %c0_179] : memref<67x32xf32, #tpu.memory_space<vmem>>, vector<1x32xf32>
    %cst_180 = arith.constant dense<0.000000e+00> : vector<56xf32>
    %388 = vector.multi_reduction <add>, %385, %cst_180 [1] : vector<56x32xf32> to vector<56xf32>
    %389 = vector.shape_cast %388 : vector<56xf32> to vector<56x1xf32>
    %cst_181 = arith.constant 3.200000e+01 : f32
    %390 = vector.broadcast %cst_181 : f32 to vector<56x1xf32>
    %391 = arith.divf %389, %390 : vector<56x1xf32>
    %392 = vector.broadcast %391 : vector<56x1xf32> to vector<56x32xf32>
    %393 = arith.subf %385, %392 : vector<56x32xf32>
    %394 = arith.mulf %393, %393 : vector<56x32xf32>
    %cst_182 = arith.constant dense<0.000000e+00> : vector<56xf32>
    %395 = vector.multi_reduction <add>, %394, %cst_182 [1] : vector<56x32xf32> to vector<56xf32>
    %396 = vector.shape_cast %395 : vector<56xf32> to vector<56x1xf32>
    %cst_183 = arith.constant 3.200000e+01 : f32
    %397 = vector.broadcast %cst_183 : f32 to vector<56x1xf32>
    %398 = arith.divf %396, %397 : vector<56x1xf32>
    %399 = vector.broadcast %391 : vector<56x1xf32> to vector<56x32xf32>
    %400 = arith.subf %385, %399 : vector<56x32xf32>
    %cst_184 = arith.constant 9.99999974E-6 : f32
    %401 = vector.broadcast %cst_184 : f32 to vector<56x1xf32>
    %402 = arith.addf %398, %401 : vector<56x1xf32>
    %403 = math.rsqrt %402 : vector<56x1xf32>
    %404 = vector.broadcast %403 : vector<56x1xf32> to vector<56x32xf32>
    %405 = arith.mulf %400, %404 : vector<56x32xf32>
    %406 = vector.broadcast %386 : vector<1x32xf32> to vector<56x32xf32>
    %407 = arith.mulf %405, %406 : vector<56x32xf32>
    %408 = vector.broadcast %387 : vector<1x32xf32> to vector<56x32xf32>
    %409 = arith.addf %407, %408 : vector<56x32xf32>
    %410 = arith.negf %409 : vector<56x32xf32>
    %411 = math.exp %410 : vector<56x32xf32>
    %cst_185 = arith.constant 1.000000e+00 : f32
    %412 = vector.broadcast %cst_185 : f32 to vector<56x32xf32>
    %413 = arith.addf %412, %411 : vector<56x32xf32>
    %414 = arith.divf %412, %413 : vector<56x32xf32>
    %415 = arith.mulf %409, %414 : vector<56x32xf32>
    %c17_186 = arith.constant 17 : index
    %c0_187 = arith.constant 0 : index
    %c0_188 = arith.constant 0 : index
    %416 = vector.load %arg8[%c17_186, %c0_187, %c0_188] : memref<45x32x32xf32, #tpu.memory_space<vmem>>, vector<1x32x32xf32>
    %417 = vector.shape_cast %416 : vector<1x32x32xf32> to vector<32x32xf32>
    %cst_189 = arith.constant dense<0.000000e+00> : vector<56x32xf32>
    %418 = tpu.matmul %415, %417, %cst_189 {dimension_numbers = #tpu.dot_dimension_numbers<[1], [0], [0], [1], [0, 0, 1, 1], [], []>} : vector<56x32xf32>, vector<32x32xf32>, vector<56x32xf32> -> vector<56x32xf32>
    %c25 = arith.constant 25 : index
    %c0_190 = arith.constant 0 : index
    %419 = vector.load %arg9[%c25, %c0_190] : memref<67x32xf32, #tpu.memory_space<vmem>>, vector<1x32xf32>
    %420 = vector.broadcast %419 : vector<1x32xf32> to vector<56x32xf32>
    %421 = arith.addf %418, %420 : vector<56x32xf32>
    %422 = arith.negf %421 : vector<56x32xf32>
    %423 = math.exp %422 : vector<56x32xf32>
    %cst_191 = arith.constant 1.000000e+00 : f32
    %424 = vector.broadcast %cst_191 : f32 to vector<56x32xf32>
    %425 = arith.addf %424, %423 : vector<56x32xf32>
    %426 = arith.divf %424, %425 : vector<56x32xf32>
    %427 = arith.mulf %421, %426 : vector<56x32xf32>
    %cst_192 = arith.constant dense<0.000000e+00> : vector<8x32xf32>
    %428 = tpu.matmul %2, %427, %cst_192 {dimension_numbers = #tpu.dot_dimension_numbers<[1], [0], [0], [1], [0, 0, 1, 1], [], []>} : vector<8x56xf32>, vector<56x32xf32>, vector<8x32xf32> -> vector<8x32xf32>
    %c18_193 = arith.constant 18 : index
    %c0_194 = arith.constant 0 : index
    %c0_195 = arith.constant 0 : index
    %429 = vector.load %arg8[%c18_193, %c0_194, %c0_195] : memref<45x32x32xf32, #tpu.memory_space<vmem>>, vector<1x32x32xf32>
    %430 = vector.shape_cast %429 : vector<1x32x32xf32> to vector<32x32xf32>
    %cst_196 = arith.constant dense<0.000000e+00> : vector<8x32xf32>
    %431 = tpu.matmul %253, %430, %cst_196 {dimension_numbers = #tpu.dot_dimension_numbers<[1], [0], [0], [1], [0, 0, 1, 1], [], []>} : vector<8x32xf32>, vector<32x32xf32>, vector<8x32xf32> -> vector<8x32xf32>
    %c19_197 = arith.constant 19 : index
    %c0_198 = arith.constant 0 : index
    %c0_199 = arith.constant 0 : index
    %432 = vector.load %arg8[%c19_197, %c0_198, %c0_199] : memref<45x32x32xf32, #tpu.memory_space<vmem>>, vector<1x32x32xf32>
    %433 = vector.shape_cast %432 : vector<1x32x32xf32> to vector<32x32xf32>
    %cst_200 = arith.constant dense<0.000000e+00> : vector<8x32xf32>
    %434 = tpu.matmul %428, %433, %cst_200 {dimension_numbers = #tpu.dot_dimension_numbers<[1], [0], [0], [1], [0, 0, 1, 1], [], []>} : vector<8x32xf32>, vector<32x32xf32>, vector<8x32xf32> -> vector<8x32xf32>
    %435 = arith.addf %431, %434 : vector<8x32xf32>
    %c26 = arith.constant 26 : index
    %c0_201 = arith.constant 0 : index
    %436 = vector.load %arg9[%c26, %c0_201] : memref<67x32xf32, #tpu.memory_space<vmem>>, vector<1x32xf32>
    %437 = vector.broadcast %436 : vector<1x32xf32> to vector<8x32xf32>
    %438 = arith.addf %435, %437 : vector<8x32xf32>
    %c27 = arith.constant 27 : index
    %c0_202 = arith.constant 0 : index
    %439 = vector.load %arg9[%c27, %c0_202] : memref<67x32xf32, #tpu.memory_space<vmem>>, vector<1x32xf32>
    %c28 = arith.constant 28 : index
    %c0_203 = arith.constant 0 : index
    %440 = vector.load %arg9[%c28, %c0_203] : memref<67x32xf32, #tpu.memory_space<vmem>>, vector<1x32xf32>
    %cst_204 = arith.constant dense<0.000000e+00> : vector<8xf32>
    %441 = vector.multi_reduction <add>, %438, %cst_204 [1] : vector<8x32xf32> to vector<8xf32>
    %442 = vector.shape_cast %441 : vector<8xf32> to vector<8x1xf32>
    %cst_205 = arith.constant 3.200000e+01 : f32
    %443 = vector.broadcast %cst_205 : f32 to vector<8x1xf32>
    %444 = arith.divf %442, %443 : vector<8x1xf32>
    %445 = vector.broadcast %444 : vector<8x1xf32> to vector<8x32xf32>
    %446 = arith.subf %438, %445 : vector<8x32xf32>
    %447 = arith.mulf %446, %446 : vector<8x32xf32>
    %cst_206 = arith.constant dense<0.000000e+00> : vector<8xf32>
    %448 = vector.multi_reduction <add>, %447, %cst_206 [1] : vector<8x32xf32> to vector<8xf32>
    %449 = vector.shape_cast %448 : vector<8xf32> to vector<8x1xf32>
    %cst_207 = arith.constant 3.200000e+01 : f32
    %450 = vector.broadcast %cst_207 : f32 to vector<8x1xf32>
    %451 = arith.divf %449, %450 : vector<8x1xf32>
    %452 = vector.broadcast %444 : vector<8x1xf32> to vector<8x32xf32>
    %453 = arith.subf %438, %452 : vector<8x32xf32>
    %cst_208 = arith.constant 9.99999974E-6 : f32
    %454 = vector.broadcast %cst_208 : f32 to vector<8x1xf32>
    %455 = arith.addf %451, %454 : vector<8x1xf32>
    %456 = math.rsqrt %455 : vector<8x1xf32>
    %457 = vector.broadcast %456 : vector<8x1xf32> to vector<8x32xf32>
    %458 = arith.mulf %453, %457 : vector<8x32xf32>
    %459 = vector.broadcast %439 : vector<1x32xf32> to vector<8x32xf32>
    %460 = arith.mulf %458, %459 : vector<8x32xf32>
    %461 = vector.broadcast %440 : vector<1x32xf32> to vector<8x32xf32>
    %462 = arith.addf %460, %461 : vector<8x32xf32>
    %463 = arith.negf %462 : vector<8x32xf32>
    %464 = math.exp %463 : vector<8x32xf32>
    %cst_209 = arith.constant 1.000000e+00 : f32
    %465 = vector.broadcast %cst_209 : f32 to vector<8x32xf32>
    %466 = arith.addf %465, %464 : vector<8x32xf32>
    %467 = arith.divf %465, %466 : vector<8x32xf32>
    %468 = arith.mulf %462, %467 : vector<8x32xf32>
    %c20_210 = arith.constant 20 : index
    %c0_211 = arith.constant 0 : index
    %c0_212 = arith.constant 0 : index
    %469 = vector.load %arg8[%c20_210, %c0_211, %c0_212] : memref<45x32x32xf32, #tpu.memory_space<vmem>>, vector<1x32x32xf32>
    %470 = vector.shape_cast %469 : vector<1x32x32xf32> to vector<32x32xf32>
    %cst_213 = arith.constant dense<0.000000e+00> : vector<8x32xf32>
    %471 = tpu.matmul %468, %470, %cst_213 {dimension_numbers = #tpu.dot_dimension_numbers<[1], [0], [0], [1], [0, 0, 1, 1], [], []>} : vector<8x32xf32>, vector<32x32xf32>, vector<8x32xf32> -> vector<8x32xf32>
    %472 = arith.addf %253, %471 : vector<8x32xf32>
    %c29 = arith.constant 29 : index
    %c0_214 = arith.constant 0 : index
    %473 = vector.load %arg9[%c29, %c0_214] : memref<67x32xf32, #tpu.memory_space<vmem>>, vector<1x32xf32>
    %474 = vector.broadcast %473 : vector<1x32xf32> to vector<8x32xf32>
    %475 = arith.addf %472, %474 : vector<8x32xf32>
    %cst_215 = arith.constant dense<0.000000e+00> : vector<56x32xf32>
    %476 = tpu.matmul %0, %475, %cst_215 {dimension_numbers = #tpu.dot_dimension_numbers<[1], [0], [0], [1], [0, 0, 1, 1], [], []>} : vector<56x8xf32>, vector<8x32xf32>, vector<56x32xf32> -> vector<56x32xf32>
    %cst_216 = arith.constant dense<0.000000e+00> : vector<56x32xf32>
    %477 = tpu.matmul %1, %475, %cst_216 {dimension_numbers = #tpu.dot_dimension_numbers<[1], [0], [0], [1], [0, 0, 1, 1], [], []>} : vector<56x8xf32>, vector<8x32xf32>, vector<56x32xf32> -> vector<56x32xf32>
    %c21_217 = arith.constant 21 : index
    %c0_218 = arith.constant 0 : index
    %c0_219 = arith.constant 0 : index
    %478 = vector.load %arg8[%c21_217, %c0_218, %c0_219] : memref<45x32x32xf32, #tpu.memory_space<vmem>>, vector<1x32x32xf32>
    %479 = vector.shape_cast %478 : vector<1x32x32xf32> to vector<32x32xf32>
    %cst_220 = arith.constant dense<0.000000e+00> : vector<56x32xf32>
    %480 = tpu.matmul %476, %479, %cst_220 {dimension_numbers = #tpu.dot_dimension_numbers<[1], [0], [0], [1], [0, 0, 1, 1], [], []>} : vector<56x32xf32>, vector<32x32xf32>, vector<56x32xf32> -> vector<56x32xf32>
    %c22_221 = arith.constant 22 : index
    %c0_222 = arith.constant 0 : index
    %c0_223 = arith.constant 0 : index
    %481 = vector.load %arg8[%c22_221, %c0_222, %c0_223] : memref<45x32x32xf32, #tpu.memory_space<vmem>>, vector<1x32x32xf32>
    %482 = vector.shape_cast %481 : vector<1x32x32xf32> to vector<32x32xf32>
    %cst_224 = arith.constant dense<0.000000e+00> : vector<56x32xf32>
    %483 = tpu.matmul %477, %482, %cst_224 {dimension_numbers = #tpu.dot_dimension_numbers<[1], [0], [0], [1], [0, 0, 1, 1], [], []>} : vector<56x32xf32>, vector<32x32xf32>, vector<56x32xf32> -> vector<56x32xf32>
    %484 = arith.addf %480, %483 : vector<56x32xf32>
    %c4_225 = arith.constant 4 : index
    %c0_226 = arith.constant 0 : index
    %c0_227 = arith.constant 0 : index
    %485 = vector.load %arg10[%c4_225, %c0_226, %c0_227] : memref<9x2x32xf32, #tpu.memory_space<vmem>>, vector<1x2x32xf32>
    %486 = vector.shape_cast %485 : vector<1x2x32xf32> to vector<2x32xf32>
    %487 = vector.extract_strided_slice %486 {offsets = [0, 0], sizes = [1, 32], strides = [1, 1]} : vector<2x32xf32> to vector<1x32xf32>
    %488 = vector.broadcast %354 : vector<56x1xf32> to vector<56x32xf32>
    %489 = vector.broadcast %487 : vector<1x32xf32> to vector<56x32xf32>
    %490 = arith.mulf %488, %489 : vector<56x32xf32>
    %491 = vector.extract_strided_slice %486 {offsets = [1, 0], sizes = [1, 32], strides = [1, 1]} : vector<2x32xf32> to vector<1x32xf32>
    %492 = vector.broadcast %8 : vector<56x1xf32> to vector<56x32xf32>
    %493 = vector.broadcast %491 : vector<1x32xf32> to vector<56x32xf32>
    %494 = arith.mulf %492, %493 : vector<56x32xf32>
    %495 = arith.addf %490, %494 : vector<56x32xf32>
    %496 = arith.addf %484, %495 : vector<56x32xf32>
    %c30 = arith.constant 30 : index
    %c0_228 = arith.constant 0 : index
    %497 = vector.load %arg9[%c30, %c0_228] : memref<67x32xf32, #tpu.memory_space<vmem>>, vector<1x32xf32>
    %498 = vector.broadcast %497 : vector<1x32xf32> to vector<56x32xf32>
    %499 = arith.addf %496, %498 : vector<56x32xf32>
    %c31 = arith.constant 31 : index
    %c0_229 = arith.constant 0 : index
    %500 = vector.load %arg9[%c31, %c0_229] : memref<67x32xf32, #tpu.memory_space<vmem>>, vector<1x32xf32>
    %c32 = arith.constant 32 : index
    %c0_230 = arith.constant 0 : index
    %501 = vector.load %arg9[%c32, %c0_230] : memref<67x32xf32, #tpu.memory_space<vmem>>, vector<1x32xf32>
    %cst_231 = arith.constant dense<0.000000e+00> : vector<56xf32>
    %502 = vector.multi_reduction <add>, %499, %cst_231 [1] : vector<56x32xf32> to vector<56xf32>
    %503 = vector.shape_cast %502 : vector<56xf32> to vector<56x1xf32>
    %cst_232 = arith.constant 3.200000e+01 : f32
    %504 = vector.broadcast %cst_232 : f32 to vector<56x1xf32>
    %505 = arith.divf %503, %504 : vector<56x1xf32>
    %506 = vector.broadcast %505 : vector<56x1xf32> to vector<56x32xf32>
    %507 = arith.subf %499, %506 : vector<56x32xf32>
    %508 = arith.mulf %507, %507 : vector<56x32xf32>
    %cst_233 = arith.constant dense<0.000000e+00> : vector<56xf32>
    %509 = vector.multi_reduction <add>, %508, %cst_233 [1] : vector<56x32xf32> to vector<56xf32>
    %510 = vector.shape_cast %509 : vector<56xf32> to vector<56x1xf32>
    %cst_234 = arith.constant 3.200000e+01 : f32
    %511 = vector.broadcast %cst_234 : f32 to vector<56x1xf32>
    %512 = arith.divf %510, %511 : vector<56x1xf32>
    %513 = vector.broadcast %505 : vector<56x1xf32> to vector<56x32xf32>
    %514 = arith.subf %499, %513 : vector<56x32xf32>
    %cst_235 = arith.constant 9.99999974E-6 : f32
    %515 = vector.broadcast %cst_235 : f32 to vector<56x1xf32>
    %516 = arith.addf %512, %515 : vector<56x1xf32>
    %517 = math.rsqrt %516 : vector<56x1xf32>
    %518 = vector.broadcast %517 : vector<56x1xf32> to vector<56x32xf32>
    %519 = arith.mulf %514, %518 : vector<56x32xf32>
    %520 = vector.broadcast %500 : vector<1x32xf32> to vector<56x32xf32>
    %521 = arith.mulf %519, %520 : vector<56x32xf32>
    %522 = vector.broadcast %501 : vector<1x32xf32> to vector<56x32xf32>
    %523 = arith.addf %521, %522 : vector<56x32xf32>
    %524 = arith.negf %523 : vector<56x32xf32>
    %525 = math.exp %524 : vector<56x32xf32>
    %cst_236 = arith.constant 1.000000e+00 : f32
    %526 = vector.broadcast %cst_236 : f32 to vector<56x32xf32>
    %527 = arith.addf %526, %525 : vector<56x32xf32>
    %528 = arith.divf %526, %527 : vector<56x32xf32>
    %529 = arith.mulf %523, %528 : vector<56x32xf32>
    %c23_237 = arith.constant 23 : index
    %c0_238 = arith.constant 0 : index
    %c0_239 = arith.constant 0 : index
    %530 = vector.load %arg8[%c23_237, %c0_238, %c0_239] : memref<45x32x32xf32, #tpu.memory_space<vmem>>, vector<1x32x32xf32>
    %531 = vector.shape_cast %530 : vector<1x32x32xf32> to vector<32x32xf32>
    %cst_240 = arith.constant dense<0.000000e+00> : vector<56x32xf32>
    %532 = tpu.matmul %529, %531, %cst_240 {dimension_numbers = #tpu.dot_dimension_numbers<[1], [0], [0], [1], [0, 0, 1, 1], [], []>} : vector<56x32xf32>, vector<32x32xf32>, vector<56x32xf32> -> vector<56x32xf32>
    %c33 = arith.constant 33 : index
    %c0_241 = arith.constant 0 : index
    %533 = vector.load %arg9[%c33, %c0_241] : memref<67x32xf32, #tpu.memory_space<vmem>>, vector<1x32xf32>
    %534 = vector.broadcast %533 : vector<1x32xf32> to vector<56x32xf32>
    %535 = arith.addf %532, %534 : vector<56x32xf32>
    %536 = arith.negf %535 : vector<56x32xf32>
    %537 = math.exp %536 : vector<56x32xf32>
    %cst_242 = arith.constant 1.000000e+00 : f32
    %538 = vector.broadcast %cst_242 : f32 to vector<56x32xf32>
    %539 = arith.addf %538, %537 : vector<56x32xf32>
    %540 = arith.divf %538, %539 : vector<56x32xf32>
    %541 = arith.mulf %535, %540 : vector<56x32xf32>
    %cst_243 = arith.constant dense<0.000000e+00> : vector<8x32xf32>
    %542 = tpu.matmul %2, %541, %cst_243 {dimension_numbers = #tpu.dot_dimension_numbers<[1], [0], [0], [1], [0, 0, 1, 1], [], []>} : vector<8x56xf32>, vector<56x32xf32>, vector<8x32xf32> -> vector<8x32xf32>
    %c24_244 = arith.constant 24 : index
    %c0_245 = arith.constant 0 : index
    %c0_246 = arith.constant 0 : index
    %543 = vector.load %arg8[%c24_244, %c0_245, %c0_246] : memref<45x32x32xf32, #tpu.memory_space<vmem>>, vector<1x32x32xf32>
    %544 = vector.shape_cast %543 : vector<1x32x32xf32> to vector<32x32xf32>
    %cst_247 = arith.constant dense<0.000000e+00> : vector<8x32xf32>
    %545 = tpu.matmul %475, %544, %cst_247 {dimension_numbers = #tpu.dot_dimension_numbers<[1], [0], [0], [1], [0, 0, 1, 1], [], []>} : vector<8x32xf32>, vector<32x32xf32>, vector<8x32xf32> -> vector<8x32xf32>
    %c25_248 = arith.constant 25 : index
    %c0_249 = arith.constant 0 : index
    %c0_250 = arith.constant 0 : index
    %546 = vector.load %arg8[%c25_248, %c0_249, %c0_250] : memref<45x32x32xf32, #tpu.memory_space<vmem>>, vector<1x32x32xf32>
    %547 = vector.shape_cast %546 : vector<1x32x32xf32> to vector<32x32xf32>
    %cst_251 = arith.constant dense<0.000000e+00> : vector<8x32xf32>
    %548 = tpu.matmul %542, %547, %cst_251 {dimension_numbers = #tpu.dot_dimension_numbers<[1], [0], [0], [1], [0, 0, 1, 1], [], []>} : vector<8x32xf32>, vector<32x32xf32>, vector<8x32xf32> -> vector<8x32xf32>
    %549 = arith.addf %545, %548 : vector<8x32xf32>
    %c34 = arith.constant 34 : index
    %c0_252 = arith.constant 0 : index
    %550 = vector.load %arg9[%c34, %c0_252] : memref<67x32xf32, #tpu.memory_space<vmem>>, vector<1x32xf32>
    %551 = vector.broadcast %550 : vector<1x32xf32> to vector<8x32xf32>
    %552 = arith.addf %549, %551 : vector<8x32xf32>
    %c35 = arith.constant 35 : index
    %c0_253 = arith.constant 0 : index
    %553 = vector.load %arg9[%c35, %c0_253] : memref<67x32xf32, #tpu.memory_space<vmem>>, vector<1x32xf32>
    %c36 = arith.constant 36 : index
    %c0_254 = arith.constant 0 : index
    %554 = vector.load %arg9[%c36, %c0_254] : memref<67x32xf32, #tpu.memory_space<vmem>>, vector<1x32xf32>
    %cst_255 = arith.constant dense<0.000000e+00> : vector<8xf32>
    %555 = vector.multi_reduction <add>, %552, %cst_255 [1] : vector<8x32xf32> to vector<8xf32>
    %556 = vector.shape_cast %555 : vector<8xf32> to vector<8x1xf32>
    %cst_256 = arith.constant 3.200000e+01 : f32
    %557 = vector.broadcast %cst_256 : f32 to vector<8x1xf32>
    %558 = arith.divf %556, %557 : vector<8x1xf32>
    %559 = vector.broadcast %558 : vector<8x1xf32> to vector<8x32xf32>
    %560 = arith.subf %552, %559 : vector<8x32xf32>
    %561 = arith.mulf %560, %560 : vector<8x32xf32>
    %cst_257 = arith.constant dense<0.000000e+00> : vector<8xf32>
    %562 = vector.multi_reduction <add>, %561, %cst_257 [1] : vector<8x32xf32> to vector<8xf32>
    %563 = vector.shape_cast %562 : vector<8xf32> to vector<8x1xf32>
    %cst_258 = arith.constant 3.200000e+01 : f32
    %564 = vector.broadcast %cst_258 : f32 to vector<8x1xf32>
    %565 = arith.divf %563, %564 : vector<8x1xf32>
    %566 = vector.broadcast %558 : vector<8x1xf32> to vector<8x32xf32>
    %567 = arith.subf %552, %566 : vector<8x32xf32>
    %cst_259 = arith.constant 9.99999974E-6 : f32
    %568 = vector.broadcast %cst_259 : f32 to vector<8x1xf32>
    %569 = arith.addf %565, %568 : vector<8x1xf32>
    %570 = math.rsqrt %569 : vector<8x1xf32>
    %571 = vector.broadcast %570 : vector<8x1xf32> to vector<8x32xf32>
    %572 = arith.mulf %567, %571 : vector<8x32xf32>
    %573 = vector.broadcast %553 : vector<1x32xf32> to vector<8x32xf32>
    %574 = arith.mulf %572, %573 : vector<8x32xf32>
    %575 = vector.broadcast %554 : vector<1x32xf32> to vector<8x32xf32>
    %576 = arith.addf %574, %575 : vector<8x32xf32>
    %577 = arith.negf %576 : vector<8x32xf32>
    %578 = math.exp %577 : vector<8x32xf32>
    %cst_260 = arith.constant 1.000000e+00 : f32
    %579 = vector.broadcast %cst_260 : f32 to vector<8x32xf32>
    %580 = arith.addf %579, %578 : vector<8x32xf32>
    %581 = arith.divf %579, %580 : vector<8x32xf32>
    %582 = arith.mulf %576, %581 : vector<8x32xf32>
    %c26_261 = arith.constant 26 : index
    %c0_262 = arith.constant 0 : index
    %c0_263 = arith.constant 0 : index
    %583 = vector.load %arg8[%c26_261, %c0_262, %c0_263] : memref<45x32x32xf32, #tpu.memory_space<vmem>>, vector<1x32x32xf32>
    %584 = vector.shape_cast %583 : vector<1x32x32xf32> to vector<32x32xf32>
    %cst_264 = arith.constant dense<0.000000e+00> : vector<8x32xf32>
    %585 = tpu.matmul %582, %584, %cst_264 {dimension_numbers = #tpu.dot_dimension_numbers<[1], [0], [0], [1], [0, 0, 1, 1], [], []>} : vector<8x32xf32>, vector<32x32xf32>, vector<8x32xf32> -> vector<8x32xf32>
    %586 = arith.addf %475, %585 : vector<8x32xf32>
    %c37 = arith.constant 37 : index
    %c0_265 = arith.constant 0 : index
    %587 = vector.load %arg9[%c37, %c0_265] : memref<67x32xf32, #tpu.memory_space<vmem>>, vector<1x32xf32>
    %588 = vector.broadcast %587 : vector<1x32xf32> to vector<8x32xf32>
    %589 = arith.addf %586, %588 : vector<8x32xf32>
    %cst_266 = arith.constant dense<0.000000e+00> : vector<56x32xf32>
    %590 = tpu.matmul %0, %589, %cst_266 {dimension_numbers = #tpu.dot_dimension_numbers<[1], [0], [0], [1], [0, 0, 1, 1], [], []>} : vector<56x8xf32>, vector<8x32xf32>, vector<56x32xf32> -> vector<56x32xf32>
    %cst_267 = arith.constant dense<0.000000e+00> : vector<56x32xf32>
    %591 = tpu.matmul %1, %589, %cst_267 {dimension_numbers = #tpu.dot_dimension_numbers<[1], [0], [0], [1], [0, 0, 1, 1], [], []>} : vector<56x8xf32>, vector<8x32xf32>, vector<56x32xf32> -> vector<56x32xf32>
    %c27_268 = arith.constant 27 : index
    %c0_269 = arith.constant 0 : index
    %c0_270 = arith.constant 0 : index
    %592 = vector.load %arg8[%c27_268, %c0_269, %c0_270] : memref<45x32x32xf32, #tpu.memory_space<vmem>>, vector<1x32x32xf32>
    %593 = vector.shape_cast %592 : vector<1x32x32xf32> to vector<32x32xf32>
    %cst_271 = arith.constant dense<0.000000e+00> : vector<56x32xf32>
    %594 = tpu.matmul %590, %593, %cst_271 {dimension_numbers = #tpu.dot_dimension_numbers<[1], [0], [0], [1], [0, 0, 1, 1], [], []>} : vector<56x32xf32>, vector<32x32xf32>, vector<56x32xf32> -> vector<56x32xf32>
    %c28_272 = arith.constant 28 : index
    %c0_273 = arith.constant 0 : index
    %c0_274 = arith.constant 0 : index
    %595 = vector.load %arg8[%c28_272, %c0_273, %c0_274] : memref<45x32x32xf32, #tpu.memory_space<vmem>>, vector<1x32x32xf32>
    %596 = vector.shape_cast %595 : vector<1x32x32xf32> to vector<32x32xf32>
    %cst_275 = arith.constant dense<0.000000e+00> : vector<56x32xf32>
    %597 = tpu.matmul %591, %596, %cst_275 {dimension_numbers = #tpu.dot_dimension_numbers<[1], [0], [0], [1], [0, 0, 1, 1], [], []>} : vector<56x32xf32>, vector<32x32xf32>, vector<56x32xf32> -> vector<56x32xf32>
    %598 = arith.addf %594, %597 : vector<56x32xf32>
    %c5_276 = arith.constant 5 : index
    %c0_277 = arith.constant 0 : index
    %c0_278 = arith.constant 0 : index
    %599 = vector.load %arg10[%c5_276, %c0_277, %c0_278] : memref<9x2x32xf32, #tpu.memory_space<vmem>>, vector<1x2x32xf32>
    %600 = vector.shape_cast %599 : vector<1x2x32xf32> to vector<2x32xf32>
    %601 = vector.extract_strided_slice %600 {offsets = [0, 0], sizes = [1, 32], strides = [1, 1]} : vector<2x32xf32> to vector<1x32xf32>
    %602 = vector.broadcast %354 : vector<56x1xf32> to vector<56x32xf32>
    %603 = vector.broadcast %601 : vector<1x32xf32> to vector<56x32xf32>
    %604 = arith.mulf %602, %603 : vector<56x32xf32>
    %605 = vector.extract_strided_slice %600 {offsets = [1, 0], sizes = [1, 32], strides = [1, 1]} : vector<2x32xf32> to vector<1x32xf32>
    %606 = vector.broadcast %8 : vector<56x1xf32> to vector<56x32xf32>
    %607 = vector.broadcast %605 : vector<1x32xf32> to vector<56x32xf32>
    %608 = arith.mulf %606, %607 : vector<56x32xf32>
    %609 = arith.addf %604, %608 : vector<56x32xf32>
    %610 = arith.addf %598, %609 : vector<56x32xf32>
    %c38 = arith.constant 38 : index
    %c0_279 = arith.constant 0 : index
    %611 = vector.load %arg9[%c38, %c0_279] : memref<67x32xf32, #tpu.memory_space<vmem>>, vector<1x32xf32>
    %612 = vector.broadcast %611 : vector<1x32xf32> to vector<56x32xf32>
    %613 = arith.addf %610, %612 : vector<56x32xf32>
    %c39 = arith.constant 39 : index
    %c0_280 = arith.constant 0 : index
    %614 = vector.load %arg9[%c39, %c0_280] : memref<67x32xf32, #tpu.memory_space<vmem>>, vector<1x32xf32>
    %c40 = arith.constant 40 : index
    %c0_281 = arith.constant 0 : index
    %615 = vector.load %arg9[%c40, %c0_281] : memref<67x32xf32, #tpu.memory_space<vmem>>, vector<1x32xf32>
    %cst_282 = arith.constant dense<0.000000e+00> : vector<56xf32>
    %616 = vector.multi_reduction <add>, %613, %cst_282 [1] : vector<56x32xf32> to vector<56xf32>
    %617 = vector.shape_cast %616 : vector<56xf32> to vector<56x1xf32>
    %cst_283 = arith.constant 3.200000e+01 : f32
    %618 = vector.broadcast %cst_283 : f32 to vector<56x1xf32>
    %619 = arith.divf %617, %618 : vector<56x1xf32>
    %620 = vector.broadcast %619 : vector<56x1xf32> to vector<56x32xf32>
    %621 = arith.subf %613, %620 : vector<56x32xf32>
    %622 = arith.mulf %621, %621 : vector<56x32xf32>
    %cst_284 = arith.constant dense<0.000000e+00> : vector<56xf32>
    %623 = vector.multi_reduction <add>, %622, %cst_284 [1] : vector<56x32xf32> to vector<56xf32>
    %624 = vector.shape_cast %623 : vector<56xf32> to vector<56x1xf32>
    %cst_285 = arith.constant 3.200000e+01 : f32
    %625 = vector.broadcast %cst_285 : f32 to vector<56x1xf32>
    %626 = arith.divf %624, %625 : vector<56x1xf32>
    %627 = vector.broadcast %619 : vector<56x1xf32> to vector<56x32xf32>
    %628 = arith.subf %613, %627 : vector<56x32xf32>
    %cst_286 = arith.constant 9.99999974E-6 : f32
    %629 = vector.broadcast %cst_286 : f32 to vector<56x1xf32>
    %630 = arith.addf %626, %629 : vector<56x1xf32>
    %631 = math.rsqrt %630 : vector<56x1xf32>
    %632 = vector.broadcast %631 : vector<56x1xf32> to vector<56x32xf32>
    %633 = arith.mulf %628, %632 : vector<56x32xf32>
    %634 = vector.broadcast %614 : vector<1x32xf32> to vector<56x32xf32>
    %635 = arith.mulf %633, %634 : vector<56x32xf32>
    %636 = vector.broadcast %615 : vector<1x32xf32> to vector<56x32xf32>
    %637 = arith.addf %635, %636 : vector<56x32xf32>
    %638 = arith.negf %637 : vector<56x32xf32>
    %639 = math.exp %638 : vector<56x32xf32>
    %cst_287 = arith.constant 1.000000e+00 : f32
    %640 = vector.broadcast %cst_287 : f32 to vector<56x32xf32>
    %641 = arith.addf %640, %639 : vector<56x32xf32>
    %642 = arith.divf %640, %641 : vector<56x32xf32>
    %643 = arith.mulf %637, %642 : vector<56x32xf32>
    %c29_288 = arith.constant 29 : index
    %c0_289 = arith.constant 0 : index
    %c0_290 = arith.constant 0 : index
    %644 = vector.load %arg8[%c29_288, %c0_289, %c0_290] : memref<45x32x32xf32, #tpu.memory_space<vmem>>, vector<1x32x32xf32>
    %645 = vector.shape_cast %644 : vector<1x32x32xf32> to vector<32x32xf32>
    %cst_291 = arith.constant dense<0.000000e+00> : vector<56x32xf32>
    %646 = tpu.matmul %643, %645, %cst_291 {dimension_numbers = #tpu.dot_dimension_numbers<[1], [0], [0], [1], [0, 0, 1, 1], [], []>} : vector<56x32xf32>, vector<32x32xf32>, vector<56x32xf32> -> vector<56x32xf32>
    %c41 = arith.constant 41 : index
    %c0_292 = arith.constant 0 : index
    %647 = vector.load %arg9[%c41, %c0_292] : memref<67x32xf32, #tpu.memory_space<vmem>>, vector<1x32xf32>
    %648 = vector.broadcast %647 : vector<1x32xf32> to vector<56x32xf32>
    %649 = arith.addf %646, %648 : vector<56x32xf32>
    %c42 = arith.constant 42 : index
    %c0_293 = arith.constant 0 : index
    %650 = vector.load %arg9[%c42, %c0_293] : memref<67x32xf32, #tpu.memory_space<vmem>>, vector<1x32xf32>
    %c43 = arith.constant 43 : index
    %c0_294 = arith.constant 0 : index
    %651 = vector.load %arg9[%c43, %c0_294] : memref<67x32xf32, #tpu.memory_space<vmem>>, vector<1x32xf32>
    %cst_295 = arith.constant dense<0.000000e+00> : vector<56xf32>
    %652 = vector.multi_reduction <add>, %649, %cst_295 [1] : vector<56x32xf32> to vector<56xf32>
    %653 = vector.shape_cast %652 : vector<56xf32> to vector<56x1xf32>
    %cst_296 = arith.constant 3.200000e+01 : f32
    %654 = vector.broadcast %cst_296 : f32 to vector<56x1xf32>
    %655 = arith.divf %653, %654 : vector<56x1xf32>
    %656 = vector.broadcast %655 : vector<56x1xf32> to vector<56x32xf32>
    %657 = arith.subf %649, %656 : vector<56x32xf32>
    %658 = arith.mulf %657, %657 : vector<56x32xf32>
    %cst_297 = arith.constant dense<0.000000e+00> : vector<56xf32>
    %659 = vector.multi_reduction <add>, %658, %cst_297 [1] : vector<56x32xf32> to vector<56xf32>
    %660 = vector.shape_cast %659 : vector<56xf32> to vector<56x1xf32>
    %cst_298 = arith.constant 3.200000e+01 : f32
    %661 = vector.broadcast %cst_298 : f32 to vector<56x1xf32>
    %662 = arith.divf %660, %661 : vector<56x1xf32>
    %663 = vector.broadcast %655 : vector<56x1xf32> to vector<56x32xf32>
    %664 = arith.subf %649, %663 : vector<56x32xf32>
    %cst_299 = arith.constant 9.99999974E-6 : f32
    %665 = vector.broadcast %cst_299 : f32 to vector<56x1xf32>
    %666 = arith.addf %662, %665 : vector<56x1xf32>
    %667 = math.rsqrt %666 : vector<56x1xf32>
    %668 = vector.broadcast %667 : vector<56x1xf32> to vector<56x32xf32>
    %669 = arith.mulf %664, %668 : vector<56x32xf32>
    %670 = vector.broadcast %650 : vector<1x32xf32> to vector<56x32xf32>
    %671 = arith.mulf %669, %670 : vector<56x32xf32>
    %672 = vector.broadcast %651 : vector<1x32xf32> to vector<56x32xf32>
    %673 = arith.addf %671, %672 : vector<56x32xf32>
    %674 = arith.negf %673 : vector<56x32xf32>
    %675 = math.exp %674 : vector<56x32xf32>
    %cst_300 = arith.constant 1.000000e+00 : f32
    %676 = vector.broadcast %cst_300 : f32 to vector<56x32xf32>
    %677 = arith.addf %676, %675 : vector<56x32xf32>
    %678 = arith.divf %676, %677 : vector<56x32xf32>
    %679 = arith.mulf %673, %678 : vector<56x32xf32>
    %c0_301 = arith.constant 0 : index
    %c0_302 = arith.constant 0 : index
    %680 = vector.load %arg11[%c0_301, %c0_302] : memref<32x3xf32, #tpu.memory_space<vmem>>, vector<32x3xf32>
    %681 = vector.extract_strided_slice %680 {offsets = [0, 1], sizes = [32, 1], strides = [1, 1]} : vector<32x3xf32> to vector<32x1xf32>
    %cst_303 = arith.constant dense<0.000000e+00> : vector<56x1xf32>
    %682 = tpu.matmul %679, %681, %cst_303 {dimension_numbers = #tpu.dot_dimension_numbers<[1], [0], [0], [1], [0, 0, 1, 1], [], []>} : vector<56x32xf32>, vector<32x1xf32>, vector<56x1xf32> -> vector<56x1xf32>
    %683 = vector.broadcast %682 : vector<56x1xf32> to vector<56x3xf32>
    %684 = arith.mulf %361, %683 : vector<56x3xf32>
    %cst_304 = arith.constant dense<0.000000e+00> : vector<8x3xf32>
    %685 = tpu.matmul %2, %684, %cst_304 {dimension_numbers = #tpu.dot_dimension_numbers<[1], [0], [0], [1], [0, 0, 1, 1], [], []>} : vector<8x56xf32>, vector<56x3xf32>, vector<8x3xf32> -> vector<8x3xf32>
    %686 = arith.addf %350, %685 : vector<8x3xf32>
    %cst_305 = arith.constant dense<0.000000e+00> : vector<56x3xf32>
    %687 = tpu.matmul %3, %686, %cst_305 {dimension_numbers = #tpu.dot_dimension_numbers<[1], [0], [0], [1], [0, 0, 1, 1], [], []>} : vector<56x8xf32>, vector<8x3xf32>, vector<56x3xf32> -> vector<56x3xf32>
    %688 = arith.mulf %687, %687 : vector<56x3xf32>
    %cst_306 = arith.constant dense<0.000000e+00> : vector<56xf32>
    %689 = vector.multi_reduction <add>, %688, %cst_306 [1] : vector<56x3xf32> to vector<56xf32>
    %690 = vector.shape_cast %689 : vector<56xf32> to vector<56x1xf32>
    %cst_307 = arith.constant 9.99999993E-9 : f32
    %691 = vector.broadcast %cst_307 : f32 to vector<56x1xf32>
    %692 = arith.addf %690, %691 : vector<56x1xf32>
    %693 = math.sqrt %692 : vector<56x1xf32>
    %cst_308 = arith.constant 1.000000e+00 : f32
    %694 = vector.broadcast %cst_308 : f32 to vector<56x1xf32>
    %695 = arith.addf %693, %694 : vector<56x1xf32>
    %696 = vector.broadcast %695 : vector<56x1xf32> to vector<56x3xf32>
    %697 = arith.divf %687, %696 : vector<56x3xf32>
    %cst_309 = arith.constant dense<0.000000e+00> : vector<56x32xf32>
    %698 = tpu.matmul %0, %589, %cst_309 {dimension_numbers = #tpu.dot_dimension_numbers<[1], [0], [0], [1], [0, 0, 1, 1], [], []>} : vector<56x8xf32>, vector<8x32xf32>, vector<56x32xf32> -> vector<56x32xf32>
    %cst_310 = arith.constant dense<0.000000e+00> : vector<56x32xf32>
    %699 = tpu.matmul %1, %589, %cst_310 {dimension_numbers = #tpu.dot_dimension_numbers<[1], [0], [0], [1], [0, 0, 1, 1], [], []>} : vector<56x8xf32>, vector<8x32xf32>, vector<56x32xf32> -> vector<56x32xf32>
    %c30_311 = arith.constant 30 : index
    %c0_312 = arith.constant 0 : index
    %c0_313 = arith.constant 0 : index
    %700 = vector.load %arg8[%c30_311, %c0_312, %c0_313] : memref<45x32x32xf32, #tpu.memory_space<vmem>>, vector<1x32x32xf32>
    %701 = vector.shape_cast %700 : vector<1x32x32xf32> to vector<32x32xf32>
    %cst_314 = arith.constant dense<0.000000e+00> : vector<56x32xf32>
    %702 = tpu.matmul %698, %701, %cst_314 {dimension_numbers = #tpu.dot_dimension_numbers<[1], [0], [0], [1], [0, 0, 1, 1], [], []>} : vector<56x32xf32>, vector<32x32xf32>, vector<56x32xf32> -> vector<56x32xf32>
    %c31_315 = arith.constant 31 : index
    %c0_316 = arith.constant 0 : index
    %c0_317 = arith.constant 0 : index
    %703 = vector.load %arg8[%c31_315, %c0_316, %c0_317] : memref<45x32x32xf32, #tpu.memory_space<vmem>>, vector<1x32x32xf32>
    %704 = vector.shape_cast %703 : vector<1x32x32xf32> to vector<32x32xf32>
    %cst_318 = arith.constant dense<0.000000e+00> : vector<56x32xf32>
    %705 = tpu.matmul %699, %704, %cst_318 {dimension_numbers = #tpu.dot_dimension_numbers<[1], [0], [0], [1], [0, 0, 1, 1], [], []>} : vector<56x32xf32>, vector<32x32xf32>, vector<56x32xf32> -> vector<56x32xf32>
    %706 = arith.addf %702, %705 : vector<56x32xf32>
    %c6_319 = arith.constant 6 : index
    %c0_320 = arith.constant 0 : index
    %c0_321 = arith.constant 0 : index
    %707 = vector.load %arg10[%c6_319, %c0_320, %c0_321] : memref<9x2x32xf32, #tpu.memory_space<vmem>>, vector<1x2x32xf32>
    %708 = vector.shape_cast %707 : vector<1x2x32xf32> to vector<2x32xf32>
    %709 = vector.extract_strided_slice %708 {offsets = [0, 0], sizes = [1, 32], strides = [1, 1]} : vector<2x32xf32> to vector<1x32xf32>
    %710 = vector.broadcast %690 : vector<56x1xf32> to vector<56x32xf32>
    %711 = vector.broadcast %709 : vector<1x32xf32> to vector<56x32xf32>
    %712 = arith.mulf %710, %711 : vector<56x32xf32>
    %713 = vector.extract_strided_slice %708 {offsets = [1, 0], sizes = [1, 32], strides = [1, 1]} : vector<2x32xf32> to vector<1x32xf32>
    %714 = vector.broadcast %8 : vector<56x1xf32> to vector<56x32xf32>
    %715 = vector.broadcast %713 : vector<1x32xf32> to vector<56x32xf32>
    %716 = arith.mulf %714, %715 : vector<56x32xf32>
    %717 = arith.addf %712, %716 : vector<56x32xf32>
    %718 = arith.addf %706, %717 : vector<56x32xf32>
    %c44 = arith.constant 44 : index
    %c0_322 = arith.constant 0 : index
    %719 = vector.load %arg9[%c44, %c0_322] : memref<67x32xf32, #tpu.memory_space<vmem>>, vector<1x32xf32>
    %720 = vector.broadcast %719 : vector<1x32xf32> to vector<56x32xf32>
    %721 = arith.addf %718, %720 : vector<56x32xf32>
    %c45 = arith.constant 45 : index
    %c0_323 = arith.constant 0 : index
    %722 = vector.load %arg9[%c45, %c0_323] : memref<67x32xf32, #tpu.memory_space<vmem>>, vector<1x32xf32>
    %c46 = arith.constant 46 : index
    %c0_324 = arith.constant 0 : index
    %723 = vector.load %arg9[%c46, %c0_324] : memref<67x32xf32, #tpu.memory_space<vmem>>, vector<1x32xf32>
    %cst_325 = arith.constant dense<0.000000e+00> : vector<56xf32>
    %724 = vector.multi_reduction <add>, %721, %cst_325 [1] : vector<56x32xf32> to vector<56xf32>
    %725 = vector.shape_cast %724 : vector<56xf32> to vector<56x1xf32>
    %cst_326 = arith.constant 3.200000e+01 : f32
    %726 = vector.broadcast %cst_326 : f32 to vector<56x1xf32>
    %727 = arith.divf %725, %726 : vector<56x1xf32>
    %728 = vector.broadcast %727 : vector<56x1xf32> to vector<56x32xf32>
    %729 = arith.subf %721, %728 : vector<56x32xf32>
    %730 = arith.mulf %729, %729 : vector<56x32xf32>
    %cst_327 = arith.constant dense<0.000000e+00> : vector<56xf32>
    %731 = vector.multi_reduction <add>, %730, %cst_327 [1] : vector<56x32xf32> to vector<56xf32>
    %732 = vector.shape_cast %731 : vector<56xf32> to vector<56x1xf32>
    %cst_328 = arith.constant 3.200000e+01 : f32
    %733 = vector.broadcast %cst_328 : f32 to vector<56x1xf32>
    %734 = arith.divf %732, %733 : vector<56x1xf32>
    %735 = vector.broadcast %727 : vector<56x1xf32> to vector<56x32xf32>
    %736 = arith.subf %721, %735 : vector<56x32xf32>
    %cst_329 = arith.constant 9.99999974E-6 : f32
    %737 = vector.broadcast %cst_329 : f32 to vector<56x1xf32>
    %738 = arith.addf %734, %737 : vector<56x1xf32>
    %739 = math.rsqrt %738 : vector<56x1xf32>
    %740 = vector.broadcast %739 : vector<56x1xf32> to vector<56x32xf32>
    %741 = arith.mulf %736, %740 : vector<56x32xf32>
    %742 = vector.broadcast %722 : vector<1x32xf32> to vector<56x32xf32>
    %743 = arith.mulf %741, %742 : vector<56x32xf32>
    %744 = vector.broadcast %723 : vector<1x32xf32> to vector<56x32xf32>
    %745 = arith.addf %743, %744 : vector<56x32xf32>
    %746 = arith.negf %745 : vector<56x32xf32>
    %747 = math.exp %746 : vector<56x32xf32>
    %cst_330 = arith.constant 1.000000e+00 : f32
    %748 = vector.broadcast %cst_330 : f32 to vector<56x32xf32>
    %749 = arith.addf %748, %747 : vector<56x32xf32>
    %750 = arith.divf %748, %749 : vector<56x32xf32>
    %751 = arith.mulf %745, %750 : vector<56x32xf32>
    %c32_331 = arith.constant 32 : index
    %c0_332 = arith.constant 0 : index
    %c0_333 = arith.constant 0 : index
    %752 = vector.load %arg8[%c32_331, %c0_332, %c0_333] : memref<45x32x32xf32, #tpu.memory_space<vmem>>, vector<1x32x32xf32>
    %753 = vector.shape_cast %752 : vector<1x32x32xf32> to vector<32x32xf32>
    %cst_334 = arith.constant dense<0.000000e+00> : vector<56x32xf32>
    %754 = tpu.matmul %751, %753, %cst_334 {dimension_numbers = #tpu.dot_dimension_numbers<[1], [0], [0], [1], [0, 0, 1, 1], [], []>} : vector<56x32xf32>, vector<32x32xf32>, vector<56x32xf32> -> vector<56x32xf32>
    %c47 = arith.constant 47 : index
    %c0_335 = arith.constant 0 : index
    %755 = vector.load %arg9[%c47, %c0_335] : memref<67x32xf32, #tpu.memory_space<vmem>>, vector<1x32xf32>
    %756 = vector.broadcast %755 : vector<1x32xf32> to vector<56x32xf32>
    %757 = arith.addf %754, %756 : vector<56x32xf32>
    %758 = arith.negf %757 : vector<56x32xf32>
    %759 = math.exp %758 : vector<56x32xf32>
    %cst_336 = arith.constant 1.000000e+00 : f32
    %760 = vector.broadcast %cst_336 : f32 to vector<56x32xf32>
    %761 = arith.addf %760, %759 : vector<56x32xf32>
    %762 = arith.divf %760, %761 : vector<56x32xf32>
    %763 = arith.mulf %757, %762 : vector<56x32xf32>
    %cst_337 = arith.constant dense<0.000000e+00> : vector<8x32xf32>
    %764 = tpu.matmul %2, %763, %cst_337 {dimension_numbers = #tpu.dot_dimension_numbers<[1], [0], [0], [1], [0, 0, 1, 1], [], []>} : vector<8x56xf32>, vector<56x32xf32>, vector<8x32xf32> -> vector<8x32xf32>
    %c33_338 = arith.constant 33 : index
    %c0_339 = arith.constant 0 : index
    %c0_340 = arith.constant 0 : index
    %765 = vector.load %arg8[%c33_338, %c0_339, %c0_340] : memref<45x32x32xf32, #tpu.memory_space<vmem>>, vector<1x32x32xf32>
    %766 = vector.shape_cast %765 : vector<1x32x32xf32> to vector<32x32xf32>
    %cst_341 = arith.constant dense<0.000000e+00> : vector<8x32xf32>
    %767 = tpu.matmul %589, %766, %cst_341 {dimension_numbers = #tpu.dot_dimension_numbers<[1], [0], [0], [1], [0, 0, 1, 1], [], []>} : vector<8x32xf32>, vector<32x32xf32>, vector<8x32xf32> -> vector<8x32xf32>
    %c34_342 = arith.constant 34 : index
    %c0_343 = arith.constant 0 : index
    %c0_344 = arith.constant 0 : index
    %768 = vector.load %arg8[%c34_342, %c0_343, %c0_344] : memref<45x32x32xf32, #tpu.memory_space<vmem>>, vector<1x32x32xf32>
    %769 = vector.shape_cast %768 : vector<1x32x32xf32> to vector<32x32xf32>
    %cst_345 = arith.constant dense<0.000000e+00> : vector<8x32xf32>
    %770 = tpu.matmul %764, %769, %cst_345 {dimension_numbers = #tpu.dot_dimension_numbers<[1], [0], [0], [1], [0, 0, 1, 1], [], []>} : vector<8x32xf32>, vector<32x32xf32>, vector<8x32xf32> -> vector<8x32xf32>
    %771 = arith.addf %767, %770 : vector<8x32xf32>
    %c48 = arith.constant 48 : index
    %c0_346 = arith.constant 0 : index
    %772 = vector.load %arg9[%c48, %c0_346] : memref<67x32xf32, #tpu.memory_space<vmem>>, vector<1x32xf32>
    %773 = vector.broadcast %772 : vector<1x32xf32> to vector<8x32xf32>
    %774 = arith.addf %771, %773 : vector<8x32xf32>
    %c49 = arith.constant 49 : index
    %c0_347 = arith.constant 0 : index
    %775 = vector.load %arg9[%c49, %c0_347] : memref<67x32xf32, #tpu.memory_space<vmem>>, vector<1x32xf32>
    %c50 = arith.constant 50 : index
    %c0_348 = arith.constant 0 : index
    %776 = vector.load %arg9[%c50, %c0_348] : memref<67x32xf32, #tpu.memory_space<vmem>>, vector<1x32xf32>
    %cst_349 = arith.constant dense<0.000000e+00> : vector<8xf32>
    %777 = vector.multi_reduction <add>, %774, %cst_349 [1] : vector<8x32xf32> to vector<8xf32>
    %778 = vector.shape_cast %777 : vector<8xf32> to vector<8x1xf32>
    %cst_350 = arith.constant 3.200000e+01 : f32
    %779 = vector.broadcast %cst_350 : f32 to vector<8x1xf32>
    %780 = arith.divf %778, %779 : vector<8x1xf32>
    %781 = vector.broadcast %780 : vector<8x1xf32> to vector<8x32xf32>
    %782 = arith.subf %774, %781 : vector<8x32xf32>
    %783 = arith.mulf %782, %782 : vector<8x32xf32>
    %cst_351 = arith.constant dense<0.000000e+00> : vector<8xf32>
    %784 = vector.multi_reduction <add>, %783, %cst_351 [1] : vector<8x32xf32> to vector<8xf32>
    %785 = vector.shape_cast %784 : vector<8xf32> to vector<8x1xf32>
    %cst_352 = arith.constant 3.200000e+01 : f32
    %786 = vector.broadcast %cst_352 : f32 to vector<8x1xf32>
    %787 = arith.divf %785, %786 : vector<8x1xf32>
    %788 = vector.broadcast %780 : vector<8x1xf32> to vector<8x32xf32>
    %789 = arith.subf %774, %788 : vector<8x32xf32>
    %cst_353 = arith.constant 9.99999974E-6 : f32
    %790 = vector.broadcast %cst_353 : f32 to vector<8x1xf32>
    %791 = arith.addf %787, %790 : vector<8x1xf32>
    %792 = math.rsqrt %791 : vector<8x1xf32>
    %793 = vector.broadcast %792 : vector<8x1xf32> to vector<8x32xf32>
    %794 = arith.mulf %789, %793 : vector<8x32xf32>
    %795 = vector.broadcast %775 : vector<1x32xf32> to vector<8x32xf32>
    %796 = arith.mulf %794, %795 : vector<8x32xf32>
    %797 = vector.broadcast %776 : vector<1x32xf32> to vector<8x32xf32>
    %798 = arith.addf %796, %797 : vector<8x32xf32>
    %799 = arith.negf %798 : vector<8x32xf32>
    %800 = math.exp %799 : vector<8x32xf32>
    %cst_354 = arith.constant 1.000000e+00 : f32
    %801 = vector.broadcast %cst_354 : f32 to vector<8x32xf32>
    %802 = arith.addf %801, %800 : vector<8x32xf32>
    %803 = arith.divf %801, %802 : vector<8x32xf32>
    %804 = arith.mulf %798, %803 : vector<8x32xf32>
    %c35_355 = arith.constant 35 : index
    %c0_356 = arith.constant 0 : index
    %c0_357 = arith.constant 0 : index
    %805 = vector.load %arg8[%c35_355, %c0_356, %c0_357] : memref<45x32x32xf32, #tpu.memory_space<vmem>>, vector<1x32x32xf32>
    %806 = vector.shape_cast %805 : vector<1x32x32xf32> to vector<32x32xf32>
    %cst_358 = arith.constant dense<0.000000e+00> : vector<8x32xf32>
    %807 = tpu.matmul %804, %806, %cst_358 {dimension_numbers = #tpu.dot_dimension_numbers<[1], [0], [0], [1], [0, 0, 1, 1], [], []>} : vector<8x32xf32>, vector<32x32xf32>, vector<8x32xf32> -> vector<8x32xf32>
    %808 = arith.addf %589, %807 : vector<8x32xf32>
    %c51 = arith.constant 51 : index
    %c0_359 = arith.constant 0 : index
    %809 = vector.load %arg9[%c51, %c0_359] : memref<67x32xf32, #tpu.memory_space<vmem>>, vector<1x32xf32>
    %810 = vector.broadcast %809 : vector<1x32xf32> to vector<8x32xf32>
    %811 = arith.addf %808, %810 : vector<8x32xf32>
    %cst_360 = arith.constant dense<0.000000e+00> : vector<56x32xf32>
    %812 = tpu.matmul %0, %811, %cst_360 {dimension_numbers = #tpu.dot_dimension_numbers<[1], [0], [0], [1], [0, 0, 1, 1], [], []>} : vector<56x8xf32>, vector<8x32xf32>, vector<56x32xf32> -> vector<56x32xf32>
    %cst_361 = arith.constant dense<0.000000e+00> : vector<56x32xf32>
    %813 = tpu.matmul %1, %811, %cst_361 {dimension_numbers = #tpu.dot_dimension_numbers<[1], [0], [0], [1], [0, 0, 1, 1], [], []>} : vector<56x8xf32>, vector<8x32xf32>, vector<56x32xf32> -> vector<56x32xf32>
    %c36_362 = arith.constant 36 : index
    %c0_363 = arith.constant 0 : index
    %c0_364 = arith.constant 0 : index
    %814 = vector.load %arg8[%c36_362, %c0_363, %c0_364] : memref<45x32x32xf32, #tpu.memory_space<vmem>>, vector<1x32x32xf32>
    %815 = vector.shape_cast %814 : vector<1x32x32xf32> to vector<32x32xf32>
    %cst_365 = arith.constant dense<0.000000e+00> : vector<56x32xf32>
    %816 = tpu.matmul %812, %815, %cst_365 {dimension_numbers = #tpu.dot_dimension_numbers<[1], [0], [0], [1], [0, 0, 1, 1], [], []>} : vector<56x32xf32>, vector<32x32xf32>, vector<56x32xf32> -> vector<56x32xf32>
    %c37_366 = arith.constant 37 : index
    %c0_367 = arith.constant 0 : index
    %c0_368 = arith.constant 0 : index
    %817 = vector.load %arg8[%c37_366, %c0_367, %c0_368] : memref<45x32x32xf32, #tpu.memory_space<vmem>>, vector<1x32x32xf32>
    %818 = vector.shape_cast %817 : vector<1x32x32xf32> to vector<32x32xf32>
    %cst_369 = arith.constant dense<0.000000e+00> : vector<56x32xf32>
    %819 = tpu.matmul %813, %818, %cst_369 {dimension_numbers = #tpu.dot_dimension_numbers<[1], [0], [0], [1], [0, 0, 1, 1], [], []>} : vector<56x32xf32>, vector<32x32xf32>, vector<56x32xf32> -> vector<56x32xf32>
    %820 = arith.addf %816, %819 : vector<56x32xf32>
    %c7_370 = arith.constant 7 : index
    %c0_371 = arith.constant 0 : index
    %c0_372 = arith.constant 0 : index
    %821 = vector.load %arg10[%c7_370, %c0_371, %c0_372] : memref<9x2x32xf32, #tpu.memory_space<vmem>>, vector<1x2x32xf32>
    %822 = vector.shape_cast %821 : vector<1x2x32xf32> to vector<2x32xf32>
    %823 = vector.extract_strided_slice %822 {offsets = [0, 0], sizes = [1, 32], strides = [1, 1]} : vector<2x32xf32> to vector<1x32xf32>
    %824 = vector.broadcast %690 : vector<56x1xf32> to vector<56x32xf32>
    %825 = vector.broadcast %823 : vector<1x32xf32> to vector<56x32xf32>
    %826 = arith.mulf %824, %825 : vector<56x32xf32>
    %827 = vector.extract_strided_slice %822 {offsets = [1, 0], sizes = [1, 32], strides = [1, 1]} : vector<2x32xf32> to vector<1x32xf32>
    %828 = vector.broadcast %8 : vector<56x1xf32> to vector<56x32xf32>
    %829 = vector.broadcast %827 : vector<1x32xf32> to vector<56x32xf32>
    %830 = arith.mulf %828, %829 : vector<56x32xf32>
    %831 = arith.addf %826, %830 : vector<56x32xf32>
    %832 = arith.addf %820, %831 : vector<56x32xf32>
    %c52 = arith.constant 52 : index
    %c0_373 = arith.constant 0 : index
    %833 = vector.load %arg9[%c52, %c0_373] : memref<67x32xf32, #tpu.memory_space<vmem>>, vector<1x32xf32>
    %834 = vector.broadcast %833 : vector<1x32xf32> to vector<56x32xf32>
    %835 = arith.addf %832, %834 : vector<56x32xf32>
    %c53 = arith.constant 53 : index
    %c0_374 = arith.constant 0 : index
    %836 = vector.load %arg9[%c53, %c0_374] : memref<67x32xf32, #tpu.memory_space<vmem>>, vector<1x32xf32>
    %c54 = arith.constant 54 : index
    %c0_375 = arith.constant 0 : index
    %837 = vector.load %arg9[%c54, %c0_375] : memref<67x32xf32, #tpu.memory_space<vmem>>, vector<1x32xf32>
    %cst_376 = arith.constant dense<0.000000e+00> : vector<56xf32>
    %838 = vector.multi_reduction <add>, %835, %cst_376 [1] : vector<56x32xf32> to vector<56xf32>
    %839 = vector.shape_cast %838 : vector<56xf32> to vector<56x1xf32>
    %cst_377 = arith.constant 3.200000e+01 : f32
    %840 = vector.broadcast %cst_377 : f32 to vector<56x1xf32>
    %841 = arith.divf %839, %840 : vector<56x1xf32>
    %842 = vector.broadcast %841 : vector<56x1xf32> to vector<56x32xf32>
    %843 = arith.subf %835, %842 : vector<56x32xf32>
    %844 = arith.mulf %843, %843 : vector<56x32xf32>
    %cst_378 = arith.constant dense<0.000000e+00> : vector<56xf32>
    %845 = vector.multi_reduction <add>, %844, %cst_378 [1] : vector<56x32xf32> to vector<56xf32>
    %846 = vector.shape_cast %845 : vector<56xf32> to vector<56x1xf32>
    %cst_379 = arith.constant 3.200000e+01 : f32
    %847 = vector.broadcast %cst_379 : f32 to vector<56x1xf32>
    %848 = arith.divf %846, %847 : vector<56x1xf32>
    %849 = vector.broadcast %841 : vector<56x1xf32> to vector<56x32xf32>
    %850 = arith.subf %835, %849 : vector<56x32xf32>
    %cst_380 = arith.constant 9.99999974E-6 : f32
    %851 = vector.broadcast %cst_380 : f32 to vector<56x1xf32>
    %852 = arith.addf %848, %851 : vector<56x1xf32>
    %853 = math.rsqrt %852 : vector<56x1xf32>
    %854 = vector.broadcast %853 : vector<56x1xf32> to vector<56x32xf32>
    %855 = arith.mulf %850, %854 : vector<56x32xf32>
    %856 = vector.broadcast %836 : vector<1x32xf32> to vector<56x32xf32>
    %857 = arith.mulf %855, %856 : vector<56x32xf32>
    %858 = vector.broadcast %837 : vector<1x32xf32> to vector<56x32xf32>
    %859 = arith.addf %857, %858 : vector<56x32xf32>
    %860 = arith.negf %859 : vector<56x32xf32>
    %861 = math.exp %860 : vector<56x32xf32>
    %cst_381 = arith.constant 1.000000e+00 : f32
    %862 = vector.broadcast %cst_381 : f32 to vector<56x32xf32>
    %863 = arith.addf %862, %861 : vector<56x32xf32>
    %864 = arith.divf %862, %863 : vector<56x32xf32>
    %865 = arith.mulf %859, %864 : vector<56x32xf32>
    %c38_382 = arith.constant 38 : index
    %c0_383 = arith.constant 0 : index
    %c0_384 = arith.constant 0 : index
    %866 = vector.load %arg8[%c38_382, %c0_383, %c0_384] : memref<45x32x32xf32, #tpu.memory_space<vmem>>, vector<1x32x32xf32>
    %867 = vector.shape_cast %866 : vector<1x32x32xf32> to vector<32x32xf32>
    %cst_385 = arith.constant dense<0.000000e+00> : vector<56x32xf32>
    %868 = tpu.matmul %865, %867, %cst_385 {dimension_numbers = #tpu.dot_dimension_numbers<[1], [0], [0], [1], [0, 0, 1, 1], [], []>} : vector<56x32xf32>, vector<32x32xf32>, vector<56x32xf32> -> vector<56x32xf32>
    %c55 = arith.constant 55 : index
    %c0_386 = arith.constant 0 : index
    %869 = vector.load %arg9[%c55, %c0_386] : memref<67x32xf32, #tpu.memory_space<vmem>>, vector<1x32xf32>
    %870 = vector.broadcast %869 : vector<1x32xf32> to vector<56x32xf32>
    %871 = arith.addf %868, %870 : vector<56x32xf32>
    %872 = arith.negf %871 : vector<56x32xf32>
    %873 = math.exp %872 : vector<56x32xf32>
    %cst_387 = arith.constant 1.000000e+00 : f32
    %874 = vector.broadcast %cst_387 : f32 to vector<56x32xf32>
    %875 = arith.addf %874, %873 : vector<56x32xf32>
    %876 = arith.divf %874, %875 : vector<56x32xf32>
    %877 = arith.mulf %871, %876 : vector<56x32xf32>
    %cst_388 = arith.constant dense<0.000000e+00> : vector<8x32xf32>
    %878 = tpu.matmul %2, %877, %cst_388 {dimension_numbers = #tpu.dot_dimension_numbers<[1], [0], [0], [1], [0, 0, 1, 1], [], []>} : vector<8x56xf32>, vector<56x32xf32>, vector<8x32xf32> -> vector<8x32xf32>
    %c39_389 = arith.constant 39 : index
    %c0_390 = arith.constant 0 : index
    %c0_391 = arith.constant 0 : index
    %879 = vector.load %arg8[%c39_389, %c0_390, %c0_391] : memref<45x32x32xf32, #tpu.memory_space<vmem>>, vector<1x32x32xf32>
    %880 = vector.shape_cast %879 : vector<1x32x32xf32> to vector<32x32xf32>
    %cst_392 = arith.constant dense<0.000000e+00> : vector<8x32xf32>
    %881 = tpu.matmul %811, %880, %cst_392 {dimension_numbers = #tpu.dot_dimension_numbers<[1], [0], [0], [1], [0, 0, 1, 1], [], []>} : vector<8x32xf32>, vector<32x32xf32>, vector<8x32xf32> -> vector<8x32xf32>
    %c40_393 = arith.constant 40 : index
    %c0_394 = arith.constant 0 : index
    %c0_395 = arith.constant 0 : index
    %882 = vector.load %arg8[%c40_393, %c0_394, %c0_395] : memref<45x32x32xf32, #tpu.memory_space<vmem>>, vector<1x32x32xf32>
    %883 = vector.shape_cast %882 : vector<1x32x32xf32> to vector<32x32xf32>
    %cst_396 = arith.constant dense<0.000000e+00> : vector<8x32xf32>
    %884 = tpu.matmul %878, %883, %cst_396 {dimension_numbers = #tpu.dot_dimension_numbers<[1], [0], [0], [1], [0, 0, 1, 1], [], []>} : vector<8x32xf32>, vector<32x32xf32>, vector<8x32xf32> -> vector<8x32xf32>
    %885 = arith.addf %881, %884 : vector<8x32xf32>
    %c56 = arith.constant 56 : index
    %c0_397 = arith.constant 0 : index
    %886 = vector.load %arg9[%c56, %c0_397] : memref<67x32xf32, #tpu.memory_space<vmem>>, vector<1x32xf32>
    %887 = vector.broadcast %886 : vector<1x32xf32> to vector<8x32xf32>
    %888 = arith.addf %885, %887 : vector<8x32xf32>
    %c57 = arith.constant 57 : index
    %c0_398 = arith.constant 0 : index
    %889 = vector.load %arg9[%c57, %c0_398] : memref<67x32xf32, #tpu.memory_space<vmem>>, vector<1x32xf32>
    %c58 = arith.constant 58 : index
    %c0_399 = arith.constant 0 : index
    %890 = vector.load %arg9[%c58, %c0_399] : memref<67x32xf32, #tpu.memory_space<vmem>>, vector<1x32xf32>
    %cst_400 = arith.constant dense<0.000000e+00> : vector<8xf32>
    %891 = vector.multi_reduction <add>, %888, %cst_400 [1] : vector<8x32xf32> to vector<8xf32>
    %892 = vector.shape_cast %891 : vector<8xf32> to vector<8x1xf32>
    %cst_401 = arith.constant 3.200000e+01 : f32
    %893 = vector.broadcast %cst_401 : f32 to vector<8x1xf32>
    %894 = arith.divf %892, %893 : vector<8x1xf32>
    %895 = vector.broadcast %894 : vector<8x1xf32> to vector<8x32xf32>
    %896 = arith.subf %888, %895 : vector<8x32xf32>
    %897 = arith.mulf %896, %896 : vector<8x32xf32>
    %cst_402 = arith.constant dense<0.000000e+00> : vector<8xf32>
    %898 = vector.multi_reduction <add>, %897, %cst_402 [1] : vector<8x32xf32> to vector<8xf32>
    %899 = vector.shape_cast %898 : vector<8xf32> to vector<8x1xf32>
    %cst_403 = arith.constant 3.200000e+01 : f32
    %900 = vector.broadcast %cst_403 : f32 to vector<8x1xf32>
    %901 = arith.divf %899, %900 : vector<8x1xf32>
    %902 = vector.broadcast %894 : vector<8x1xf32> to vector<8x32xf32>
    %903 = arith.subf %888, %902 : vector<8x32xf32>
    %cst_404 = arith.constant 9.99999974E-6 : f32
    %904 = vector.broadcast %cst_404 : f32 to vector<8x1xf32>
    %905 = arith.addf %901, %904 : vector<8x1xf32>
    %906 = math.rsqrt %905 : vector<8x1xf32>
    %907 = vector.broadcast %906 : vector<8x1xf32> to vector<8x32xf32>
    %908 = arith.mulf %903, %907 : vector<8x32xf32>
    %909 = vector.broadcast %889 : vector<1x32xf32> to vector<8x32xf32>
    %910 = arith.mulf %908, %909 : vector<8x32xf32>
    %911 = vector.broadcast %890 : vector<1x32xf32> to vector<8x32xf32>
    %912 = arith.addf %910, %911 : vector<8x32xf32>
    %913 = arith.negf %912 : vector<8x32xf32>
    %914 = math.exp %913 : vector<8x32xf32>
    %cst_405 = arith.constant 1.000000e+00 : f32
    %915 = vector.broadcast %cst_405 : f32 to vector<8x32xf32>
    %916 = arith.addf %915, %914 : vector<8x32xf32>
    %917 = arith.divf %915, %916 : vector<8x32xf32>
    %918 = arith.mulf %912, %917 : vector<8x32xf32>
    %c41_406 = arith.constant 41 : index
    %c0_407 = arith.constant 0 : index
    %c0_408 = arith.constant 0 : index
    %919 = vector.load %arg8[%c41_406, %c0_407, %c0_408] : memref<45x32x32xf32, #tpu.memory_space<vmem>>, vector<1x32x32xf32>
    %920 = vector.shape_cast %919 : vector<1x32x32xf32> to vector<32x32xf32>
    %cst_409 = arith.constant dense<0.000000e+00> : vector<8x32xf32>
    %921 = tpu.matmul %918, %920, %cst_409 {dimension_numbers = #tpu.dot_dimension_numbers<[1], [0], [0], [1], [0, 0, 1, 1], [], []>} : vector<8x32xf32>, vector<32x32xf32>, vector<8x32xf32> -> vector<8x32xf32>
    %922 = arith.addf %811, %921 : vector<8x32xf32>
    %c59 = arith.constant 59 : index
    %c0_410 = arith.constant 0 : index
    %923 = vector.load %arg9[%c59, %c0_410] : memref<67x32xf32, #tpu.memory_space<vmem>>, vector<1x32xf32>
    %924 = vector.broadcast %923 : vector<1x32xf32> to vector<8x32xf32>
    %925 = arith.addf %922, %924 : vector<8x32xf32>
    %cst_411 = arith.constant dense<0.000000e+00> : vector<56x32xf32>
    %926 = tpu.matmul %0, %925, %cst_411 {dimension_numbers = #tpu.dot_dimension_numbers<[1], [0], [0], [1], [0, 0, 1, 1], [], []>} : vector<56x8xf32>, vector<8x32xf32>, vector<56x32xf32> -> vector<56x32xf32>
    %cst_412 = arith.constant dense<0.000000e+00> : vector<56x32xf32>
    %927 = tpu.matmul %1, %925, %cst_412 {dimension_numbers = #tpu.dot_dimension_numbers<[1], [0], [0], [1], [0, 0, 1, 1], [], []>} : vector<56x8xf32>, vector<8x32xf32>, vector<56x32xf32> -> vector<56x32xf32>
    %c42_413 = arith.constant 42 : index
    %c0_414 = arith.constant 0 : index
    %c0_415 = arith.constant 0 : index
    %928 = vector.load %arg8[%c42_413, %c0_414, %c0_415] : memref<45x32x32xf32, #tpu.memory_space<vmem>>, vector<1x32x32xf32>
    %929 = vector.shape_cast %928 : vector<1x32x32xf32> to vector<32x32xf32>
    %cst_416 = arith.constant dense<0.000000e+00> : vector<56x32xf32>
    %930 = tpu.matmul %926, %929, %cst_416 {dimension_numbers = #tpu.dot_dimension_numbers<[1], [0], [0], [1], [0, 0, 1, 1], [], []>} : vector<56x32xf32>, vector<32x32xf32>, vector<56x32xf32> -> vector<56x32xf32>
    %c43_417 = arith.constant 43 : index
    %c0_418 = arith.constant 0 : index
    %c0_419 = arith.constant 0 : index
    %931 = vector.load %arg8[%c43_417, %c0_418, %c0_419] : memref<45x32x32xf32, #tpu.memory_space<vmem>>, vector<1x32x32xf32>
    %932 = vector.shape_cast %931 : vector<1x32x32xf32> to vector<32x32xf32>
    %cst_420 = arith.constant dense<0.000000e+00> : vector<56x32xf32>
    %933 = tpu.matmul %927, %932, %cst_420 {dimension_numbers = #tpu.dot_dimension_numbers<[1], [0], [0], [1], [0, 0, 1, 1], [], []>} : vector<56x32xf32>, vector<32x32xf32>, vector<56x32xf32> -> vector<56x32xf32>
    %934 = arith.addf %930, %933 : vector<56x32xf32>
    %c8_421 = arith.constant 8 : index
    %c0_422 = arith.constant 0 : index
    %c0_423 = arith.constant 0 : index
    %935 = vector.load %arg10[%c8_421, %c0_422, %c0_423] : memref<9x2x32xf32, #tpu.memory_space<vmem>>, vector<1x2x32xf32>
    %936 = vector.shape_cast %935 : vector<1x2x32xf32> to vector<2x32xf32>
    %937 = vector.extract_strided_slice %936 {offsets = [0, 0], sizes = [1, 32], strides = [1, 1]} : vector<2x32xf32> to vector<1x32xf32>
    %938 = vector.broadcast %690 : vector<56x1xf32> to vector<56x32xf32>
    %939 = vector.broadcast %937 : vector<1x32xf32> to vector<56x32xf32>
    %940 = arith.mulf %938, %939 : vector<56x32xf32>
    %941 = vector.extract_strided_slice %936 {offsets = [1, 0], sizes = [1, 32], strides = [1, 1]} : vector<2x32xf32> to vector<1x32xf32>
    %942 = vector.broadcast %8 : vector<56x1xf32> to vector<56x32xf32>
    %943 = vector.broadcast %941 : vector<1x32xf32> to vector<56x32xf32>
    %944 = arith.mulf %942, %943 : vector<56x32xf32>
    %945 = arith.addf %940, %944 : vector<56x32xf32>
    %946 = arith.addf %934, %945 : vector<56x32xf32>
    %c60 = arith.constant 60 : index
    %c0_424 = arith.constant 0 : index
    %947 = vector.load %arg9[%c60, %c0_424] : memref<67x32xf32, #tpu.memory_space<vmem>>, vector<1x32xf32>
    %948 = vector.broadcast %947 : vector<1x32xf32> to vector<56x32xf32>
    %949 = arith.addf %946, %948 : vector<56x32xf32>
    %c61 = arith.constant 61 : index
    %c0_425 = arith.constant 0 : index
    %950 = vector.load %arg9[%c61, %c0_425] : memref<67x32xf32, #tpu.memory_space<vmem>>, vector<1x32xf32>
    %c62 = arith.constant 62 : index
    %c0_426 = arith.constant 0 : index
    %951 = vector.load %arg9[%c62, %c0_426] : memref<67x32xf32, #tpu.memory_space<vmem>>, vector<1x32xf32>
    %cst_427 = arith.constant dense<0.000000e+00> : vector<56xf32>
    %952 = vector.multi_reduction <add>, %949, %cst_427 [1] : vector<56x32xf32> to vector<56xf32>
    %953 = vector.shape_cast %952 : vector<56xf32> to vector<56x1xf32>
    %cst_428 = arith.constant 3.200000e+01 : f32
    %954 = vector.broadcast %cst_428 : f32 to vector<56x1xf32>
    %955 = arith.divf %953, %954 : vector<56x1xf32>
    %956 = vector.broadcast %955 : vector<56x1xf32> to vector<56x32xf32>
    %957 = arith.subf %949, %956 : vector<56x32xf32>
    %958 = arith.mulf %957, %957 : vector<56x32xf32>
    %cst_429 = arith.constant dense<0.000000e+00> : vector<56xf32>
    %959 = vector.multi_reduction <add>, %958, %cst_429 [1] : vector<56x32xf32> to vector<56xf32>
    %960 = vector.shape_cast %959 : vector<56xf32> to vector<56x1xf32>
    %cst_430 = arith.constant 3.200000e+01 : f32
    %961 = vector.broadcast %cst_430 : f32 to vector<56x1xf32>
    %962 = arith.divf %960, %961 : vector<56x1xf32>
    %963 = vector.broadcast %955 : vector<56x1xf32> to vector<56x32xf32>
    %964 = arith.subf %949, %963 : vector<56x32xf32>
    %cst_431 = arith.constant 9.99999974E-6 : f32
    %965 = vector.broadcast %cst_431 : f32 to vector<56x1xf32>
    %966 = arith.addf %962, %965 : vector<56x1xf32>
    %967 = math.rsqrt %966 : vector<56x1xf32>
    %968 = vector.broadcast %967 : vector<56x1xf32> to vector<56x32xf32>
    %969 = arith.mulf %964, %968 : vector<56x32xf32>
    %970 = vector.broadcast %950 : vector<1x32xf32> to vector<56x32xf32>
    %971 = arith.mulf %969, %970 : vector<56x32xf32>
    %972 = vector.broadcast %951 : vector<1x32xf32> to vector<56x32xf32>
    %973 = arith.addf %971, %972 : vector<56x32xf32>
    %974 = arith.negf %973 : vector<56x32xf32>
    %975 = math.exp %974 : vector<56x32xf32>
    %cst_432 = arith.constant 1.000000e+00 : f32
    %976 = vector.broadcast %cst_432 : f32 to vector<56x32xf32>
    %977 = arith.addf %976, %975 : vector<56x32xf32>
    %978 = arith.divf %976, %977 : vector<56x32xf32>
    %979 = arith.mulf %973, %978 : vector<56x32xf32>
    %c44_433 = arith.constant 44 : index
    %c0_434 = arith.constant 0 : index
    %c0_435 = arith.constant 0 : index
    %980 = vector.load %arg8[%c44_433, %c0_434, %c0_435] : memref<45x32x32xf32, #tpu.memory_space<vmem>>, vector<1x32x32xf32>
    %981 = vector.shape_cast %980 : vector<1x32x32xf32> to vector<32x32xf32>
    %cst_436 = arith.constant dense<0.000000e+00> : vector<56x32xf32>
    %982 = tpu.matmul %979, %981, %cst_436 {dimension_numbers = #tpu.dot_dimension_numbers<[1], [0], [0], [1], [0, 0, 1, 1], [], []>} : vector<56x32xf32>, vector<32x32xf32>, vector<56x32xf32> -> vector<56x32xf32>
    %c63 = arith.constant 63 : index
    %c0_437 = arith.constant 0 : index
    %983 = vector.load %arg9[%c63, %c0_437] : memref<67x32xf32, #tpu.memory_space<vmem>>, vector<1x32xf32>
    %984 = vector.broadcast %983 : vector<1x32xf32> to vector<56x32xf32>
    %985 = arith.addf %982, %984 : vector<56x32xf32>
    %c64 = arith.constant 64 : index
    %c0_438 = arith.constant 0 : index
    %986 = vector.load %arg9[%c64, %c0_438] : memref<67x32xf32, #tpu.memory_space<vmem>>, vector<1x32xf32>
    %c65 = arith.constant 65 : index
    %c0_439 = arith.constant 0 : index
    %987 = vector.load %arg9[%c65, %c0_439] : memref<67x32xf32, #tpu.memory_space<vmem>>, vector<1x32xf32>
    %cst_440 = arith.constant dense<0.000000e+00> : vector<56xf32>
    %988 = vector.multi_reduction <add>, %985, %cst_440 [1] : vector<56x32xf32> to vector<56xf32>
    %989 = vector.shape_cast %988 : vector<56xf32> to vector<56x1xf32>
    %cst_441 = arith.constant 3.200000e+01 : f32
    %990 = vector.broadcast %cst_441 : f32 to vector<56x1xf32>
    %991 = arith.divf %989, %990 : vector<56x1xf32>
    %992 = vector.broadcast %991 : vector<56x1xf32> to vector<56x32xf32>
    %993 = arith.subf %985, %992 : vector<56x32xf32>
    %994 = arith.mulf %993, %993 : vector<56x32xf32>
    %cst_442 = arith.constant dense<0.000000e+00> : vector<56xf32>
    %995 = vector.multi_reduction <add>, %994, %cst_442 [1] : vector<56x32xf32> to vector<56xf32>
    %996 = vector.shape_cast %995 : vector<56xf32> to vector<56x1xf32>
    %cst_443 = arith.constant 3.200000e+01 : f32
    %997 = vector.broadcast %cst_443 : f32 to vector<56x1xf32>
    %998 = arith.divf %996, %997 : vector<56x1xf32>
    %999 = vector.broadcast %991 : vector<56x1xf32> to vector<56x32xf32>
    %1000 = arith.subf %985, %999 : vector<56x32xf32>
    %cst_444 = arith.constant 9.99999974E-6 : f32
    %1001 = vector.broadcast %cst_444 : f32 to vector<56x1xf32>
    %1002 = arith.addf %998, %1001 : vector<56x1xf32>
    %1003 = math.rsqrt %1002 : vector<56x1xf32>
    %1004 = vector.broadcast %1003 : vector<56x1xf32> to vector<56x32xf32>
    %1005 = arith.mulf %1000, %1004 : vector<56x32xf32>
    %1006 = vector.broadcast %986 : vector<1x32xf32> to vector<56x32xf32>
    %1007 = arith.mulf %1005, %1006 : vector<56x32xf32>
    %1008 = vector.broadcast %987 : vector<1x32xf32> to vector<56x32xf32>
    %1009 = arith.addf %1007, %1008 : vector<56x32xf32>
    %1010 = arith.negf %1009 : vector<56x32xf32>
    %1011 = math.exp %1010 : vector<56x32xf32>
    %cst_445 = arith.constant 1.000000e+00 : f32
    %1012 = vector.broadcast %cst_445 : f32 to vector<56x32xf32>
    %1013 = arith.addf %1012, %1011 : vector<56x32xf32>
    %1014 = arith.divf %1012, %1013 : vector<56x32xf32>
    %1015 = arith.mulf %1009, %1014 : vector<56x32xf32>
    %c0_446 = arith.constant 0 : index
    %c0_447 = arith.constant 0 : index
    %1016 = vector.load %arg11[%c0_446, %c0_447] : memref<32x3xf32, #tpu.memory_space<vmem>>, vector<32x3xf32>
    %1017 = vector.extract_strided_slice %1016 {offsets = [0, 2], sizes = [32, 1], strides = [1, 1]} : vector<32x3xf32> to vector<32x1xf32>
    %cst_448 = arith.constant dense<0.000000e+00> : vector<56x1xf32>
    %1018 = tpu.matmul %1015, %1017, %cst_448 {dimension_numbers = #tpu.dot_dimension_numbers<[1], [0], [0], [1], [0, 0, 1, 1], [], []>} : vector<56x32xf32>, vector<32x1xf32>, vector<56x1xf32> -> vector<56x1xf32>
    %1019 = vector.broadcast %1018 : vector<56x1xf32> to vector<56x3xf32>
    %1020 = arith.mulf %697, %1019 : vector<56x3xf32>
    %cst_449 = arith.constant dense<0.000000e+00> : vector<8x3xf32>
    %1021 = tpu.matmul %2, %1020, %cst_449 {dimension_numbers = #tpu.dot_dimension_numbers<[1], [0], [0], [1], [0, 0, 1, 1], [], []>} : vector<8x56xf32>, vector<56x3xf32>, vector<8x3xf32> -> vector<8x3xf32>
    %1022 = arith.addf %686, %1021 : vector<8x3xf32>
    %c0_450 = arith.constant 0 : index
    %c0_451 = arith.constant 0 : index
    %1023 = vector.load %arg6[%c0_450, %c0_451] : memref<32x6xf32, #tpu.memory_space<vmem>>, vector<32x6xf32>
    %cst_452 = arith.constant dense<0.000000e+00> : vector<8x6xf32>
    %1024 = tpu.matmul %925, %1023, %cst_452 {dimension_numbers = #tpu.dot_dimension_numbers<[1], [0], [0], [1], [0, 0, 1, 1], [], []>} : vector<8x32xf32>, vector<32x6xf32>, vector<8x6xf32> -> vector<8x6xf32>
    %c0_453 = arith.constant 0 : index
    %c0_454 = arith.constant 0 : index
    %1025 = vector.load %arg7[%c0_453, %c0_454] : memref<1x6xf32, #tpu.memory_space<vmem>>, vector<1x6xf32>
    %1026 = vector.broadcast %1025 : vector<1x6xf32> to vector<8x6xf32>
    %1027 = arith.addf %1024, %1026 : vector<8x6xf32>
    %c0_455 = arith.constant 0 : index
    %c0_456 = arith.constant 0 : index
    %1028 = vector.load %arg12[%c0_455, %c0_456] : memref<8x6xf32, #tpu.memory_space<vmem>>, vector<8x6xf32>
    tpu.vector_store %arg12[%c0_455, %c0_456], %1027 {strides = array<i32>} : memref<8x6xf32, #tpu.memory_space<vmem>>, vector<8x6xf32>,
    %c0_457 = arith.constant 0 : index
    %c0_458 = arith.constant 0 : index
    %1029 = vector.load %arg13[%c0_457, %c0_458] : memref<8x3xf32, #tpu.memory_space<vmem>>, vector<8x3xf32>
    tpu.vector_store %arg13[%c0_457, %c0_458], %1022 {strides = array<i32>} : memref<8x3xf32, #tpu.memory_space<vmem>>, vector<8x3xf32>,
    return
  }
}

</mosaic_0001>

<llo_original>
// kernel: egnn_forward.1
$region0: #{egnn_forward.1}
  #allocation0 [shape = 'u32[]', space=smem, size = 0x4, offset = 0x4, fixed_abs, tag = 'smem constant byte address 0x4 - core index']
  #allocation1 [shape = 'u32[72,128]{1,0:T(1,128)}', space=vmem, size = 0x9000, scoped, tag = 'internal scratch']
  %s0 = inlined_call_operand.vmem [shape: f32[8,6], index: 0, kind: input, shape index: {}]
  %s1 = inlined_call_operand.vmem [shape: f32[8,3], index: 1, kind: input, shape index: {}]
  %s2 = inlined_call_operand.vmem [shape: f32[56,8], index: 2, kind: input, shape index: {}]
  %s3 = inlined_call_operand.vmem [shape: f32[56,8], index: 3, kind: input, shape index: {}]
  %s4 = inlined_call_operand.vmem [shape: f32[8,56], index: 4, kind: input, shape index: {}]
  %s5 = inlined_call_operand.vmem [shape: f32[6,32], index: 5, kind: input, shape index: {}]
  %s6 = inlined_call_operand.vmem [shape: f32[32,6], index: 6, kind: input, shape index: {}]
  %s7 = inlined_call_operand.vmem [shape: f32[1,6], index: 7, kind: input, shape index: {}]
  %s8 = inlined_call_operand.vmem [shape: f32[45,32,32], index: 8, kind: input, shape index: {}]
  %s9 = inlined_call_operand.vmem [shape: f32[67,32], index: 9, kind: input, shape index: {}]
  %s10 = inlined_call_operand.vmem [shape: f32[9,2,32], index: 10, kind: input, shape index: {}]
  %s11 = inlined_call_operand.vmem [shape: f32[32,3], index: 11, kind: input, shape index: {}]
  %s12 = inlined_call_operand.hbm [shape: f32[8,6], index: 12, kind: output, shape index: {0}]
  %s13 = inlined_call_operand.vmem [shape: f32[8,3], index: 13, kind: output, shape index: {1}]
  %14 = xla_tuple %s12, %s13
  %s15 = sld [smem:[#allocation0]]
  $region66: #{egnn_forward.1} parent=0
    _
  %s17 = ssub.s32 1, %s15
  %s18 = scalar_select 0, %s17, %s15
  $region1: #{egnn_forward.1} parent=0
    #allocation2 [shape = 'u8[4096]{0}', space=vmem, size = 0x1000, scoped, tag = 'output window, operand 0, single buffered']
    #allocation3 [shape = 's32[1]{0}', space=sflag, size = 0x4, scoped, tag = 'scoped memory for egnn_forward.1']
    %19 = vsyncpa [#allocation3], 0
    // Predicated region
    $region2: #{egnn_forward.1} parent=1 // pred_check
      _
    $region3: #{egnn_forward.1} parent=1 // pred_check_branch
      %21 = sbr.rel (0) target = $region5
    $region4: #{egnn_forward.1} parent=1 // pred_region
      _
    $region5: #{egnn_forward.1} parent=1 // pred_fallthru
      _
    // Predicated region
    $region6: #{egnn_forward.1} parent=1 // pred_check
      _
    $region7: #{egnn_forward.1} parent=1 // pred_check_branch
      %23 = sbr.rel (0) target = $region9
    $region8: #{egnn_forward.1} parent=1 // pred_region
      _
    $region9: #{egnn_forward.1} parent=1 // pred_fallthru
      _
    // Predicated region
    $region10: #{egnn_forward.1} parent=1 // pred_check
      _
    $region11: #{egnn_forward.1} parent=1 // pred_check_branch
      %25 = sbr.rel (0) target = $region13
    $region12: #{egnn_forward.1} parent=1 // pred_region
      _
    $region13: #{egnn_forward.1} parent=1 // pred_fallthru
      _
    // Predicated region
    $region14: #{egnn_forward.1} parent=1 // pred_check
      _
    $region15: #{egnn_forward.1} parent=1 // pred_check_branch
      %27 = sbr.rel (0) target = $region17
    $region16: #{egnn_forward.1} parent=1 // pred_region
      _
    $region17: #{egnn_forward.1} parent=1 // pred_fallthru
      _
    // Predicated region
    $region18: #{egnn_forward.1} parent=1 // pred_check
      _
    $region19: #{egnn_forward.1} parent=1 // pred_check_branch
      %29 = sbr.rel (0) target = $region21
    $region20: #{egnn_forward.1} parent=1 // pred_region
      _
    $region21: #{egnn_forward.1} parent=1 // pred_fallthru
      _
    // Predicated region
    $region22: #{egnn_forward.1} parent=1 // pred_check
      _
    $region23: #{egnn_forward.1} parent=1 // pred_check_branch
      %31 = sbr.rel (0) target = $region25
    $region24: #{egnn_forward.1} parent=1 // pred_region
      _
    $region25: #{egnn_forward.1} parent=1 // pred_fallthru
      _
    // Predicated region
    $region26: #{egnn_forward.1} parent=1 // pred_check
      _
    $region27: #{egnn_forward.1} parent=1 // pred_check_branch
      %33 = sbr.rel (0) target = $region29
    $region28: #{egnn_forward.1} parent=1 // pred_region
      _
    $region29: #{egnn_forward.1} parent=1 // pred_fallthru
      _
    // Predicated region
    $region30: #{egnn_forward.1} parent=1 // pred_check
      _
    $region31: #{egnn_forward.1} parent=1 // pred_check_branch
      %35 = sbr.rel (0) target = $region33
    $region32: #{egnn_forward.1} parent=1 // pred_region
      _
    $region33: #{egnn_forward.1} parent=1 // pred_fallthru
      _
    // Predicated region
    $region34: #{egnn_forward.1} parent=1 // pred_check
      _
    $region35: #{egnn_forward.1} parent=1 // pred_check_branch
      %37 = sbr.rel (0) target = $region37
    $region36: #{egnn_forward.1} parent=1 // pred_region
      _
    $region37: #{egnn_forward.1} parent=1 // pred_fallthru
      _
    // Predicated region
    $region38: #{egnn_forward.1} parent=1 // pred_check
      _
    $region39: #{egnn_forward.1} parent=1 // pred_check_branch
      %39 = sbr.rel (0) target = $region41
    $region40: #{egnn_forward.1} parent=1 // pred_region
      _
    $region41: #{egnn_forward.1} parent=1 // pred_fallthru
      _
    // Predicated region
    $region42: #{egnn_forward.1} parent=1 // pred_check
      _
    $region43: #{egnn_forward.1} parent=1 // pred_check_branch
      %41 = sbr.rel (0) target = $region45
    $region44: #{egnn_forward.1} parent=1 // pred_region
      _
    $region45: #{egnn_forward.1} parent=1 // pred_fallthru
      _
    // Predicated region
    $region46: #{egnn_forward.1} parent=1 // pred_check
      _
    $region47: #{egnn_forward.1} parent=1 // pred_check_branch
      %43 = sbr.rel (0) target = $region49
    $region48: #{egnn_forward.1} parent=1 // pred_region
      _
    $region49: #{egnn_forward.1} parent=1 // pred_fallthru
      _
    %v44 = vld [vmem:[%s2] sm:$0xff]
    %v45 = vld [vmem:[%s2 + $0x8] sm:$0xff]
    %v46 = vld [vmem:[%s2 + $0x10] sm:$0xff]
    %v47 = vld [vmem:[%s2 + $0x18] sm:$0xff]
    %v48 = vld [vmem:[%s2 + $0x20] sm:$0xff]
    %v49 = vld [vmem:[%s2 + $0x28] sm:$0xff]
    %v50 = vld [vmem:[%s2 + $0x30] sm:$0xff]
    %v51 = vld [vmem:[%s3] sm:$0xff]
    %v52 = vld [vmem:[%s3 + $0x8] sm:$0xff]
    %v53 = vld [vmem:[%s3 + $0x10] sm:$0xff]
    %v54 = vld [vmem:[%s3 + $0x18] sm:$0xff]
    %v55 = vld [vmem:[%s3 + $0x20] sm:$0xff]
    %v56 = vld [vmem:[%s3 + $0x28] sm:$0xff]
    %v57 = vld [vmem:[%s3 + $0x30] sm:$0xff]
    %v58 = vld [vmem:[%s4] sm:$0xff]
    %v59 = vsub.f32 %v44, %v51
    %v60 = vsub.f32 %v45, %v52
    %v61 = vsub.f32 %v46, %v53
    %v62 = vsub.f32 %v47, %v54
    %v63 = vsub.f32 %v48, %v55
    %v64 = vsub.f32 %v49, %v56
    %v65 = vsub.f32 %v50, %v57
    %v66 = vld [vmem:[%s1] sm:$0xff]
    %vm67 = vcmask 64512
    %v69 = vsel %vm67, %v59, 0
    %v72 = vsel %vm67, %v60, 0
    %v75 = vsel %vm67, %v61, 0
    %v78 = vsel %vm67, %v62, 0
    %v81 = vsel %vm67, %v63, 0
    %v84 = vsel %vm67, %v64, 0
    %v87 = vsel %vm67, %v65, 0
    %89 = vmatpush.msra.mxu0 0.0
    %90 = vmatpush.msra.mxu0 0.0
    %91 = vmatpush.msra.mxu0 0.0
    %92 = vmatpush.msra.mxu0 0.0
    %93 = vmatpush.msra.mxu0 0.0
    %94 = vmatpush.msra.mxu0 0.0
    %95 = vmatpush.msra.mxu0 0.0
    %96 = vmatpush.msra.mxu0 0.0
    %97 = vmatpush.msra.mxu0 0.0
    %98 = vmatpush.msra.mxu0 0.0
    %99 = vmatpush.msra.mxu0 0.0
    %100 = vmatpush.msra.mxu0 0.0
    %101 = vmatpush.msra.mxu0 0.0
    %102 = vmatpush.msra.mxu0 0.0
    %103 = vmatpush.msra.mxu0 0.0
    %104 = vmatpush.msra.mxu0 %v66
    %105 = vmatmul.f32.gmra.mxu0 %v69
    %v106 = vpop.f32.mrf.mxu0
    %v107 = vadd.f32 0.0, %v106
    %108 = vmatmul.f32.gmra.mxu0 %v72
    %v109 = vpop.f32.mrf.mxu0
    %v110 = vadd.f32 0.0, %v109
    %111 = vmatmul.f32.gmra.mxu0 %v75
    %v112 = vpop.f32.mrf.mxu0
    %v113 = vadd.f32 0.0, %v112
    %114 = vmatmul.f32.gmra.mxu0 %v78
    %v115 = vpop.f32.mrf.mxu0
    %v116 = vadd.f32 0.0, %v115
    %117 = vmatmul.f32.gmra.mxu0 %v81
    %v118 = vpop.f32.mrf.mxu0
    %v119 = vadd.f32 0.0, %v118
    %120 = vmatmul.f32.gmra.mxu0 %v84
    %v121 = vpop.f32.mrf.mxu0
    %v122 = vadd.f32 0.0, %v121
    %123 = vmatmul.f32.gmra.mxu0 %v87
    %v124 = vpop.f32.mrf.mxu0
    %v125 = vadd.f32 0.0, %v124
    %126 = vdwg.mxu0
    %v127 = vmul.f32 %v107, %v107
    %v128 = vmul.f32 %v110, %v110
    %v129 = vmul.f32 %v113, %v113
    %v130 = vmul.f32 %v116, %v116
    %v131 = vmul.f32 %v119, %v119
    %v132 = vmul.f32 %v122, %v122
    %v133 = vmul.f32 %v125, %v125
    %vm134 = vcmask 23552
    %v135 = vsel %vm134, %v127, 0.0
    %136 = vadd.xlane.f32.xlu0 %v135
    %v137 = vpop.xlane.xlu0 %136
    %v138 = vsel %vm134, %v128, 0.0
    %139 = vadd.xlane.f32.xlu0 %v138
    %v140 = vpop.xlane.xlu0 %139
    %v141 = vsel %vm134, %v129, 0.0
    %142 = vadd.xlane.f32.xlu0 %v141
    %v143 = vpop.xlane.xlu0 %142
    %v144 = vsel %vm134, %v130, 0.0
    %145 = vadd.xlane.f32.xlu0 %v144
    %v146 = vpop.xlane.xlu0 %145
    %v147 = vsel %vm134, %v131, 0.0
    %148 = vadd.xlane.f32.xlu0 %v147
    %v149 = vpop.xlane.xlu0 %148
    %v150 = vsel %vm134, %v132, 0.0
    %151 = vadd.xlane.f32.xlu0 %v150
    %v152 = vpop.xlane.xlu0 %151
    %v153 = vsel %vm134, %v133, 0.0
    %154 = vadd.xlane.f32.xlu0 %v153
    %v155 = vpop.xlane.xlu0 %154
    %v156 = vld [vmem:[%s0] sm:$0xff]
    %v157 = vld [vmem:[%s5] sm:$0x3f]
    %v158 = vld [vmem:[%s9 + $0x42] sm:$0x1]
    %v159 = vperm.slane %v158, 0
    %vm160 = vcmask 48128
    %v162 = vsel %vm160, %v156, 0
    %vm164 = vcmask 1045504
    %v166 = vsel %vm164, %v157, 0
    %168 = vmatpush.msra.mxu0 0.0
    %169 = vmatpush.msra.mxu0 0.0
    %170 = vmatpush.msra.mxu0 0.0
    %171 = vmatpush.msra.mxu0 0.0
    %172 = vmatpush.msra.mxu0 0.0
    %173 = vmatpush.msra.mxu0 0.0
    %174 = vmatpush.msra.mxu0 0.0
    %175 = vmatpush.msra.mxu0 0.0
    %176 = vmatpush.msra.mxu0 0.0
    %177 = vmatpush.msra.mxu0 0.0
    %178 = vmatpush.msra.mxu0 0.0
    %179 = vmatpush.msra.mxu0 0.0
    %180 = vmatpush.msra.mxu0 0.0
    %181 = vmatpush.msra.mxu0 0.0
    %182 = vmatpush.msra.mxu0 0.0
    %183 = vmatpush.msra.mxu0 %v166
    %184 = vmatmul.f32.gmra.mxu0 %v162
    %v185 = vpop.f32.mrf.mxu0
    %v186 = vadd.f32 %v159, %v185
    %187 = vdwg.mxu0
    %v188 = vadd.f32 %v137, 1e-08
    %v189 = vadd.f32 %v140, 1e-08
    %v190 = vadd.f32 %v143, 1e-08
    %v191 = vadd.f32 %v146, 1e-08
    %v192 = vadd.f32 %v149, 1e-08
    %v193 = vadd.f32 %v152, 1e-08
    %v194 = vadd.f32 %v155, 1e-08
    %v195 = vrsqrt.pop %v188
    %v196 = vmul.f32 %v195, %v188
    %v197 = vmul.f32 %v196, %v195
    %v198 = vmul.f32 0.5, %v197
    %v199 = vsub.f32 1.5, %v198
    %v200 = vmul.f32 %v195, %v199
    %v201 = vmul.f32 %v188, %v200
    %vm202 = vcmp.eq.f32.partialorder %v188, inf
    %v203 = vsel %vm202, %v188, %v201
    %vm204 = vcmp.eq.f32.partialorder %v188, 0.0
    %v205 = vand.u32 %v188, 2147483648
    %v206 = vsel %vm204, %v205, %v203
    %v207 = vrsqrt.pop %v189
    %v208 = vmul.f32 %v207, %v189
    %v209 = vmul.f32 %v208, %v207
    %v210 = vmul.f32 0.5, %v209
    %v211 = vsub.f32 1.5, %v210
    %v212 = vmul.f32 %v207, %v211
    %v213 = vmul.f32 %v189, %v212
    %vm214 = vcmp.eq.f32.partialorder %v189, inf
    %v215 = vsel %vm214, %v189, %v213
    %vm216 = vcmp.eq.f32.partialorder %v189, 0.0
    %v217 = vand.u32 %v189, 2147483648
    %v218 = vsel %vm216, %v217, %v215
    %v219 = vrsqrt.pop %v190
    %v220 = vmul.f32 %v219, %v190
    %v221 = vmul.f32 %v220, %v219
    %v222 = vmul.f32 0.5, %v221
    %v223 = vsub.f32 1.5, %v222
    %v224 = vmul.f32 %v219, %v223
    %v225 = vmul.f32 %v190, %v224
    %vm226 = vcmp.eq.f32.partialorder %v190, inf
    %v227 = vsel %vm226, %v190, %v225
    %vm228 = vcmp.eq.f32.partialorder %v190, 0.0
    %v229 = vand.u32 %v190, 2147483648
    %v230 = vsel %vm228, %v229, %v227
    %v231 = vrsqrt.pop %v191
    %v232 = vmul.f32 %v231, %v191
    %v233 = vmul.f32 %v232, %v231
    %v234 = vmul.f32 0.5, %v233
    %v235 = vsub.f32 1.5, %v234
    %v236 = vmul.f32 %v231, %v235
    %v237 = vmul.f32 %v191, %v236
    %vm238 = vcmp.eq.f32.partialorder %v191, inf
    %v239 = vsel %vm238, %v191, %v237
    %vm240 = vcmp.eq.f32.partialorder %v191, 0.0
    %v241 = vand.u32 %v191, 2147483648
    %v242 = vsel %vm240, %v241, %v239
    %v243 = vrsqrt.pop %v192
    %v244 = vmul.f32 %v243, %v192
    %v245 = vmul.f32 %v244, %v243
    %v246 = vmul.f32 0.5, %v245
    %v247 = vsub.f32 1.5, %v246
    %v248 = vmul.f32 %v243, %v247
    %v249 = vmul.f32 %v192, %v248
    %vm250 = vcmp.eq.f32.partialorder %v192, inf
    %v251 = vsel %vm250, %v192, %v249
    %vm252 = vcmp.eq.f32.partialorder %v192, 0.0
    %v253 = vand.u32 %v192, 2147483648
    %v254 = vsel %vm252, %v253, %v251
    %v255 = vrsqrt.pop %v193
    %v256 = vmul.f32 %v255, %v193
    %v257 = vmul.f32 %v256, %v255
    %v258 = vmul.f32 0.5, %v257
    %v259 = vsub.f32 1.5, %v258
    %v260 = vmul.f32 %v255, %v259
    %v261 = vmul.f32 %v193, %v260
    %vm262 = vcmp.eq.f32.partialorder %v193, inf
    %v263 = vsel %vm262, %v193, %v261
    %vm264 = vcmp.eq.f32.partialorder %v193, 0.0
    %v265 = vand.u32 %v193, 2147483648
    %v266 = vsel %vm264, %v265, %v263
    %v267 = vrsqrt.pop %v194
    %v268 = vmul.f32 %v267, %v194
    %v269 = vmul.f32 %v268, %v267
    %v270 = vmul.f32 0.5, %v269
    %v271 = vsub.f32 1.5, %v270
    %v272 = vmul.f32 %v267, %v271
    %v273 = vmul.f32 %v194, %v272
    %vm274 = vcmp.eq.f32.partialorder %v194, inf
    %v275 = vsel %vm274, %v194, %v273
    %vm276 = vcmp.eq.f32.partialorder %v194, 0.0
    %v277 = vand.u32 %v194, 2147483648
    %v278 = vsel %vm276, %v277, %v275
    %v279 = vadd.f32 %v206, 1.0
    %v280 = vadd.f32 %v218, 1.0
    %v281 = vadd.f32 %v230, 1.0
    %v282 = vadd.f32 %v242, 1.0
    %v283 = vadd.f32 %v254, 1.0
    %v284 = vadd.f32 %v266, 1.0
    %v285 = vadd.f32 %v278, 1.0
    %v286 = vrcp.pop %v279
    %v287 = vmul.f32 %v279, %v286
    %v288 = vsub.f32 1.0, %v287
    %v289 = vmul.f32 %v286, %v288
    %v290 = vadd.f32 %v286, %v289
    %vm291 = vweird.f32 %v279
    %vm292 = vweird.f32 %v286
    %vm293 = vmor %vm291, %vm292
    %v294 = vsel %vm293, %v286, %v290
    %v295 = vand.u32 2147483647, %v279
    %vm296 = vcmp.eq.f32.partialorder %v295, 8.507059e+37
    %v297 = vand.u32 %v279, 2147483648
    %v298 = vor.u32 1.1754944e-38, %v297
    %v299 = vsel %vm296, %v298, %v294
    %v300 = vmul.f32 %v107, %v299
    %v301 = vrcp.pop %v280
    %v302 = vmul.f32 %v280, %v301
    %v303 = vsub.f32 1.0, %v302
    %v304 = vmul.f32 %v301, %v303
    %v305 = vadd.f32 %v301, %v304
    %vm306 = vweird.f32 %v280
    %vm307 = vweird.f32 %v301
    %vm308 = vmor %vm306, %vm307
    %v309 = vsel %vm308, %v301, %v305
    %v310 = vand.u32 2147483647, %v280
    %vm311 = vcmp.eq.f32.partialorder %v310, 8.507059e+37
    %v312 = vand.u32 %v280, 2147483648
    %v313 = vor.u32 1.1754944e-38, %v312
    %v314 = vsel %vm311, %v313, %v309
    %v315 = vmul.f32 %v110, %v314
    %v316 = vrcp.pop %v281
    %v317 = vmul.f32 %v281, %v316
    %v318 = vsub.f32 1.0, %v317
    %v319 = vmul.f32 %v316, %v318
    %v320 = vadd.f32 %v316, %v319
    %vm321 = vweird.f32 %v281
    %vm322 = vweird.f32 %v316
    %vm323 = vmor %vm321, %vm322
    %v324 = vsel %vm323, %v316, %v320
    %v325 = vand.u32 2147483647, %v281
    %vm326 = vcmp.eq.f32.partialorder %v325, 8.507059e+37
    %v327 = vand.u32 %v281, 2147483648
    %v328 = vor.u32 1.1754944e-38, %v327
    %v329 = vsel %vm326, %v328, %v324
    %v330 = vmul.f32 %v113, %v329
    %v331 = vrcp.pop %v282
    %v332 = vmul.f32 %v282, %v331
    %v333 = vsub.f32 1.0, %v332
    %v334 = vmul.f32 %v331, %v333
    %v335 = vadd.f32 %v331, %v334
    %vm336 = vweird.f32 %v282
    %vm337 = vweird.f32 %v331
    %vm338 = vmor %vm336, %vm337
    %v339 = vsel %vm338, %v331, %v335
    %v340 = vand.u32 2147483647, %v282
    %vm341 = vcmp.eq.f32.partialorder %v340, 8.507059e+37
    %v342 = vand.u32 %v282, 2147483648
    %v343 = vor.u32 1.1754944e-38, %v342
    %v344 = vsel %vm341, %v343, %v339
    %v345 = vmul.f32 %v116, %v344
    %v346 = vrcp.pop %v283
    %v347 = vmul.f32 %v283, %v346
    %v348 = vsub.f32 1.0, %v347
    %v349 = vmul.f32 %v346, %v348
    %v350 = vadd.f32 %v346, %v349
    %vm351 = vweird.f32 %v283
    %vm352 = vweird.f32 %v346
    %vm353 = vmor %vm351, %vm352
    %v354 = vsel %vm353, %v346, %v350
    %v355 = vand.u32 2147483647, %v283
    %vm356 = vcmp.eq.f32.partialorder %v355, 8.507059e+37
    %v357 = vand.u32 %v283, 2147483648
    %v358 = vor.u32 1.1754944e-38, %v357
    %v359 = vsel %vm356, %v358, %v354
    %v360 = vmul.f32 %v119, %v359
    %v361 = vrcp.pop %v284
    %v362 = vmul.f32 %v284, %v361
    %v363 = vsub.f32 1.0, %v362
    %v364 = vmul.f32 %v361, %v363
    %v365 = vadd.f32 %v361, %v364
    %vm366 = vweird.f32 %v284
    %vm367 = vweird.f32 %v361
    %vm368 = vmor %vm366, %vm367
    %v369 = vsel %vm368, %v361, %v365
    %v370 = vand.u32 2147483647, %v284
    %vm371 = vcmp.eq.f32.partialorder %v370, 8.507059e+37
    %v372 = vand.u32 %v284, 2147483648
    %v373 = vor.u32 1.1754944e-38, %v372
    %v374 = vsel %vm371, %v373, %v369
    %v375 = vmul.f32 %v122, %v374
    %v376 = vrcp.pop %v285
    %v377 = vmul.f32 %v285, %v376
    %v378 = vsub.f32 1.0, %v377
    %v379 = vmul.f32 %v376, %v378
    %v380 = vadd.f32 %v376, %v379
    %vm381 = vweird.f32 %v285
    %vm382 = vweird.f32 %v376
    %vm383 = vmor %vm381, %vm382
    %v384 = vsel %vm383, %v376, %v380
    %v385 = vand.u32 2147483647, %v285
    %vm386 = vcmp.eq.f32.partialorder %v385, 8.507059e+37
    %v387 = vand.u32 %v285, 2147483648
    %v388 = vor.u32 1.1754944e-38, %v387
    %v389 = vsel %vm386, %v388, %v384
    %v390 = vmul.f32 %v125, %v389
    %v392 = vsel %vm67, %v44, 0
    %v395 = vsel %vm67, %v45, 0
    %v398 = vsel %vm67, %v46, 0
    %v401 = vsel %vm67, %v47, 0
    %v404 = vsel %vm67, %v48, 0
    %v407 = vsel %vm67, %v49, 0
    %v410 = vsel %vm67, %v50, 0
    %412 = vmatpush.msra.mxu0 0.0
    %413 = vmatpush.msra.mxu0 0.0
    %414 = vmatpush.msra.mxu0 0.0
    %415 = vmatpush.msra.mxu0 0.0
    %416 = vmatpush.msra.mxu0 0.0
    %417 = vmatpush.msra.mxu0 0.0
    %418 = vmatpush.msra.mxu0 0.0
    %419 = vmatpush.msra.mxu0 0.0
    %420 = vmatpush.msra.mxu0 0.0
    %421 = vmatpush.msra.mxu0 0.0
    %422 = vmatpush.msra.mxu0 0.0
    %423 = vmatpush.msra.mxu0 0.0
    %424 = vmatpush.msra.mxu0 0.0
    %425 = vmatpush.msra.mxu0 0.0
    %426 = vmatpush.msra.mxu0 0.0
    %427 = vmatpush.msra.mxu0 %v186
    %428 = vmatmul.f32.gmra.mxu0 %v392
    %v429 = vpop.f32.mrf.mxu0
    %v430 = vadd.f32 0.0, %v429
    %431 = vmatmul.f32.gmra.mxu0 %v395
    %v432 = vpop.f32.mrf.mxu0
    %v433 = vadd.f32 0.0, %v432
    %434 = vmatmul.f32.gmra.mxu0 %v398
    %v435 = vpop.f32.mrf.mxu0
    %v436 = vadd.f32 0.0, %v435
    %437 = vmatmul.f32.gmra.mxu0 %v401
    %v438 = vpop.f32.mrf.mxu0
    %v439 = vadd.f32 0.0, %v438
    %440 = vmatmul.f32.gmra.mxu0 %v404
    %v441 = vpop.f32.mrf.mxu0
    %v442 = vadd.f32 0.0, %v441
    %443 = vmatmul.f32.gmra.mxu0 %v407
    %v444 = vpop.f32.mrf.mxu0
    %v445 = vadd.f32 0.0, %v444
    %446 = vmatmul.f32.gmra.mxu0 %v410
    %v447 = vpop.f32.mrf.mxu0
    %v448 = vadd.f32 0.0, %v447
    %449 = vdwg.mxu0
    %v451 = vsel %vm67, %v51, 0
    %v454 = vsel %vm67, %v52, 0
    %v457 = vsel %vm67, %v53, 0
    %v460 = vsel %vm67, %v54, 0
    %v463 = vsel %vm67, %v55, 0
    %v466 = vsel %vm67, %v56, 0
    %v469 = vsel %vm67, %v57, 0
    %471 = vmatpush.msra.mxu0 0.0
    %472 = vmatpush.msra.mxu0 0.0
    %473 = vmatpush.msra.mxu0 0.0
    %474 = vmatpush.msra.mxu0 0.0
    %475 = vmatpush.msra.mxu0 0.0
    %476 = vmatpush.msra.mxu0 0.0
    %477 = vmatpush.msra.mxu0 0.0
    %478 = vmatpush.msra.mxu0 0.0
    %479 = vmatpush.msra.mxu0 0.0
    %480 = vmatpush.msra.mxu0 0.0
    %481 = vmatpush.msra.mxu0 0.0
    %482 = vmatpush.msra.mxu0 0.0
    %483 = vmatpush.msra.mxu0 0.0
    %484 = vmatpush.msra.mxu0 0.0
    %485 = vmatpush.msra.mxu0 0.0
    %486 = vmatpush.msra.mxu0 %v186
    %487 = vmatmul.f32.gmra.mxu0 %v451
    %v488 = vpop.f32.mrf.mxu0
    %v489 = vadd.f32 0.0, %v488
    %490 = vmatmul.f32.gmra.mxu0 %v454
    %v491 = vpop.f32.mrf.mxu0
    %v492 = vadd.f32 0.0, %v491
    %493 = vmatmul.f32.gmra.mxu0 %v457
    %v494 = vpop.f32.mrf.mxu0
    %v495 = vadd.f32 0.0, %v494
    %496 = vmatmul.f32.gmra.mxu0 %v460
    %v497 = vpop.f32.mrf.mxu0
    %v498 = vadd.f32 0.0, %v497
    %499 = vmatmul.f32.gmra.mxu0 %v463
    %v500 = vpop.f32.mrf.mxu0
    %v501 = vadd.f32 0.0, %v500
    %502 = vmatmul.f32.gmra.mxu0 %v466
    %v503 = vpop.f32.mrf.mxu0
    %v504 = vadd.f32 0.0, %v503
    %505 = vmatmul.f32.gmra.mxu0 %v469
    %v506 = vpop.f32.mrf.mxu0
    %v507 = vadd.f32 0.0, %v506
    %508 = vdwg.mxu0
    %v509 = vld [vmem:[%s8] sm:$0xff]
    %v510 = vld [vmem:[%s8 + $0x8] sm:$0xff]
    %v511 = vld [vmem:[%s8 + $0x10] sm:$0xff]
    %v512 = vld [vmem:[%s8 + $0x18] sm:$0xff]
    %s513 = scalar_lea.vmem %s8, 32
    %v514 = vld [vmem:[%s513] sm:$0xff]
    %v515 = vld [vmem:[%s513 + $0x8] sm:$0xff]
    %v516 = vld [vmem:[%s513 + $0x10] sm:$0xff]
    %v517 = vld [vmem:[%s513 + $0x18] sm:$0xff]
    %vm518 = vcmask 261120
    %v520 = vsel %vm518, %v489, 0
    %v523 = vsel %vm518, %v492, 0
    %v526 = vsel %vm518, %v495, 0
    %v529 = vsel %vm518, %v498, 0
    %v532 = vsel %vm518, %v501, 0
    %v535 = vsel %vm518, %v504, 0
    %v538 = vsel %vm518, %v507, 0
    %540 = vmatpush.msra.mxu0 0.0
    %541 = vmatpush.msra.mxu0 0.0
    %542 = vmatpush.msra.mxu0 0.0
    %543 = vmatpush.msra.mxu0 0.0
    %544 = vmatpush.msra.mxu0 0.0
    %545 = vmatpush.msra.mxu0 0.0
    %546 = vmatpush.msra.mxu0 0.0
    %547 = vmatpush.msra.mxu0 0.0
    %548 = vmatpush.msra.mxu0 0.0
    %549 = vmatpush.msra.mxu0 0.0
    %550 = vmatpush.msra.mxu0 0.0
    %551 = vmatpush.msra.mxu0 0.0
    %552 = vmatpush.msra.mxu0 %v517
    %553 = vmatpush.msra.mxu0 %v516
    %554 = vmatpush.msra.mxu0 %v515
    %555 = vmatpush.msra.mxu0 %v514
    %556 = vmatmul.f32.gmra.mxu0 %v520
    %v557 = vpop.f32.mrf.mxu0
    %v558 = vadd.f32 0.0, %v557
    %559 = vmatmul.f32.gmra.mxu0 %v523
    %v560 = vpop.f32.mrf.mxu0
    %v561 = vadd.f32 0.0, %v560
    %562 = vmatmul.f32.gmra.mxu0 %v526
    %v563 = vpop.f32.mrf.mxu0
    %v564 = vadd.f32 0.0, %v563
    %565 = vmatmul.f32.gmra.mxu0 %v529
    %v566 = vpop.f32.mrf.mxu0
    %v567 = vadd.f32 0.0, %v566
    %568 = vmatmul.f32.gmra.mxu0 %v532
    %v569 = vpop.f32.mrf.mxu0
    %v570 = vadd.f32 0.0, %v569
    %571 = vmatmul.f32.gmra.mxu0 %v535
    %v572 = vpop.f32.mrf.mxu0
    %v573 = vadd.f32 0.0, %v572
    %574 = vmatmul.f32.gmra.mxu0 %v538
    %v575 = vpop.f32.mrf.mxu0
    %v576 = vadd.f32 0.0, %v575
    %577 = vdwg.mxu0
    %v579 = vsel %vm518, %v430, 0
    %v582 = vsel %vm518, %v433, 0
    %v585 = vsel %vm518, %v436, 0
    %v588 = vsel %vm518, %v439, 0
    %v591 = vsel %vm518, %v442, 0
    %v594 = vsel %vm518, %v445, 0
    %v597 = vsel %vm518, %v448, 0
    %599 = vmatpush.msra.mxu0 0.0
    %600 = vmatpush.msra.mxu0 0.0
    %601 = vmatpush.msra.mxu0 0.0
    %602 = vmatpush.msra.mxu0 0.0
    %603 = vmatpush.msra.mxu0 0.0
    %604 = vmatpush.msra.mxu0 0.0
    %605 = vmatpush.msra.mxu0 0.0
    %606 = vmatpush.msra.mxu0 0.0
    %607 = vmatpush.msra.mxu0 0.0
    %608 = vmatpush.msra.mxu0 0.0
    %609 = vmatpush.msra.mxu0 0.0
    %610 = vmatpush.msra.mxu0 0.0
    %611 = vmatpush.msra.mxu0 %v512
    %612 = vmatpush.msra.mxu0 %v511
    %613 = vmatpush.msra.mxu0 %v510
    %614 = vmatpush.msra.mxu0 %v509
    %615 = vmatmul.f32.gmra.mxu0 %v579
    %v616 = vpop.f32.mrf.mxu0
    %v617 = vadd.f32 %v558, %v616
    %618 = vmatmul.f32.gmra.mxu0 %v582
    %v619 = vpop.f32.mrf.mxu0
    %v620 = vadd.f32 %v561, %v619
    %621 = vmatmul.f32.gmra.mxu0 %v585
    %v622 = vpop.f32.mrf.mxu0
    %v623 = vadd.f32 %v564, %v622
    %624 = vmatmul.f32.gmra.mxu0 %v588
    %v625 = vpop.f32.mrf.mxu0
    %v626 = vadd.f32 %v567, %v625
    %627 = vmatmul.f32.gmra.mxu0 %v591
    %v628 = vpop.f32.mrf.mxu0
    %v629 = vadd.f32 %v570, %v628
    %630 = vmatmul.f32.gmra.mxu0 %v594
    %v631 = vpop.f32.mrf.mxu0
    %v632 = vadd.f32 %v573, %v631
    %633 = vmatmul.f32.gmra.mxu0 %v597
    %v634 = vpop.f32.mrf.mxu0
    %v635 = vadd.f32 %v576, %v634
    %636 = vdwg.mxu0
    %v637 = vld [vmem:[%s10] sm:$0x3]
    %v638 = vperm.slane %v637, 0
    %v639 = vmul.f32 %v137, %v638
    %v640 = vmul.f32 %v140, %v638
    %v641 = vmul.f32 %v143, %v638
    %v642 = vmul.f32 %v146, %v638
    %v643 = vmul.f32 %v149, %v638
    %v644 = vmul.f32 %v152, %v638
    %v645 = vmul.f32 %v155, %v638
    %v646 = vperm.slane %v637, 1
    %v647 = vmul.f32 %v137, %v646
    %v648 = vmul.f32 %v140, %v646
    %v649 = vmul.f32 %v143, %v646
    %v650 = vmul.f32 %v146, %v646
    %v651 = vmul.f32 %v149, %v646
    %v652 = vmul.f32 %v152, %v646
    %v653 = vmul.f32 %v155, %v646
    %v654 = vadd.f32 %v639, %v647
    %v655 = vadd.f32 %v640, %v648
    %v656 = vadd.f32 %v641, %v649
    %v657 = vadd.f32 %v642, %v650
    %v658 = vadd.f32 %v643, %v651
    %v659 = vadd.f32 %v644, %v652
    %v660 = vadd.f32 %v645, %v653
    %v661 = vadd.f32 %v617, %v654
    %v662 = vadd.f32 %v620, %v655
    %v663 = vadd.f32 %v623, %v656
    %v664 = vadd.f32 %v626, %v657
    %v665 = vadd.f32 %v629, %v658
    %v666 = vadd.f32 %v632, %v659
    %v667 = vadd.f32 %v635, %v660
    %v668 = vld [vmem:[%s9] sm:$0x1]
    %v669 = vperm.slane %v668, 0
    %v670 = vadd.f32 %v661, %v669
    %v671 = vadd.f32 %v662, %v669
    %v672 = vadd.f32 %v663, %v669
    %v673 = vadd.f32 %v664, %v669
    %v674 = vadd.f32 %v665, %v669
    %v675 = vadd.f32 %v666, %v669
    %v676 = vadd.f32 %v667, %v669
    %v677 = vld [vmem:[%s9 + $0x1] sm:$0x1]
    %v678 = vld [vmem:[%s9 + $0x2] sm:$0x1]
    %v679 = vsel %vm518, %v670, 0.0
    %680 = vadd.xlane.f32.xlu0 %v679
    %v681 = vpop.xlane.xlu0 %680
    %v682 = vsel %vm518, %v671, 0.0
    %683 = vadd.xlane.f32.xlu0 %v682
    %v684 = vpop.xlane.xlu0 %683
    %v685 = vsel %vm518, %v672, 0.0
    %686 = vadd.xlane.f32.xlu0 %v685
    %v687 = vpop.xlane.xlu0 %686
    %v688 = vsel %vm518, %v673, 0.0
    %689 = vadd.xlane.f32.xlu0 %v688
    %v690 = vpop.xlane.xlu0 %689
    %v691 = vsel %vm518, %v674, 0.0
    %692 = vadd.xlane.f32.xlu0 %v691
    %v693 = vpop.xlane.xlu0 %692
    %v694 = vsel %vm518, %v675, 0.0
    %695 = vadd.xlane.f32.xlu0 %v694
    %v696 = vpop.xlane.xlu0 %695
    %v697 = vsel %vm518, %v676, 0.0
    %698 = vadd.xlane.f32.xlu0 %v697
    %v699 = vpop.xlane.xlu0 %698
    %v700 = vrcp.pop 32.0
    %v701 = vmul.f32 32.0, %v700
    %v702 = vsub.f32 1.0, %v701
    %v703 = vmul.f32 %v700, %v702
    %v704 = vadd.f32 %v700, %v703
    %vm705 = vweird.f32 %v700
    %v706 = vsel %vm705, %v700, %v704
    %v707 = vmul.f32 %v681, %v706
    %v708 = vmul.f32 %v684, %v706
    %v709 = vmul.f32 %v687, %v706
    %v710 = vmul.f32 %v690, %v706
    %v711 = vmul.f32 %v693, %v706
    %v712 = vmul.f32 %v696, %v706
    %v713 = vmul.f32 %v699, %v706
    %v714 = vsub.f32 %v670, %v707
    %v715 = vsub.f32 %v671, %v708
    %v716 = vsub.f32 %v672, %v709
    %v717 = vsub.f32 %v673, %v710
    %v718 = vsub.f32 %v674, %v711
    %v719 = vsub.f32 %v675, %v712
    %v720 = vsub.f32 %v676, %v713
    %v721 = vmul.f32 %v714, %v714
    %v722 = vmul.f32 %v715, %v715
    %v723 = vmul.f32 %v716, %v716
    %v724 = vmul.f32 %v717, %v717
    %v725 = vmul.f32 %v718, %v718
    %v726 = vmul.f32 %v719, %v719
    %v727 = vmul.f32 %v720, %v720
    %v728 = vsel %vm518, %v721, 0.0
    %729 = vadd.xlane.f32.xlu0 %v728
    %v730 = vpop.xlane.xlu0 %729
    %v731 = vsel %vm518, %v722, 0.0
    %732 = vadd.xlane.f32.xlu0 %v731
    %v733 = vpop.xlane.xlu0 %732
    %v734 = vsel %vm518, %v723, 0.0
    %735 = vadd.xlane.f32.xlu0 %v734
    %v736 = vpop.xlane.xlu0 %735
    %v737 = vsel %vm518, %v724, 0.0
    %738 = vadd.xlane.f32.xlu0 %v737
    %v739 = vpop.xlane.xlu0 %738
    %v740 = vsel %vm518, %v725, 0.0
    %741 = vadd.xlane.f32.xlu0 %v740
    %v742 = vpop.xlane.xlu0 %741
    %v743 = vsel %vm518, %v726, 0.0
    %744 = vadd.xlane.f32.xlu0 %v743
    %v745 = vpop.xlane.xlu0 %744
    %v746 = vsel %vm518, %v727, 0.0
    %747 = vadd.xlane.f32.xlu0 %v746
    %v748 = vpop.xlane.xlu0 %747
    %v749 = vmul.f32 %v730, %v706
    %v750 = vmul.f32 %v733, %v706
    %v751 = vmul.f32 %v736, %v706
    %v752 = vmul.f32 %v739, %v706
    %v753 = vmul.f32 %v742, %v706
    %v754 = vmul.f32 %v745, %v706
    %v755 = vmul.f32 %v748, %v706
    %v756 = vadd.f32 %v749, 1e-05
    %v757 = vadd.f32 %v750, 1e-05
    %v758 = vadd.f32 %v751, 1e-05
    %v759 = vadd.f32 %v752, 1e-05
    %v760 = vadd.f32 %v753, 1e-05
    %v761 = vadd.f32 %v754, 1e-05
    %v762 = vadd.f32 %v755, 1e-05
    %v763 = vrsqrt.pop %v756
    %v764 = vmul.f32 %v763, %v756
    %v765 = vmul.f32 %v764, %v763
    %v766 = vmul.f32 0.5, %v765
    %v767 = vsub.f32 1.5, %v766
    %v768 = vmul.f32 %v763, %v767
    %vm769 = vweird.f32 %v756
    %vm770 = vweird.f32 %v763
    %vm771 = vmor %vm769, %vm770
    %v772 = vsel %vm771, %v763, %v768
    %v773 = vrsqrt.pop %v757
    %v774 = vmul.f32 %v773, %v757
    %v775 = vmul.f32 %v774, %v773
    %v776 = vmul.f32 0.5, %v775
    %v777 = vsub.f32 1.5, %v776
    %v778 = vmul.f32 %v773, %v777
    %vm779 = vweird.f32 %v757
    %vm780 = vweird.f32 %v773
    %vm781 = vmor %vm779, %vm780
    %v782 = vsel %vm781, %v773, %v778
    %v783 = vrsqrt.pop %v758
    %v784 = vmul.f32 %v783, %v758
    %v785 = vmul.f32 %v784, %v783
    %v786 = vmul.f32 0.5, %v785
    %v787 = vsub.f32 1.5, %v786
    %v788 = vmul.f32 %v783, %v787
    %vm789 = vweird.f32 %v758
    %vm790 = vweird.f32 %v783
    %vm791 = vmor %vm789, %vm790
    %v792 = vsel %vm791, %v783, %v788
    %v793 = vrsqrt.pop %v759
    %v794 = vmul.f32 %v793, %v759
    %v795 = vmul.f32 %v794, %v793
    %v796 = vmul.f32 0.5, %v795
    %v797 = vsub.f32 1.5, %v796
    %v798 = vmul.f32 %v793, %v797
    %vm799 = vweird.f32 %v759
    %vm800 = vweird.f32 %v793
    %vm801 = vmor %vm799, %vm800
    %v802 = vsel %vm801, %v793, %v798
    %v803 = vrsqrt.pop %v760
    %v804 = vmul.f32 %v803, %v760
    %v805 = vmul.f32 %v804, %v803
    %v806 = vmul.f32 0.5, %v805
    %v807 = vsub.f32 1.5, %v806
    %v808 = vmul.f32 %v803, %v807
    %vm809 = vweird.f32 %v760
    %vm810 = vweird.f32 %v803
    %vm811 = vmor %vm809, %vm810
    %v812 = vsel %vm811, %v803, %v808
    %v813 = vrsqrt.pop %v761
    %v814 = vmul.f32 %v813, %v761
    %v815 = vmul.f32 %v814, %v813
    %v816 = vmul.f32 0.5, %v815
    %v817 = vsub.f32 1.5, %v816
    %v818 = vmul.f32 %v813, %v817
    %vm819 = vweird.f32 %v761
    %vm820 = vweird.f32 %v813
    %vm821 = vmor %vm819, %vm820
    %v822 = vsel %vm821, %v813, %v818
    %v823 = vrsqrt.pop %v762
    %v824 = vmul.f32 %v823, %v762
    %v825 = vmul.f32 %v824, %v823
    %v826 = vmul.f32 0.5, %v825
    %v827 = vsub.f32 1.5, %v826
    %v828 = vmul.f32 %v823, %v827
    %vm829 = vweird.f32 %v762
    %vm830 = vweird.f32 %v823
    %vm831 = vmor %vm829, %vm830
    %v832 = vsel %vm831, %v823, %v828
    %v833 = vmul.f32 %v714, %v772
    %v834 = vmul.f32 %v715, %v782
    %v835 = vmul.f32 %v716, %v792
    %v836 = vmul.f32 %v717, %v802
    %v837 = vmul.f32 %v718, %v812
    %v838 = vmul.f32 %v719, %v822
    %v839 = vmul.f32 %v720, %v832
    %v840 = vperm.slane %v677, 0
    %v841 = vmul.f32 %v833, %v840
    %v842 = vmul.f32 %v834, %v840
    %v843 = vmul.f32 %v835, %v840
    %v844 = vmul.f32 %v836, %v840
    %v845 = vmul.f32 %v837, %v840
    %v846 = vmul.f32 %v838, %v840
    %v847 = vmul.f32 %v839, %v840
    %v848 = vperm.slane %v678, 0
    %v849 = vadd.f32 %v841, %v848
    %v850 = vadd.f32 %v842, %v848
    %v851 = vadd.f32 %v843, %v848
    %v852 = vadd.f32 %v844, %v848
    %v853 = vadd.f32 %v845, %v848
    %v854 = vadd.f32 %v846, %v848
    %v855 = vadd.f32 %v847, %v848
    %v856 = vxor.u32 %v849, 2147483648
    %v857 = vxor.u32 %v850, 2147483648
    %v858 = vxor.u32 %v851, 2147483648
    %v859 = vxor.u32 %v852, 2147483648
    %v860 = vxor.u32 %v853, 2147483648
    %v861 = vxor.u32 %v854, 2147483648
    %v862 = vxor.u32 %v855, 2147483648
    %v863 = vmul.f32 %v856, 1.442695
    %v864 = vpow.pop %v863
    %v865 = vmul.f32 %v857, 1.442695
    %v866 = vpow.pop %v865
    %v867 = vmul.f32 %v858, 1.442695
    %v868 = vpow.pop %v867
    %v869 = vmul.f32 %v859, 1.442695
    %v870 = vpow.pop %v869
    %v871 = vmul.f32 %v860, 1.442695
    %v872 = vpow.pop %v871
    %v873 = vmul.f32 %v861, 1.442695
    %v874 = vpow.pop %v873
    %v875 = vmul.f32 %v862, 1.442695
    %v876 = vpow.pop %v875
    %v877 = vadd.f32 %v864, 1.0
    %v878 = vadd.f32 %v866, 1.0
    %v879 = vadd.f32 %v868, 1.0
    %v880 = vadd.f32 %v870, 1.0
    %v881 = vadd.f32 %v872, 1.0
    %v882 = vadd.f32 %v874, 1.0
    %v883 = vadd.f32 %v876, 1.0
    %v884 = vrcp.pop %v877
    %v885 = vmul.f32 %v877, %v884
    %v886 = vsub.f32 1.0, %v885
    %v887 = vmul.f32 %v884, %v886
    %v888 = vadd.f32 %v884, %v887
    %vm889 = vweird.f32 %v877
    %vm890 = vweird.f32 %v884
    %vm891 = vmor %vm889, %vm890
    %v892 = vsel %vm891, %v884, %v888
    %v893 = vand.u32 2147483647, %v877
    %vm894 = vcmp.eq.f32.partialorder %v893, 8.507059e+37
    %v895 = vand.u32 %v877, 2147483648
    %v896 = vor.u32 1.1754944e-38, %v895
    %v897 = vsel %vm894, %v896, %v892
    %v898 = vmul.f32 1.0, %v897
    %v899 = vrcp.pop %v878
    %v900 = vmul.f32 %v878, %v899
    %v901 = vsub.f32 1.0, %v900
    %v902 = vmul.f32 %v899, %v901
    %v903 = vadd.f32 %v899, %v902
    %vm904 = vweird.f32 %v878
    %vm905 = vweird.f32 %v899
    %vm906 = vmor %vm904, %vm905
    %v907 = vsel %vm906, %v899, %v903
    %v908 = vand.u32 2147483647, %v878
    %vm909 = vcmp.eq.f32.partialorder %v908, 8.507059e+37
    %v910 = vand.u32 %v878, 2147483648
    %v911 = vor.u32 1.1754944e-38, %v910
    %v912 = vsel %vm909, %v911, %v907
    %v913 = vmul.f32 1.0, %v912
    %v914 = vrcp.pop %v879
    %v915 = vmul.f32 %v879, %v914
    %v916 = vsub.f32 1.0, %v915
    %v917 = vmul.f32 %v914, %v916
    %v918 = vadd.f32 %v914, %v917
    %vm919 = vweird.f32 %v879
    %vm920 = vweird.f32 %v914
    %vm921 = vmor %vm919, %vm920
    %v922 = vsel %vm921, %v914, %v918
    %v923 = vand.u32 2147483647, %v879
    %vm924 = vcmp.eq.f32.partialorder %v923, 8.507059e+37
    %v925 = vand.u32 %v879, 2147483648
    %v926 = vor.u32 1.1754944e-38, %v925
    %v927 = vsel %vm924, %v926, %v922
    %v928 = vmul.f32 1.0, %v927
    %v929 = vrcp.pop %v880
    %v930 = vmul.f32 %v880, %v929
    %v931 = vsub.f32 1.0, %v930
    %v932 = vmul.f32 %v929, %v931
    %v933 = vadd.f32 %v929, %v932
    %vm934 = vweird.f32 %v880
    %vm935 = vweird.f32 %v929
    %vm936 = vmor %vm934, %vm935
    %v937 = vsel %vm936, %v929, %v933
    %v938 = vand.u32 2147483647, %v880
    %vm939 = vcmp.eq.f32.partialorder %v938, 8.507059e+37
    %v940 = vand.u32 %v880, 2147483648
    %v941 = vor.u32 1.1754944e-38, %v940
    %v942 = vsel %vm939, %v941, %v937
    %v943 = vmul.f32 1.0, %v942
    %v944 = vrcp.pop %v881
    %v945 = vmul.f32 %v881, %v944
    %v946 = vsub.f32 1.0, %v945
    %v947 = vmul.f32 %v944, %v946
    %v948 = vadd.f32 %v944, %v947
    %vm949 = vweird.f32 %v881
    %vm950 = vweird.f32 %v944
    %vm951 = vmor %vm949, %vm950
    %v952 = vsel %vm951, %v944, %v948
    %v953 = vand.u32 2147483647, %v881
    %vm954 = vcmp.eq.f32.partialorder %v953, 8.507059e+37
    %v955 = vand.u32 %v881, 2147483648
    %v956 = vor.u32 1.1754944e-38, %v955
    %v957 = vsel %vm954, %v956, %v952
    %v958 = vmul.f32 1.0, %v957
    %v959 = vrcp.pop %v882
    %v960 = vmul.f32 %v882, %v959
    %v961 = vsub.f32 1.0, %v960
    %v962 = vmul.f32 %v959, %v961
    %v963 = vadd.f32 %v959, %v962
    %vm964 = vweird.f32 %v882
    %vm965 = vweird.f32 %v959
    %vm966 = vmor %vm964, %vm965
    %v967 = vsel %vm966, %v959, %v963
    %v968 = vand.u32 2147483647, %v882
    %vm969 = vcmp.eq.f32.partialorder %v968, 8.507059e+37
    %v970 = vand.u32 %v882, 2147483648
    %v971 = vor.u32 1.1754944e-38, %v970
    %v972 = vsel %vm969, %v971, %v967
    %v973 = vmul.f32 1.0, %v972
    %v974 = vrcp.pop %v883
    %v975 = vmul.f32 %v883, %v974
    %v976 = vsub.f32 1.0, %v975
    %v977 = vmul.f32 %v974, %v976
    %v978 = vadd.f32 %v974, %v977
    %vm979 = vweird.f32 %v883
    %vm980 = vweird.f32 %v974
    %vm981 = vmor %vm979, %vm980
    %v982 = vsel %vm981, %v974, %v978
    %v983 = vand.u32 2147483647, %v883
    %vm984 = vcmp.eq.f32.partialorder %v983, 8.507059e+37
    %v985 = vand.u32 %v883, 2147483648
    %v986 = vor.u32 1.1754944e-38, %v985
    %v987 = vsel %vm984, %v986, %v982
    %v988 = vmul.f32 1.0, %v987
    %v989 = vmul.f32 %v849, %v898
    %v990 = vmul.f32 %v850, %v913
    %v991 = vmul.f32 %v851, %v928
    %v992 = vmul.f32 %v852, %v943
    %v993 = vmul.f32 %v853, %v958
    %v994 = vmul.f32 %v854, %v973
    %v995 = vmul.f32 %v855, %v988
    %s996 = scalar_lea.vmem %s8, 64
    %v997 = vld [vmem:[%s996] sm:$0xff]
    %v998 = vld [vmem:[%s996 + $0x8] sm:$0xff]
    %v999 = vld [vmem:[%s996 + $0x10] sm:$0xff]
    %v1000 = vld [vmem:[%s996 + $0x18] sm:$0xff]
    %v1001 = vld [vmem:[%s9 + $0x3] sm:$0x1]
    %v1002 = vperm.slane %v1001, 0
    %v1004 = vsel %vm518, %v989, 0
    %v1007 = vsel %vm518, %v990, 0
    %v1010 = vsel %vm518, %v991, 0
    %v1013 = vsel %vm518, %v992, 0
    %v1016 = vsel %vm518, %v993, 0
    %v1019 = vsel %vm518, %v994, 0
    %v1022 = vsel %vm518, %v995, 0
    %1024 = vmatpush.msra.mxu0 0.0
    %1025 = vmatpush.msra.mxu0 0.0
    %1026 = vmatpush.msra.mxu0 0.0
    %1027 = vmatpush.msra.mxu0 0.0
    %1028 = vmatpush.msra.mxu0 0.0
    %1029 = vmatpush.msra.mxu0 0.0
    %1030 = vmatpush.msra.mxu0 0.0
    %1031 = vmatpush.msra.mxu0 0.0
    %1032 = vmatpush.msra.mxu0 0.0
    %1033 = vmatpush.msra.mxu0 0.0
    %1034 = vmatpush.msra.mxu0 0.0
    %1035 = vmatpush.msra.mxu0 0.0
    %1036 = vmatpush.msra.mxu0 %v1000
    %1037 = vmatpush.msra.mxu0 %v999
    %1038 = vmatpush.msra.mxu0 %v998
    %1039 = vmatpush.msra.mxu0 %v997
    %1040 = vmatmul.f32.gmra.mxu0 %v1004
    %v1041 = vpop.f32.mrf.mxu0
    %v1042 = vadd.f32 %v1002, %v1041
    %1043 = vmatmul.f32.gmra.mxu0 %v1007
    %v1044 = vpop.f32.mrf.mxu0
    %v1045 = vadd.f32 %v1002, %v1044
    %1046 = vmatmul.f32.gmra.mxu0 %v1010
    %v1047 = vpop.f32.mrf.mxu0
    %v1048 = vadd.f32 %v1002, %v1047
    %1049 = vmatmul.f32.gmra.mxu0 %v1013
    %v1050 = vpop.f32.mrf.mxu0
    %v1051 = vadd.f32 %v1002, %v1050
    %1052 = vmatmul.f32.gmra.mxu0 %v1016
    %v1053 = vpop.f32.mrf.mxu0
    %v1054 = vadd.f32 %v1002, %v1053
    %1055 = vmatmul.f32.gmra.mxu0 %v1019
    %v1056 = vpop.f32.mrf.mxu0
    %v1057 = vadd.f32 %v1002, %v1056
    %1058 = vmatmul.f32.gmra.mxu0 %v1022
    %v1059 = vpop.f32.mrf.mxu0
    %v1060 = vadd.f32 %v1002, %v1059
    %1061 = vdwg.mxu0
    %v1062 = vxor.u32 %v1042, 2147483648
    %v1063 = vxor.u32 %v1045, 2147483648
    %v1064 = vxor.u32 %v1048, 2147483648
    %v1065 = vxor.u32 %v1051, 2147483648
    %v1066 = vxor.u32 %v1054, 2147483648
    %v1067 = vxor.u32 %v1057, 2147483648
    %v1068 = vxor.u32 %v1060, 2147483648
    %v1069 = vmul.f32 %v1062, 1.442695
    %v1070 = vpow.pop %v1069
    %v1071 = vmul.f32 %v1063, 1.442695
    %v1072 = vpow.pop %v1071
    %v1073 = vmul.f32 %v1064, 1.442695
    %v1074 = vpow.pop %v1073
    %v1075 = vmul.f32 %v1065, 1.442695
    %v1076 = vpow.pop %v1075
    %v1077 = vmul.f32 %v1066, 1.442695
    %v1078 = vpow.pop %v1077
    %v1079 = vmul.f32 %v1067, 1.442695
    %v1080 = vpow.pop %v1079
    %v1081 = vmul.f32 %v1068, 1.442695
    %v1082 = vpow.pop %v1081
    %v1083 = vadd.f32 %v1070, 1.0
    %v1084 = vadd.f32 %v1072, 1.0
    %v1085 = vadd.f32 %v1074, 1.0
    %v1086 = vadd.f32 %v1076, 1.0
    %v1087 = vadd.f32 %v1078, 1.0
    %v1088 = vadd.f32 %v1080, 1.0
    %v1089 = vadd.f32 %v1082, 1.0
    %v1090 = vrcp.pop %v1083
    %v1091 = vmul.f32 %v1083, %v1090
    %v1092 = vsub.f32 1.0, %v1091
    %v1093 = vmul.f32 %v1090, %v1092
    %v1094 = vadd.f32 %v1090, %v1093
    %vm1095 = vweird.f32 %v1083
    %vm1096 = vweird.f32 %v1090
    %vm1097 = vmor %vm1095, %vm1096
    %v1098 = vsel %vm1097, %v1090, %v1094
    %v1099 = vand.u32 2147483647, %v1083
    %vm1100 = vcmp.eq.f32.partialorder %v1099, 8.507059e+37
    %v1101 = vand.u32 %v1083, 2147483648
    %v1102 = vor.u32 1.1754944e-38, %v1101
    %v1103 = vsel %vm1100, %v1102, %v1098
    %v1104 = vmul.f32 1.0, %v1103
    %v1105 = vrcp.pop %v1084
    %v1106 = vmul.f32 %v1084, %v1105
    %v1107 = vsub.f32 1.0, %v1106
    %v1108 = vmul.f32 %v1105, %v1107
    %v1109 = vadd.f32 %v1105, %v1108
    %vm1110 = vweird.f32 %v1084
    %vm1111 = vweird.f32 %v1105
    %vm1112 = vmor %vm1110, %vm1111
    %v1113 = vsel %vm1112, %v1105, %v1109
    %v1114 = vand.u32 2147483647, %v1084
    %vm1115 = vcmp.eq.f32.partialorder %v1114, 8.507059e+37
    %v1116 = vand.u32 %v1084, 2147483648
    %v1117 = vor.u32 1.1754944e-38, %v1116
    %v1118 = vsel %vm1115, %v1117, %v1113
    %v1119 = vmul.f32 1.0, %v1118
    %v1120 = vrcp.pop %v1085
    %v1121 = vmul.f32 %v1085, %v1120
    %v1122 = vsub.f32 1.0, %v1121
    %v1123 = vmul.f32 %v1120, %v1122
    %v1124 = vadd.f32 %v1120, %v1123
    %vm1125 = vweird.f32 %v1085
    %vm1126 = vweird.f32 %v1120
    %vm1127 = vmor %vm1125, %vm1126
    %v1128 = vsel %vm1127, %v1120, %v1124
    %v1129 = vand.u32 2147483647, %v1085
    %vm1130 = vcmp.eq.f32.partialorder %v1129, 8.507059e+37
    %v1131 = vand.u32 %v1085, 2147483648
    %v1132 = vor.u32 1.1754944e-38, %v1131
    %v1133 = vsel %vm1130, %v1132, %v1128
    %v1134 = vmul.f32 1.0, %v1133
    %v1135 = vrcp.pop %v1086
    %v1136 = vmul.f32 %v1086, %v1135
    %v1137 = vsub.f32 1.0, %v1136
    %v1138 = vmul.f32 %v1135, %v1137
    %v1139 = vadd.f32 %v1135, %v1138
    %vm1140 = vweird.f32 %v1086
    %vm1141 = vweird.f32 %v1135
    %vm1142 = vmor %vm1140, %vm1141
    %v1143 = vsel %vm1142, %v1135, %v1139
    %v1144 = vand.u32 2147483647, %v1086
    %vm1145 = vcmp.eq.f32.partialorder %v1144, 8.507059e+37
    %v1146 = vand.u32 %v1086, 2147483648
    %v1147 = vor.u32 1.1754944e-38, %v1146
    %v1148 = vsel %vm1145, %v1147, %v1143
    %v1149 = vmul.f32 1.0, %v1148
    %v1150 = vrcp.pop %v1087
    %v1151 = vmul.f32 %v1087, %v1150
    %v1152 = vsub.f32 1.0, %v1151
    %v1153 = vmul.f32 %v1150, %v1152
    %v1154 = vadd.f32 %v1150, %v1153
    %vm1155 = vweird.f32 %v1087
    %vm1156 = vweird.f32 %v1150
    %vm1157 = vmor %vm1155, %vm1156
    %v1158 = vsel %vm1157, %v1150, %v1154
    %v1159 = vand.u32 2147483647, %v1087
    %vm1160 = vcmp.eq.f32.partialorder %v1159, 8.507059e+37
    %v1161 = vand.u32 %v1087, 2147483648
    %v1162 = vor.u32 1.1754944e-38, %v1161
    %v1163 = vsel %vm1160, %v1162, %v1158
    %v1164 = vmul.f32 1.0, %v1163
    %v1165 = vrcp.pop %v1088
    %v1166 = vmul.f32 %v1088, %v1165
    %v1167 = vsub.f32 1.0, %v1166
    %v1168 = vmul.f32 %v1165, %v1167
    %v1169 = vadd.f32 %v1165, %v1168
    %vm1170 = vweird.f32 %v1088
    %vm1171 = vweird.f32 %v1165
    %vm1172 = vmor %vm1170, %vm1171
    %v1173 = vsel %vm1172, %v1165, %v1169
    %v1174 = vand.u32 2147483647, %v1088
    %vm1175 = vcmp.eq.f32.partialorder %v1174, 8.507059e+37
    %v1176 = vand.u32 %v1088, 2147483648
    %v1177 = vor.u32 1.1754944e-38, %v1176
    %v1178 = vsel %vm1175, %v1177, %v1173
    %v1179 = vmul.f32 1.0, %v1178
    %v1180 = vrcp.pop %v1089
    %v1181 = vmul.f32 %v1089, %v1180
    %v1182 = vsub.f32 1.0, %v1181
    %v1183 = vmul.f32 %v1180, %v1182
    %v1184 = vadd.f32 %v1180, %v1183
    %vm1185 = vweird.f32 %v1089
    %vm1186 = vweird.f32 %v1180
    %vm1187 = vmor %vm1185, %vm1186
    %v1188 = vsel %vm1187, %v1180, %v1184
    %v1189 = vand.u32 2147483647, %v1089
    %vm1190 = vcmp.eq.f32.partialorder %v1189, 8.507059e+37
    %v1191 = vand.u32 %v1089, 2147483648
    %v1192 = vor.u32 1.1754944e-38, %v1191
    %v1193 = vsel %vm1190, %v1192, %v1188
    %v1194 = vmul.f32 1.0, %v1193
    %v1195 = vmul.f32 %v1042, %v1104
    %v1196 = vmul.f32 %v1045, %v1119
    %v1197 = vmul.f32 %v1048, %v1134
    %v1198 = vmul.f32 %v1051, %v1149
    %v1199 = vmul.f32 %v1054, %v1164
    %v1200 = vmul.f32 %v1057, %v1179
    %v1201 = vmul.f32 %v1060, %v1194
    %vm1202 = vcmask 457728
    %v1204 = vsel %vm1202, %v58, 0
    %1206 = vmatpush.msra.mxu0 0.0
    %1207 = vmatpush.msra.mxu0 0.0
    %1208 = vmatpush.msra.mxu0 0.0
    %1209 = vmatpush.msra.mxu0 0.0
    %1210 = vmatpush.msra.mxu0 0.0
    %1211 = vmatpush.msra.mxu0 0.0
    %1212 = vmatpush.msra.mxu0 0.0
    %1213 = vmatpush.msra.mxu0 0.0
    %1214 = vmatpush.msra.mxu0 0.0
    %1215 = vmatpush.msra.mxu0 %v1201
    %1216 = vmatpush.msra.mxu0 %v1200
    %1217 = vmatpush.msra.mxu0 %v1199
    %1218 = vmatpush.msra.mxu0 %v1198
    %1219 = vmatpush.msra.mxu0 %v1197
    %1220 = vmatpush.msra.mxu0 %v1196
    %1221 = vmatpush.msra.mxu0 %v1195
    %1222 = vmatmul.f32.gmra.mxu0 %v1204
    %v1223 = vpop.f32.mrf.mxu0
    %v1224 = vadd.f32 0.0, %v1223
    %1225 = vdwg.mxu0
    %s1226 = scalar_lea.vmem %s8, 96
    %v1227 = vld [vmem:[%s1226] sm:$0xff]
    %v1228 = vld [vmem:[%s1226 + $0x8] sm:$0xff]
    %v1229 = vld [vmem:[%s1226 + $0x10] sm:$0xff]
    %v1230 = vld [vmem:[%s1226 + $0x18] sm:$0xff]
    %s1231 = scalar_lea.vmem %s8, 128
    %v1232 = vld [vmem:[%s1231] sm:$0xff]
    %v1233 = vld [vmem:[%s1231 + $0x8] sm:$0xff]
    %v1234 = vld [vmem:[%s1231 + $0x10] sm:$0xff]
    %v1235 = vld [vmem:[%s1231 + $0x18] sm:$0xff]
    %v1237 = vsel %vm518, %v1224, 0
    %1239 = vmatpush.msra.mxu0 0.0
    %1240 = vmatpush.msra.mxu0 0.0
    %1241 = vmatpush.msra.mxu0 0.0
    %1242 = vmatpush.msra.mxu0 0.0
    %1243 = vmatpush.msra.mxu0 0.0
    %1244 = vmatpush.msra.mxu0 0.0
    %1245 = vmatpush.msra.mxu0 0.0
    %1246 = vmatpush.msra.mxu0 0.0
    %1247 = vmatpush.msra.mxu0 0.0
    %1248 = vmatpush.msra.mxu0 0.0
    %1249 = vmatpush.msra.mxu0 0.0
    %1250 = vmatpush.msra.mxu0 0.0
    %1251 = vmatpush.msra.mxu0 %v1235
    %1252 = vmatpush.msra.mxu0 %v1234
    %1253 = vmatpush.msra.mxu0 %v1233
    %1254 = vmatpush.msra.mxu0 %v1232
    %1255 = vmatmul.f32.gmra.mxu0 %v1237
    %v1256 = vpop.f32.mrf.mxu0
    %v1257 = vadd.f32 0.0, %v1256
    %1258 = vdwg.mxu0
    %v1260 = vsel %vm518, %v186, 0
    %1262 = vmatpush.msra.mxu0 0.0
    %1263 = vmatpush.msra.mxu0 0.0
    %1264 = vmatpush.msra.mxu0 0.0
    %1265 = vmatpush.msra.mxu0 0.0
    %1266 = vmatpush.msra.mxu0 0.0
    %1267 = vmatpush.msra.mxu0 0.0
    %1268 = vmatpush.msra.mxu0 0.0
    %1269 = vmatpush.msra.mxu0 0.0
    %1270 = vmatpush.msra.mxu0 0.0
    %1271 = vmatpush.msra.mxu0 0.0
    %1272 = vmatpush.msra.mxu0 0.0
    %1273 = vmatpush.msra.mxu0 0.0
    %1274 = vmatpush.msra.mxu0 %v1230
    %1275 = vmatpush.msra.mxu0 %v1229
    %1276 = vmatpush.msra.mxu0 %v1228
    %1277 = vmatpush.msra.mxu0 %v1227
    %1278 = vmatmul.f32.gmra.mxu0 %v1260
    %v1279 = vpop.f32.mrf.mxu0
    %v1280 = vadd.f32 %v1257, %v1279
    %1281 = vdwg.mxu0
    %v1282 = vld [vmem:[%s9 + $0x4] sm:$0x1]
    %v1283 = vperm.slane %v1282, 0
    %v1284 = vadd.f32 %v1280, %v1283
    %v1285 = vld [vmem:[%s9 + $0x5] sm:$0x1]
    %v1286 = vld [vmem:[%s9 + $0x6] sm:$0x1]
    %v1287 = vsel %vm518, %v1284, 0.0
    %1288 = vadd.xlane.f32.xlu0 %v1287
    %v1289 = vpop.xlane.xlu0 %1288
    %v1290 = vmul.f32 %v1289, %v706
    %v1291 = vsub.f32 %v1284, %v1290
    %v1292 = vmul.f32 %v1291, %v1291
    %v1293 = vsel %vm518, %v1292, 0.0
    %1294 = vadd.xlane.f32.xlu0 %v1293
    %v1295 = vpop.xlane.xlu0 %1294
    %v1296 = vmul.f32 %v1295, %v706
    %v1297 = vadd.f32 %v1296, 1e-05
    %v1298 = vrsqrt.pop %v1297
    %v1299 = vmul.f32 %v1298, %v1297
    %v1300 = vmul.f32 %v1299, %v1298
    %v1301 = vmul.f32 0.5, %v1300
    %v1302 = vsub.f32 1.5, %v1301
    %v1303 = vmul.f32 %v1298, %v1302
    %vm1304 = vweird.f32 %v1297
    %vm1305 = vweird.f32 %v1298
    %vm1306 = vmor %vm1304, %vm1305
    %v1307 = vsel %vm1306, %v1298, %v1303
    %v1308 = vmul.f32 %v1291, %v1307
    %v1309 = vperm.slane %v1285, 0
    %v1310 = vmul.f32 %v1308, %v1309
    %v1311 = vperm.slane %v1286, 0
    %v1312 = vadd.f32 %v1310, %v1311
    %v1313 = vxor.u32 %v1312, 2147483648
    %v1314 = vmul.f32 %v1313, 1.442695
    %v1315 = vpow.pop %v1314
    %v1316 = vadd.f32 %v1315, 1.0
    %v1317 = vrcp.pop %v1316
    %v1318 = vmul.f32 %v1316, %v1317
    %v1319 = vsub.f32 1.0, %v1318
    %v1320 = vmul.f32 %v1317, %v1319
    %v1321 = vadd.f32 %v1317, %v1320
    %vm1322 = vweird.f32 %v1316
    %vm1323 = vweird.f32 %v1317
    %vm1324 = vmor %vm1322, %vm1323
    %v1325 = vsel %vm1324, %v1317, %v1321
    %v1326 = vand.u32 2147483647, %v1316
    %vm1327 = vcmp.eq.f32.partialorder %v1326, 8.507059e+37
    %v1328 = vand.u32 %v1316, 2147483648
    %v1329 = vor.u32 1.1754944e-38, %v1328
    %v1330 = vsel %vm1327, %v1329, %v1325
    %v1331 = vmul.f32 1.0, %v1330
    %v1332 = vmul.f32 %v1312, %v1331
    %s1333 = scalar_lea.vmem %s8, 160
    %v1334 = vld [vmem:[%s1333] sm:$0xff]
    %v1335 = vld [vmem:[%s1333 + $0x8] sm:$0xff]
    %v1336 = vld [vmem:[%s1333 + $0x10] sm:$0xff]
    %v1337 = vld [vmem:[%s1333 + $0x18] sm:$0xff]
    %v1339 = vsel %vm518, %v1332, 0
    %1341 = vmatpush.msra.mxu0 0.0
    %1342 = vmatpush.msra.mxu0 0.0
    %1343 = vmatpush.msra.mxu0 0.0
    %1344 = vmatpush.msra.mxu0 0.0
    %1345 = vmatpush.msra.mxu0 0.0
    %1346 = vmatpush.msra.mxu0 0.0
    %1347 = vmatpush.msra.mxu0 0.0
    %1348 = vmatpush.msra.mxu0 0.0
    %1349 = vmatpush.msra.mxu0 0.0
    %1350 = vmatpush.msra.mxu0 0.0
    %1351 = vmatpush.msra.mxu0 0.0
    %1352 = vmatpush.msra.mxu0 0.0
    %1353 = vmatpush.msra.mxu0 %v1337
    %1354 = vmatpush.msra.mxu0 %v1336
    %1355 = vmatpush.msra.mxu0 %v1335
    %1356 = vmatpush.msra.mxu0 %v1334
    %1357 = vmatmul.f32.gmra.mxu0 %v1339
    %v1358 = vpop.f32.mrf.mxu0
    %v1359 = vadd.f32 0.0, %v1358
    %1360 = vdwg.mxu0
    %v1361 = vadd.f32 %v186, %v1359
    %v1362 = vld [vmem:[%s9 + $0x7] sm:$0x1]
    %v1363 = vperm.slane %v1362, 0
    %v1364 = vadd.f32 %v1361, %v1363
    %1365 = vmatpush.msra.mxu0 0.0
    %1366 = vmatpush.msra.mxu0 0.0
    %1367 = vmatpush.msra.mxu0 0.0
    %1368 = vmatpush.msra.mxu0 0.0
    %1369 = vmatpush.msra.mxu0 0.0
    %1370 = vmatpush.msra.mxu0 0.0
    %1371 = vmatpush.msra.mxu0 0.0
    %1372 = vmatpush.msra.mxu0 0.0
    %1373 = vmatpush.msra.mxu0 0.0
    %1374 = vmatpush.msra.mxu0 0.0
    %1375 = vmatpush.msra.mxu0 0.0
    %1376 = vmatpush.msra.mxu0 0.0
    %1377 = vmatpush.msra.mxu0 0.0
    %1378 = vmatpush.msra.mxu0 0.0
    %1379 = vmatpush.msra.mxu0 0.0
    %1380 = vmatpush.msra.mxu0 %v1364
    %1381 = vmatmul.f32.gmra.mxu0 %v392
    %v1382 = vpop.f32.mrf.mxu0
    %v1383 = vadd.f32 0.0, %v1382
    %1384 = vmatmul.f32.gmra.mxu0 %v395
    %v1385 = vpop.f32.mrf.mxu0
    %v1386 = vadd.f32 0.0, %v1385
    %1387 = vmatmul.f32.gmra.mxu0 %v398
    %v1388 = vpop.f32.mrf.mxu0
    %v1389 = vadd.f32 0.0, %v1388
    %1390 = vmatmul.f32.gmra.mxu0 %v401
    %v1391 = vpop.f32.mrf.mxu0
    %v1392 = vadd.f32 0.0, %v1391
    %1393 = vmatmul.f32.gmra.mxu0 %v404
    %v1394 = vpop.f32.mrf.mxu0
    %v1395 = vadd.f32 0.0, %v1394
    %1396 = vmatmul.f32.gmra.mxu0 %v407
    %v1397 = vpop.f32.mrf.mxu0
    %v1398 = vadd.f32 0.0, %v1397
    %1399 = vmatmul.f32.gmra.mxu0 %v410
    %v1400 = vpop.f32.mrf.mxu0
    %v1401 = vadd.f32 0.0, %v1400
    %1402 = vdwg.mxu0
    %1403 = vmatpush.msra.mxu0 0.0
    %1404 = vmatpush.msra.mxu0 0.0
    %1405 = vmatpush.msra.mxu0 0.0
    %1406 = vmatpush.msra.mxu0 0.0
    %1407 = vmatpush.msra.mxu0 0.0
    %1408 = vmatpush.msra.mxu0 0.0
    %1409 = vmatpush.msra.mxu0 0.0
    %1410 = vmatpush.msra.mxu0 0.0
    %1411 = vmatpush.msra.mxu0 0.0
    %1412 = vmatpush.msra.mxu0 0.0
    %1413 = vmatpush.msra.mxu0 0.0
    %1414 = vmatpush.msra.mxu0 0.0
    %1415 = vmatpush.msra.mxu0 0.0
    %1416 = vmatpush.msra.mxu0 0.0
    %1417 = vmatpush.msra.mxu0 0.0
    %1418 = vmatpush.msra.mxu0 %v1364
    %1419 = vmatmul.f32.gmra.mxu0 %v451
    %v1420 = vpop.f32.mrf.mxu0
    %v1421 = vadd.f32 0.0, %v1420
    %1422 = vmatmul.f32.gmra.mxu0 %v454
    %v1423 = vpop.f32.mrf.mxu0
    %v1424 = vadd.f32 0.0, %v1423
    %1425 = vmatmul.f32.gmra.mxu0 %v457
    %v1426 = vpop.f32.mrf.mxu0
    %v1427 = vadd.f32 0.0, %v1426
    %1428 = vmatmul.f32.gmra.mxu0 %v460
    %v1429 = vpop.f32.mrf.mxu0
    %v1430 = vadd.f32 0.0, %v1429
    %1431 = vmatmul.f32.gmra.mxu0 %v463
    %v1432 = vpop.f32.mrf.mxu0
    %v1433 = vadd.f32 0.0, %v1432
    %1434 = vmatmul.f32.gmra.mxu0 %v466
    %v1435 = vpop.f32.mrf.mxu0
    %v1436 = vadd.f32 0.0, %v1435
    %1437 = vmatmul.f32.gmra.mxu0 %v469
    %v1438 = vpop.f32.mrf.mxu0
    %v1439 = vadd.f32 0.0, %v1438
    %1440 = vdwg.mxu0
    %s1441 = scalar_lea.vmem %s8, 192
    %v1442 = vld [vmem:[%s1441] sm:$0xff]
    %v1443 = vld [vmem:[%s1441 + $0x8] sm:$0xff]
    %v1444 = vld [vmem:[%s1441 + $0x10] sm:$0xff]
    %v1445 = vld [vmem:[%s1441 + $0x18] sm:$0xff]
    %s1446 = scalar_lea.vmem %s8, 224
    %v1447 = vld [vmem:[%s1446] sm:$0xff]
    %v1448 = vld [vmem:[%s1446 + $0x8] sm:$0xff]
    %v1449 = vld [vmem:[%s1446 + $0x10] sm:$0xff]
    %v1450 = vld [vmem:[%s1446 + $0x18] sm:$0xff]
    %v1452 = vsel %vm518, %v1421, 0
    %v1455 = vsel %vm518, %v1424, 0
    %v1458 = vsel %vm518, %v1427, 0
    %v1461 = vsel %vm518, %v1430, 0
    %v1464 = vsel %vm518, %v1433, 0
    %v1467 = vsel %vm518, %v1436, 0
    %v1470 = vsel %vm518, %v1439, 0
    %1472 = vmatpush.msra.mxu0 0.0
    %1473 = vmatpush.msra.mxu0 0.0
    %1474 = vmatpush.msra.mxu0 0.0
    %1475 = vmatpush.msra.mxu0 0.0
    %1476 = vmatpush.msra.mxu0 0.0
    %1477 = vmatpush.msra.mxu0 0.0
    %1478 = vmatpush.msra.mxu0 0.0
    %1479 = vmatpush.msra.mxu0 0.0
    %1480 = vmatpush.msra.mxu0 0.0
    %1481 = vmatpush.msra.mxu0 0.0
    %1482 = vmatpush.msra.mxu0 0.0
    %1483 = vmatpush.msra.mxu0 0.0
    %1484 = vmatpush.msra.mxu0 %v1450
    %1485 = vmatpush.msra.mxu0 %v1449
    %1486 = vmatpush.msra.mxu0 %v1448
    %1487 = vmatpush.msra.mxu0 %v1447
    %1488 = vmatmul.f32.gmra.mxu0 %v1452
    %v1489 = vpop.f32.mrf.mxu0
    %v1490 = vadd.f32 0.0, %v1489
    %1491 = vmatmul.f32.gmra.mxu0 %v1455
    %v1492 = vpop.f32.mrf.mxu0
    %v1493 = vadd.f32 0.0, %v1492
    %1494 = vmatmul.f32.gmra.mxu0 %v1458
    %v1495 = vpop.f32.mrf.mxu0
    %v1496 = vadd.f32 0.0, %v1495
    %1497 = vmatmul.f32.gmra.mxu0 %v1461
    %v1498 = vpop.f32.mrf.mxu0
    %v1499 = vadd.f32 0.0, %v1498
    %1500 = vmatmul.f32.gmra.mxu0 %v1464
    %v1501 = vpop.f32.mrf.mxu0
    %v1502 = vadd.f32 0.0, %v1501
    %1503 = vmatmul.f32.gmra.mxu0 %v1467
    %v1504 = vpop.f32.mrf.mxu0
    %v1505 = vadd.f32 0.0, %v1504
    %1506 = vmatmul.f32.gmra.mxu0 %v1470
    %v1507 = vpop.f32.mrf.mxu0
    %v1508 = vadd.f32 0.0, %v1507
    %1509 = vdwg.mxu0
    %v1511 = vsel %vm518, %v1383, 0
    %v1514 = vsel %vm518, %v1386, 0
    %v1517 = vsel %vm518, %v1389, 0
    %v1520 = vsel %vm518, %v1392, 0
    %v1523 = vsel %vm518, %v1395, 0
    %v1526 = vsel %vm518, %v1398, 0
    %v1529 = vsel %vm518, %v1401, 0
    %1531 = vmatpush.msra.mxu0 0.0
    %1532 = vmatpush.msra.mxu0 0.0
    %1533 = vmatpush.msra.mxu0 0.0
    %1534 = vmatpush.msra.mxu0 0.0
    %1535 = vmatpush.msra.mxu0 0.0
    %1536 = vmatpush.msra.mxu0 0.0
    %1537 = vmatpush.msra.mxu0 0.0
    %1538 = vmatpush.msra.mxu0 0.0
    %1539 = vmatpush.msra.mxu0 0.0
    %1540 = vmatpush.msra.mxu0 0.0
    %1541 = vmatpush.msra.mxu0 0.0
    %1542 = vmatpush.msra.mxu0 0.0
    %1543 = vmatpush.msra.mxu0 %v1445
    %1544 = vmatpush.msra.mxu0 %v1444
    %1545 = vmatpush.msra.mxu0 %v1443
    %1546 = vmatpush.msra.mxu0 %v1442
    %1547 = vmatmul.f32.gmra.mxu0 %v1511
    %v1548 = vpop.f32.mrf.mxu0
    %v1549 = vadd.f32 %v1490, %v1548
    %1550 = vmatmul.f32.gmra.mxu0 %v1514
    %v1551 = vpop.f32.mrf.mxu0
    %v1552 = vadd.f32 %v1493, %v1551
    %1553 = vmatmul.f32.gmra.mxu0 %v1517
    %v1554 = vpop.f32.mrf.mxu0
    %v1555 = vadd.f32 %v1496, %v1554
    %1556 = vmatmul.f32.gmra.mxu0 %v1520
    %v1557 = vpop.f32.mrf.mxu0
    %v1558 = vadd.f32 %v1499, %v1557
    %1559 = vmatmul.f32.gmra.mxu0 %v1523
    %v1560 = vpop.f32.mrf.mxu0
    %v1561 = vadd.f32 %v1502, %v1560
    %1562 = vmatmul.f32.gmra.mxu0 %v1526
    %v1563 = vpop.f32.mrf.mxu0
    %v1564 = vadd.f32 %v1505, %v1563
    %1565 = vmatmul.f32.gmra.mxu0 %v1529
    %v1566 = vpop.f32.mrf.mxu0
    %v1567 = vadd.f32 %v1508, %v1566
    %1568 = vdwg.mxu0
    %s1569 = scalar_lea.vmem %s10, 2
    %v1570 = vld [vmem:[%s1569] sm:$0x3]
    %v1571 = vperm.slane %v1570, 0
    %v1572 = vmul.f32 %v137, %v1571
    %v1573 = vmul.f32 %v140, %v1571
    %v1574 = vmul.f32 %v143, %v1571
    %v1575 = vmul.f32 %v146, %v1571
    %v1576 = vmul.f32 %v149, %v1571
    %v1577 = vmul.f32 %v152, %v1571
    %v1578 = vmul.f32 %v155, %v1571
    %v1579 = vperm.slane %v1570, 1
    %v1580 = vmul.f32 %v137, %v1579
    %v1581 = vmul.f32 %v140, %v1579
    %v1582 = vmul.f32 %v143, %v1579
    %v1583 = vmul.f32 %v146, %v1579
    %v1584 = vmul.f32 %v149, %v1579
    %v1585 = vmul.f32 %v152, %v1579
    %v1586 = vmul.f32 %v155, %v1579
    %v1587 = vadd.f32 %v1572, %v1580
    %v1588 = vadd.f32 %v1573, %v1581
    %v1589 = vadd.f32 %v1574, %v1582
    %v1590 = vadd.f32 %v1575, %v1583
    %v1591 = vadd.f32 %v1576, %v1584
    %v1592 = vadd.f32 %v1577, %v1585
    %v1593 = vadd.f32 %v1578, %v1586
    %v1594 = vadd.f32 %v1549, %v1587
    %v1595 = vadd.f32 %v1552, %v1588
    %v1596 = vadd.f32 %v1555, %v1589
    %v1597 = vadd.f32 %v1558, %v1590
    %v1598 = vadd.f32 %v1561, %v1591
    %v1599 = vadd.f32 %v1564, %v1592
    %v1600 = vadd.f32 %v1567, %v1593
    %v1601 = vld [vmem:[%s9 + $0x8] sm:$0x1]
    %v1602 = vperm.slane %v1601, 0
    %v1603 = vadd.f32 %v1594, %v1602
    %v1604 = vadd.f32 %v1595, %v1602
    %v1605 = vadd.f32 %v1596, %v1602
    %v1606 = vadd.f32 %v1597, %v1602
    %v1607 = vadd.f32 %v1598, %v1602
    %v1608 = vadd.f32 %v1599, %v1602
    %v1609 = vadd.f32 %v1600, %v1602
    %v1610 = vld [vmem:[%s9 + $0x9] sm:$0x1]
    %v1611 = vld [vmem:[%s9 + $0xa] sm:$0x1]
    %v1612 = vsel %vm518, %v1603, 0.0
    %1613 = vadd.xlane.f32.xlu0 %v1612
    %v1614 = vpop.xlane.xlu0 %1613
    %v1615 = vsel %vm518, %v1604, 0.0
    %1616 = vadd.xlane.f32.xlu0 %v1615
    %v1617 = vpop.xlane.xlu0 %1616
    %v1618 = vsel %vm518, %v1605, 0.0
    %1619 = vadd.xlane.f32.xlu0 %v1618
    %v1620 = vpop.xlane.xlu0 %1619
    %v1621 = vsel %vm518, %v1606, 0.0
    %1622 = vadd.xlane.f32.xlu0 %v1621
    %v1623 = vpop.xlane.xlu0 %1622
    %v1624 = vsel %vm518, %v1607, 0.0
    %1625 = vadd.xlane.f32.xlu0 %v1624
    %v1626 = vpop.xlane.xlu0 %1625
    %v1627 = vsel %vm518, %v1608, 0.0
    %1628 = vadd.xlane.f32.xlu0 %v1627
    %v1629 = vpop.xlane.xlu0 %1628
    %v1630 = vsel %vm518, %v1609, 0.0
    %1631 = vadd.xlane.f32.xlu0 %v1630
    %v1632 = vpop.xlane.xlu0 %1631
    %v1633 = vmul.f32 %v1614, %v706
    %v1634 = vmul.f32 %v1617, %v706
    %v1635 = vmul.f32 %v1620, %v706
    %v1636 = vmul.f32 %v1623, %v706
    %v1637 = vmul.f32 %v1626, %v706
    %v1638 = vmul.f32 %v1629, %v706
    %v1639 = vmul.f32 %v1632, %v706
    %v1640 = vsub.f32 %v1603, %v1633
    %v1641 = vsub.f32 %v1604, %v1634
    %v1642 = vsub.f32 %v1605, %v1635
    %v1643 = vsub.f32 %v1606, %v1636
    %v1644 = vsub.f32 %v1607, %v1637
    %v1645 = vsub.f32 %v1608, %v1638
    %v1646 = vsub.f32 %v1609, %v1639
    %v1647 = vmul.f32 %v1640, %v1640
    %v1648 = vmul.f32 %v1641, %v1641
    %v1649 = vmul.f32 %v1642, %v1642
    %v1650 = vmul.f32 %v1643, %v1643
    %v1651 = vmul.f32 %v1644, %v1644
    %v1652 = vmul.f32 %v1645, %v1645
    %v1653 = vmul.f32 %v1646, %v1646
    %v1654 = vsel %vm518, %v1647, 0.0
    %1655 = vadd.xlane.f32.xlu0 %v1654
    %v1656 = vpop.xlane.xlu0 %1655
    %v1657 = vsel %vm518, %v1648, 0.0
    %1658 = vadd.xlane.f32.xlu0 %v1657
    %v1659 = vpop.xlane.xlu0 %1658
    %v1660 = vsel %vm518, %v1649, 0.0
    %1661 = vadd.xlane.f32.xlu0 %v1660
    %v1662 = vpop.xlane.xlu0 %1661
    %v1663 = vsel %vm518, %v1650, 0.0
    %1664 = vadd.xlane.f32.xlu0 %v1663
    %v1665 = vpop.xlane.xlu0 %1664
    %v1666 = vsel %vm518, %v1651, 0.0
    %1667 = vadd.xlane.f32.xlu0 %v1666
    %v1668 = vpop.xlane.xlu0 %1667
    %v1669 = vsel %vm518, %v1652, 0.0
    %1670 = vadd.xlane.f32.xlu0 %v1669
    %v1671 = vpop.xlane.xlu0 %1670
    %v1672 = vsel %vm518, %v1653, 0.0
    %1673 = vadd.xlane.f32.xlu0 %v1672
    %v1674 = vpop.xlane.xlu0 %1673
    %v1675 = vmul.f32 %v1656, %v706
    %v1676 = vmul.f32 %v1659, %v706
    %v1677 = vmul.f32 %v1662, %v706
    %v1678 = vmul.f32 %v1665, %v706
    %v1679 = vmul.f32 %v1668, %v706
    %v1680 = vmul.f32 %v1671, %v706
    %v1681 = vmul.f32 %v1674, %v706
    %v1682 = vadd.f32 %v1675, 1e-05
    %v1683 = vadd.f32 %v1676, 1e-05
    %v1684 = vadd.f32 %v1677, 1e-05
    %v1685 = vadd.f32 %v1678, 1e-05
    %v1686 = vadd.f32 %v1679, 1e-05
    %v1687 = vadd.f32 %v1680, 1e-05
    %v1688 = vadd.f32 %v1681, 1e-05
    %v1689 = vrsqrt.pop %v1682
    %v1690 = vmul.f32 %v1689, %v1682
    %v1691 = vmul.f32 %v1690, %v1689
    %v1692 = vmul.f32 0.5, %v1691
    %v1693 = vsub.f32 1.5, %v1692
    %v1694 = vmul.f32 %v1689, %v1693
    %vm1695 = vweird.f32 %v1682
    %vm1696 = vweird.f32 %v1689
    %vm1697 = vmor %vm1695, %vm1696
    %v1698 = vsel %vm1697, %v1689, %v1694
    %v1699 = vrsqrt.pop %v1683
    %v1700 = vmul.f32 %v1699, %v1683
    %v1701 = vmul.f32 %v1700, %v1699
    %v1702 = vmul.f32 0.5, %v1701
    %v1703 = vsub.f32 1.5, %v1702
    %v1704 = vmul.f32 %v1699, %v1703
    %vm1705 = vweird.f32 %v1683
    %vm1706 = vweird.f32 %v1699
    %vm1707 = vmor %vm1705, %vm1706
    %v1708 = vsel %vm1707, %v1699, %v1704
    %v1709 = vrsqrt.pop %v1684
    %v1710 = vmul.f32 %v1709, %v1684
    %v1711 = vmul.f32 %v1710, %v1709
    %v1712 = vmul.f32 0.5, %v1711
    %v1713 = vsub.f32 1.5, %v1712
    %v1714 = vmul.f32 %v1709, %v1713
    %vm1715 = vweird.f32 %v1684
    %vm1716 = vweird.f32 %v1709
    %vm1717 = vmor %vm1715, %vm1716
    %v1718 = vsel %vm1717, %v1709, %v1714
    %v1719 = vrsqrt.pop %v1685
    %v1720 = vmul.f32 %v1719, %v1685
    %v1721 = vmul.f32 %v1720, %v1719
    %v1722 = vmul.f32 0.5, %v1721
    %v1723 = vsub.f32 1.5, %v1722
    %v1724 = vmul.f32 %v1719, %v1723
    %vm1725 = vweird.f32 %v1685
    %vm1726 = vweird.f32 %v1719
    %vm1727 = vmor %vm1725, %vm1726
    %v1728 = vsel %vm1727, %v1719, %v1724
    %v1729 = vrsqrt.pop %v1686
    %v1730 = vmul.f32 %v1729, %v1686
    %v1731 = vmul.f32 %v1730, %v1729
    %v1732 = vmul.f32 0.5, %v1731
    %v1733 = vsub.f32 1.5, %v1732
    %v1734 = vmul.f32 %v1729, %v1733
    %vm1735 = vweird.f32 %v1686
    %vm1736 = vweird.f32 %v1729
    %vm1737 = vmor %vm1735, %vm1736
    %v1738 = vsel %vm1737, %v1729, %v1734
    %v1739 = vrsqrt.pop %v1687
    %v1740 = vmul.f32 %v1739, %v1687
    %v1741 = vmul.f32 %v1740, %v1739
    %v1742 = vmul.f32 0.5, %v1741
    %v1743 = vsub.f32 1.5, %v1742
    %v1744 = vmul.f32 %v1739, %v1743
    %vm1745 = vweird.f32 %v1687
    %vm1746 = vweird.f32 %v1739
    %vm1747 = vmor %vm1745, %vm1746
    %v1748 = vsel %vm1747, %v1739, %v1744
    %v1749 = vrsqrt.pop %v1688
    %v1750 = vmul.f32 %v1749, %v1688
    %v1751 = vmul.f32 %v1750, %v1749
    %v1752 = vmul.f32 0.5, %v1751
    %v1753 = vsub.f32 1.5, %v1752
    %v1754 = vmul.f32 %v1749, %v1753
    %vm1755 = vweird.f32 %v1688
    %vm1756 = vweird.f32 %v1749
    %vm1757 = vmor %vm1755, %vm1756
    %v1758 = vsel %vm1757, %v1749, %v1754
    %v1759 = vmul.f32 %v1640, %v1698
    %v1760 = vmul.f32 %v1641, %v1708
    %v1761 = vmul.f32 %v1642, %v1718
    %v1762 = vmul.f32 %v1643, %v1728
    %v1763 = vmul.f32 %v1644, %v1738
    %v1764 = vmul.f32 %v1645, %v1748
    %v1765 = vmul.f32 %v1646, %v1758
    %v1766 = vperm.slane %v1610, 0
    %v1767 = vmul.f32 %v1759, %v1766
    %v1768 = vmul.f32 %v1760, %v1766
    %v1769 = vmul.f32 %v1761, %v1766
    %v1770 = vmul.f32 %v1762, %v1766
    %v1771 = vmul.f32 %v1763, %v1766
    %v1772 = vmul.f32 %v1764, %v1766
    %v1773 = vmul.f32 %v1765, %v1766
    %v1774 = vperm.slane %v1611, 0
    %v1775 = vadd.f32 %v1767, %v1774
    %v1776 = vadd.f32 %v1768, %v1774
    %v1777 = vadd.f32 %v1769, %v1774
    %v1778 = vadd.f32 %v1770, %v1774
    %v1779 = vadd.f32 %v1771, %v1774
    %v1780 = vadd.f32 %v1772, %v1774
    %v1781 = vadd.f32 %v1773, %v1774
    %v1782 = vxor.u32 %v1775, 2147483648
    %v1783 = vxor.u32 %v1776, 2147483648
    %v1784 = vxor.u32 %v1777, 2147483648
    %v1785 = vxor.u32 %v1778, 2147483648
    %v1786 = vxor.u32 %v1779, 2147483648
    %v1787 = vxor.u32 %v1780, 2147483648
    %v1788 = vxor.u32 %v1781, 2147483648
    %v1789 = vmul.f32 %v1782, 1.442695
    %v1790 = vpow.pop %v1789
    %v1791 = vmul.f32 %v1783, 1.442695
    %v1792 = vpow.pop %v1791
    %v1793 = vmul.f32 %v1784, 1.442695
    %v1794 = vpow.pop %v1793
    %v1795 = vmul.f32 %v1785, 1.442695
    %v1796 = vpow.pop %v1795
    %v1797 = vmul.f32 %v1786, 1.442695
    %v1798 = vpow.pop %v1797
    %v1799 = vmul.f32 %v1787, 1.442695
    %v1800 = vpow.pop %v1799
    %v1801 = vmul.f32 %v1788, 1.442695
    %v1802 = vpow.pop %v1801
    %v1803 = vadd.f32 %v1790, 1.0
    %v1804 = vadd.f32 %v1792, 1.0
    %v1805 = vadd.f32 %v1794, 1.0
    %v1806 = vadd.f32 %v1796, 1.0
    %v1807 = vadd.f32 %v1798, 1.0
    %v1808 = vadd.f32 %v1800, 1.0
    %v1809 = vadd.f32 %v1802, 1.0
    %v1810 = vrcp.pop %v1803
    %v1811 = vmul.f32 %v1803, %v1810
    %v1812 = vsub.f32 1.0, %v1811
    %v1813 = vmul.f32 %v1810, %v1812
    %v1814 = vadd.f32 %v1810, %v1813
    %vm1815 = vweird.f32 %v1803
    %vm1816 = vweird.f32 %v1810
    %vm1817 = vmor %vm1815, %vm1816
    %v1818 = vsel %vm1817, %v1810, %v1814
    %v1819 = vand.u32 2147483647, %v1803
    %vm1820 = vcmp.eq.f32.partialorder %v1819, 8.507059e+37
    %v1821 = vand.u32 %v1803, 2147483648
    %v1822 = vor.u32 1.1754944e-38, %v1821
    %v1823 = vsel %vm1820, %v1822, %v1818
    %v1824 = vmul.f32 1.0, %v1823
    %v1825 = vrcp.pop %v1804
    %v1826 = vmul.f32 %v1804, %v1825
    %v1827 = vsub.f32 1.0, %v1826
    %v1828 = vmul.f32 %v1825, %v1827
    %v1829 = vadd.f32 %v1825, %v1828
    %vm1830 = vweird.f32 %v1804
    %vm1831 = vweird.f32 %v1825
    %vm1832 = vmor %vm1830, %vm1831
    %v1833 = vsel %vm1832, %v1825, %v1829
    %v1834 = vand.u32 2147483647, %v1804
    %vm1835 = vcmp.eq.f32.partialorder %v1834, 8.507059e+37
    %v1836 = vand.u32 %v1804, 2147483648
    %v1837 = vor.u32 1.1754944e-38, %v1836
    %v1838 = vsel %vm1835, %v1837, %v1833
    %v1839 = vmul.f32 1.0, %v1838
    %v1840 = vrcp.pop %v1805
    %v1841 = vmul.f32 %v1805, %v1840
    %v1842 = vsub.f32 1.0, %v1841
    %v1843 = vmul.f32 %v1840, %v1842
    %v1844 = vadd.f32 %v1840, %v1843
    %vm1845 = vweird.f32 %v1805
    %vm1846 = vweird.f32 %v1840
    %vm1847 = vmor %vm1845, %vm1846
    %v1848 = vsel %vm1847, %v1840, %v1844
    %v1849 = vand.u32 2147483647, %v1805
    %vm1850 = vcmp.eq.f32.partialorder %v1849, 8.507059e+37
    %v1851 = vand.u32 %v1805, 2147483648
    %v1852 = vor.u32 1.1754944e-38, %v1851
    %v1853 = vsel %vm1850, %v1852, %v1848
    %v1854 = vmul.f32 1.0, %v1853
    %v1855 = vrcp.pop %v1806
    %v1856 = vmul.f32 %v1806, %v1855
    %v1857 = vsub.f32 1.0, %v1856
    %v1858 = vmul.f32 %v1855, %v1857
    %v1859 = vadd.f32 %v1855, %v1858
    %vm1860 = vweird.f32 %v1806
    %vm1861 = vweird.f32 %v1855
    %vm1862 = vmor %vm1860, %vm1861
    %v1863 = vsel %vm1862, %v1855, %v1859
    %v1864 = vand.u32 2147483647, %v1806
    %vm1865 = vcmp.eq.f32.partialorder %v1864, 8.507059e+37
    %v1866 = vand.u32 %v1806, 2147483648
    %v1867 = vor.u32 1.1754944e-38, %v1866
    %v1868 = vsel %vm1865, %v1867, %v1863
    %v1869 = vmul.f32 1.0, %v1868
    %v1870 = vrcp.pop %v1807
    %v1871 = vmul.f32 %v1807, %v1870
    %v1872 = vsub.f32 1.0, %v1871
    %v1873 = vmul.f32 %v1870, %v1872
    %v1874 = vadd.f32 %v1870, %v1873
    %vm1875 = vweird.f32 %v1807
    %vm1876 = vweird.f32 %v1870
    %vm1877 = vmor %vm1875, %vm1876
    %v1878 = vsel %vm1877, %v1870, %v1874
    %v1879 = vand.u32 2147483647, %v1807
    %vm1880 = vcmp.eq.f32.partialorder %v1879, 8.507059e+37
    %v1881 = vand.u32 %v1807, 2147483648
    %v1882 = vor.u32 1.1754944e-38, %v1881
    %v1883 = vsel %vm1880, %v1882, %v1878
    %v1884 = vmul.f32 1.0, %v1883
    %v1885 = vrcp.pop %v1808
    %v1886 = vmul.f32 %v1808, %v1885
    %v1887 = vsub.f32 1.0, %v1886
    %v1888 = vmul.f32 %v1885, %v1887
    %v1889 = vadd.f32 %v1885, %v1888
    %vm1890 = vweird.f32 %v1808
    %vm1891 = vweird.f32 %v1885
    %vm1892 = vmor %vm1890, %vm1891
    %v1893 = vsel %vm1892, %v1885, %v1889
    %v1894 = vand.u32 2147483647, %v1808
    %vm1895 = vcmp.eq.f32.partialorder %v1894, 8.507059e+37
    %v1896 = vand.u32 %v1808, 2147483648
    %v1897 = vor.u32 1.1754944e-38, %v1896
    %v1898 = vsel %vm1895, %v1897, %v1893
    %v1899 = vmul.f32 1.0, %v1898
    %v1900 = vrcp.pop %v1809
    %v1901 = vmul.f32 %v1809, %v1900
    %v1902 = vsub.f32 1.0, %v1901
    %v1903 = vmul.f32 %v1900, %v1902
    %v1904 = vadd.f32 %v1900, %v1903
    %vm1905 = vweird.f32 %v1809
    %vm1906 = vweird.f32 %v1900
    %vm1907 = vmor %vm1905, %vm1906
    %v1908 = vsel %vm1907, %v1900, %v1904
    %v1909 = vand.u32 2147483647, %v1809
    %vm1910 = vcmp.eq.f32.partialorder %v1909, 8.507059e+37
    %v1911 = vand.u32 %v1809, 2147483648
    %v1912 = vor.u32 1.1754944e-38, %v1911
    %v1913 = vsel %vm1910, %v1912, %v1908
    %v1914 = vmul.f32 1.0, %v1913
    %v1915 = vmul.f32 %v1775, %v1824
    %v1916 = vmul.f32 %v1776, %v1839
    %v1917 = vmul.f32 %v1777, %v1854
    %v1918 = vmul.f32 %v1778, %v1869
    %v1919 = vmul.f32 %v1779, %v1884
    %v1920 = vmul.f32 %v1780, %v1899
    %v1921 = vmul.f32 %v1781, %v1914
    %s1922 = scalar_lea.vmem %s8, 256
    %v1923 = vld [vmem:[%s1922] sm:$0xff]
    %v1924 = vld [vmem:[%s1922 + $0x8] sm:$0xff]
    %v1925 = vld [vmem:[%s1922 + $0x10] sm:$0xff]
    %v1926 = vld [vmem:[%s1922 + $0x18] sm:$0xff]
    %v1927 = vld [vmem:[%s9 + $0xb] sm:$0x1]
    %v1928 = vperm.slane %v1927, 0
    %v1930 = vsel %vm518, %v1915, 0
    %v1933 = vsel %vm518, %v1916, 0
    %v1936 = vsel %vm518, %v1917, 0
    %v1939 = vsel %vm518, %v1918, 0
    %v1942 = vsel %vm518, %v1919, 0
    %v1945 = vsel %vm518, %v1920, 0
    %v1948 = vsel %vm518, %v1921, 0
    %1950 = vmatpush.msra.mxu0 0.0
    %1951 = vmatpush.msra.mxu0 0.0
    %1952 = vmatpush.msra.mxu0 0.0
    %1953 = vmatpush.msra.mxu0 0.0
    %1954 = vmatpush.msra.mxu0 0.0
    %1955 = vmatpush.msra.mxu0 0.0
    %1956 = vmatpush.msra.mxu0 0.0
    %1957 = vmatpush.msra.mxu0 0.0
    %1958 = vmatpush.msra.mxu0 0.0
    %1959 = vmatpush.msra.mxu0 0.0
    %1960 = vmatpush.msra.mxu0 0.0
    %1961 = vmatpush.msra.mxu0 0.0
    %1962 = vmatpush.msra.mxu0 %v1926
    %1963 = vmatpush.msra.mxu0 %v1925
    %1964 = vmatpush.msra.mxu0 %v1924
    %1965 = vmatpush.msra.mxu0 %v1923
    %1966 = vmatmul.f32.gmra.mxu0 %v1930
    %v1967 = vpop.f32.mrf.mxu0
    %v1968 = vadd.f32 %v1928, %v1967
    %1969 = vmatmul.f32.gmra.mxu0 %v1933
    %v1970 = vpop.f32.mrf.mxu0
    %v1971 = vadd.f32 %v1928, %v1970
    %1972 = vmatmul.f32.gmra.mxu0 %v1936
    %v1973 = vpop.f32.mrf.mxu0
    %v1974 = vadd.f32 %v1928, %v1973
    %1975 = vmatmul.f32.gmra.mxu0 %v1939
    %v1976 = vpop.f32.mrf.mxu0
    %v1977 = vadd.f32 %v1928, %v1976
    %1978 = vmatmul.f32.gmra.mxu0 %v1942
    %v1979 = vpop.f32.mrf.mxu0
    %v1980 = vadd.f32 %v1928, %v1979
    %1981 = vmatmul.f32.gmra.mxu0 %v1945
    %v1982 = vpop.f32.mrf.mxu0
    %v1983 = vadd.f32 %v1928, %v1982
    %1984 = vmatmul.f32.gmra.mxu0 %v1948
    %v1985 = vpop.f32.mrf.mxu0
    %v1986 = vadd.f32 %v1928, %v1985
    %1987 = vdwg.mxu0
    %v1988 = vxor.u32 %v1968, 2147483648
    %v1989 = vxor.u32 %v1971, 2147483648
    %v1990 = vxor.u32 %v1974, 2147483648
    %v1991 = vxor.u32 %v1977, 2147483648
    %v1992 = vxor.u32 %v1980, 2147483648
    %v1993 = vxor.u32 %v1983, 2147483648
    %v1994 = vxor.u32 %v1986, 2147483648
    %v1995 = vmul.f32 %v1988, 1.442695
    %v1996 = vpow.pop %v1995
    %v1997 = vmul.f32 %v1989, 1.442695
    %v1998 = vpow.pop %v1997
    %v1999 = vmul.f32 %v1990, 1.442695
    %v2000 = vpow.pop %v1999
    %v2001 = vmul.f32 %v1991, 1.442695
    %v2002 = vpow.pop %v2001
    %v2003 = vmul.f32 %v1992, 1.442695
    %v2004 = vpow.pop %v2003
    %v2005 = vmul.f32 %v1993, 1.442695
    %v2006 = vpow.pop %v2005
    %v2007 = vmul.f32 %v1994, 1.442695
    %v2008 = vpow.pop %v2007
    %v2009 = vadd.f32 %v1996, 1.0
    %v2010 = vadd.f32 %v1998, 1.0
    %v2011 = vadd.f32 %v2000, 1.0
    %v2012 = vadd.f32 %v2002, 1.0
    %v2013 = vadd.f32 %v2004, 1.0
    %v2014 = vadd.f32 %v2006, 1.0
    %v2015 = vadd.f32 %v2008, 1.0
    %v2016 = vrcp.pop %v2009
    %v2017 = vmul.f32 %v2009, %v2016
    %v2018 = vsub.f32 1.0, %v2017
    %v2019 = vmul.f32 %v2016, %v2018
    %v2020 = vadd.f32 %v2016, %v2019
    %vm2021 = vweird.f32 %v2009
    %vm2022 = vweird.f32 %v2016
    %vm2023 = vmor %vm2021, %vm2022
    %v2024 = vsel %vm2023, %v2016, %v2020
    %v2025 = vand.u32 2147483647, %v2009
    %vm2026 = vcmp.eq.f32.partialorder %v2025, 8.507059e+37
    %v2027 = vand.u32 %v2009, 2147483648
    %v2028 = vor.u32 1.1754944e-38, %v2027
    %v2029 = vsel %vm2026, %v2028, %v2024
    %v2030 = vmul.f32 1.0, %v2029
    %v2031 = vrcp.pop %v2010
    %v2032 = vmul.f32 %v2010, %v2031
    %v2033 = vsub.f32 1.0, %v2032
    %v2034 = vmul.f32 %v2031, %v2033
    %v2035 = vadd.f32 %v2031, %v2034
    %vm2036 = vweird.f32 %v2010
    %vm2037 = vweird.f32 %v2031
    %vm2038 = vmor %vm2036, %vm2037
    %v2039 = vsel %vm2038, %v2031, %v2035
    %v2040 = vand.u32 2147483647, %v2010
    %vm2041 = vcmp.eq.f32.partialorder %v2040, 8.507059e+37
    %v2042 = vand.u32 %v2010, 2147483648
    %v2043 = vor.u32 1.1754944e-38, %v2042
    %v2044 = vsel %vm2041, %v2043, %v2039
    %v2045 = vmul.f32 1.0, %v2044
    %v2046 = vrcp.pop %v2011
    %v2047 = vmul.f32 %v2011, %v2046
    %v2048 = vsub.f32 1.0, %v2047
    %v2049 = vmul.f32 %v2046, %v2048
    %v2050 = vadd.f32 %v2046, %v2049
    %vm2051 = vweird.f32 %v2011
    %vm2052 = vweird.f32 %v2046
    %vm2053 = vmor %vm2051, %vm2052
    %v2054 = vsel %vm2053, %v2046, %v2050
    %v2055 = vand.u32 2147483647, %v2011
    %vm2056 = vcmp.eq.f32.partialorder %v2055, 8.507059e+37
    %v2057 = vand.u32 %v2011, 2147483648
    %v2058 = vor.u32 1.1754944e-38, %v2057
    %v2059 = vsel %vm2056, %v2058, %v2054
    %v2060 = vmul.f32 1.0, %v2059
    %v2061 = vrcp.pop %v2012
    %v2062 = vmul.f32 %v2012, %v2061
    %v2063 = vsub.f32 1.0, %v2062
    %v2064 = vmul.f32 %v2061, %v2063
    %v2065 = vadd.f32 %v2061, %v2064
    %vm2066 = vweird.f32 %v2012
    %vm2067 = vweird.f32 %v2061
    %vm2068 = vmor %vm2066, %vm2067
    %v2069 = vsel %vm2068, %v2061, %v2065
    %v2070 = vand.u32 2147483647, %v2012
    %vm2071 = vcmp.eq.f32.partialorder %v2070, 8.507059e+37
    %v2072 = vand.u32 %v2012, 2147483648
    %v2073 = vor.u32 1.1754944e-38, %v2072
    %v2074 = vsel %vm2071, %v2073, %v2069
    %v2075 = vmul.f32 1.0, %v2074
    %v2076 = vrcp.pop %v2013
    %v2077 = vmul.f32 %v2013, %v2076
    %v2078 = vsub.f32 1.0, %v2077
    %v2079 = vmul.f32 %v2076, %v2078
    %v2080 = vadd.f32 %v2076, %v2079
    %vm2081 = vweird.f32 %v2013
    %vm2082 = vweird.f32 %v2076
    %vm2083 = vmor %vm2081, %vm2082
    %v2084 = vsel %vm2083, %v2076, %v2080
    %v2085 = vand.u32 2147483647, %v2013
    %vm2086 = vcmp.eq.f32.partialorder %v2085, 8.507059e+37
    %v2087 = vand.u32 %v2013, 2147483648
    %v2088 = vor.u32 1.1754944e-38, %v2087
    %v2089 = vsel %vm2086, %v2088, %v2084
    %v2090 = vmul.f32 1.0, %v2089
    %v2091 = vrcp.pop %v2014
    %v2092 = vmul.f32 %v2014, %v2091
    %v2093 = vsub.f32 1.0, %v2092
    %v2094 = vmul.f32 %v2091, %v2093
    %v2095 = vadd.f32 %v2091, %v2094
    %vm2096 = vweird.f32 %v2014
    %vm2097 = vweird.f32 %v2091
    %vm2098 = vmor %vm2096, %vm2097
    %v2099 = vsel %vm2098, %v2091, %v2095
    %v2100 = vand.u32 2147483647, %v2014
    %vm2101 = vcmp.eq.f32.partialorder %v2100, 8.507059e+37
    %v2102 = vand.u32 %v2014, 2147483648
    %v2103 = vor.u32 1.1754944e-38, %v2102
    %v2104 = vsel %vm2101, %v2103, %v2099
    %v2105 = vmul.f32 1.0, %v2104
    %v2106 = vrcp.pop %v2015
    %v2107 = vmul.f32 %v2015, %v2106
    %v2108 = vsub.f32 1.0, %v2107
    %v2109 = vmul.f32 %v2106, %v2108
    %v2110 = vadd.f32 %v2106, %v2109
    %vm2111 = vweird.f32 %v2015
    %vm2112 = vweird.f32 %v2106
    %vm2113 = vmor %vm2111, %vm2112
    %v2114 = vsel %vm2113, %v2106, %v2110
    %v2115 = vand.u32 2147483647, %v2015
    %vm2116 = vcmp.eq.f32.partialorder %v2115, 8.507059e+37
    %v2117 = vand.u32 %v2015, 2147483648
    %v2118 = vor.u32 1.1754944e-38, %v2117
    %v2119 = vsel %vm2116, %v2118, %v2114
    %v2120 = vmul.f32 1.0, %v2119
    %v2121 = vmul.f32 %v1968, %v2030
    %v2122 = vmul.f32 %v1971, %v2045
    %v2123 = vmul.f32 %v1974, %v2060
    %v2124 = vmul.f32 %v1977, %v2075
    %v2125 = vmul.f32 %v1980, %v2090
    %v2126 = vmul.f32 %v1983, %v2105
    %v2127 = vmul.f32 %v1986, %v2120
    %2128 = vmatpush.msra.mxu0 0.0
    %2129 = vmatpush.msra.mxu0 0.0
    %2130 = vmatpush.msra.mxu0 0.0
    %2131 = vmatpush.msra.mxu0 0.0
    %2132 = vmatpush.msra.mxu0 0.0
    %2133 = vmatpush.msra.mxu0 0.0
    %2134 = vmatpush.msra.mxu0 0.0
    %2135 = vmatpush.msra.mxu0 0.0
    %2136 = vmatpush.msra.mxu0 0.0
    %2137 = vmatpush.msra.mxu0 %v2127
    %2138 = vmatpush.msra.mxu0 %v2126
    %2139 = vmatpush.msra.mxu0 %v2125
    %2140 = vmatpush.msra.mxu0 %v2124
    %2141 = vmatpush.msra.mxu0 %v2123
    %2142 = vmatpush.msra.mxu0 %v2122
    %2143 = vmatpush.msra.mxu0 %v2121
    %2144 = vmatmul.f32.gmra.mxu0 %v1204
    %v2145 = vpop.f32.mrf.mxu0
    %v2146 = vadd.f32 0.0, %v2145
    %2147 = vdwg.mxu0
    %s2148 = scalar_lea.vmem %s8, 288
    %v2149 = vld [vmem:[%s2148] sm:$0xff]
    %v2150 = vld [vmem:[%s2148 + $0x8] sm:$0xff]
    %v2151 = vld [vmem:[%s2148 + $0x10] sm:$0xff]
    %v2152 = vld [vmem:[%s2148 + $0x18] sm:$0xff]
    %s2153 = scalar_lea.vmem %s8, 320
    %v2154 = vld [vmem:[%s2153] sm:$0xff]
    %v2155 = vld [vmem:[%s2153 + $0x8] sm:$0xff]
    %v2156 = vld [vmem:[%s2153 + $0x10] sm:$0xff]
    %v2157 = vld [vmem:[%s2153 + $0x18] sm:$0xff]
    %v2159 = vsel %vm518, %v2146, 0
    %2161 = vmatpush.msra.mxu0 0.0
    %2162 = vmatpush.msra.mxu0 0.0
    %2163 = vmatpush.msra.mxu0 0.0
    %2164 = vmatpush.msra.mxu0 0.0
    %2165 = vmatpush.msra.mxu0 0.0
    %2166 = vmatpush.msra.mxu0 0.0
    %2167 = vmatpush.msra.mxu0 0.0
    %2168 = vmatpush.msra.mxu0 0.0
    %2169 = vmatpush.msra.mxu0 0.0
    %2170 = vmatpush.msra.mxu0 0.0
    %2171 = vmatpush.msra.mxu0 0.0
    %2172 = vmatpush.msra.mxu0 0.0
    %2173 = vmatpush.msra.mxu0 %v2157
    %2174 = vmatpush.msra.mxu0 %v2156
    %2175 = vmatpush.msra.mxu0 %v2155
    %2176 = vmatpush.msra.mxu0 %v2154
    %2177 = vmatmul.f32.gmra.mxu0 %v2159
    %v2178 = vpop.f32.mrf.mxu0
    %v2179 = vadd.f32 0.0, %v2178
    %2180 = vdwg.mxu0
    %v2182 = vsel %vm518, %v1364, 0
    %2184 = vmatpush.msra.mxu0 0.0
    %2185 = vmatpush.msra.mxu0 0.0
    %2186 = vmatpush.msra.mxu0 0.0
    %2187 = vmatpush.msra.mxu0 0.0
    %2188 = vmatpush.msra.mxu0 0.0
    %2189 = vmatpush.msra.mxu0 0.0
    %2190 = vmatpush.msra.mxu0 0.0
    %2191 = vmatpush.msra.mxu0 0.0
    %2192 = vmatpush.msra.mxu0 0.0
    %2193 = vmatpush.msra.mxu0 0.0
    %2194 = vmatpush.msra.mxu0 0.0
    %2195 = vmatpush.msra.mxu0 0.0
    %2196 = vmatpush.msra.mxu0 %v2152
    %2197 = vmatpush.msra.mxu0 %v2151
    %2198 = vmatpush.msra.mxu0 %v2150
    %2199 = vmatpush.msra.mxu0 %v2149
    %2200 = vmatmul.f32.gmra.mxu0 %v2182
    %v2201 = vpop.f32.mrf.mxu0
    %v2202 = vadd.f32 %v2179, %v2201
    %2203 = vdwg.mxu0
    %v2204 = vld [vmem:[%s9 + $0xc] sm:$0x1]
    %v2205 = vperm.slane %v2204, 0
    %v2206 = vadd.f32 %v2202, %v2205
    %v2207 = vld [vmem:[%s9 + $0xd] sm:$0x1]
    %v2208 = vld [vmem:[%s9 + $0xe] sm:$0x1]
    %v2209 = vsel %vm518, %v2206, 0.0
    %2210 = vadd.xlane.f32.xlu0 %v2209
    %v2211 = vpop.xlane.xlu0 %2210
    %v2212 = vmul.f32 %v2211, %v706
    %v2213 = vsub.f32 %v2206, %v2212
    %v2214 = vmul.f32 %v2213, %v2213
    %v2215 = vsel %vm518, %v2214, 0.0
    %2216 = vadd.xlane.f32.xlu0 %v2215
    %v2217 = vpop.xlane.xlu0 %2216
    %v2218 = vmul.f32 %v2217, %v706
    %v2219 = vadd.f32 %v2218, 1e-05
    %v2220 = vrsqrt.pop %v2219
    %v2221 = vmul.f32 %v2220, %v2219
    %v2222 = vmul.f32 %v2221, %v2220
    %v2223 = vmul.f32 0.5, %v2222
    %v2224 = vsub.f32 1.5, %v2223
    %v2225 = vmul.f32 %v2220, %v2224
    %vm2226 = vweird.f32 %v2219
    %vm2227 = vweird.f32 %v2220
    %vm2228 = vmor %vm2226, %vm2227
    %v2229 = vsel %vm2228, %v2220, %v2225
    %v2230 = vmul.f32 %v2213, %v2229
    %v2231 = vperm.slane %v2207, 0
    %v2232 = vmul.f32 %v2230, %v2231
    %v2233 = vperm.slane %v2208, 0
    %v2234 = vadd.f32 %v2232, %v2233
    %v2235 = vxor.u32 %v2234, 2147483648
    %v2236 = vmul.f32 %v2235, 1.442695
    %v2237 = vpow.pop %v2236
    %v2238 = vadd.f32 %v2237, 1.0
    %v2239 = vrcp.pop %v2238
    %v2240 = vmul.f32 %v2238, %v2239
    %v2241 = vsub.f32 1.0, %v2240
    %v2242 = vmul.f32 %v2239, %v2241
    %v2243 = vadd.f32 %v2239, %v2242
    %vm2244 = vweird.f32 %v2238
    %vm2245 = vweird.f32 %v2239
    %vm2246 = vmor %vm2244, %vm2245
    %v2247 = vsel %vm2246, %v2239, %v2243
    %v2248 = vand.u32 2147483647, %v2238
    %vm2249 = vcmp.eq.f32.partialorder %v2248, 8.507059e+37
    %v2250 = vand.u32 %v2238, 2147483648
    %v2251 = vor.u32 1.1754944e-38, %v2250
    %v2252 = vsel %vm2249, %v2251, %v2247
    %v2253 = vmul.f32 1.0, %v2252
    %v2254 = vmul.f32 %v2234, %v2253
    %s2255 = scalar_lea.vmem %s8, 352
    %v2256 = vld [vmem:[%s2255] sm:$0xff]
    %v2257 = vld [vmem:[%s2255 + $0x8] sm:$0xff]
    %v2258 = vld [vmem:[%s2255 + $0x10] sm:$0xff]
    %v2259 = vld [vmem:[%s2255 + $0x18] sm:$0xff]
    %v2261 = vsel %vm518, %v2254, 0
    %2263 = vmatpush.msra.mxu0 0.0
    %2264 = vmatpush.msra.mxu0 0.0
    %2265 = vmatpush.msra.mxu0 0.0
    %2266 = vmatpush.msra.mxu0 0.0
    %2267 = vmatpush.msra.mxu0 0.0
    %2268 = vmatpush.msra.mxu0 0.0
    %2269 = vmatpush.msra.mxu0 0.0
    %2270 = vmatpush.msra.mxu0 0.0
    %2271 = vmatpush.msra.mxu0 0.0
    %2272 = vmatpush.msra.mxu0 0.0
    %2273 = vmatpush.msra.mxu0 0.0
    %2274 = vmatpush.msra.mxu0 0.0
    %2275 = vmatpush.msra.mxu0 %v2259
    %2276 = vmatpush.msra.mxu0 %v2258
    %2277 = vmatpush.msra.mxu0 %v2257
    %2278 = vmatpush.msra.mxu0 %v2256
    %2279 = vmatmul.f32.gmra.mxu0 %v2261
    %v2280 = vpop.f32.mrf.mxu0
    %v2281 = vadd.f32 0.0, %v2280
    %2282 = vdwg.mxu0
    %v2283 = vadd.f32 %v1364, %v2281
    %v2284 = vld [vmem:[%s9 + $0xf] sm:$0x1]
    %v2285 = vperm.slane %v2284, 0
    %v2286 = vadd.f32 %v2283, %v2285
    %2287 = vmatpush.msra.mxu0 0.0
    %2288 = vmatpush.msra.mxu0 0.0
    %2289 = vmatpush.msra.mxu0 0.0
    %2290 = vmatpush.msra.mxu0 0.0
    %2291 = vmatpush.msra.mxu0 0.0
    %2292 = vmatpush.msra.mxu0 0.0
    %2293 = vmatpush.msra.mxu0 0.0
    %2294 = vmatpush.msra.mxu0 0.0
    %2295 = vmatpush.msra.mxu0 0.0
    %2296 = vmatpush.msra.mxu0 0.0
    %2297 = vmatpush.msra.mxu0 0.0
    %2298 = vmatpush.msra.mxu0 0.0
    %2299 = vmatpush.msra.mxu0 0.0
    %2300 = vmatpush.msra.mxu0 0.0
    %2301 = vmatpush.msra.mxu0 0.0
    %2302 = vmatpush.msra.mxu0 %v2286
    %2303 = vmatmul.f32.gmra.mxu0 %v392
    %v2304 = vpop.f32.mrf.mxu0
    %v2305 = vadd.f32 0.0, %v2304
    %2306 = vmatmul.f32.gmra.mxu0 %v395
    %v2307 = vpop.f32.mrf.mxu0
    %v2308 = vadd.f32 0.0, %v2307
    %2309 = vmatmul.f32.gmra.mxu0 %v398
    %v2310 = vpop.f32.mrf.mxu0
    %v2311 = vadd.f32 0.0, %v2310
    %2312 = vmatmul.f32.gmra.mxu0 %v401
    %v2313 = vpop.f32.mrf.mxu0
    %v2314 = vadd.f32 0.0, %v2313
    %2315 = vmatmul.f32.gmra.mxu0 %v404
    %v2316 = vpop.f32.mrf.mxu0
    %v2317 = vadd.f32 0.0, %v2316
    %2318 = vmatmul.f32.gmra.mxu0 %v407
    %v2319 = vpop.f32.mrf.mxu0
    %v2320 = vadd.f32 0.0, %v2319
    %2321 = vmatmul.f32.gmra.mxu0 %v410
    %v2322 = vpop.f32.mrf.mxu0
    %v2323 = vadd.f32 0.0, %v2322
    %2324 = vdwg.mxu0
    %2325 = vmatpush.msra.mxu0 0.0
    %2326 = vmatpush.msra.mxu0 0.0
    %2327 = vmatpush.msra.mxu0 0.0
    %2328 = vmatpush.msra.mxu0 0.0
    %2329 = vmatpush.msra.mxu0 0.0
    %2330 = vmatpush.msra.mxu0 0.0
    %2331 = vmatpush.msra.mxu0 0.0
    %2332 = vmatpush.msra.mxu0 0.0
    %2333 = vmatpush.msra.mxu0 0.0
    %2334 = vmatpush.msra.mxu0 0.0
    %2335 = vmatpush.msra.mxu0 0.0
    %2336 = vmatpush.msra.mxu0 0.0
    %2337 = vmatpush.msra.mxu0 0.0
    %2338 = vmatpush.msra.mxu0 0.0
    %2339 = vmatpush.msra.mxu0 0.0
    %2340 = vmatpush.msra.mxu0 %v2286
    %2341 = vmatmul.f32.gmra.mxu0 %v451
    %v2342 = vpop.f32.mrf.mxu0
    %v2343 = vadd.f32 0.0, %v2342
    %2344 = vmatmul.f32.gmra.mxu0 %v454
    %v2345 = vpop.f32.mrf.mxu0
    %v2346 = vadd.f32 0.0, %v2345
    %2347 = vmatmul.f32.gmra.mxu0 %v457
    %v2348 = vpop.f32.mrf.mxu0
    %v2349 = vadd.f32 0.0, %v2348
    %2350 = vmatmul.f32.gmra.mxu0 %v460
    %v2351 = vpop.f32.mrf.mxu0
    %v2352 = vadd.f32 0.0, %v2351
    %2353 = vmatmul.f32.gmra.mxu0 %v463
    %v2354 = vpop.f32.mrf.mxu0
    %v2355 = vadd.f32 0.0, %v2354
    %2356 = vmatmul.f32.gmra.mxu0 %v466
    %v2357 = vpop.f32.mrf.mxu0
    %v2358 = vadd.f32 0.0, %v2357
    %2359 = vmatmul.f32.gmra.mxu0 %v469
    %v2360 = vpop.f32.mrf.mxu0
    %v2361 = vadd.f32 0.0, %v2360
    %2362 = vdwg.mxu0
    %s2363 = scalar_lea.vmem %s8, 384
    %v2364 = vld [vmem:[%s2363] sm:$0xff]
    %v2365 = vld [vmem:[%s2363 + $0x8] sm:$0xff]
    %v2366 = vld [vmem:[%s2363 + $0x10] sm:$0xff]
    %v2367 = vld [vmem:[%s2363 + $0x18] sm:$0xff]
    %s2368 = scalar_lea.vmem %s8, 416
    %v2369 = vld [vmem:[%s2368] sm:$0xff]
    %v2370 = vld [vmem:[%s2368 + $0x8] sm:$0xff]
    %v2371 = vld [vmem:[%s2368 + $0x10] sm:$0xff]
    %v2372 = vld [vmem:[%s2368 + $0x18] sm:$0xff]
    %v2374 = vsel %vm518, %v2343, 0
    %v2377 = vsel %vm518, %v2346, 0
    %v2380 = vsel %vm518, %v2349, 0
    %v2383 = vsel %vm518, %v2352, 0
    %v2386 = vsel %vm518, %v2355, 0
    %v2389 = vsel %vm518, %v2358, 0
    %v2392 = vsel %vm518, %v2361, 0
    %2394 = vmatpush.msra.mxu0 0.0
    %2395 = vmatpush.msra.mxu0 0.0
    %2396 = vmatpush.msra.mxu0 0.0
    %2397 = vmatpush.msra.mxu0 0.0
    %2398 = vmatpush.msra.mxu0 0.0
    %2399 = vmatpush.msra.mxu0 0.0
    %2400 = vmatpush.msra.mxu0 0.0
    %2401 = vmatpush.msra.mxu0 0.0
    %2402 = vmatpush.msra.mxu0 0.0
    %2403 = vmatpush.msra.mxu0 0.0
    %2404 = vmatpush.msra.mxu0 0.0
    %2405 = vmatpush.msra.mxu0 0.0
    %2406 = vmatpush.msra.mxu0 %v2372
    %2407 = vmatpush.msra.mxu0 %v2371
    %2408 = vmatpush.msra.mxu0 %v2370
    %2409 = vmatpush.msra.mxu0 %v2369
    %2410 = vmatmul.f32.gmra.mxu0 %v2374
    %v2411 = vpop.f32.mrf.mxu0
    %v2412 = vadd.f32 0.0, %v2411
    %2413 = vmatmul.f32.gmra.mxu0 %v2377
    %v2414 = vpop.f32.mrf.mxu0
    %v2415 = vadd.f32 0.0, %v2414
    %2416 = vmatmul.f32.gmra.mxu0 %v2380
    %v2417 = vpop.f32.mrf.mxu0
    %v2418 = vadd.f32 0.0, %v2417
    %2419 = vmatmul.f32.gmra.mxu0 %v2383
    %v2420 = vpop.f32.mrf.mxu0
    %v2421 = vadd.f32 0.0, %v2420
    %2422 = vmatmul.f32.gmra.mxu0 %v2386
    %v2423 = vpop.f32.mrf.mxu0
    %v2424 = vadd.f32 0.0, %v2423
    %2425 = vmatmul.f32.gmra.mxu0 %v2389
    %v2426 = vpop.f32.mrf.mxu0
    %v2427 = vadd.f32 0.0, %v2426
    %2428 = vmatmul.f32.gmra.mxu0 %v2392
    %v2429 = vpop.f32.mrf.mxu0
    %v2430 = vadd.f32 0.0, %v2429
    %2431 = vdwg.mxu0
    %v2433 = vsel %vm518, %v2305, 0
    %v2436 = vsel %vm518, %v2308, 0
    %v2439 = vsel %vm518, %v2311, 0
    %v2442 = vsel %vm518, %v2314, 0
    %v2445 = vsel %vm518, %v2317, 0
    %v2448 = vsel %vm518, %v2320, 0
    %v2451 = vsel %vm518, %v2323, 0
    %2453 = vmatpush.msra.mxu0 0.0
    %2454 = vmatpush.msra.mxu0 0.0
    %2455 = vmatpush.msra.mxu0 0.0
    %2456 = vmatpush.msra.mxu0 0.0
    %2457 = vmatpush.msra.mxu0 0.0
    %2458 = vmatpush.msra.mxu0 0.0
    %2459 = vmatpush.msra.mxu0 0.0
    %2460 = vmatpush.msra.mxu0 0.0
    %2461 = vmatpush.msra.mxu0 0.0
    %2462 = vmatpush.msra.mxu0 0.0
    %2463 = vmatpush.msra.mxu0 0.0
    %2464 = vmatpush.msra.mxu0 0.0
    %2465 = vmatpush.msra.mxu0 %v2367
    %2466 = vmatpush.msra.mxu0 %v2366
    %2467 = vmatpush.msra.mxu0 %v2365
    %2468 = vmatpush.msra.mxu0 %v2364
    %2469 = vmatmul.f32.gmra.mxu0 %v2433
    %v2470 = vpop.f32.mrf.mxu0
    %v2471 = vadd.f32 %v2412, %v2470
    %2472 = vmatmul.f32.gmra.mxu0 %v2436
    %v2473 = vpop.f32.mrf.mxu0
    %v2474 = vadd.f32 %v2415, %v2473
    %2475 = vmatmul.f32.gmra.mxu0 %v2439
    %v2476 = vpop.f32.mrf.mxu0
    %v2477 = vadd.f32 %v2418, %v2476
    %2478 = vmatmul.f32.gmra.mxu0 %v2442
    %v2479 = vpop.f32.mrf.mxu0
    %v2480 = vadd.f32 %v2421, %v2479
    %2481 = vmatmul.f32.gmra.mxu0 %v2445
    %v2482 = vpop.f32.mrf.mxu0
    %v2483 = vadd.f32 %v2424, %v2482
    %2484 = vmatmul.f32.gmra.mxu0 %v2448
    %v2485 = vpop.f32.mrf.mxu0
    %v2486 = vadd.f32 %v2427, %v2485
    %2487 = vmatmul.f32.gmra.mxu0 %v2451
    %v2488 = vpop.f32.mrf.mxu0
    %v2489 = vadd.f32 %v2430, %v2488
    %2490 = vdwg.mxu0
    %s2491 = scalar_lea.vmem %s10, 4
    %v2492 = vld [vmem:[%s2491] sm:$0x3]
    %v2493 = vperm.slane %v2492, 0
    %v2494 = vmul.f32 %v137, %v2493
    %v2495 = vmul.f32 %v140, %v2493
    %v2496 = vmul.f32 %v143, %v2493
    %v2497 = vmul.f32 %v146, %v2493
    %v2498 = vmul.f32 %v149, %v2493
    %v2499 = vmul.f32 %v152, %v2493
    %v2500 = vmul.f32 %v155, %v2493
    %v2501 = vperm.slane %v2492, 1
    %v2502 = vmul.f32 %v137, %v2501
    %v2503 = vmul.f32 %v140, %v2501
    %v2504 = vmul.f32 %v143, %v2501
    %v2505 = vmul.f32 %v146, %v2501
    %v2506 = vmul.f32 %v149, %v2501
    %v2507 = vmul.f32 %v152, %v2501
    %v2508 = vmul.f32 %v155, %v2501
    %v2509 = vadd.f32 %v2494, %v2502
    %v2510 = vadd.f32 %v2495, %v2503
    %v2511 = vadd.f32 %v2496, %v2504
    %v2512 = vadd.f32 %v2497, %v2505
    %v2513 = vadd.f32 %v2498, %v2506
    %v2514 = vadd.f32 %v2499, %v2507
    %v2515 = vadd.f32 %v2500, %v2508
    %v2516 = vadd.f32 %v2471, %v2509
    %v2517 = vadd.f32 %v2474, %v2510
    %v2518 = vadd.f32 %v2477, %v2511
    %v2519 = vadd.f32 %v2480, %v2512
    %v2520 = vadd.f32 %v2483, %v2513
    %v2521 = vadd.f32 %v2486, %v2514
    %v2522 = vadd.f32 %v2489, %v2515
    %v2523 = vld [vmem:[%s9 + $0x10] sm:$0x1]
    %v2524 = vperm.slane %v2523, 0
    %v2525 = vadd.f32 %v2516, %v2524
    %v2526 = vadd.f32 %v2517, %v2524
    %v2527 = vadd.f32 %v2518, %v2524
    %v2528 = vadd.f32 %v2519, %v2524
    %v2529 = vadd.f32 %v2520, %v2524
    %v2530 = vadd.f32 %v2521, %v2524
    %v2531 = vadd.f32 %v2522, %v2524
    %v2532 = vld [vmem:[%s9 + $0x11] sm:$0x1]
    %v2533 = vld [vmem:[%s9 + $0x12] sm:$0x1]
    %v2534 = vsel %vm518, %v2525, 0.0
    %2535 = vadd.xlane.f32.xlu0 %v2534
    %v2536 = vpop.xlane.xlu0 %2535
    %v2537 = vsel %vm518, %v2526, 0.0
    %2538 = vadd.xlane.f32.xlu0 %v2537
    %v2539 = vpop.xlane.xlu0 %2538
    %v2540 = vsel %vm518, %v2527, 0.0
    %2541 = vadd.xlane.f32.xlu0 %v2540
    %v2542 = vpop.xlane.xlu0 %2541
    %v2543 = vsel %vm518, %v2528, 0.0
    %2544 = vadd.xlane.f32.xlu0 %v2543
    %v2545 = vpop.xlane.xlu0 %2544
    %v2546 = vsel %vm518, %v2529, 0.0
    %2547 = vadd.xlane.f32.xlu0 %v2546
    %v2548 = vpop.xlane.xlu0 %2547
    %v2549 = vsel %vm518, %v2530, 0.0
    %2550 = vadd.xlane.f32.xlu0 %v2549
    %v2551 = vpop.xlane.xlu0 %2550
    %v2552 = vsel %vm518, %v2531, 0.0
    %2553 = vadd.xlane.f32.xlu0 %v2552
    %v2554 = vpop.xlane.xlu0 %2553
    %v2555 = vmul.f32 %v2536, %v706
    %v2556 = vmul.f32 %v2539, %v706
    %v2557 = vmul.f32 %v2542, %v706
    %v2558 = vmul.f32 %v2545, %v706
    %v2559 = vmul.f32 %v2548, %v706
    %v2560 = vmul.f32 %v2551, %v706
    %v2561 = vmul.f32 %v2554, %v706
    %v2562 = vsub.f32 %v2525, %v2555
    %v2563 = vsub.f32 %v2526, %v2556
    %v2564 = vsub.f32 %v2527, %v2557
    %v2565 = vsub.f32 %v2528, %v2558
    %v2566 = vsub.f32 %v2529, %v2559
    %v2567 = vsub.f32 %v2530, %v2560
    %v2568 = vsub.f32 %v2531, %v2561
    %v2569 = vmul.f32 %v2562, %v2562
    %v2570 = vmul.f32 %v2563, %v2563
    %v2571 = vmul.f32 %v2564, %v2564
    %v2572 = vmul.f32 %v2565, %v2565
    %v2573 = vmul.f32 %v2566, %v2566
    %v2574 = vmul.f32 %v2567, %v2567
    %v2575 = vmul.f32 %v2568, %v2568
    %v2576 = vsel %vm518, %v2569, 0.0
    %2577 = vadd.xlane.f32.xlu0 %v2576
    %v2578 = vpop.xlane.xlu0 %2577
    %v2579 = vsel %vm518, %v2570, 0.0
    %2580 = vadd.xlane.f32.xlu0 %v2579
    %v2581 = vpop.xlane.xlu0 %2580
    %v2582 = vsel %vm518, %v2571, 0.0
    %2583 = vadd.xlane.f32.xlu0 %v2582
    %v2584 = vpop.xlane.xlu0 %2583
    %v2585 = vsel %vm518, %v2572, 0.0
    %2586 = vadd.xlane.f32.xlu0 %v2585
    %v2587 = vpop.xlane.xlu0 %2586
    %v2588 = vsel %vm518, %v2573, 0.0
    %2589 = vadd.xlane.f32.xlu0 %v2588
    %v2590 = vpop.xlane.xlu0 %2589
    %v2591 = vsel %vm518, %v2574, 0.0
    %2592 = vadd.xlane.f32.xlu0 %v2591
    %v2593 = vpop.xlane.xlu0 %2592
    %v2594 = vsel %vm518, %v2575, 0.0
    %2595 = vadd.xlane.f32.xlu0 %v2594
    %v2596 = vpop.xlane.xlu0 %2595
    %v2597 = vmul.f32 %v2578, %v706
    %v2598 = vmul.f32 %v2581, %v706
    %v2599 = vmul.f32 %v2584, %v706
    %v2600 = vmul.f32 %v2587, %v706
    %v2601 = vmul.f32 %v2590, %v706
    %v2602 = vmul.f32 %v2593, %v706
    %v2603 = vmul.f32 %v2596, %v706
    %v2604 = vadd.f32 %v2597, 1e-05
    %v2605 = vadd.f32 %v2598, 1e-05
    %v2606 = vadd.f32 %v2599, 1e-05
    %v2607 = vadd.f32 %v2600, 1e-05
    %v2608 = vadd.f32 %v2601, 1e-05
    %v2609 = vadd.f32 %v2602, 1e-05
    %v2610 = vadd.f32 %v2603, 1e-05
    %v2611 = vrsqrt.pop %v2604
    %v2612 = vmul.f32 %v2611, %v2604
    %v2613 = vmul.f32 %v2612, %v2611
    %v2614 = vmul.f32 0.5, %v2613
    %v2615 = vsub.f32 1.5, %v2614
    %v2616 = vmul.f32 %v2611, %v2615
    %vm2617 = vweird.f32 %v2604
    %vm2618 = vweird.f32 %v2611
    %vm2619 = vmor %vm2617, %vm2618
    %v2620 = vsel %vm2619, %v2611, %v2616
    %v2621 = vrsqrt.pop %v2605
    %v2622 = vmul.f32 %v2621, %v2605
    %v2623 = vmul.f32 %v2622, %v2621
    %v2624 = vmul.f32 0.5, %v2623
    %v2625 = vsub.f32 1.5, %v2624
    %v2626 = vmul.f32 %v2621, %v2625
    %vm2627 = vweird.f32 %v2605
    %vm2628 = vweird.f32 %v2621
    %vm2629 = vmor %vm2627, %vm2628
    %v2630 = vsel %vm2629, %v2621, %v2626
    %v2631 = vrsqrt.pop %v2606
    %v2632 = vmul.f32 %v2631, %v2606
    %v2633 = vmul.f32 %v2632, %v2631
    %v2634 = vmul.f32 0.5, %v2633
    %v2635 = vsub.f32 1.5, %v2634
    %v2636 = vmul.f32 %v2631, %v2635
    %vm2637 = vweird.f32 %v2606
    %vm2638 = vweird.f32 %v2631
    %vm2639 = vmor %vm2637, %vm2638
    %v2640 = vsel %vm2639, %v2631, %v2636
    %v2641 = vrsqrt.pop %v2607
    %v2642 = vmul.f32 %v2641, %v2607
    %v2643 = vmul.f32 %v2642, %v2641
    %v2644 = vmul.f32 0.5, %v2643
    %v2645 = vsub.f32 1.5, %v2644
    %v2646 = vmul.f32 %v2641, %v2645
    %vm2647 = vweird.f32 %v2607
    %vm2648 = vweird.f32 %v2641
    %vm2649 = vmor %vm2647, %vm2648
    %v2650 = vsel %vm2649, %v2641, %v2646
    %v2651 = vrsqrt.pop %v2608
    %v2652 = vmul.f32 %v2651, %v2608
    %v2653 = vmul.f32 %v2652, %v2651
    %v2654 = vmul.f32 0.5, %v2653
    %v2655 = vsub.f32 1.5, %v2654
    %v2656 = vmul.f32 %v2651, %v2655
    %vm2657 = vweird.f32 %v2608
    %vm2658 = vweird.f32 %v2651
    %vm2659 = vmor %vm2657, %vm2658
    %v2660 = vsel %vm2659, %v2651, %v2656
    %v2661 = vrsqrt.pop %v2609
    %v2662 = vmul.f32 %v2661, %v2609
    %v2663 = vmul.f32 %v2662, %v2661
    %v2664 = vmul.f32 0.5, %v2663
    %v2665 = vsub.f32 1.5, %v2664
    %v2666 = vmul.f32 %v2661, %v2665
    %vm2667 = vweird.f32 %v2609
    %vm2668 = vweird.f32 %v2661
    %vm2669 = vmor %vm2667, %vm2668
    %v2670 = vsel %vm2669, %v2661, %v2666
    %v2671 = vrsqrt.pop %v2610
    %v2672 = vmul.f32 %v2671, %v2610
    %v2673 = vmul.f32 %v2672, %v2671
    %v2674 = vmul.f32 0.5, %v2673
    %v2675 = vsub.f32 1.5, %v2674
    %v2676 = vmul.f32 %v2671, %v2675
    %vm2677 = vweird.f32 %v2610
    %vm2678 = vweird.f32 %v2671
    %vm2679 = vmor %vm2677, %vm2678
    %v2680 = vsel %vm2679, %v2671, %v2676
    %v2681 = vmul.f32 %v2562, %v2620
    %v2682 = vmul.f32 %v2563, %v2630
    %v2683 = vmul.f32 %v2564, %v2640
    %v2684 = vmul.f32 %v2565, %v2650
    %v2685 = vmul.f32 %v2566, %v2660
    %v2686 = vmul.f32 %v2567, %v2670
    %v2687 = vmul.f32 %v2568, %v2680
    %v2688 = vperm.slane %v2532, 0
    %v2689 = vmul.f32 %v2681, %v2688
    %v2690 = vmul.f32 %v2682, %v2688
    %v2691 = vmul.f32 %v2683, %v2688
    %v2692 = vmul.f32 %v2684, %v2688
    %v2693 = vmul.f32 %v2685, %v2688
    %v2694 = vmul.f32 %v2686, %v2688
    %v2695 = vmul.f32 %v2687, %v2688
    %v2696 = vperm.slane %v2533, 0
    %v2697 = vadd.f32 %v2689, %v2696
    %v2698 = vadd.f32 %v2690, %v2696
    %v2699 = vadd.f32 %v2691, %v2696
    %v2700 = vadd.f32 %v2692, %v2696
    %v2701 = vadd.f32 %v2693, %v2696
    %v2702 = vadd.f32 %v2694, %v2696
    %v2703 = vadd.f32 %v2695, %v2696
    %v2704 = vxor.u32 %v2697, 2147483648
    %v2705 = vxor.u32 %v2698, 2147483648
    %v2706 = vxor.u32 %v2699, 2147483648
    %v2707 = vxor.u32 %v2700, 2147483648
    %v2708 = vxor.u32 %v2701, 2147483648
    %v2709 = vxor.u32 %v2702, 2147483648
    %v2710 = vxor.u32 %v2703, 2147483648
    %v2711 = vmul.f32 %v2704, 1.442695
    %v2712 = vpow.pop %v2711
    %v2713 = vmul.f32 %v2705, 1.442695
    %v2714 = vpow.pop %v2713
    %v2715 = vmul.f32 %v2706, 1.442695
    %v2716 = vpow.pop %v2715
    %v2717 = vmul.f32 %v2707, 1.442695
    %v2718 = vpow.pop %v2717
    %v2719 = vmul.f32 %v2708, 1.442695
    %v2720 = vpow.pop %v2719
    %v2721 = vmul.f32 %v2709, 1.442695
    %v2722 = vpow.pop %v2721
    %v2723 = vmul.f32 %v2710, 1.442695
    %v2724 = vpow.pop %v2723
    %v2725 = vadd.f32 %v2712, 1.0
    %v2726 = vadd.f32 %v2714, 1.0
    %v2727 = vadd.f32 %v2716, 1.0
    %v2728 = vadd.f32 %v2718, 1.0
    %v2729 = vadd.f32 %v2720, 1.0
    %v2730 = vadd.f32 %v2722, 1.0
    %v2731 = vadd.f32 %v2724, 1.0
    %v2732 = vrcp.pop %v2725
    %v2733 = vmul.f32 %v2725, %v2732
    %v2734 = vsub.f32 1.0, %v2733
    %v2735 = vmul.f32 %v2732, %v2734
    %v2736 = vadd.f32 %v2732, %v2735
    %vm2737 = vweird.f32 %v2725
    %vm2738 = vweird.f32 %v2732
    %vm2739 = vmor %vm2737, %vm2738
    %v2740 = vsel %vm2739, %v2732, %v2736
    %v2741 = vand.u32 2147483647, %v2725
    %vm2742 = vcmp.eq.f32.partialorder %v2741, 8.507059e+37
    %v2743 = vand.u32 %v2725, 2147483648
    %v2744 = vor.u32 1.1754944e-38, %v2743
    %v2745 = vsel %vm2742, %v2744, %v2740
    %v2746 = vmul.f32 1.0, %v2745
    %v2747 = vrcp.pop %v2726
    %v2748 = vmul.f32 %v2726, %v2747
    %v2749 = vsub.f32 1.0, %v2748
    %v2750 = vmul.f32 %v2747, %v2749
    %v2751 = vadd.f32 %v2747, %v2750
    %vm2752 = vweird.f32 %v2726
    %vm2753 = vweird.f32 %v2747
    %vm2754 = vmor %vm2752, %vm2753
    %v2755 = vsel %vm2754, %v2747, %v2751
    %v2756 = vand.u32 2147483647, %v2726
    %vm2757 = vcmp.eq.f32.partialorder %v2756, 8.507059e+37
    %v2758 = vand.u32 %v2726, 2147483648
    %v2759 = vor.u32 1.1754944e-38, %v2758
    %v2760 = vsel %vm2757, %v2759, %v2755
    %v2761 = vmul.f32 1.0, %v2760
    %v2762 = vrcp.pop %v2727
    %v2763 = vmul.f32 %v2727, %v2762
    %v2764 = vsub.f32 1.0, %v2763
    %v2765 = vmul.f32 %v2762, %v2764
    %v2766 = vadd.f32 %v2762, %v2765
    %vm2767 = vweird.f32 %v2727
    %vm2768 = vweird.f32 %v2762
    %vm2769 = vmor %vm2767, %vm2768
    %v2770 = vsel %vm2769, %v2762, %v2766
    %v2771 = vand.u32 2147483647, %v2727
    %vm2772 = vcmp.eq.f32.partialorder %v2771, 8.507059e+37
    %v2773 = vand.u32 %v2727, 2147483648
    %v2774 = vor.u32 1.1754944e-38, %v2773
    %v2775 = vsel %vm2772, %v2774, %v2770
    %v2776 = vmul.f32 1.0, %v2775
    %v2777 = vrcp.pop %v2728
    %v2778 = vmul.f32 %v2728, %v2777
    %v2779 = vsub.f32 1.0, %v2778
    %v2780 = vmul.f32 %v2777, %v2779
    %v2781 = vadd.f32 %v2777, %v2780
    %vm2782 = vweird.f32 %v2728
    %vm2783 = vweird.f32 %v2777
    %vm2784 = vmor %vm2782, %vm2783
    %v2785 = vsel %vm2784, %v2777, %v2781
    %v2786 = vand.u32 2147483647, %v2728
    %vm2787 = vcmp.eq.f32.partialorder %v2786, 8.507059e+37
    %v2788 = vand.u32 %v2728, 2147483648
    %v2789 = vor.u32 1.1754944e-38, %v2788
    %v2790 = vsel %vm2787, %v2789, %v2785
    %v2791 = vmul.f32 1.0, %v2790
    %v2792 = vrcp.pop %v2729
    %v2793 = vmul.f32 %v2729, %v2792
    %v2794 = vsub.f32 1.0, %v2793
    %v2795 = vmul.f32 %v2792, %v2794
    %v2796 = vadd.f32 %v2792, %v2795
    %vm2797 = vweird.f32 %v2729
    %vm2798 = vweird.f32 %v2792
    %vm2799 = vmor %vm2797, %vm2798
    %v2800 = vsel %vm2799, %v2792, %v2796
    %v2801 = vand.u32 2147483647, %v2729
    %vm2802 = vcmp.eq.f32.partialorder %v2801, 8.507059e+37
    %v2803 = vand.u32 %v2729, 2147483648
    %v2804 = vor.u32 1.1754944e-38, %v2803
    %v2805 = vsel %vm2802, %v2804, %v2800
    %v2806 = vmul.f32 1.0, %v2805
    %v2807 = vrcp.pop %v2730
    %v2808 = vmul.f32 %v2730, %v2807
    %v2809 = vsub.f32 1.0, %v2808
    %v2810 = vmul.f32 %v2807, %v2809
    %v2811 = vadd.f32 %v2807, %v2810
    %vm2812 = vweird.f32 %v2730
    %vm2813 = vweird.f32 %v2807
    %vm2814 = vmor %vm2812, %vm2813
    %v2815 = vsel %vm2814, %v2807, %v2811
    %v2816 = vand.u32 2147483647, %v2730
    %vm2817 = vcmp.eq.f32.partialorder %v2816, 8.507059e+37
    %v2818 = vand.u32 %v2730, 2147483648
    %v2819 = vor.u32 1.1754944e-38, %v2818
    %v2820 = vsel %vm2817, %v2819, %v2815
    %v2821 = vmul.f32 1.0, %v2820
    %v2822 = vrcp.pop %v2731
    %v2823 = vmul.f32 %v2731, %v2822
    %v2824 = vsub.f32 1.0, %v2823
    %v2825 = vmul.f32 %v2822, %v2824
    %v2826 = vadd.f32 %v2822, %v2825
    %vm2827 = vweird.f32 %v2731
    %vm2828 = vweird.f32 %v2822
    %vm2829 = vmor %vm2827, %vm2828
    %v2830 = vsel %vm2829, %v2822, %v2826
    %v2831 = vand.u32 2147483647, %v2731
    %vm2832 = vcmp.eq.f32.partialorder %v2831, 8.507059e+37
    %v2833 = vand.u32 %v2731, 2147483648
    %v2834 = vor.u32 1.1754944e-38, %v2833
    %v2835 = vsel %vm2832, %v2834, %v2830
    %v2836 = vmul.f32 1.0, %v2835
    %v2837 = vmul.f32 %v2697, %v2746
    %v2838 = vmul.f32 %v2698, %v2761
    %v2839 = vmul.f32 %v2699, %v2776
    %v2840 = vmul.f32 %v2700, %v2791
    %v2841 = vmul.f32 %v2701, %v2806
    %v2842 = vmul.f32 %v2702, %v2821
    %v2843 = vmul.f32 %v2703, %v2836
    %s2844 = scalar_lea.vmem %s8, 448
    %v2845 = vld [vmem:[%s2844] sm:$0xff]
    %v2846 = vld [vmem:[%s2844 + $0x8] sm:$0xff]
    %v2847 = vld [vmem:[%s2844 + $0x10] sm:$0xff]
    %v2848 = vld [vmem:[%s2844 + $0x18] sm:$0xff]
    %v2849 = vld [vmem:[%s9 + $0x13] sm:$0x1]
    %v2850 = vperm.slane %v2849, 0
    %v2852 = vsel %vm518, %v2837, 0
    %v2855 = vsel %vm518, %v2838, 0
    %v2858 = vsel %vm518, %v2839, 0
    %v2861 = vsel %vm518, %v2840, 0
    %v2864 = vsel %vm518, %v2841, 0
    %v2867 = vsel %vm518, %v2842, 0
    %v2870 = vsel %vm518, %v2843, 0
    %2872 = vmatpush.msra.mxu0 0.0
    %2873 = vmatpush.msra.mxu0 0.0
    %2874 = vmatpush.msra.mxu0 0.0
    %2875 = vmatpush.msra.mxu0 0.0
    %2876 = vmatpush.msra.mxu0 0.0
    %2877 = vmatpush.msra.mxu0 0.0
    %2878 = vmatpush.msra.mxu0 0.0
    %2879 = vmatpush.msra.mxu0 0.0
    %2880 = vmatpush.msra.mxu0 0.0
    %2881 = vmatpush.msra.mxu0 0.0
    %2882 = vmatpush.msra.mxu0 0.0
    %2883 = vmatpush.msra.mxu0 0.0
    %2884 = vmatpush.msra.mxu0 %v2848
    %2885 = vmatpush.msra.mxu0 %v2847
    %2886 = vmatpush.msra.mxu0 %v2846
    %2887 = vmatpush.msra.mxu0 %v2845
    %2888 = vmatmul.f32.gmra.mxu0 %v2852
    %v2889 = vpop.f32.mrf.mxu0
    %v2890 = vadd.f32 %v2850, %v2889
    %2891 = vmatmul.f32.gmra.mxu0 %v2855
    %v2892 = vpop.f32.mrf.mxu0
    %v2893 = vadd.f32 %v2850, %v2892
    %2894 = vmatmul.f32.gmra.mxu0 %v2858
    %v2895 = vpop.f32.mrf.mxu0
    %v2896 = vadd.f32 %v2850, %v2895
    %2897 = vmatmul.f32.gmra.mxu0 %v2861
    %v2898 = vpop.f32.mrf.mxu0
    %v2899 = vadd.f32 %v2850, %v2898
    %2900 = vmatmul.f32.gmra.mxu0 %v2864
    %v2901 = vpop.f32.mrf.mxu0
    %v2902 = vadd.f32 %v2850, %v2901
    %2903 = vmatmul.f32.gmra.mxu0 %v2867
    %v2904 = vpop.f32.mrf.mxu0
    %v2905 = vadd.f32 %v2850, %v2904
    %2906 = vmatmul.f32.gmra.mxu0 %v2870
    %v2907 = vpop.f32.mrf.mxu0
    %v2908 = vadd.f32 %v2850, %v2907
    %2909 = vdwg.mxu0
    %v2910 = vld [vmem:[%s9 + $0x14] sm:$0x1]
    %v2911 = vld [vmem:[%s9 + $0x15] sm:$0x1]
    %v2912 = vsel %vm518, %v2890, 0.0
    %2913 = vadd.xlane.f32.xlu0 %v2912
    %v2914 = vpop.xlane.xlu0 %2913
    %v2915 = vsel %vm518, %v2893, 0.0
    %2916 = vadd.xlane.f32.xlu0 %v2915
    %v2917 = vpop.xlane.xlu0 %2916
    %v2918 = vsel %vm518, %v2896, 0.0
    %2919 = vadd.xlane.f32.xlu0 %v2918
    %v2920 = vpop.xlane.xlu0 %2919
    %v2921 = vsel %vm518, %v2899, 0.0
    %2922 = vadd.xlane.f32.xlu0 %v2921
    %v2923 = vpop.xlane.xlu0 %2922
    %v2924 = vsel %vm518, %v2902, 0.0
    %2925 = vadd.xlane.f32.xlu0 %v2924
    %v2926 = vpop.xlane.xlu0 %2925
    %v2927 = vsel %vm518, %v2905, 0.0
    %2928 = vadd.xlane.f32.xlu0 %v2927
    %v2929 = vpop.xlane.xlu0 %2928
    %v2930 = vsel %vm518, %v2908, 0.0
    %2931 = vadd.xlane.f32.xlu0 %v2930
    %v2932 = vpop.xlane.xlu0 %2931
    %v2933 = vmul.f32 %v2914, %v706
    %v2934 = vmul.f32 %v2917, %v706
    %v2935 = vmul.f32 %v2920, %v706
    %v2936 = vmul.f32 %v2923, %v706
    %v2937 = vmul.f32 %v2926, %v706
    %v2938 = vmul.f32 %v2929, %v706
    %v2939 = vmul.f32 %v2932, %v706
    %v2940 = vsub.f32 %v2890, %v2933
    %v2941 = vsub.f32 %v2893, %v2934
    %v2942 = vsub.f32 %v2896, %v2935
    %v2943 = vsub.f32 %v2899, %v2936
    %v2944 = vsub.f32 %v2902, %v2937
    %v2945 = vsub.f32 %v2905, %v2938
    %v2946 = vsub.f32 %v2908, %v2939
    %v2947 = vmul.f32 %v2940, %v2940
    %v2948 = vmul.f32 %v2941, %v2941
    %v2949 = vmul.f32 %v2942, %v2942
    %v2950 = vmul.f32 %v2943, %v2943
    %v2951 = vmul.f32 %v2944, %v2944
    %v2952 = vmul.f32 %v2945, %v2945
    %v2953 = vmul.f32 %v2946, %v2946
    %v2954 = vsel %vm518, %v2947, 0.0
    %2955 = vadd.xlane.f32.xlu0 %v2954
    %v2956 = vpop.xlane.xlu0 %2955
    %v2957 = vsel %vm518, %v2948, 0.0
    %2958 = vadd.xlane.f32.xlu0 %v2957
    %v2959 = vpop.xlane.xlu0 %2958
    %v2960 = vsel %vm518, %v2949, 0.0
    %2961 = vadd.xlane.f32.xlu0 %v2960
    %v2962 = vpop.xlane.xlu0 %2961
    %v2963 = vsel %vm518, %v2950, 0.0
    %2964 = vadd.xlane.f32.xlu0 %v2963
    %v2965 = vpop.xlane.xlu0 %2964
    %v2966 = vsel %vm518, %v2951, 0.0
    %2967 = vadd.xlane.f32.xlu0 %v2966
    %v2968 = vpop.xlane.xlu0 %2967
    %v2969 = vsel %vm518, %v2952, 0.0
    %2970 = vadd.xlane.f32.xlu0 %v2969
    %v2971 = vpop.xlane.xlu0 %2970
    %v2972 = vsel %vm518, %v2953, 0.0
    %2973 = vadd.xlane.f32.xlu0 %v2972
    %v2974 = vpop.xlane.xlu0 %2973
    %v2975 = vmul.f32 %v2956, %v706
    %v2976 = vmul.f32 %v2959, %v706
    %v2977 = vmul.f32 %v2962, %v706
    %v2978 = vmul.f32 %v2965, %v706
    %v2979 = vmul.f32 %v2968, %v706
    %v2980 = vmul.f32 %v2971, %v706
    %v2981 = vmul.f32 %v2974, %v706
    %v2982 = vadd.f32 %v2975, 1e-05
    %v2983 = vadd.f32 %v2976, 1e-05
    %v2984 = vadd.f32 %v2977, 1e-05
    %v2985 = vadd.f32 %v2978, 1e-05
    %v2986 = vadd.f32 %v2979, 1e-05
    %v2987 = vadd.f32 %v2980, 1e-05
    %v2988 = vadd.f32 %v2981, 1e-05
    %v2989 = vrsqrt.pop %v2982
    %v2990 = vmul.f32 %v2989, %v2982
    %v2991 = vmul.f32 %v2990, %v2989
    %v2992 = vmul.f32 0.5, %v2991
    %v2993 = vsub.f32 1.5, %v2992
    %v2994 = vmul.f32 %v2989, %v2993
    %vm2995 = vweird.f32 %v2982
    %vm2996 = vweird.f32 %v2989
    %vm2997 = vmor %vm2995, %vm2996
    %v2998 = vsel %vm2997, %v2989, %v2994
    %v2999 = vrsqrt.pop %v2983
    %v3000 = vmul.f32 %v2999, %v2983
    %v3001 = vmul.f32 %v3000, %v2999
    %v3002 = vmul.f32 0.5, %v3001
    %v3003 = vsub.f32 1.5, %v3002
    %v3004 = vmul.f32 %v2999, %v3003
    %vm3005 = vweird.f32 %v2983
    %vm3006 = vweird.f32 %v2999
    %vm3007 = vmor %vm3005, %vm3006
    %v3008 = vsel %vm3007, %v2999, %v3004
    %v3009 = vrsqrt.pop %v2984
    %v3010 = vmul.f32 %v3009, %v2984
    %v3011 = vmul.f32 %v3010, %v3009
    %v3012 = vmul.f32 0.5, %v3011
    %v3013 = vsub.f32 1.5, %v3012
    %v3014 = vmul.f32 %v3009, %v3013
    %vm3015 = vweird.f32 %v2984
    %vm3016 = vweird.f32 %v3009
    %vm3017 = vmor %vm3015, %vm3016
    %v3018 = vsel %vm3017, %v3009, %v3014
    %v3019 = vrsqrt.pop %v2985
    %v3020 = vmul.f32 %v3019, %v2985
    %v3021 = vmul.f32 %v3020, %v3019
    %v3022 = vmul.f32 0.5, %v3021
    %v3023 = vsub.f32 1.5, %v3022
    %v3024 = vmul.f32 %v3019, %v3023
    %vm3025 = vweird.f32 %v2985
    %vm3026 = vweird.f32 %v3019
    %vm3027 = vmor %vm3025, %vm3026
    %v3028 = vsel %vm3027, %v3019, %v3024
    %v3029 = vrsqrt.pop %v2986
    %v3030 = vmul.f32 %v3029, %v2986
    %v3031 = vmul.f32 %v3030, %v3029
    %v3032 = vmul.f32 0.5, %v3031
    %v3033 = vsub.f32 1.5, %v3032
    %v3034 = vmul.f32 %v3029, %v3033
    %vm3035 = vweird.f32 %v2986
    %vm3036 = vweird.f32 %v3029
    %vm3037 = vmor %vm3035, %vm3036
    %v3038 = vsel %vm3037, %v3029, %v3034
    %v3039 = vrsqrt.pop %v2987
    %v3040 = vmul.f32 %v3039, %v2987
    %v3041 = vmul.f32 %v3040, %v3039
    %v3042 = vmul.f32 0.5, %v3041
    %v3043 = vsub.f32 1.5, %v3042
    %v3044 = vmul.f32 %v3039, %v3043
    %vm3045 = vweird.f32 %v2987
    %vm3046 = vweird.f32 %v3039
    %vm3047 = vmor %vm3045, %vm3046
    %v3048 = vsel %vm3047, %v3039, %v3044
    %v3049 = vrsqrt.pop %v2988
    %v3050 = vmul.f32 %v3049, %v2988
    %v3051 = vmul.f32 %v3050, %v3049
    %v3052 = vmul.f32 0.5, %v3051
    %v3053 = vsub.f32 1.5, %v3052
    %v3054 = vmul.f32 %v3049, %v3053
    %vm3055 = vweird.f32 %v2988
    %vm3056 = vweird.f32 %v3049
    %vm3057 = vmor %vm3055, %vm3056
    %v3058 = vsel %vm3057, %v3049, %v3054
    %v3059 = vmul.f32 %v2940, %v2998
    %v3060 = vmul.f32 %v2941, %v3008
    %v3061 = vmul.f32 %v2942, %v3018
    %v3062 = vmul.f32 %v2943, %v3028
    %v3063 = vmul.f32 %v2944, %v3038
    %v3064 = vmul.f32 %v2945, %v3048
    %v3065 = vmul.f32 %v2946, %v3058
    %v3066 = vperm.slane %v2910, 0
    %v3067 = vmul.f32 %v3059, %v3066
    %v3068 = vmul.f32 %v3060, %v3066
    %v3069 = vmul.f32 %v3061, %v3066
    %v3070 = vmul.f32 %v3062, %v3066
    %v3071 = vmul.f32 %v3063, %v3066
    %v3072 = vmul.f32 %v3064, %v3066
    %v3073 = vmul.f32 %v3065, %v3066
    %v3074 = vperm.slane %v2911, 0
    %v3075 = vadd.f32 %v3067, %v3074
    %v3076 = vadd.f32 %v3068, %v3074
    %v3077 = vadd.f32 %v3069, %v3074
    %v3078 = vadd.f32 %v3070, %v3074
    %v3079 = vadd.f32 %v3071, %v3074
    %v3080 = vadd.f32 %v3072, %v3074
    %v3081 = vadd.f32 %v3073, %v3074
    %v3082 = vxor.u32 %v3075, 2147483648
    %v3083 = vxor.u32 %v3076, 2147483648
    %v3084 = vxor.u32 %v3077, 2147483648
    %v3085 = vxor.u32 %v3078, 2147483648
    %v3086 = vxor.u32 %v3079, 2147483648
    %v3087 = vxor.u32 %v3080, 2147483648
    %v3088 = vxor.u32 %v3081, 2147483648
    %v3089 = vmul.f32 %v3082, 1.442695
    %v3090 = vpow.pop %v3089
    %v3091 = vmul.f32 %v3083, 1.442695
    %v3092 = vpow.pop %v3091
    %v3093 = vmul.f32 %v3084, 1.442695
    %v3094 = vpow.pop %v3093
    %v3095 = vmul.f32 %v3085, 1.442695
    %v3096 = vpow.pop %v3095
    %v3097 = vmul.f32 %v3086, 1.442695
    %v3098 = vpow.pop %v3097
    %v3099 = vmul.f32 %v3087, 1.442695
    %v3100 = vpow.pop %v3099
    %v3101 = vmul.f32 %v3088, 1.442695
    %v3102 = vpow.pop %v3101
    %v3103 = vadd.f32 %v3090, 1.0
    %v3104 = vadd.f32 %v3092, 1.0
    %v3105 = vadd.f32 %v3094, 1.0
    %v3106 = vadd.f32 %v3096, 1.0
    %v3107 = vadd.f32 %v3098, 1.0
    %v3108 = vadd.f32 %v3100, 1.0
    %v3109 = vadd.f32 %v3102, 1.0
    %v3110 = vrcp.pop %v3103
    %v3111 = vmul.f32 %v3103, %v3110
    %v3112 = vsub.f32 1.0, %v3111
    %v3113 = vmul.f32 %v3110, %v3112
    %v3114 = vadd.f32 %v3110, %v3113
    %vm3115 = vweird.f32 %v3103
    %vm3116 = vweird.f32 %v3110
    %vm3117 = vmor %vm3115, %vm3116
    %v3118 = vsel %vm3117, %v3110, %v3114
    %v3119 = vand.u32 2147483647, %v3103
    %vm3120 = vcmp.eq.f32.partialorder %v3119, 8.507059e+37
    %v3121 = vand.u32 %v3103, 2147483648
    %v3122 = vor.u32 1.1754944e-38, %v3121
    %v3123 = vsel %vm3120, %v3122, %v3118
    %v3124 = vmul.f32 1.0, %v3123
    %v3125 = vrcp.pop %v3104
    %v3126 = vmul.f32 %v3104, %v3125
    %v3127 = vsub.f32 1.0, %v3126
    %v3128 = vmul.f32 %v3125, %v3127
    %v3129 = vadd.f32 %v3125, %v3128
    %vm3130 = vweird.f32 %v3104
    %vm3131 = vweird.f32 %v3125
    %vm3132 = vmor %vm3130, %vm3131
    %v3133 = vsel %vm3132, %v3125, %v3129
    %v3134 = vand.u32 2147483647, %v3104
    %vm3135 = vcmp.eq.f32.partialorder %v3134, 8.507059e+37
    %v3136 = vand.u32 %v3104, 2147483648
    %v3137 = vor.u32 1.1754944e-38, %v3136
    %v3138 = vsel %vm3135, %v3137, %v3133
    %v3139 = vmul.f32 1.0, %v3138
    %v3140 = vrcp.pop %v3105
    %v3141 = vmul.f32 %v3105, %v3140
    %v3142 = vsub.f32 1.0, %v3141
    %v3143 = vmul.f32 %v3140, %v3142
    %v3144 = vadd.f32 %v3140, %v3143
    %vm3145 = vweird.f32 %v3105
    %vm3146 = vweird.f32 %v3140
    %vm3147 = vmor %vm3145, %vm3146
    %v3148 = vsel %vm3147, %v3140, %v3144
    %v3149 = vand.u32 2147483647, %v3105
    %vm3150 = vcmp.eq.f32.partialorder %v3149, 8.507059e+37
    %v3151 = vand.u32 %v3105, 2147483648
    %v3152 = vor.u32 1.1754944e-38, %v3151
    %v3153 = vsel %vm3150, %v3152, %v3148
    %v3154 = vmul.f32 1.0, %v3153
    %v3155 = vrcp.pop %v3106
    %v3156 = vmul.f32 %v3106, %v3155
    %v3157 = vsub.f32 1.0, %v3156
    %v3158 = vmul.f32 %v3155, %v3157
    %v3159 = vadd.f32 %v3155, %v3158
    %vm3160 = vweird.f32 %v3106
    %vm3161 = vweird.f32 %v3155
    %vm3162 = vmor %vm3160, %vm3161
    %v3163 = vsel %vm3162, %v3155, %v3159
    %v3164 = vand.u32 2147483647, %v3106
    %vm3165 = vcmp.eq.f32.partialorder %v3164, 8.507059e+37
    %v3166 = vand.u32 %v3106, 2147483648
    %v3167 = vor.u32 1.1754944e-38, %v3166
    %v3168 = vsel %vm3165, %v3167, %v3163
    %v3169 = vmul.f32 1.0, %v3168
    %v3170 = vrcp.pop %v3107
    %v3171 = vmul.f32 %v3107, %v3170
    %v3172 = vsub.f32 1.0, %v3171
    %v3173 = vmul.f32 %v3170, %v3172
    %v3174 = vadd.f32 %v3170, %v3173
    %vm3175 = vweird.f32 %v3107
    %vm3176 = vweird.f32 %v3170
    %vm3177 = vmor %vm3175, %vm3176
    %v3178 = vsel %vm3177, %v3170, %v3174
    %v3179 = vand.u32 2147483647, %v3107
    %vm3180 = vcmp.eq.f32.partialorder %v3179, 8.507059e+37
    %v3181 = vand.u32 %v3107, 2147483648
    %v3182 = vor.u32 1.1754944e-38, %v3181
    %v3183 = vsel %vm3180, %v3182, %v3178
    %v3184 = vmul.f32 1.0, %v3183
    %v3185 = vrcp.pop %v3108
    %v3186 = vmul.f32 %v3108, %v3185
    %v3187 = vsub.f32 1.0, %v3186
    %v3188 = vmul.f32 %v3185, %v3187
    %v3189 = vadd.f32 %v3185, %v3188
    %vm3190 = vweird.f32 %v3108
    %vm3191 = vweird.f32 %v3185
    %vm3192 = vmor %vm3190, %vm3191
    %v3193 = vsel %vm3192, %v3185, %v3189
    %v3194 = vand.u32 2147483647, %v3108
    %vm3195 = vcmp.eq.f32.partialorder %v3194, 8.507059e+37
    %v3196 = vand.u32 %v3108, 2147483648
    %v3197 = vor.u32 1.1754944e-38, %v3196
    %v3198 = vsel %vm3195, %v3197, %v3193
    %v3199 = vmul.f32 1.0, %v3198
    %v3200 = vrcp.pop %v3109
    %v3201 = vmul.f32 %v3109, %v3200
    %v3202 = vsub.f32 1.0, %v3201
    %v3203 = vmul.f32 %v3200, %v3202
    %v3204 = vadd.f32 %v3200, %v3203
    %vm3205 = vweird.f32 %v3109
    %vm3206 = vweird.f32 %v3200
    %vm3207 = vmor %vm3205, %vm3206
    %v3208 = vsel %vm3207, %v3200, %v3204
    %v3209 = vand.u32 2147483647, %v3109
    %vm3210 = vcmp.eq.f32.partialorder %v3209, 8.507059e+37
    %v3211 = vand.u32 %v3109, 2147483648
    %v3212 = vor.u32 1.1754944e-38, %v3211
    %v3213 = vsel %vm3210, %v3212, %v3208
    %v3214 = vmul.f32 1.0, %v3213
    %v3215 = vmul.f32 %v3075, %v3124
    %v3216 = vmul.f32 %v3076, %v3139
    %v3217 = vmul.f32 %v3077, %v3154
    %v3218 = vmul.f32 %v3078, %v3169
    %v3219 = vmul.f32 %v3079, %v3184
    %v3220 = vmul.f32 %v3080, %v3199
    %v3221 = vmul.f32 %v3081, %v3214
    %v3222 = vld [vmem:[%s11] sm:$0xff]
    %v3223 = vld [vmem:[%s11 + $0x8] sm:$0xff]
    %v3224 = vld [vmem:[%s11 + $0x10] sm:$0xff]
    %v3225 = vld [vmem:[%s11 + $0x18] sm:$0xff]
    %v3227 = vsel %vm518, %v3215, 0
    %v3230 = vsel %vm518, %v3216, 0
    %v3233 = vsel %vm518, %v3217, 0
    %v3236 = vsel %vm518, %v3218, 0
    %v3239 = vsel %vm518, %v3219, 0
    %v3242 = vsel %vm518, %v3220, 0
    %v3245 = vsel %vm518, %v3221, 0
    %3247 = vmatpush.msra.mxu0 0.0
    %3248 = vmatpush.msra.mxu0 0.0
    %3249 = vmatpush.msra.mxu0 0.0
    %3250 = vmatpush.msra.mxu0 0.0
    %3251 = vmatpush.msra.mxu0 0.0
    %3252 = vmatpush.msra.mxu0 0.0
    %3253 = vmatpush.msra.mxu0 0.0
    %3254 = vmatpush.msra.mxu0 0.0
    %3255 = vmatpush.msra.mxu0 0.0
    %3256 = vmatpush.msra.mxu0 0.0
    %3257 = vmatpush.msra.mxu0 0.0
    %3258 = vmatpush.msra.mxu0 0.0
    %3259 = vmatpush.msra.mxu0 %v3225
    %3260 = vmatpush.msra.mxu0 %v3224
    %3261 = vmatpush.msra.mxu0 %v3223
    %3262 = vmatpush.msra.mxu0 %v3222
    %3263 = vmatmul.f32.gmra.mxu0 %v3227
    %v3264 = vpop.f32.mrf.mxu0
    %v3265 = vadd.f32 0.0, %v3264
    %3266 = vmatmul.f32.gmra.mxu0 %v3230
    %v3267 = vpop.f32.mrf.mxu0
    %v3268 = vadd.f32 0.0, %v3267
    %3269 = vmatmul.f32.gmra.mxu0 %v3233
    %v3270 = vpop.f32.mrf.mxu0
    %v3271 = vadd.f32 0.0, %v3270
    %3272 = vmatmul.f32.gmra.mxu0 %v3236
    %v3273 = vpop.f32.mrf.mxu0
    %v3274 = vadd.f32 0.0, %v3273
    %3275 = vmatmul.f32.gmra.mxu0 %v3239
    %v3276 = vpop.f32.mrf.mxu0
    %v3277 = vadd.f32 0.0, %v3276
    %3278 = vmatmul.f32.gmra.mxu0 %v3242
    %v3279 = vpop.f32.mrf.mxu0
    %v3280 = vadd.f32 0.0, %v3279
    %3281 = vmatmul.f32.gmra.mxu0 %v3245
    %v3282 = vpop.f32.mrf.mxu0
    %v3283 = vadd.f32 0.0, %v3282
    %3284 = vdwg.mxu0
    %3286 = vset.pattern.permute.xlu0 0
    %3287 = vperm.xlu0 %3286, %v3265
    %v3288 = vpop.permute.xlu0 %3287
    %3291 = vset.pattern.permute.xlu0 0
    %3292 = vperm.xlu0 %3291, %v3268
    %v3293 = vpop.permute.xlu0 %3292
    %3296 = vset.pattern.permute.xlu0 0
    %3297 = vperm.xlu0 %3296, %v3271
    %v3298 = vpop.permute.xlu0 %3297
    %3301 = vset.pattern.permute.xlu0 0
    %3302 = vperm.xlu0 %3301, %v3274
    %v3303 = vpop.permute.xlu0 %3302
    %3306 = vset.pattern.permute.xlu0 0
    %3307 = vperm.xlu0 %3306, %v3277
    %v3308 = vpop.permute.xlu0 %3307
    %3311 = vset.pattern.permute.xlu0 0
    %3312 = vperm.xlu0 %3311, %v3280
    %v3313 = vpop.permute.xlu0 %3312
    %3316 = vset.pattern.permute.xlu0 0
    %3317 = vperm.xlu0 %3316, %v3283
    %v3318 = vpop.permute.xlu0 %3317
    %v3320 = vmul.f32 %v300, %v3288
    %v3321 = vmul.f32 %v315, %v3293
    %v3322 = vmul.f32 %v330, %v3298
    %v3323 = vmul.f32 %v345, %v3303
    %v3324 = vmul.f32 %v360, %v3308
    %v3325 = vmul.f32 %v375, %v3313
    %v3326 = vmul.f32 %v390, %v3318
    %3327 = vmatpush.msra.mxu0 0.0
    %3328 = vmatpush.msra.mxu0 0.0
    %3329 = vmatpush.msra.mxu0 0.0
    %3330 = vmatpush.msra.mxu0 0.0
    %3331 = vmatpush.msra.mxu0 0.0
    %3332 = vmatpush.msra.mxu0 0.0
    %3333 = vmatpush.msra.mxu0 0.0
    %3334 = vmatpush.msra.mxu0 0.0
    %3335 = vmatpush.msra.mxu0 0.0
    %3336 = vmatpush.msra.mxu0 %v3326
    %3337 = vmatpush.msra.mxu0 %v3325
    %3338 = vmatpush.msra.mxu0 %v3324
    %3339 = vmatpush.msra.mxu0 %v3323
    %3340 = vmatpush.msra.mxu0 %v3322
    %3341 = vmatpush.msra.mxu0 %v3321
    %3342 = vmatpush.msra.mxu0 %v3320
    %3343 = vmatmul.f32.gmra.mxu0 %v1204
    %v3344 = vpop.f32.mrf.mxu0
    %v3345 = vadd.f32 0.0, %v3344
    %3346 = vdwg.mxu0
    %v3347 = vadd.f32 %v66, %v3345
    %3348 = vmatpush.msra.mxu0 0.0
    %3349 = vmatpush.msra.mxu0 0.0
    %3350 = vmatpush.msra.mxu0 0.0
    %3351 = vmatpush.msra.mxu0 0.0
    %3352 = vmatpush.msra.mxu0 0.0
    %3353 = vmatpush.msra.mxu0 0.0
    %3354 = vmatpush.msra.mxu0 0.0
    %3355 = vmatpush.msra.mxu0 0.0
    %3356 = vmatpush.msra.mxu0 0.0
    %3357 = vmatpush.msra.mxu0 0.0
    %3358 = vmatpush.msra.mxu0 0.0
    %3359 = vmatpush.msra.mxu0 0.0
    %3360 = vmatpush.msra.mxu0 0.0
    %3361 = vmatpush.msra.mxu0 0.0
    %3362 = vmatpush.msra.mxu0 0.0
    %3363 = vmatpush.msra.mxu0 %v3347
    %3364 = vmatmul.f32.gmra.mxu0 %v69
    %v3365 = vpop.f32.mrf.mxu0
    %v3366 = vadd.f32 0.0, %v3365
    %3367 = vmatmul.f32.gmra.mxu0 %v72
    %v3368 = vpop.f32.mrf.mxu0
    %v3369 = vadd.f32 0.0, %v3368
    %3370 = vmatmul.f32.gmra.mxu0 %v75
    %v3371 = vpop.f32.mrf.mxu0
    %v3372 = vadd.f32 0.0, %v3371
    %3373 = vmatmul.f32.gmra.mxu0 %v78
    %v3374 = vpop.f32.mrf.mxu0
    %v3375 = vadd.f32 0.0, %v3374
    %3376 = vmatmul.f32.gmra.mxu0 %v81
    %v3377 = vpop.f32.mrf.mxu0
    %v3378 = vadd.f32 0.0, %v3377
    %3379 = vmatmul.f32.gmra.mxu0 %v84
    %v3380 = vpop.f32.mrf.mxu0
    %v3381 = vadd.f32 0.0, %v3380
    %3382 = vmatmul.f32.gmra.mxu0 %v87
    %v3383 = vpop.f32.mrf.mxu0
    %v3384 = vadd.f32 0.0, %v3383
    %3385 = vdwg.mxu0
    %v3386 = vmul.f32 %v3366, %v3366
    %v3387 = vmul.f32 %v3369, %v3369
    %v3388 = vmul.f32 %v3372, %v3372
    %v3389 = vmul.f32 %v3375, %v3375
    %v3390 = vmul.f32 %v3378, %v3378
    %v3391 = vmul.f32 %v3381, %v3381
    %v3392 = vmul.f32 %v3384, %v3384
    %v3393 = vsel %vm134, %v3386, 0.0
    %3394 = vadd.xlane.f32.xlu0 %v3393
    %v3395 = vpop.xlane.xlu0 %3394
    %v3396 = vsel %vm134, %v3387, 0.0
    %3397 = vadd.xlane.f32.xlu0 %v3396
    %v3398 = vpop.xlane.xlu0 %3397
    %v3399 = vsel %vm134, %v3388, 0.0
    %3400 = vadd.xlane.f32.xlu0 %v3399
    %v3401 = vpop.xlane.xlu0 %3400
    %v3402 = vsel %vm134, %v3389, 0.0
    %3403 = vadd.xlane.f32.xlu0 %v3402
    %v3404 = vpop.xlane.xlu0 %3403
    %v3405 = vsel %vm134, %v3390, 0.0
    %3406 = vadd.xlane.f32.xlu0 %v3405
    %v3407 = vpop.xlane.xlu0 %3406
    %v3408 = vsel %vm134, %v3391, 0.0
    %3409 = vadd.xlane.f32.xlu0 %v3408
    %v3410 = vpop.xlane.xlu0 %3409
    %v3411 = vsel %vm134, %v3392, 0.0
    %3412 = vadd.xlane.f32.xlu0 %v3411
    %v3413 = vpop.xlane.xlu0 %3412
    %v3414 = vadd.f32 %v3395, 1e-08
    %v3415 = vadd.f32 %v3398, 1e-08
    %v3416 = vadd.f32 %v3401, 1e-08
    %v3417 = vadd.f32 %v3404, 1e-08
    %v3418 = vadd.f32 %v3407, 1e-08
    %v3419 = vadd.f32 %v3410, 1e-08
    %v3420 = vadd.f32 %v3413, 1e-08
    %v3421 = vrsqrt.pop %v3414
    %v3422 = vmul.f32 %v3421, %v3414
    %v3423 = vmul.f32 %v3422, %v3421
    %v3424 = vmul.f32 0.5, %v3423
    %v3425 = vsub.f32 1.5, %v3424
    %v3426 = vmul.f32 %v3421, %v3425
    %v3427 = vmul.f32 %v3414, %v3426
    %vm3428 = vcmp.eq.f32.partialorder %v3414, inf
    %v3429 = vsel %vm3428, %v3414, %v3427
    %vm3430 = vcmp.eq.f32.partialorder %v3414, 0.0
    %v3431 = vand.u32 %v3414, 2147483648
    %v3432 = vsel %vm3430, %v3431, %v3429
    %v3433 = vrsqrt.pop %v3415
    %v3434 = vmul.f32 %v3433, %v3415
    %v3435 = vmul.f32 %v3434, %v3433
    %v3436 = vmul.f32 0.5, %v3435
    %v3437 = vsub.f32 1.5, %v3436
    %v3438 = vmul.f32 %v3433, %v3437
    %v3439 = vmul.f32 %v3415, %v3438
    %vm3440 = vcmp.eq.f32.partialorder %v3415, inf
    %v3441 = vsel %vm3440, %v3415, %v3439
    %vm3442 = vcmp.eq.f32.partialorder %v3415, 0.0
    %v3443 = vand.u32 %v3415, 2147483648
    %v3444 = vsel %vm3442, %v3443, %v3441
    %v3445 = vrsqrt.pop %v3416
    %v3446 = vmul.f32 %v3445, %v3416
    %v3447 = vmul.f32 %v3446, %v3445
    %v3448 = vmul.f32 0.5, %v3447
    %v3449 = vsub.f32 1.5, %v3448
    %v3450 = vmul.f32 %v3445, %v3449
    %v3451 = vmul.f32 %v3416, %v3450
    %vm3452 = vcmp.eq.f32.partialorder %v3416, inf
    %v3453 = vsel %vm3452, %v3416, %v3451
    %vm3454 = vcmp.eq.f32.partialorder %v3416, 0.0
    %v3455 = vand.u32 %v3416, 2147483648
    %v3456 = vsel %vm3454, %v3455, %v3453
    %v3457 = vrsqrt.pop %v3417
    %v3458 = vmul.f32 %v3457, %v3417
    %v3459 = vmul.f32 %v3458, %v3457
    %v3460 = vmul.f32 0.5, %v3459
    %v3461 = vsub.f32 1.5, %v3460
    %v3462 = vmul.f32 %v3457, %v3461
    %v3463 = vmul.f32 %v3417, %v3462
    %vm3464 = vcmp.eq.f32.partialorder %v3417, inf
    %v3465 = vsel %vm3464, %v3417, %v3463
    %vm3466 = vcmp.eq.f32.partialorder %v3417, 0.0
    %v3467 = vand.u32 %v3417, 2147483648
    %v3468 = vsel %vm3466, %v3467, %v3465
    %v3469 = vrsqrt.pop %v3418
    %v3470 = vmul.f32 %v3469, %v3418
    %v3471 = vmul.f32 %v3470, %v3469
    %v3472 = vmul.f32 0.5, %v3471
    %v3473 = vsub.f32 1.5, %v3472
    %v3474 = vmul.f32 %v3469, %v3473
    %v3475 = vmul.f32 %v3418, %v3474
    %vm3476 = vcmp.eq.f32.partialorder %v3418, inf
    %v3477 = vsel %vm3476, %v3418, %v3475
    %vm3478 = vcmp.eq.f32.partialorder %v3418, 0.0
    %v3479 = vand.u32 %v3418, 2147483648
    %v3480 = vsel %vm3478, %v3479, %v3477
    %v3481 = vrsqrt.pop %v3419
    %v3482 = vmul.f32 %v3481, %v3419
    %v3483 = vmul.f32 %v3482, %v3481
    %v3484 = vmul.f32 0.5, %v3483
    %v3485 = vsub.f32 1.5, %v3484
    %v3486 = vmul.f32 %v3481, %v3485
    %v3487 = vmul.f32 %v3419, %v3486
    %vm3488 = vcmp.eq.f32.partialorder %v3419, inf
    %v3489 = vsel %vm3488, %v3419, %v3487
    %vm3490 = vcmp.eq.f32.partialorder %v3419, 0.0
    %v3491 = vand.u32 %v3419, 2147483648
    %v3492 = vsel %vm3490, %v3491, %v3489
    %v3493 = vrsqrt.pop %v3420
    %v3494 = vmul.f32 %v3493, %v3420
    %v3495 = vmul.f32 %v3494, %v3493
    %v3496 = vmul.f32 0.5, %v3495
    %v3497 = vsub.f32 1.5, %v3496
    %v3498 = vmul.f32 %v3493, %v3497
    %v3499 = vmul.f32 %v3420, %v3498
    %vm3500 = vcmp.eq.f32.partialorder %v3420, inf
    %v3501 = vsel %vm3500, %v3420, %v3499
    %vm3502 = vcmp.eq.f32.partialorder %v3420, 0.0
    %v3503 = vand.u32 %v3420, 2147483648
    %v3504 = vsel %vm3502, %v3503, %v3501
    %v3505 = vadd.f32 %v3432, 1.0
    %v3506 = vadd.f32 %v3444, 1.0
    %v3507 = vadd.f32 %v3456, 1.0
    %v3508 = vadd.f32 %v3468, 1.0
    %v3509 = vadd.f32 %v3480, 1.0
    %v3510 = vadd.f32 %v3492, 1.0
    %v3511 = vadd.f32 %v3504, 1.0
    %v3512 = vrcp.pop %v3505
    %v3513 = vmul.f32 %v3505, %v3512
    %v3514 = vsub.f32 1.0, %v3513
    %v3515 = vmul.f32 %v3512, %v3514
    %v3516 = vadd.f32 %v3512, %v3515
    %vm3517 = vweird.f32 %v3505
    %vm3518 = vweird.f32 %v3512
    %vm3519 = vmor %vm3517, %vm3518
    %v3520 = vsel %vm3519, %v3512, %v3516
    %v3521 = vand.u32 2147483647, %v3505
    %vm3522 = vcmp.eq.f32.partialorder %v3521, 8.507059e+37
    %v3523 = vand.u32 %v3505, 2147483648
    %v3524 = vor.u32 1.1754944e-38, %v3523
    %v3525 = vsel %vm3522, %v3524, %v3520
    %v3526 = vmul.f32 %v3366, %v3525
    %v3527 = vrcp.pop %v3506
    %v3528 = vmul.f32 %v3506, %v3527
    %v3529 = vsub.f32 1.0, %v3528
    %v3530 = vmul.f32 %v3527, %v3529
    %v3531 = vadd.f32 %v3527, %v3530
    %vm3532 = vweird.f32 %v3506
    %vm3533 = vweird.f32 %v3527
    %vm3534 = vmor %vm3532, %vm3533
    %v3535 = vsel %vm3534, %v3527, %v3531
    %v3536 = vand.u32 2147483647, %v3506
    %vm3537 = vcmp.eq.f32.partialorder %v3536, 8.507059e+37
    %v3538 = vand.u32 %v3506, 2147483648
    %v3539 = vor.u32 1.1754944e-38, %v3538
    %v3540 = vsel %vm3537, %v3539, %v3535
    %v3541 = vmul.f32 %v3369, %v3540
    %v3542 = vrcp.pop %v3507
    %v3543 = vmul.f32 %v3507, %v3542
    %v3544 = vsub.f32 1.0, %v3543
    %v3545 = vmul.f32 %v3542, %v3544
    %v3546 = vadd.f32 %v3542, %v3545
    %vm3547 = vweird.f32 %v3507
    %vm3548 = vweird.f32 %v3542
    %vm3549 = vmor %vm3547, %vm3548
    %v3550 = vsel %vm3549, %v3542, %v3546
    %v3551 = vand.u32 2147483647, %v3507
    %vm3552 = vcmp.eq.f32.partialorder %v3551, 8.507059e+37
    %v3553 = vand.u32 %v3507, 2147483648
    %v3554 = vor.u32 1.1754944e-38, %v3553
    %v3555 = vsel %vm3552, %v3554, %v3550
    %v3556 = vmul.f32 %v3372, %v3555
    %v3557 = vrcp.pop %v3508
    %v3558 = vmul.f32 %v3508, %v3557
    %v3559 = vsub.f32 1.0, %v3558
    %v3560 = vmul.f32 %v3557, %v3559
    %v3561 = vadd.f32 %v3557, %v3560
    %vm3562 = vweird.f32 %v3508
    %vm3563 = vweird.f32 %v3557
    %vm3564 = vmor %vm3562, %vm3563
    %v3565 = vsel %vm3564, %v3557, %v3561
    %v3566 = vand.u32 2147483647, %v3508
    %vm3567 = vcmp.eq.f32.partialorder %v3566, 8.507059e+37
    %v3568 = vand.u32 %v3508, 2147483648
    %v3569 = vor.u32 1.1754944e-38, %v3568
    %v3570 = vsel %vm3567, %v3569, %v3565
    %v3571 = vmul.f32 %v3375, %v3570
    %v3572 = vrcp.pop %v3509
    %v3573 = vmul.f32 %v3509, %v3572
    %v3574 = vsub.f32 1.0, %v3573
    %v3575 = vmul.f32 %v3572, %v3574
    %v3576 = vadd.f32 %v3572, %v3575
    %vm3577 = vweird.f32 %v3509
    %vm3578 = vweird.f32 %v3572
    %vm3579 = vmor %vm3577, %vm3578
    %v3580 = vsel %vm3579, %v3572, %v3576
    %v3581 = vand.u32 2147483647, %v3509
    %vm3582 = vcmp.eq.f32.partialorder %v3581, 8.507059e+37
    %v3583 = vand.u32 %v3509, 2147483648
    %v3584 = vor.u32 1.1754944e-38, %v3583
    %v3585 = vsel %vm3582, %v3584, %v3580
    %v3586 = vmul.f32 %v3378, %v3585
    %v3587 = vrcp.pop %v3510
    %v3588 = vmul.f32 %v3510, %v3587
    %v3589 = vsub.f32 1.0, %v3588
    %v3590 = vmul.f32 %v3587, %v3589
    %v3591 = vadd.f32 %v3587, %v3590
    %vm3592 = vweird.f32 %v3510
    %vm3593 = vweird.f32 %v3587
    %vm3594 = vmor %vm3592, %vm3593
    %v3595 = vsel %vm3594, %v3587, %v3591
    %v3596 = vand.u32 2147483647, %v3510
    %vm3597 = vcmp.eq.f32.partialorder %v3596, 8.507059e+37
    %v3598 = vand.u32 %v3510, 2147483648
    %v3599 = vor.u32 1.1754944e-38, %v3598
    %v3600 = vsel %vm3597, %v3599, %v3595
    %v3601 = vmul.f32 %v3381, %v3600
    %v3602 = vrcp.pop %v3511
    %v3603 = vmul.f32 %v3511, %v3602
    %v3604 = vsub.f32 1.0, %v3603
    %v3605 = vmul.f32 %v3602, %v3604
    %v3606 = vadd.f32 %v3602, %v3605
    %vm3607 = vweird.f32 %v3511
    %vm3608 = vweird.f32 %v3602
    %vm3609 = vmor %vm3607, %vm3608
    %v3610 = vsel %vm3609, %v3602, %v3606
    %v3611 = vand.u32 2147483647, %v3511
    %vm3612 = vcmp.eq.f32.partialorder %v3611, 8.507059e+37
    %v3613 = vand.u32 %v3511, 2147483648
    %v3614 = vor.u32 1.1754944e-38, %v3613
    %v3615 = vsel %vm3612, %v3614, %v3610
    %v3616 = vmul.f32 %v3384, %v3615
    %s3617 = scalar_lea.vmem %s8, 480
    %v3618 = vld [vmem:[%s3617] sm:$0xff]
    %v3619 = vld [vmem:[%s3617 + $0x8] sm:$0xff]
    %v3620 = vld [vmem:[%s3617 + $0x10] sm:$0xff]
    %v3621 = vld [vmem:[%s3617 + $0x18] sm:$0xff]
    %s3622 = scalar_lea.vmem %s8, 512
    %v3623 = vld [vmem:[%s3622] sm:$0xff]
    %v3624 = vld [vmem:[%s3622 + $0x8] sm:$0xff]
    %v3625 = vld [vmem:[%s3622 + $0x10] sm:$0xff]
    %v3626 = vld [vmem:[%s3622 + $0x18] sm:$0xff]
    %3627 = vmatpush.msra.mxu0 0.0
    %3628 = vmatpush.msra.mxu0 0.0
    %3629 = vmatpush.msra.mxu0 0.0
    %3630 = vmatpush.msra.mxu0 0.0
    %3631 = vmatpush.msra.mxu0 0.0
    %3632 = vmatpush.msra.mxu0 0.0
    %3633 = vmatpush.msra.mxu0 0.0
    %3634 = vmatpush.msra.mxu0 0.0
    %3635 = vmatpush.msra.mxu0 0.0
    %3636 = vmatpush.msra.mxu0 0.0
    %3637 = vmatpush.msra.mxu0 0.0
    %3638 = vmatpush.msra.mxu0 0.0
    %3639 = vmatpush.msra.mxu0 %v3626
    %3640 = vmatpush.msra.mxu0 %v3625
    %3641 = vmatpush.msra.mxu0 %v3624
    %3642 = vmatpush.msra.mxu0 %v3623
    %3643 = vmatmul.f32.gmra.mxu0 %v2374
    %v3644 = vpop.f32.mrf.mxu0
    %v3645 = vadd.f32 0.0, %v3644
    %3646 = vmatmul.f32.gmra.mxu0 %v2377
    %v3647 = vpop.f32.mrf.mxu0
    %v3648 = vadd.f32 0.0, %v3647
    %3649 = vmatmul.f32.gmra.mxu0 %v2380
    %v3650 = vpop.f32.mrf.mxu0
    %v3651 = vadd.f32 0.0, %v3650
    %3652 = vmatmul.f32.gmra.mxu0 %v2383
    %v3653 = vpop.f32.mrf.mxu0
    %v3654 = vadd.f32 0.0, %v3653
    %3655 = vmatmul.f32.gmra.mxu0 %v2386
    %v3656 = vpop.f32.mrf.mxu0
    %v3657 = vadd.f32 0.0, %v3656
    %3658 = vmatmul.f32.gmra.mxu0 %v2389
    %v3659 = vpop.f32.mrf.mxu0
    %v3660 = vadd.f32 0.0, %v3659
    %3661 = vmatmul.f32.gmra.mxu0 %v2392
    %v3662 = vpop.f32.mrf.mxu0
    %v3663 = vadd.f32 0.0, %v3662
    %3664 = vdwg.mxu0
    %3665 = vmatpush.msra.mxu0 0.0
    %3666 = vmatpush.msra.mxu0 0.0
    %3667 = vmatpush.msra.mxu0 0.0
    %3668 = vmatpush.msra.mxu0 0.0
    %3669 = vmatpush.msra.mxu0 0.0
    %3670 = vmatpush.msra.mxu0 0.0
    %3671 = vmatpush.msra.mxu0 0.0
    %3672 = vmatpush.msra.mxu0 0.0
    %3673 = vmatpush.msra.mxu0 0.0
    %3674 = vmatpush.msra.mxu0 0.0
    %3675 = vmatpush.msra.mxu0 0.0
    %3676 = vmatpush.msra.mxu0 0.0
    %3677 = vmatpush.msra.mxu0 %v3621
    %3678 = vmatpush.msra.mxu0 %v3620
    %3679 = vmatpush.msra.mxu0 %v3619
    %3680 = vmatpush.msra.mxu0 %v3618
    %3681 = vmatmul.f32.gmra.mxu0 %v2433
    %v3682 = vpop.f32.mrf.mxu0
    %v3683 = vadd.f32 %v3645, %v3682
    %3684 = vmatmul.f32.gmra.mxu0 %v2436
    %v3685 = vpop.f32.mrf.mxu0
    %v3686 = vadd.f32 %v3648, %v3685
    %3687 = vmatmul.f32.gmra.mxu0 %v2439
    %v3688 = vpop.f32.mrf.mxu0
    %v3689 = vadd.f32 %v3651, %v3688
    %3690 = vmatmul.f32.gmra.mxu0 %v2442
    %v3691 = vpop.f32.mrf.mxu0
    %v3692 = vadd.f32 %v3654, %v3691
    %3693 = vmatmul.f32.gmra.mxu0 %v2445
    %v3694 = vpop.f32.mrf.mxu0
    %v3695 = vadd.f32 %v3657, %v3694
    %3696 = vmatmul.f32.gmra.mxu0 %v2448
    %v3697 = vpop.f32.mrf.mxu0
    %v3698 = vadd.f32 %v3660, %v3697
    %3699 = vmatmul.f32.gmra.mxu0 %v2451
    %v3700 = vpop.f32.mrf.mxu0
    %v3701 = vadd.f32 %v3663, %v3700
    %3702 = vdwg.mxu0
    %s3703 = scalar_lea.vmem %s10, 6
    %v3704 = vld [vmem:[%s3703] sm:$0x3]
    %v3705 = vperm.slane %v3704, 0
    %v3706 = vmul.f32 %v3395, %v3705
    %v3707 = vmul.f32 %v3398, %v3705
    %v3708 = vmul.f32 %v3401, %v3705
    %v3709 = vmul.f32 %v3404, %v3705
    %v3710 = vmul.f32 %v3407, %v3705
    %v3711 = vmul.f32 %v3410, %v3705
    %v3712 = vmul.f32 %v3413, %v3705
    %v3713 = vperm.slane %v3704, 1
    %v3714 = vmul.f32 %v137, %v3713
    %v3715 = vmul.f32 %v140, %v3713
    %v3716 = vmul.f32 %v143, %v3713
    %v3717 = vmul.f32 %v146, %v3713
    %v3718 = vmul.f32 %v149, %v3713
    %v3719 = vmul.f32 %v152, %v3713
    %v3720 = vmul.f32 %v155, %v3713
    %v3721 = vadd.f32 %v3706, %v3714
    %v3722 = vadd.f32 %v3707, %v3715
    %v3723 = vadd.f32 %v3708, %v3716
    %v3724 = vadd.f32 %v3709, %v3717
    %v3725 = vadd.f32 %v3710, %v3718
    %v3726 = vadd.f32 %v3711, %v3719
    %v3727 = vadd.f32 %v3712, %v3720
    %v3728 = vadd.f32 %v3683, %v3721
    %v3729 = vadd.f32 %v3686, %v3722
    %v3730 = vadd.f32 %v3689, %v3723
    %v3731 = vadd.f32 %v3692, %v3724
    %v3732 = vadd.f32 %v3695, %v3725
    %v3733 = vadd.f32 %v3698, %v3726
    %v3734 = vadd.f32 %v3701, %v3727
    %v3735 = vld [vmem:[%s9 + $0x16] sm:$0x1]
    %v3736 = vperm.slane %v3735, 0
    %v3737 = vadd.f32 %v3728, %v3736
    %v3738 = vadd.f32 %v3729, %v3736
    %v3739 = vadd.f32 %v3730, %v3736
    %v3740 = vadd.f32 %v3731, %v3736
    %v3741 = vadd.f32 %v3732, %v3736
    %v3742 = vadd.f32 %v3733, %v3736
    %v3743 = vadd.f32 %v3734, %v3736
    %v3744 = vld [vmem:[%s9 + $0x17] sm:$0x1]
    %v3745 = vld [vmem:[%s9 + $0x18] sm:$0x1]
    %v3746 = vsel %vm518, %v3737, 0.0
    %3747 = vadd.xlane.f32.xlu0 %v3746
    %v3748 = vpop.xlane.xlu0 %3747
    %v3749 = vsel %vm518, %v3738, 0.0
    %3750 = vadd.xlane.f32.xlu0 %v3749
    %v3751 = vpop.xlane.xlu0 %3750
    %v3752 = vsel %vm518, %v3739, 0.0
    %3753 = vadd.xlane.f32.xlu0 %v3752
    %v3754 = vpop.xlane.xlu0 %3753
    %v3755 = vsel %vm518, %v3740, 0.0
    %3756 = vadd.xlane.f32.xlu0 %v3755
    %v3757 = vpop.xlane.xlu0 %3756
    %v3758 = vsel %vm518, %v3741, 0.0
    %3759 = vadd.xlane.f32.xlu0 %v3758
    %v3760 = vpop.xlane.xlu0 %3759
    %v3761 = vsel %vm518, %v3742, 0.0
    %3762 = vadd.xlane.f32.xlu0 %v3761
    %v3763 = vpop.xlane.xlu0 %3762
    %v3764 = vsel %vm518, %v3743, 0.0
    %3765 = vadd.xlane.f32.xlu0 %v3764
    %v3766 = vpop.xlane.xlu0 %3765
    %v3767 = vmul.f32 %v3748, %v706
    %v3768 = vmul.f32 %v3751, %v706
    %v3769 = vmul.f32 %v3754, %v706
    %v3770 = vmul.f32 %v3757, %v706
    %v3771 = vmul.f32 %v3760, %v706
    %v3772 = vmul.f32 %v3763, %v706
    %v3773 = vmul.f32 %v3766, %v706
    %v3774 = vsub.f32 %v3737, %v3767
    %v3775 = vsub.f32 %v3738, %v3768
    %v3776 = vsub.f32 %v3739, %v3769
    %v3777 = vsub.f32 %v3740, %v3770
    %v3778 = vsub.f32 %v3741, %v3771
    %v3779 = vsub.f32 %v3742, %v3772
    %v3780 = vsub.f32 %v3743, %v3773
    %v3781 = vmul.f32 %v3774, %v3774
    %v3782 = vmul.f32 %v3775, %v3775
    %v3783 = vmul.f32 %v3776, %v3776
    %v3784 = vmul.f32 %v3777, %v3777
    %v3785 = vmul.f32 %v3778, %v3778
    %v3786 = vmul.f32 %v3779, %v3779
    %v3787 = vmul.f32 %v3780, %v3780
    %v3788 = vsel %vm518, %v3781, 0.0
    %3789 = vadd.xlane.f32.xlu0 %v3788
    %v3790 = vpop.xlane.xlu0 %3789
    %v3791 = vsel %vm518, %v3782, 0.0
    %3792 = vadd.xlane.f32.xlu0 %v3791
    %v3793 = vpop.xlane.xlu0 %3792
    %v3794 = vsel %vm518, %v3783, 0.0
    %3795 = vadd.xlane.f32.xlu0 %v3794
    %v3796 = vpop.xlane.xlu0 %3795
    %v3797 = vsel %vm518, %v3784, 0.0
    %3798 = vadd.xlane.f32.xlu0 %v3797
    %v3799 = vpop.xlane.xlu0 %3798
    %v3800 = vsel %vm518, %v3785, 0.0
    %3801 = vadd.xlane.f32.xlu0 %v3800
    %v3802 = vpop.xlane.xlu0 %3801
    %v3803 = vsel %vm518, %v3786, 0.0
    %3804 = vadd.xlane.f32.xlu0 %v3803
    %v3805 = vpop.xlane.xlu0 %3804
    %v3806 = vsel %vm518, %v3787, 0.0
    %3807 = vadd.xlane.f32.xlu0 %v3806
    %v3808 = vpop.xlane.xlu0 %3807
    %v3809 = vmul.f32 %v3790, %v706
    %v3810 = vmul.f32 %v3793, %v706
    %v3811 = vmul.f32 %v3796, %v706
    %v3812 = vmul.f32 %v3799, %v706
    %v3813 = vmul.f32 %v3802, %v706
    %v3814 = vmul.f32 %v3805, %v706
    %v3815 = vmul.f32 %v3808, %v706
    %v3816 = vadd.f32 %v3809, 1e-05
    %v3817 = vadd.f32 %v3810, 1e-05
    %v3818 = vadd.f32 %v3811, 1e-05
    %v3819 = vadd.f32 %v3812, 1e-05
    %v3820 = vadd.f32 %v3813, 1e-05
    %v3821 = vadd.f32 %v3814, 1e-05
    %v3822 = vadd.f32 %v3815, 1e-05
    %v3823 = vrsqrt.pop %v3816
    %v3824 = vmul.f32 %v3823, %v3816
    %v3825 = vmul.f32 %v3824, %v3823
    %v3826 = vmul.f32 0.5, %v3825
    %v3827 = vsub.f32 1.5, %v3826
    %v3828 = vmul.f32 %v3823, %v3827
    %vm3829 = vweird.f32 %v3816
    %vm3830 = vweird.f32 %v3823
    %vm3831 = vmor %vm3829, %vm3830
    %v3832 = vsel %vm3831, %v3823, %v3828
    %v3833 = vrsqrt.pop %v3817
    %v3834 = vmul.f32 %v3833, %v3817
    %v3835 = vmul.f32 %v3834, %v3833
    %v3836 = vmul.f32 0.5, %v3835
    %v3837 = vsub.f32 1.5, %v3836
    %v3838 = vmul.f32 %v3833, %v3837
    %vm3839 = vweird.f32 %v3817
    %vm3840 = vweird.f32 %v3833
    %vm3841 = vmor %vm3839, %vm3840
    %v3842 = vsel %vm3841, %v3833, %v3838
    %v3843 = vrsqrt.pop %v3818
    %v3844 = vmul.f32 %v3843, %v3818
    %v3845 = vmul.f32 %v3844, %v3843
    %v3846 = vmul.f32 0.5, %v3845
    %v3847 = vsub.f32 1.5, %v3846
    %v3848 = vmul.f32 %v3843, %v3847
    %vm3849 = vweird.f32 %v3818
    %vm3850 = vweird.f32 %v3843
    %vm3851 = vmor %vm3849, %vm3850
    %v3852 = vsel %vm3851, %v3843, %v3848
    %v3853 = vrsqrt.pop %v3819
    %v3854 = vmul.f32 %v3853, %v3819
    %v3855 = vmul.f32 %v3854, %v3853
    %v3856 = vmul.f32 0.5, %v3855
    %v3857 = vsub.f32 1.5, %v3856
    %v3858 = vmul.f32 %v3853, %v3857
    %vm3859 = vweird.f32 %v3819
    %vm3860 = vweird.f32 %v3853
    %vm3861 = vmor %vm3859, %vm3860
    %v3862 = vsel %vm3861, %v3853, %v3858
    %v3863 = vrsqrt.pop %v3820
    %v3864 = vmul.f32 %v3863, %v3820
    %v3865 = vmul.f32 %v3864, %v3863
    %v3866 = vmul.f32 0.5, %v3865
    %v3867 = vsub.f32 1.5, %v3866
    %v3868 = vmul.f32 %v3863, %v3867
    %vm3869 = vweird.f32 %v3820
    %vm3870 = vweird.f32 %v3863
    %vm3871 = vmor %vm3869, %vm3870
    %v3872 = vsel %vm3871, %v3863, %v3868
    %v3873 = vrsqrt.pop %v3821
    %v3874 = vmul.f32 %v3873, %v3821
    %v3875 = vmul.f32 %v3874, %v3873
    %v3876 = vmul.f32 0.5, %v3875
    %v3877 = vsub.f32 1.5, %v3876
    %v3878 = vmul.f32 %v3873, %v3877
    %vm3879 = vweird.f32 %v3821
    %vm3880 = vweird.f32 %v3873
    %vm3881 = vmor %vm3879, %vm3880
    %v3882 = vsel %vm3881, %v3873, %v3878
    %v3883 = vrsqrt.pop %v3822
    %v3884 = vmul.f32 %v3883, %v3822
    %v3885 = vmul.f32 %v3884, %v3883
    %v3886 = vmul.f32 0.5, %v3885
    %v3887 = vsub.f32 1.5, %v3886
    %v3888 = vmul.f32 %v3883, %v3887
    %vm3889 = vweird.f32 %v3822
    %vm3890 = vweird.f32 %v3883
    %vm3891 = vmor %vm3889, %vm3890
    %v3892 = vsel %vm3891, %v3883, %v3888
    %v3893 = vmul.f32 %v3774, %v3832
    %v3894 = vmul.f32 %v3775, %v3842
    %v3895 = vmul.f32 %v3776, %v3852
    %v3896 = vmul.f32 %v3777, %v3862
    %v3897 = vmul.f32 %v3778, %v3872
    %v3898 = vmul.f32 %v3779, %v3882
    %v3899 = vmul.f32 %v3780, %v3892
    %v3900 = vperm.slane %v3744, 0
    %v3901 = vmul.f32 %v3893, %v3900
    %v3902 = vmul.f32 %v3894, %v3900
    %v3903 = vmul.f32 %v3895, %v3900
    %v3904 = vmul.f32 %v3896, %v3900
    %v3905 = vmul.f32 %v3897, %v3900
    %v3906 = vmul.f32 %v3898, %v3900
    %v3907 = vmul.f32 %v3899, %v3900
    %v3908 = vperm.slane %v3745, 0
    %v3909 = vadd.f32 %v3901, %v3908
    %v3910 = vadd.f32 %v3902, %v3908
    %v3911 = vadd.f32 %v3903, %v3908
    %v3912 = vadd.f32 %v3904, %v3908
    %v3913 = vadd.f32 %v3905, %v3908
    %v3914 = vadd.f32 %v3906, %v3908
    %v3915 = vadd.f32 %v3907, %v3908
    %v3916 = vxor.u32 %v3909, 2147483648
    %v3917 = vxor.u32 %v3910, 2147483648
    %v3918 = vxor.u32 %v3911, 2147483648
    %v3919 = vxor.u32 %v3912, 2147483648
    %v3920 = vxor.u32 %v3913, 2147483648
    %v3921 = vxor.u32 %v3914, 2147483648
    %v3922 = vxor.u32 %v3915, 2147483648
    %v3923 = vmul.f32 %v3916, 1.442695
    %v3924 = vpow.pop %v3923
    %v3925 = vmul.f32 %v3917, 1.442695
    %v3926 = vpow.pop %v3925
    %v3927 = vmul.f32 %v3918, 1.442695
    %v3928 = vpow.pop %v3927
    %v3929 = vmul.f32 %v3919, 1.442695
    %v3930 = vpow.pop %v3929
    %v3931 = vmul.f32 %v3920, 1.442695
    %v3932 = vpow.pop %v3931
    %v3933 = vmul.f32 %v3921, 1.442695
    %v3934 = vpow.pop %v3933
    %v3935 = vmul.f32 %v3922, 1.442695
    %v3936 = vpow.pop %v3935
    %v3937 = vadd.f32 %v3924, 1.0
    %v3938 = vadd.f32 %v3926, 1.0
    %v3939 = vadd.f32 %v3928, 1.0
    %v3940 = vadd.f32 %v3930, 1.0
    %v3941 = vadd.f32 %v3932, 1.0
    %v3942 = vadd.f32 %v3934, 1.0
    %v3943 = vadd.f32 %v3936, 1.0
    %v3944 = vrcp.pop %v3937
    %v3945 = vmul.f32 %v3937, %v3944
    %v3946 = vsub.f32 1.0, %v3945
    %v3947 = vmul.f32 %v3944, %v3946
    %v3948 = vadd.f32 %v3944, %v3947
    %vm3949 = vweird.f32 %v3937
    %vm3950 = vweird.f32 %v3944
    %vm3951 = vmor %vm3949, %vm3950
    %v3952 = vsel %vm3951, %v3944, %v3948
    %v3953 = vand.u32 2147483647, %v3937
    %vm3954 = vcmp.eq.f32.partialorder %v3953, 8.507059e+37
    %v3955 = vand.u32 %v3937, 2147483648
    %v3956 = vor.u32 1.1754944e-38, %v3955
    %v3957 = vsel %vm3954, %v3956, %v3952
    %v3958 = vmul.f32 1.0, %v3957
    %v3959 = vrcp.pop %v3938
    %v3960 = vmul.f32 %v3938, %v3959
    %v3961 = vsub.f32 1.0, %v3960
    %v3962 = vmul.f32 %v3959, %v3961
    %v3963 = vadd.f32 %v3959, %v3962
    %vm3964 = vweird.f32 %v3938
    %vm3965 = vweird.f32 %v3959
    %vm3966 = vmor %vm3964, %vm3965
    %v3967 = vsel %vm3966, %v3959, %v3963
    %v3968 = vand.u32 2147483647, %v3938
    %vm3969 = vcmp.eq.f32.partialorder %v3968, 8.507059e+37
    %v3970 = vand.u32 %v3938, 2147483648
    %v3971 = vor.u32 1.1754944e-38, %v3970
    %v3972 = vsel %vm3969, %v3971, %v3967
    %v3973 = vmul.f32 1.0, %v3972
    %v3974 = vrcp.pop %v3939
    %v3975 = vmul.f32 %v3939, %v3974
    %v3976 = vsub.f32 1.0, %v3975
    %v3977 = vmul.f32 %v3974, %v3976
    %v3978 = vadd.f32 %v3974, %v3977
    %vm3979 = vweird.f32 %v3939
    %vm3980 = vweird.f32 %v3974
    %vm3981 = vmor %vm3979, %vm3980
    %v3982 = vsel %vm3981, %v3974, %v3978
    %v3983 = vand.u32 2147483647, %v3939
    %vm3984 = vcmp.eq.f32.partialorder %v3983, 8.507059e+37
    %v3985 = vand.u32 %v3939, 2147483648
    %v3986 = vor.u32 1.1754944e-38, %v3985
    %v3987 = vsel %vm3984, %v3986, %v3982
    %v3988 = vmul.f32 1.0, %v3987
    %v3989 = vrcp.pop %v3940
    %v3990 = vmul.f32 %v3940, %v3989
    %v3991 = vsub.f32 1.0, %v3990
    %v3992 = vmul.f32 %v3989, %v3991
    %v3993 = vadd.f32 %v3989, %v3992
    %vm3994 = vweird.f32 %v3940
    %vm3995 = vweird.f32 %v3989
    %vm3996 = vmor %vm3994, %vm3995
    %v3997 = vsel %vm3996, %v3989, %v3993
    %v3998 = vand.u32 2147483647, %v3940
    %vm3999 = vcmp.eq.f32.partialorder %v3998, 8.507059e+37
    %v4000 = vand.u32 %v3940, 2147483648
    %v4001 = vor.u32 1.1754944e-38, %v4000
    %v4002 = vsel %vm3999, %v4001, %v3997
    %v4003 = vmul.f32 1.0, %v4002
    %v4004 = vrcp.pop %v3941
    %v4005 = vmul.f32 %v3941, %v4004
    %v4006 = vsub.f32 1.0, %v4005
    %v4007 = vmul.f32 %v4004, %v4006
    %v4008 = vadd.f32 %v4004, %v4007
    %vm4009 = vweird.f32 %v3941
    %vm4010 = vweird.f32 %v4004
    %vm4011 = vmor %vm4009, %vm4010
    %v4012 = vsel %vm4011, %v4004, %v4008
    %v4013 = vand.u32 2147483647, %v3941
    %vm4014 = vcmp.eq.f32.partialorder %v4013, 8.507059e+37
    %v4015 = vand.u32 %v3941, 2147483648
    %v4016 = vor.u32 1.1754944e-38, %v4015
    %v4017 = vsel %vm4014, %v4016, %v4012
    %v4018 = vmul.f32 1.0, %v4017
    %v4019 = vrcp.pop %v3942
    %v4020 = vmul.f32 %v3942, %v4019
    %v4021 = vsub.f32 1.0, %v4020
    %v4022 = vmul.f32 %v4019, %v4021
    %v4023 = vadd.f32 %v4019, %v4022
    %vm4024 = vweird.f32 %v3942
    %vm4025 = vweird.f32 %v4019
    %vm4026 = vmor %vm4024, %vm4025
    %v4027 = vsel %vm4026, %v4019, %v4023
    %v4028 = vand.u32 2147483647, %v3942
    %vm4029 = vcmp.eq.f32.partialorder %v4028, 8.507059e+37
    %v4030 = vand.u32 %v3942, 2147483648
    %v4031 = vor.u32 1.1754944e-38, %v4030
    %v4032 = vsel %vm4029, %v4031, %v4027
    %v4033 = vmul.f32 1.0, %v4032
    %v4034 = vrcp.pop %v3943
    %v4035 = vmul.f32 %v3943, %v4034
    %v4036 = vsub.f32 1.0, %v4035
    %v4037 = vmul.f32 %v4034, %v4036
    %v4038 = vadd.f32 %v4034, %v4037
    %vm4039 = vweird.f32 %v3943
    %vm4040 = vweird.f32 %v4034
    %vm4041 = vmor %vm4039, %vm4040
    %v4042 = vsel %vm4041, %v4034, %v4038
    %v4043 = vand.u32 2147483647, %v3943
    %vm4044 = vcmp.eq.f32.partialorder %v4043, 8.507059e+37
    %v4045 = vand.u32 %v3943, 2147483648
    %v4046 = vor.u32 1.1754944e-38, %v4045
    %v4047 = vsel %vm4044, %v4046, %v4042
    %v4048 = vmul.f32 1.0, %v4047
    %v4049 = vmul.f32 %v3909, %v3958
    %v4050 = vmul.f32 %v3910, %v3973
    %v4051 = vmul.f32 %v3911, %v3988
    %v4052 = vmul.f32 %v3912, %v4003
    %v4053 = vmul.f32 %v3913, %v4018
    %v4054 = vmul.f32 %v3914, %v4033
    %v4055 = vmul.f32 %v3915, %v4048
    %s4056 = scalar_lea.vmem %s8, 544
    %v4057 = vld [vmem:[%s4056] sm:$0xff]
    %v4058 = vld [vmem:[%s4056 + $0x8] sm:$0xff]
    %v4059 = vld [vmem:[%s4056 + $0x10] sm:$0xff]
    %v4060 = vld [vmem:[%s4056 + $0x18] sm:$0xff]
    %v4061 = vld [vmem:[%s9 + $0x19] sm:$0x1]
    %v4062 = vperm.slane %v4061, 0
    %v4064 = vsel %vm518, %v4049, 0
    %v4067 = vsel %vm518, %v4050, 0
    %v4070 = vsel %vm518, %v4051, 0
    %v4073 = vsel %vm518, %v4052, 0
    %v4076 = vsel %vm518, %v4053, 0
    %v4079 = vsel %vm518, %v4054, 0
    %v4082 = vsel %vm518, %v4055, 0
    %4084 = vmatpush.msra.mxu0 0.0
    %4085 = vmatpush.msra.mxu0 0.0
    %4086 = vmatpush.msra.mxu0 0.0
    %4087 = vmatpush.msra.mxu0 0.0
    %4088 = vmatpush.msra.mxu0 0.0
    %4089 = vmatpush.msra.mxu0 0.0
    %4090 = vmatpush.msra.mxu0 0.0
    %4091 = vmatpush.msra.mxu0 0.0
    %4092 = vmatpush.msra.mxu0 0.0
    %4093 = vmatpush.msra.mxu0 0.0
    %4094 = vmatpush.msra.mxu0 0.0
    %4095 = vmatpush.msra.mxu0 0.0
    %4096 = vmatpush.msra.mxu0 %v4060
    %4097 = vmatpush.msra.mxu0 %v4059
    %4098 = vmatpush.msra.mxu0 %v4058
    %4099 = vmatpush.msra.mxu0 %v4057
    %4100 = vmatmul.f32.gmra.mxu0 %v4064
    %v4101 = vpop.f32.mrf.mxu0
    %v4102 = vadd.f32 %v4062, %v4101
    %4103 = vmatmul.f32.gmra.mxu0 %v4067
    %v4104 = vpop.f32.mrf.mxu0
    %v4105 = vadd.f32 %v4062, %v4104
    %4106 = vmatmul.f32.gmra.mxu0 %v4070
    %v4107 = vpop.f32.mrf.mxu0
    %v4108 = vadd.f32 %v4062, %v4107
    %4109 = vmatmul.f32.gmra.mxu0 %v4073
    %v4110 = vpop.f32.mrf.mxu0
    %v4111 = vadd.f32 %v4062, %v4110
    %4112 = vmatmul.f32.gmra.mxu0 %v4076
    %v4113 = vpop.f32.mrf.mxu0
    %v4114 = vadd.f32 %v4062, %v4113
    %4115 = vmatmul.f32.gmra.mxu0 %v4079
    %v4116 = vpop.f32.mrf.mxu0
    %v4117 = vadd.f32 %v4062, %v4116
    %4118 = vmatmul.f32.gmra.mxu0 %v4082
    %v4119 = vpop.f32.mrf.mxu0
    %v4120 = vadd.f32 %v4062, %v4119
    %4121 = vdwg.mxu0
    %v4122 = vxor.u32 %v4102, 2147483648
    %v4123 = vxor.u32 %v4105, 2147483648
    %v4124 = vxor.u32 %v4108, 2147483648
    %v4125 = vxor.u32 %v4111, 2147483648
    %v4126 = vxor.u32 %v4114, 2147483648
    %v4127 = vxor.u32 %v4117, 2147483648
    %v4128 = vxor.u32 %v4120, 2147483648
    %v4129 = vmul.f32 %v4122, 1.442695
    %v4130 = vpow.pop %v4129
    %v4131 = vmul.f32 %v4123, 1.442695
    %v4132 = vpow.pop %v4131
    %v4133 = vmul.f32 %v4124, 1.442695
    %v4134 = vpow.pop %v4133
    %v4135 = vmul.f32 %v4125, 1.442695
    %v4136 = vpow.pop %v4135
    %v4137 = vmul.f32 %v4126, 1.442695
    %v4138 = vpow.pop %v4137
    %v4139 = vmul.f32 %v4127, 1.442695
    %v4140 = vpow.pop %v4139
    %v4141 = vmul.f32 %v4128, 1.442695
    %v4142 = vpow.pop %v4141
    %v4143 = vadd.f32 %v4130, 1.0
    %v4144 = vadd.f32 %v4132, 1.0
    %v4145 = vadd.f32 %v4134, 1.0
    %v4146 = vadd.f32 %v4136, 1.0
    %v4147 = vadd.f32 %v4138, 1.0
    %v4148 = vadd.f32 %v4140, 1.0
    %v4149 = vadd.f32 %v4142, 1.0
    %v4150 = vrcp.pop %v4143
    %v4151 = vmul.f32 %v4143, %v4150
    %v4152 = vsub.f32 1.0, %v4151
    %v4153 = vmul.f32 %v4150, %v4152
    %v4154 = vadd.f32 %v4150, %v4153
    %vm4155 = vweird.f32 %v4143
    %vm4156 = vweird.f32 %v4150
    %vm4157 = vmor %vm4155, %vm4156
    %v4158 = vsel %vm4157, %v4150, %v4154
    %v4159 = vand.u32 2147483647, %v4143
    %vm4160 = vcmp.eq.f32.partialorder %v4159, 8.507059e+37
    %v4161 = vand.u32 %v4143, 2147483648
    %v4162 = vor.u32 1.1754944e-38, %v4161
    %v4163 = vsel %vm4160, %v4162, %v4158
    %v4164 = vmul.f32 1.0, %v4163
    %v4165 = vrcp.pop %v4144
    %v4166 = vmul.f32 %v4144, %v4165
    %v4167 = vsub.f32 1.0, %v4166
    %v4168 = vmul.f32 %v4165, %v4167
    %v4169 = vadd.f32 %v4165, %v4168
    %vm4170 = vweird.f32 %v4144
    %vm4171 = vweird.f32 %v4165
    %vm4172 = vmor %vm4170, %vm4171
    %v4173 = vsel %vm4172, %v4165, %v4169
    %v4174 = vand.u32 2147483647, %v4144
    %vm4175 = vcmp.eq.f32.partialorder %v4174, 8.507059e+37
    %v4176 = vand.u32 %v4144, 2147483648
    %v4177 = vor.u32 1.1754944e-38, %v4176
    %v4178 = vsel %vm4175, %v4177, %v4173
    %v4179 = vmul.f32 1.0, %v4178
    %v4180 = vrcp.pop %v4145
    %v4181 = vmul.f32 %v4145, %v4180
    %v4182 = vsub.f32 1.0, %v4181
    %v4183 = vmul.f32 %v4180, %v4182
    %v4184 = vadd.f32 %v4180, %v4183
    %vm4185 = vweird.f32 %v4145
    %vm4186 = vweird.f32 %v4180
    %vm4187 = vmor %vm4185, %vm4186
    %v4188 = vsel %vm4187, %v4180, %v4184
    %v4189 = vand.u32 2147483647, %v4145
    %vm4190 = vcmp.eq.f32.partialorder %v4189, 8.507059e+37
    %v4191 = vand.u32 %v4145, 2147483648
    %v4192 = vor.u32 1.1754944e-38, %v4191
    %v4193 = vsel %vm4190, %v4192, %v4188
    %v4194 = vmul.f32 1.0, %v4193
    %v4195 = vrcp.pop %v4146
    %v4196 = vmul.f32 %v4146, %v4195
    %v4197 = vsub.f32 1.0, %v4196
    %v4198 = vmul.f32 %v4195, %v4197
    %v4199 = vadd.f32 %v4195, %v4198
    %vm4200 = vweird.f32 %v4146
    %vm4201 = vweird.f32 %v4195
    %vm4202 = vmor %vm4200, %vm4201
    %v4203 = vsel %vm4202, %v4195, %v4199
    %v4204 = vand.u32 2147483647, %v4146
    %vm4205 = vcmp.eq.f32.partialorder %v4204, 8.507059e+37
    %v4206 = vand.u32 %v4146, 2147483648
    %v4207 = vor.u32 1.1754944e-38, %v4206
    %v4208 = vsel %vm4205, %v4207, %v4203
    %v4209 = vmul.f32 1.0, %v4208
    %v4210 = vrcp.pop %v4147
    %v4211 = vmul.f32 %v4147, %v4210
    %v4212 = vsub.f32 1.0, %v4211
    %v4213 = vmul.f32 %v4210, %v4212
    %v4214 = vadd.f32 %v4210, %v4213
    %vm4215 = vweird.f32 %v4147
    %vm4216 = vweird.f32 %v4210
    %vm4217 = vmor %vm4215, %vm4216
    %v4218 = vsel %vm4217, %v4210, %v4214
    %v4219 = vand.u32 2147483647, %v4147
    %vm4220 = vcmp.eq.f32.partialorder %v4219, 8.507059e+37
    %v4221 = vand.u32 %v4147, 2147483648
    %v4222 = vor.u32 1.1754944e-38, %v4221
    %v4223 = vsel %vm4220, %v4222, %v4218
    %v4224 = vmul.f32 1.0, %v4223
    %v4225 = vrcp.pop %v4148
    %v4226 = vmul.f32 %v4148, %v4225
    %v4227 = vsub.f32 1.0, %v4226
    %v4228 = vmul.f32 %v4225, %v4227
    %v4229 = vadd.f32 %v4225, %v4228
    %vm4230 = vweird.f32 %v4148
    %vm4231 = vweird.f32 %v4225
    %vm4232 = vmor %vm4230, %vm4231
    %v4233 = vsel %vm4232, %v4225, %v4229
    %v4234 = vand.u32 2147483647, %v4148
    %vm4235 = vcmp.eq.f32.partialorder %v4234, 8.507059e+37
    %v4236 = vand.u32 %v4148, 2147483648
    %v4237 = vor.u32 1.1754944e-38, %v4236
    %v4238 = vsel %vm4235, %v4237, %v4233
    %v4239 = vmul.f32 1.0, %v4238
    %v4240 = vrcp.pop %v4149
    %v4241 = vmul.f32 %v4149, %v4240
    %v4242 = vsub.f32 1.0, %v4241
    %v4243 = vmul.f32 %v4240, %v4242
    %v4244 = vadd.f32 %v4240, %v4243
    %vm4245 = vweird.f32 %v4149
    %vm4246 = vweird.f32 %v4240
    %vm4247 = vmor %vm4245, %vm4246
    %v4248 = vsel %vm4247, %v4240, %v4244
    %v4249 = vand.u32 2147483647, %v4149
    %vm4250 = vcmp.eq.f32.partialorder %v4249, 8.507059e+37
    %v4251 = vand.u32 %v4149, 2147483648
    %v4252 = vor.u32 1.1754944e-38, %v4251
    %v4253 = vsel %vm4250, %v4252, %v4248
    %v4254 = vmul.f32 1.0, %v4253
    %v4255 = vmul.f32 %v4102, %v4164
    %v4256 = vmul.f32 %v4105, %v4179
    %v4257 = vmul.f32 %v4108, %v4194
    %v4258 = vmul.f32 %v4111, %v4209
    %v4259 = vmul.f32 %v4114, %v4224
    %v4260 = vmul.f32 %v4117, %v4239
    %v4261 = vmul.f32 %v4120, %v4254
    %4262 = vmatpush.msra.mxu0 0.0
    %4263 = vmatpush.msra.mxu0 0.0
    %4264 = vmatpush.msra.mxu0 0.0
    %4265 = vmatpush.msra.mxu0 0.0
    %4266 = vmatpush.msra.mxu0 0.0
    %4267 = vmatpush.msra.mxu0 0.0
    %4268 = vmatpush.msra.mxu0 0.0
    %4269 = vmatpush.msra.mxu0 0.0
    %4270 = vmatpush.msra.mxu0 0.0
    %4271 = vmatpush.msra.mxu0 %v4261
    %4272 = vmatpush.msra.mxu0 %v4260
    %4273 = vmatpush.msra.mxu0 %v4259
    %4274 = vmatpush.msra.mxu0 %v4258
    %4275 = vmatpush.msra.mxu0 %v4257
    %4276 = vmatpush.msra.mxu0 %v4256
    %4277 = vmatpush.msra.mxu0 %v4255
    %4278 = vmatmul.f32.gmra.mxu0 %v1204
    %v4279 = vpop.f32.mrf.mxu0
    %v4280 = vadd.f32 0.0, %v4279
    %4281 = vdwg.mxu0
    %s4282 = scalar_lea.vmem %s8, 576
    %v4283 = vld [vmem:[%s4282] sm:$0xff]
    %v4284 = vld [vmem:[%s4282 + $0x8] sm:$0xff]
    %v4285 = vld [vmem:[%s4282 + $0x10] sm:$0xff]
    %v4286 = vld [vmem:[%s4282 + $0x18] sm:$0xff]
    %s4287 = scalar_lea.vmem %s8, 608
    %v4288 = vld [vmem:[%s4287] sm:$0xff]
    %v4289 = vld [vmem:[%s4287 + $0x8] sm:$0xff]
    %v4290 = vld [vmem:[%s4287 + $0x10] sm:$0xff]
    %v4291 = vld [vmem:[%s4287 + $0x18] sm:$0xff]
    %v4293 = vsel %vm518, %v4280, 0
    %4295 = vmatpush.msra.mxu0 0.0
    %4296 = vmatpush.msra.mxu0 0.0
    %4297 = vmatpush.msra.mxu0 0.0
    %4298 = vmatpush.msra.mxu0 0.0
    %4299 = vmatpush.msra.mxu0 0.0
    %4300 = vmatpush.msra.mxu0 0.0
    %4301 = vmatpush.msra.mxu0 0.0
    %4302 = vmatpush.msra.mxu0 0.0
    %4303 = vmatpush.msra.mxu0 0.0
    %4304 = vmatpush.msra.mxu0 0.0
    %4305 = vmatpush.msra.mxu0 0.0
    %4306 = vmatpush.msra.mxu0 0.0
    %4307 = vmatpush.msra.mxu0 %v4291
    %4308 = vmatpush.msra.mxu0 %v4290
    %4309 = vmatpush.msra.mxu0 %v4289
    %4310 = vmatpush.msra.mxu0 %v4288
    %4311 = vmatmul.f32.gmra.mxu0 %v4293
    %v4312 = vpop.f32.mrf.mxu0
    %v4313 = vadd.f32 0.0, %v4312
    %4314 = vdwg.mxu0
    %v4316 = vsel %vm518, %v2286, 0
    %4318 = vmatpush.msra.mxu0 0.0
    %4319 = vmatpush.msra.mxu0 0.0
    %4320 = vmatpush.msra.mxu0 0.0
    %4321 = vmatpush.msra.mxu0 0.0
    %4322 = vmatpush.msra.mxu0 0.0
    %4323 = vmatpush.msra.mxu0 0.0
    %4324 = vmatpush.msra.mxu0 0.0
    %4325 = vmatpush.msra.mxu0 0.0
    %4326 = vmatpush.msra.mxu0 0.0
    %4327 = vmatpush.msra.mxu0 0.0
    %4328 = vmatpush.msra.mxu0 0.0
    %4329 = vmatpush.msra.mxu0 0.0
    %4330 = vmatpush.msra.mxu0 %v4286
    %4331 = vmatpush.msra.mxu0 %v4285
    %4332 = vmatpush.msra.mxu0 %v4284
    %4333 = vmatpush.msra.mxu0 %v4283
    %4334 = vmatmul.f32.gmra.mxu0 %v4316
    %v4335 = vpop.f32.mrf.mxu0
    %v4336 = vadd.f32 %v4313, %v4335
    %4337 = vdwg.mxu0
    %v4338 = vld [vmem:[%s9 + $0x1a] sm:$0x1]
    %v4339 = vperm.slane %v4338, 0
    %v4340 = vadd.f32 %v4336, %v4339
    %v4341 = vld [vmem:[%s9 + $0x1b] sm:$0x1]
    %v4342 = vld [vmem:[%s9 + $0x1c] sm:$0x1]
    %v4343 = vsel %vm518, %v4340, 0.0
    %4344 = vadd.xlane.f32.xlu0 %v4343
    %v4345 = vpop.xlane.xlu0 %4344
    %v4346 = vmul.f32 %v4345, %v706
    %v4347 = vsub.f32 %v4340, %v4346
    %v4348 = vmul.f32 %v4347, %v4347
    %v4349 = vsel %vm518, %v4348, 0.0
    %4350 = vadd.xlane.f32.xlu0 %v4349
    %v4351 = vpop.xlane.xlu0 %4350
    %v4352 = vmul.f32 %v4351, %v706
    %v4353 = vadd.f32 %v4352, 1e-05
    %v4354 = vrsqrt.pop %v4353
    %v4355 = vmul.f32 %v4354, %v4353
    %v4356 = vmul.f32 %v4355, %v4354
    %v4357 = vmul.f32 0.5, %v4356
    %v4358 = vsub.f32 1.5, %v4357
    %v4359 = vmul.f32 %v4354, %v4358
    %vm4360 = vweird.f32 %v4353
    %vm4361 = vweird.f32 %v4354
    %vm4362 = vmor %vm4360, %vm4361
    %v4363 = vsel %vm4362, %v4354, %v4359
    %v4364 = vmul.f32 %v4347, %v4363
    %v4365 = vperm.slane %v4341, 0
    %v4366 = vmul.f32 %v4364, %v4365
    %v4367 = vperm.slane %v4342, 0
    %v4368 = vadd.f32 %v4366, %v4367
    %v4369 = vxor.u32 %v4368, 2147483648
    %v4370 = vmul.f32 %v4369, 1.442695
    %v4371 = vpow.pop %v4370
    %v4372 = vadd.f32 %v4371, 1.0
    %v4373 = vrcp.pop %v4372
    %v4374 = vmul.f32 %v4372, %v4373
    %v4375 = vsub.f32 1.0, %v4374
    %v4376 = vmul.f32 %v4373, %v4375
    %v4377 = vadd.f32 %v4373, %v4376
    %vm4378 = vweird.f32 %v4372
    %vm4379 = vweird.f32 %v4373
    %vm4380 = vmor %vm4378, %vm4379
    %v4381 = vsel %vm4380, %v4373, %v4377
    %v4382 = vand.u32 2147483647, %v4372
    %vm4383 = vcmp.eq.f32.partialorder %v4382, 8.507059e+37
    %v4384 = vand.u32 %v4372, 2147483648
    %v4385 = vor.u32 1.1754944e-38, %v4384
    %v4386 = vsel %vm4383, %v4385, %v4381
    %v4387 = vmul.f32 1.0, %v4386
    %v4388 = vmul.f32 %v4368, %v4387
    %s4389 = scalar_lea.vmem %s8, 640
    %v4390 = vld [vmem:[%s4389] sm:$0xff]
    %v4391 = vld [vmem:[%s4389 + $0x8] sm:$0xff]
    %v4392 = vld [vmem:[%s4389 + $0x10] sm:$0xff]
    %v4393 = vld [vmem:[%s4389 + $0x18] sm:$0xff]
    %v4395 = vsel %vm518, %v4388, 0
    %4397 = vmatpush.msra.mxu0 0.0
    %4398 = vmatpush.msra.mxu0 0.0
    %4399 = vmatpush.msra.mxu0 0.0
    %4400 = vmatpush.msra.mxu0 0.0
    %4401 = vmatpush.msra.mxu0 0.0
    %4402 = vmatpush.msra.mxu0 0.0
    %4403 = vmatpush.msra.mxu0 0.0
    %4404 = vmatpush.msra.mxu0 0.0
    %4405 = vmatpush.msra.mxu0 0.0
    %4406 = vmatpush.msra.mxu0 0.0
    %4407 = vmatpush.msra.mxu0 0.0
    %4408 = vmatpush.msra.mxu0 0.0
    %4409 = vmatpush.msra.mxu0 %v4393
    %4410 = vmatpush.msra.mxu0 %v4392
    %4411 = vmatpush.msra.mxu0 %v4391
    %4412 = vmatpush.msra.mxu0 %v4390
    %4413 = vmatmul.f32.gmra.mxu0 %v4395
    %v4414 = vpop.f32.mrf.mxu0
    %v4415 = vadd.f32 0.0, %v4414
    %4416 = vdwg.mxu0
    %v4417 = vadd.f32 %v2286, %v4415
    %v4418 = vld [vmem:[%s9 + $0x1d] sm:$0x1]
    %v4419 = vperm.slane %v4418, 0
    %v4420 = vadd.f32 %v4417, %v4419
    %4421 = vmatpush.msra.mxu0 0.0
    %4422 = vmatpush.msra.mxu0 0.0
    %4423 = vmatpush.msra.mxu0 0.0
    %4424 = vmatpush.msra.mxu0 0.0
    %4425 = vmatpush.msra.mxu0 0.0
    %4426 = vmatpush.msra.mxu0 0.0
    %4427 = vmatpush.msra.mxu0 0.0
    %4428 = vmatpush.msra.mxu0 0.0
    %4429 = vmatpush.msra.mxu0 0.0
    %4430 = vmatpush.msra.mxu0 0.0
    %4431 = vmatpush.msra.mxu0 0.0
    %4432 = vmatpush.msra.mxu0 0.0
    %4433 = vmatpush.msra.mxu0 0.0
    %4434 = vmatpush.msra.mxu0 0.0
    %4435 = vmatpush.msra.mxu0 0.0
    %4436 = vmatpush.msra.mxu0 %v4420
    %4437 = vmatmul.f32.gmra.mxu0 %v392
    %v4438 = vpop.f32.mrf.mxu0
    %v4439 = vadd.f32 0.0, %v4438
    %4440 = vmatmul.f32.gmra.mxu0 %v395
    %v4441 = vpop.f32.mrf.mxu0
    %v4442 = vadd.f32 0.0, %v4441
    %4443 = vmatmul.f32.gmra.mxu0 %v398
    %v4444 = vpop.f32.mrf.mxu0
    %v4445 = vadd.f32 0.0, %v4444
    %4446 = vmatmul.f32.gmra.mxu0 %v401
    %v4447 = vpop.f32.mrf.mxu0
    %v4448 = vadd.f32 0.0, %v4447
    %4449 = vmatmul.f32.gmra.mxu0 %v404
    %v4450 = vpop.f32.mrf.mxu0
    %v4451 = vadd.f32 0.0, %v4450
    %4452 = vmatmul.f32.gmra.mxu0 %v407
    %v4453 = vpop.f32.mrf.mxu0
    %v4454 = vadd.f32 0.0, %v4453
    %4455 = vmatmul.f32.gmra.mxu0 %v410
    %v4456 = vpop.f32.mrf.mxu0
    %v4457 = vadd.f32 0.0, %v4456
    %4458 = vdwg.mxu0
    %4459 = vmatpush.msra.mxu0 0.0
    %4460 = vmatpush.msra.mxu0 0.0
    %4461 = vmatpush.msra.mxu0 0.0
    %4462 = vmatpush.msra.mxu0 0.0
    %4463 = vmatpush.msra.mxu0 0.0
    %4464 = vmatpush.msra.mxu0 0.0
    %4465 = vmatpush.msra.mxu0 0.0
    %4466 = vmatpush.msra.mxu0 0.0
    %4467 = vmatpush.msra.mxu0 0.0
    %4468 = vmatpush.msra.mxu0 0.0
    %4469 = vmatpush.msra.mxu0 0.0
    %4470 = vmatpush.msra.mxu0 0.0
    %4471 = vmatpush.msra.mxu0 0.0
    %4472 = vmatpush.msra.mxu0 0.0
    %4473 = vmatpush.msra.mxu0 0.0
    %4474 = vmatpush.msra.mxu0 %v4420
    %4475 = vmatmul.f32.gmra.mxu0 %v451
    %v4476 = vpop.f32.mrf.mxu0
    %v4477 = vadd.f32 0.0, %v4476
    %4478 = vmatmul.f32.gmra.mxu0 %v454
    %v4479 = vpop.f32.mrf.mxu0
    %v4480 = vadd.f32 0.0, %v4479
    %4481 = vmatmul.f32.gmra.mxu0 %v457
    %v4482 = vpop.f32.mrf.mxu0
    %v4483 = vadd.f32 0.0, %v4482
    %4484 = vmatmul.f32.gmra.mxu0 %v460
    %v4485 = vpop.f32.mrf.mxu0
    %v4486 = vadd.f32 0.0, %v4485
    %4487 = vmatmul.f32.gmra.mxu0 %v463
    %v4488 = vpop.f32.mrf.mxu0
    %v4489 = vadd.f32 0.0, %v4488
    %4490 = vmatmul.f32.gmra.mxu0 %v466
    %v4491 = vpop.f32.mrf.mxu0
    %v4492 = vadd.f32 0.0, %v4491
    %4493 = vmatmul.f32.gmra.mxu0 %v469
    %v4494 = vpop.f32.mrf.mxu0
    %v4495 = vadd.f32 0.0, %v4494
    %4496 = vdwg.mxu0
    %s4497 = scalar_lea.vmem %s8, 672
    %v4498 = vld [vmem:[%s4497] sm:$0xff]
    %v4499 = vld [vmem:[%s4497 + $0x8] sm:$0xff]
    %v4500 = vld [vmem:[%s4497 + $0x10] sm:$0xff]
    %v4501 = vld [vmem:[%s4497 + $0x18] sm:$0xff]
    %s4502 = scalar_lea.vmem %s8, 704
    %v4503 = vld [vmem:[%s4502] sm:$0xff]
    %v4504 = vld [vmem:[%s4502 + $0x8] sm:$0xff]
    %v4505 = vld [vmem:[%s4502 + $0x10] sm:$0xff]
    %v4506 = vld [vmem:[%s4502 + $0x18] sm:$0xff]
    %v4508 = vsel %vm518, %v4477, 0
    %v4511 = vsel %vm518, %v4480, 0
    %v4514 = vsel %vm518, %v4483, 0
    %v4517 = vsel %vm518, %v4486, 0
    %v4520 = vsel %vm518, %v4489, 0
    %v4523 = vsel %vm518, %v4492, 0
    %v4526 = vsel %vm518, %v4495, 0
    %4528 = vmatpush.msra.mxu0 0.0
    %4529 = vmatpush.msra.mxu0 0.0
    %4530 = vmatpush.msra.mxu0 0.0
    %4531 = vmatpush.msra.mxu0 0.0
    %4532 = vmatpush.msra.mxu0 0.0
    %4533 = vmatpush.msra.mxu0 0.0
    %4534 = vmatpush.msra.mxu0 0.0
    %4535 = vmatpush.msra.mxu0 0.0
    %4536 = vmatpush.msra.mxu0 0.0
    %4537 = vmatpush.msra.mxu0 0.0
    %4538 = vmatpush.msra.mxu0 0.0
    %4539 = vmatpush.msra.mxu0 0.0
    %4540 = vmatpush.msra.mxu0 %v4506
    %4541 = vmatpush.msra.mxu0 %v4505
    %4542 = vmatpush.msra.mxu0 %v4504
    %4543 = vmatpush.msra.mxu0 %v4503
    %4544 = vmatmul.f32.gmra.mxu0 %v4508
    %v4545 = vpop.f32.mrf.mxu0
    %v4546 = vadd.f32 0.0, %v4545
    %4547 = vmatmul.f32.gmra.mxu0 %v4511
    %v4548 = vpop.f32.mrf.mxu0
    %v4549 = vadd.f32 0.0, %v4548
    %4550 = vmatmul.f32.gmra.mxu0 %v4514
    %v4551 = vpop.f32.mrf.mxu0
    %v4552 = vadd.f32 0.0, %v4551
    %4553 = vmatmul.f32.gmra.mxu0 %v4517
    %v4554 = vpop.f32.mrf.mxu0
    %v4555 = vadd.f32 0.0, %v4554
    %4556 = vmatmul.f32.gmra.mxu0 %v4520
    %v4557 = vpop.f32.mrf.mxu0
    %v4558 = vadd.f32 0.0, %v4557
    %4559 = vmatmul.f32.gmra.mxu0 %v4523
    %v4560 = vpop.f32.mrf.mxu0
    %v4561 = vadd.f32 0.0, %v4560
    %4562 = vmatmul.f32.gmra.mxu0 %v4526
    %v4563 = vpop.f32.mrf.mxu0
    %v4564 = vadd.f32 0.0, %v4563
    %4565 = vdwg.mxu0
    %v4567 = vsel %vm518, %v4439, 0
    %v4570 = vsel %vm518, %v4442, 0
    %v4573 = vsel %vm518, %v4445, 0
    %v4576 = vsel %vm518, %v4448, 0
    %v4579 = vsel %vm518, %v4451, 0
    %v4582 = vsel %vm518, %v4454, 0
    %v4585 = vsel %vm518, %v4457, 0
    %4587 = vmatpush.msra.mxu0 0.0
    %4588 = vmatpush.msra.mxu0 0.0
    %4589 = vmatpush.msra.mxu0 0.0
    %4590 = vmatpush.msra.mxu0 0.0
    %4591 = vmatpush.msra.mxu0 0.0
    %4592 = vmatpush.msra.mxu0 0.0
    %4593 = vmatpush.msra.mxu0 0.0
    %4594 = vmatpush.msra.mxu0 0.0
    %4595 = vmatpush.msra.mxu0 0.0
    %4596 = vmatpush.msra.mxu0 0.0
    %4597 = vmatpush.msra.mxu0 0.0
    %4598 = vmatpush.msra.mxu0 0.0
    %4599 = vmatpush.msra.mxu0 %v4501
    %4600 = vmatpush.msra.mxu0 %v4500
    %4601 = vmatpush.msra.mxu0 %v4499
    %4602 = vmatpush.msra.mxu0 %v4498
    %4603 = vmatmul.f32.gmra.mxu0 %v4567
    %v4604 = vpop.f32.mrf.mxu0
    %v4605 = vadd.f32 %v4546, %v4604
    %4606 = vmatmul.f32.gmra.mxu0 %v4570
    %v4607 = vpop.f32.mrf.mxu0
    %v4608 = vadd.f32 %v4549, %v4607
    %4609 = vmatmul.f32.gmra.mxu0 %v4573
    %v4610 = vpop.f32.mrf.mxu0
    %v4611 = vadd.f32 %v4552, %v4610
    %4612 = vmatmul.f32.gmra.mxu0 %v4576
    %v4613 = vpop.f32.mrf.mxu0
    %v4614 = vadd.f32 %v4555, %v4613
    %4615 = vmatmul.f32.gmra.mxu0 %v4579
    %v4616 = vpop.f32.mrf.mxu0
    %v4617 = vadd.f32 %v4558, %v4616
    %4618 = vmatmul.f32.gmra.mxu0 %v4582
    %v4619 = vpop.f32.mrf.mxu0
    %v4620 = vadd.f32 %v4561, %v4619
    %4621 = vmatmul.f32.gmra.mxu0 %v4585
    %v4622 = vpop.f32.mrf.mxu0
    %v4623 = vadd.f32 %v4564, %v4622
    %4624 = vdwg.mxu0
    %s4625 = scalar_lea.vmem %s10, 8
    %v4626 = vld [vmem:[%s4625] sm:$0x3]
    %v4627 = vperm.slane %v4626, 0
    %v4628 = vmul.f32 %v3395, %v4627
    %v4629 = vmul.f32 %v3398, %v4627
    %v4630 = vmul.f32 %v3401, %v4627
    %v4631 = vmul.f32 %v3404, %v4627
    %v4632 = vmul.f32 %v3407, %v4627
    %v4633 = vmul.f32 %v3410, %v4627
    %v4634 = vmul.f32 %v3413, %v4627
    %v4635 = vperm.slane %v4626, 1
    %v4636 = vmul.f32 %v137, %v4635
    %v4637 = vmul.f32 %v140, %v4635
    %v4638 = vmul.f32 %v143, %v4635
    %v4639 = vmul.f32 %v146, %v4635
    %v4640 = vmul.f32 %v149, %v4635
    %v4641 = vmul.f32 %v152, %v4635
    %v4642 = vmul.f32 %v155, %v4635
    %v4643 = vadd.f32 %v4628, %v4636
    %v4644 = vadd.f32 %v4629, %v4637
    %v4645 = vadd.f32 %v4630, %v4638
    %v4646 = vadd.f32 %v4631, %v4639
    %v4647 = vadd.f32 %v4632, %v4640
    %v4648 = vadd.f32 %v4633, %v4641
    %v4649 = vadd.f32 %v4634, %v4642
    %v4650 = vadd.f32 %v4605, %v4643
    %v4651 = vadd.f32 %v4608, %v4644
    %v4652 = vadd.f32 %v4611, %v4645
    %v4653 = vadd.f32 %v4614, %v4646
    %v4654 = vadd.f32 %v4617, %v4647
    %v4655 = vadd.f32 %v4620, %v4648
    %v4656 = vadd.f32 %v4623, %v4649
    %v4657 = vld [vmem:[%s9 + $0x1e] sm:$0x1]
    %v4658 = vperm.slane %v4657, 0
    %v4659 = vadd.f32 %v4650, %v4658
    %v4660 = vadd.f32 %v4651, %v4658
    %v4661 = vadd.f32 %v4652, %v4658
    %v4662 = vadd.f32 %v4653, %v4658
    %v4663 = vadd.f32 %v4654, %v4658
    %v4664 = vadd.f32 %v4655, %v4658
    %v4665 = vadd.f32 %v4656, %v4658
    %v4666 = vld [vmem:[%s9 + $0x1f] sm:$0x1]
    %v4667 = vld [vmem:[%s9 + $0x20] sm:$0x1]
    %v4668 = vsel %vm518, %v4659, 0.0
    %4669 = vadd.xlane.f32.xlu0 %v4668
    %v4670 = vpop.xlane.xlu0 %4669
    %v4671 = vsel %vm518, %v4660, 0.0
    %4672 = vadd.xlane.f32.xlu0 %v4671
    %v4673 = vpop.xlane.xlu0 %4672
    %v4674 = vsel %vm518, %v4661, 0.0
    %4675 = vadd.xlane.f32.xlu0 %v4674
    %v4676 = vpop.xlane.xlu0 %4675
    %v4677 = vsel %vm518, %v4662, 0.0
    %4678 = vadd.xlane.f32.xlu0 %v4677
    %v4679 = vpop.xlane.xlu0 %4678
    %v4680 = vsel %vm518, %v4663, 0.0
    %4681 = vadd.xlane.f32.xlu0 %v4680
    %v4682 = vpop.xlane.xlu0 %4681
    %v4683 = vsel %vm518, %v4664, 0.0
    %4684 = vadd.xlane.f32.xlu0 %v4683
    %v4685 = vpop.xlane.xlu0 %4684
    %v4686 = vsel %vm518, %v4665, 0.0
    %4687 = vadd.xlane.f32.xlu0 %v4686
    %v4688 = vpop.xlane.xlu0 %4687
    %v4689 = vmul.f32 %v4670, %v706
    %v4690 = vmul.f32 %v4673, %v706
    %v4691 = vmul.f32 %v4676, %v706
    %v4692 = vmul.f32 %v4679, %v706
    %v4693 = vmul.f32 %v4682, %v706
    %v4694 = vmul.f32 %v4685, %v706
    %v4695 = vmul.f32 %v4688, %v706
    %v4696 = vsub.f32 %v4659, %v4689
    %v4697 = vsub.f32 %v4660, %v4690
    %v4698 = vsub.f32 %v4661, %v4691
    %v4699 = vsub.f32 %v4662, %v4692
    %v4700 = vsub.f32 %v4663, %v4693
    %v4701 = vsub.f32 %v4664, %v4694
    %v4702 = vsub.f32 %v4665, %v4695
    %v4703 = vmul.f32 %v4696, %v4696
    %v4704 = vmul.f32 %v4697, %v4697
    %v4705 = vmul.f32 %v4698, %v4698
    %v4706 = vmul.f32 %v4699, %v4699
    %v4707 = vmul.f32 %v4700, %v4700
    %v4708 = vmul.f32 %v4701, %v4701
    %v4709 = vmul.f32 %v4702, %v4702
    %v4710 = vsel %vm518, %v4703, 0.0
    %4711 = vadd.xlane.f32.xlu0 %v4710
    %v4712 = vpop.xlane.xlu0 %4711
    %v4713 = vsel %vm518, %v4704, 0.0
    %4714 = vadd.xlane.f32.xlu0 %v4713
    %v4715 = vpop.xlane.xlu0 %4714
    %v4716 = vsel %vm518, %v4705, 0.0
    %4717 = vadd.xlane.f32.xlu0 %v4716
    %v4718 = vpop.xlane.xlu0 %4717
    %v4719 = vsel %vm518, %v4706, 0.0
    %4720 = vadd.xlane.f32.xlu0 %v4719
    %v4721 = vpop.xlane.xlu0 %4720
    %v4722 = vsel %vm518, %v4707, 0.0
    %4723 = vadd.xlane.f32.xlu0 %v4722
    %v4724 = vpop.xlane.xlu0 %4723
    %v4725 = vsel %vm518, %v4708, 0.0
    %4726 = vadd.xlane.f32.xlu0 %v4725
    %v4727 = vpop.xlane.xlu0 %4726
    %v4728 = vsel %vm518, %v4709, 0.0
    %4729 = vadd.xlane.f32.xlu0 %v4728
    %v4730 = vpop.xlane.xlu0 %4729
    %v4731 = vmul.f32 %v4712, %v706
    %v4732 = vmul.f32 %v4715, %v706
    %v4733 = vmul.f32 %v4718, %v706
    %v4734 = vmul.f32 %v4721, %v706
    %v4735 = vmul.f32 %v4724, %v706
    %v4736 = vmul.f32 %v4727, %v706
    %v4737 = vmul.f32 %v4730, %v706
    %v4738 = vadd.f32 %v4731, 1e-05
    %v4739 = vadd.f32 %v4732, 1e-05
    %v4740 = vadd.f32 %v4733, 1e-05
    %v4741 = vadd.f32 %v4734, 1e-05
    %v4742 = vadd.f32 %v4735, 1e-05
    %v4743 = vadd.f32 %v4736, 1e-05
    %v4744 = vadd.f32 %v4737, 1e-05
    %v4745 = vrsqrt.pop %v4738
    %v4746 = vmul.f32 %v4745, %v4738
    %v4747 = vmul.f32 %v4746, %v4745
    %v4748 = vmul.f32 0.5, %v4747
    %v4749 = vsub.f32 1.5, %v4748
    %v4750 = vmul.f32 %v4745, %v4749
    %vm4751 = vweird.f32 %v4738
    %vm4752 = vweird.f32 %v4745
    %vm4753 = vmor %vm4751, %vm4752
    %v4754 = vsel %vm4753, %v4745, %v4750
    %v4755 = vrsqrt.pop %v4739
    %v4756 = vmul.f32 %v4755, %v4739
    %v4757 = vmul.f32 %v4756, %v4755
    %v4758 = vmul.f32 0.5, %v4757
    %v4759 = vsub.f32 1.5, %v4758
    %v4760 = vmul.f32 %v4755, %v4759
    %vm4761 = vweird.f32 %v4739
    %vm4762 = vweird.f32 %v4755
    %vm4763 = vmor %vm4761, %vm4762
    %v4764 = vsel %vm4763, %v4755, %v4760
    %v4765 = vrsqrt.pop %v4740
    %v4766 = vmul.f32 %v4765, %v4740
    %v4767 = vmul.f32 %v4766, %v4765
    %v4768 = vmul.f32 0.5, %v4767
    %v4769 = vsub.f32 1.5, %v4768
    %v4770 = vmul.f32 %v4765, %v4769
    %vm4771 = vweird.f32 %v4740
    %vm4772 = vweird.f32 %v4765
    %vm4773 = vmor %vm4771, %vm4772
    %v4774 = vsel %vm4773, %v4765, %v4770
    %v4775 = vrsqrt.pop %v4741
    %v4776 = vmul.f32 %v4775, %v4741
    %v4777 = vmul.f32 %v4776, %v4775
    %v4778 = vmul.f32 0.5, %v4777
    %v4779 = vsub.f32 1.5, %v4778
    %v4780 = vmul.f32 %v4775, %v4779
    %vm4781 = vweird.f32 %v4741
    %vm4782 = vweird.f32 %v4775
    %vm4783 = vmor %vm4781, %vm4782
    %v4784 = vsel %vm4783, %v4775, %v4780
    %v4785 = vrsqrt.pop %v4742
    %v4786 = vmul.f32 %v4785, %v4742
    %v4787 = vmul.f32 %v4786, %v4785
    %v4788 = vmul.f32 0.5, %v4787
    %v4789 = vsub.f32 1.5, %v4788
    %v4790 = vmul.f32 %v4785, %v4789
    %vm4791 = vweird.f32 %v4742
    %vm4792 = vweird.f32 %v4785
    %vm4793 = vmor %vm4791, %vm4792
    %v4794 = vsel %vm4793, %v4785, %v4790
    %v4795 = vrsqrt.pop %v4743
    %v4796 = vmul.f32 %v4795, %v4743
    %v4797 = vmul.f32 %v4796, %v4795
    %v4798 = vmul.f32 0.5, %v4797
    %v4799 = vsub.f32 1.5, %v4798
    %v4800 = vmul.f32 %v4795, %v4799
    %vm4801 = vweird.f32 %v4743
    %vm4802 = vweird.f32 %v4795
    %vm4803 = vmor %vm4801, %vm4802
    %v4804 = vsel %vm4803, %v4795, %v4800
    %v4805 = vrsqrt.pop %v4744
    %v4806 = vmul.f32 %v4805, %v4744
    %v4807 = vmul.f32 %v4806, %v4805
    %v4808 = vmul.f32 0.5, %v4807
    %v4809 = vsub.f32 1.5, %v4808
    %v4810 = vmul.f32 %v4805, %v4809
    %vm4811 = vweird.f32 %v4744
    %vm4812 = vweird.f32 %v4805
    %vm4813 = vmor %vm4811, %vm4812
    %v4814 = vsel %vm4813, %v4805, %v4810
    %v4815 = vmul.f32 %v4696, %v4754
    %v4816 = vmul.f32 %v4697, %v4764
    %v4817 = vmul.f32 %v4698, %v4774
    %v4818 = vmul.f32 %v4699, %v4784
    %v4819 = vmul.f32 %v4700, %v4794
    %v4820 = vmul.f32 %v4701, %v4804
    %v4821 = vmul.f32 %v4702, %v4814
    %v4822 = vperm.slane %v4666, 0
    %v4823 = vmul.f32 %v4815, %v4822
    %v4824 = vmul.f32 %v4816, %v4822
    %v4825 = vmul.f32 %v4817, %v4822
    %v4826 = vmul.f32 %v4818, %v4822
    %v4827 = vmul.f32 %v4819, %v4822
    %v4828 = vmul.f32 %v4820, %v4822
    %v4829 = vmul.f32 %v4821, %v4822
    %v4830 = vperm.slane %v4667, 0
    %v4831 = vadd.f32 %v4823, %v4830
    %v4832 = vadd.f32 %v4824, %v4830
    %v4833 = vadd.f32 %v4825, %v4830
    %v4834 = vadd.f32 %v4826, %v4830
    %v4835 = vadd.f32 %v4827, %v4830
    %v4836 = vadd.f32 %v4828, %v4830
    %v4837 = vadd.f32 %v4829, %v4830
    %v4838 = vxor.u32 %v4831, 2147483648
    %v4839 = vxor.u32 %v4832, 2147483648
    %v4840 = vxor.u32 %v4833, 2147483648
    %v4841 = vxor.u32 %v4834, 2147483648
    %v4842 = vxor.u32 %v4835, 2147483648
    %v4843 = vxor.u32 %v4836, 2147483648
    %v4844 = vxor.u32 %v4837, 2147483648
    %v4845 = vmul.f32 %v4838, 1.442695
    %v4846 = vpow.pop %v4845
    %v4847 = vmul.f32 %v4839, 1.442695
    %v4848 = vpow.pop %v4847
    %v4849 = vmul.f32 %v4840, 1.442695
    %v4850 = vpow.pop %v4849
    %v4851 = vmul.f32 %v4841, 1.442695
    %v4852 = vpow.pop %v4851
    %v4853 = vmul.f32 %v4842, 1.442695
    %v4854 = vpow.pop %v4853
    %v4855 = vmul.f32 %v4843, 1.442695
    %v4856 = vpow.pop %v4855
    %v4857 = vmul.f32 %v4844, 1.442695
    %v4858 = vpow.pop %v4857
    %v4859 = vadd.f32 %v4846, 1.0
    %v4860 = vadd.f32 %v4848, 1.0
    %v4861 = vadd.f32 %v4850, 1.0
    %v4862 = vadd.f32 %v4852, 1.0
    %v4863 = vadd.f32 %v4854, 1.0
    %v4864 = vadd.f32 %v4856, 1.0
    %v4865 = vadd.f32 %v4858, 1.0
    %v4866 = vrcp.pop %v4859
    %v4867 = vmul.f32 %v4859, %v4866
    %v4868 = vsub.f32 1.0, %v4867
    %v4869 = vmul.f32 %v4866, %v4868
    %v4870 = vadd.f32 %v4866, %v4869
    %vm4871 = vweird.f32 %v4859
    %vm4872 = vweird.f32 %v4866
    %vm4873 = vmor %vm4871, %vm4872
    %v4874 = vsel %vm4873, %v4866, %v4870
    %v4875 = vand.u32 2147483647, %v4859
    %vm4876 = vcmp.eq.f32.partialorder %v4875, 8.507059e+37
    %v4877 = vand.u32 %v4859, 2147483648
    %v4878 = vor.u32 1.1754944e-38, %v4877
    %v4879 = vsel %vm4876, %v4878, %v4874
    %v4880 = vmul.f32 1.0, %v4879
    %v4881 = vrcp.pop %v4860
    %v4882 = vmul.f32 %v4860, %v4881
    %v4883 = vsub.f32 1.0, %v4882
    %v4884 = vmul.f32 %v4881, %v4883
    %v4885 = vadd.f32 %v4881, %v4884
    %vm4886 = vweird.f32 %v4860
    %vm4887 = vweird.f32 %v4881
    %vm4888 = vmor %vm4886, %vm4887
    %v4889 = vsel %vm4888, %v4881, %v4885
    %v4890 = vand.u32 2147483647, %v4860
    %vm4891 = vcmp.eq.f32.partialorder %v4890, 8.507059e+37
    %v4892 = vand.u32 %v4860, 2147483648
    %v4893 = vor.u32 1.1754944e-38, %v4892
    %v4894 = vsel %vm4891, %v4893, %v4889
    %v4895 = vmul.f32 1.0, %v4894
    %v4896 = vrcp.pop %v4861
    %v4897 = vmul.f32 %v4861, %v4896
    %v4898 = vsub.f32 1.0, %v4897
    %v4899 = vmul.f32 %v4896, %v4898
    %v4900 = vadd.f32 %v4896, %v4899
    %vm4901 = vweird.f32 %v4861
    %vm4902 = vweird.f32 %v4896
    %vm4903 = vmor %vm4901, %vm4902
    %v4904 = vsel %vm4903, %v4896, %v4900
    %v4905 = vand.u32 2147483647, %v4861
    %vm4906 = vcmp.eq.f32.partialorder %v4905, 8.507059e+37
    %v4907 = vand.u32 %v4861, 2147483648
    %v4908 = vor.u32 1.1754944e-38, %v4907
    %v4909 = vsel %vm4906, %v4908, %v4904
    %v4910 = vmul.f32 1.0, %v4909
    %v4911 = vrcp.pop %v4862
    %v4912 = vmul.f32 %v4862, %v4911
    %v4913 = vsub.f32 1.0, %v4912
    %v4914 = vmul.f32 %v4911, %v4913
    %v4915 = vadd.f32 %v4911, %v4914
    %vm4916 = vweird.f32 %v4862
    %vm4917 = vweird.f32 %v4911
    %vm4918 = vmor %vm4916, %vm4917
    %v4919 = vsel %vm4918, %v4911, %v4915
    %v4920 = vand.u32 2147483647, %v4862
    %vm4921 = vcmp.eq.f32.partialorder %v4920, 8.507059e+37
    %v4922 = vand.u32 %v4862, 2147483648
    %v4923 = vor.u32 1.1754944e-38, %v4922
    %v4924 = vsel %vm4921, %v4923, %v4919
    %v4925 = vmul.f32 1.0, %v4924
    %v4926 = vrcp.pop %v4863
    %v4927 = vmul.f32 %v4863, %v4926
    %v4928 = vsub.f32 1.0, %v4927
    %v4929 = vmul.f32 %v4926, %v4928
    %v4930 = vadd.f32 %v4926, %v4929
    %vm4931 = vweird.f32 %v4863
    %vm4932 = vweird.f32 %v4926
    %vm4933 = vmor %vm4931, %vm4932
    %v4934 = vsel %vm4933, %v4926, %v4930
    %v4935 = vand.u32 2147483647, %v4863
    %vm4936 = vcmp.eq.f32.partialorder %v4935, 8.507059e+37
    %v4937 = vand.u32 %v4863, 2147483648
    %v4938 = vor.u32 1.1754944e-38, %v4937
    %v4939 = vsel %vm4936, %v4938, %v4934
    %v4940 = vmul.f32 1.0, %v4939
    %v4941 = vrcp.pop %v4864
    %v4942 = vmul.f32 %v4864, %v4941
    %v4943 = vsub.f32 1.0, %v4942
    %v4944 = vmul.f32 %v4941, %v4943
    %v4945 = vadd.f32 %v4941, %v4944
    %vm4946 = vweird.f32 %v4864
    %vm4947 = vweird.f32 %v4941
    %vm4948 = vmor %vm4946, %vm4947
    %v4949 = vsel %vm4948, %v4941, %v4945
    %v4950 = vand.u32 2147483647, %v4864
    %vm4951 = vcmp.eq.f32.partialorder %v4950, 8.507059e+37
    %v4952 = vand.u32 %v4864, 2147483648
    %v4953 = vor.u32 1.1754944e-38, %v4952
    %v4954 = vsel %vm4951, %v4953, %v4949
    %v4955 = vmul.f32 1.0, %v4954
    %v4956 = vrcp.pop %v4865
    %v4957 = vmul.f32 %v4865, %v4956
    %v4958 = vsub.f32 1.0, %v4957
    %v4959 = vmul.f32 %v4956, %v4958
    %v4960 = vadd.f32 %v4956, %v4959
    %vm4961 = vweird.f32 %v4865
    %vm4962 = vweird.f32 %v4956
    %vm4963 = vmor %vm4961, %vm4962
    %v4964 = vsel %vm4963, %v4956, %v4960
    %v4965 = vand.u32 2147483647, %v4865
    %vm4966 = vcmp.eq.f32.partialorder %v4965, 8.507059e+37
    %v4967 = vand.u32 %v4865, 2147483648
    %v4968 = vor.u32 1.1754944e-38, %v4967
    %v4969 = vsel %vm4966, %v4968, %v4964
    %v4970 = vmul.f32 1.0, %v4969
    %v4971 = vmul.f32 %v4831, %v4880
    %v4972 = vmul.f32 %v4832, %v4895
    %v4973 = vmul.f32 %v4833, %v4910
    %v4974 = vmul.f32 %v4834, %v4925
    %v4975 = vmul.f32 %v4835, %v4940
    %v4976 = vmul.f32 %v4836, %v4955
    %v4977 = vmul.f32 %v4837, %v4970
    %s4978 = scalar_lea.vmem %s8, 736
    %v4979 = vld [vmem:[%s4978] sm:$0xff]
    %v4980 = vld [vmem:[%s4978 + $0x8] sm:$0xff]
    %v4981 = vld [vmem:[%s4978 + $0x10] sm:$0xff]
    %v4982 = vld [vmem:[%s4978 + $0x18] sm:$0xff]
    %v4983 = vld [vmem:[%s9 + $0x21] sm:$0x1]
    %v4984 = vperm.slane %v4983, 0
    %v4986 = vsel %vm518, %v4971, 0
    %v4989 = vsel %vm518, %v4972, 0
    %v4992 = vsel %vm518, %v4973, 0
    %v4995 = vsel %vm518, %v4974, 0
    %v4998 = vsel %vm518, %v4975, 0
    %v5001 = vsel %vm518, %v4976, 0
    %v5004 = vsel %vm518, %v4977, 0
    %5006 = vmatpush.msra.mxu0 0.0
    %5007 = vmatpush.msra.mxu0 0.0
    %5008 = vmatpush.msra.mxu0 0.0
    %5009 = vmatpush.msra.mxu0 0.0
    %5010 = vmatpush.msra.mxu0 0.0
    %5011 = vmatpush.msra.mxu0 0.0
    %5012 = vmatpush.msra.mxu0 0.0
    %5013 = vmatpush.msra.mxu0 0.0
    %5014 = vmatpush.msra.mxu0 0.0
    %5015 = vmatpush.msra.mxu0 0.0
    %5016 = vmatpush.msra.mxu0 0.0
    %5017 = vmatpush.msra.mxu0 0.0
    %5018 = vmatpush.msra.mxu0 %v4982
    %5019 = vmatpush.msra.mxu0 %v4981
    %5020 = vmatpush.msra.mxu0 %v4980
    %5021 = vmatpush.msra.mxu0 %v4979
    %5022 = vmatmul.f32.gmra.mxu0 %v4986
    %v5023 = vpop.f32.mrf.mxu0
    %v5024 = vadd.f32 %v4984, %v5023
    %5025 = vmatmul.f32.gmra.mxu0 %v4989
    %v5026 = vpop.f32.mrf.mxu0
    %v5027 = vadd.f32 %v4984, %v5026
    %5028 = vmatmul.f32.gmra.mxu0 %v4992
    %v5029 = vpop.f32.mrf.mxu0
    %v5030 = vadd.f32 %v4984, %v5029
    %5031 = vmatmul.f32.gmra.mxu0 %v4995
    %v5032 = vpop.f32.mrf.mxu0
    %v5033 = vadd.f32 %v4984, %v5032
    %5034 = vmatmul.f32.gmra.mxu0 %v4998
    %v5035 = vpop.f32.mrf.mxu0
    %v5036 = vadd.f32 %v4984, %v5035
    %5037 = vmatmul.f32.gmra.mxu0 %v5001
    %v5038 = vpop.f32.mrf.mxu0
    %v5039 = vadd.f32 %v4984, %v5038
    %5040 = vmatmul.f32.gmra.mxu0 %v5004
    %v5041 = vpop.f32.mrf.mxu0
    %v5042 = vadd.f32 %v4984, %v5041
    %5043 = vdwg.mxu0
    %v5044 = vxor.u32 %v5024, 2147483648
    %v5045 = vxor.u32 %v5027, 2147483648
    %v5046 = vxor.u32 %v5030, 2147483648
    %v5047 = vxor.u32 %v5033, 2147483648
    %v5048 = vxor.u32 %v5036, 2147483648
    %v5049 = vxor.u32 %v5039, 2147483648
    %v5050 = vxor.u32 %v5042, 2147483648
    %v5051 = vmul.f32 %v5044, 1.442695
    %v5052 = vpow.pop %v5051
    %v5053 = vmul.f32 %v5045, 1.442695
    %v5054 = vpow.pop %v5053
    %v5055 = vmul.f32 %v5046, 1.442695
    %v5056 = vpow.pop %v5055
    %v5057 = vmul.f32 %v5047, 1.442695
    %v5058 = vpow.pop %v5057
    %v5059 = vmul.f32 %v5048, 1.442695
    %v5060 = vpow.pop %v5059
    %v5061 = vmul.f32 %v5049, 1.442695
    %v5062 = vpow.pop %v5061
    %v5063 = vmul.f32 %v5050, 1.442695
    %v5064 = vpow.pop %v5063
    %v5065 = vadd.f32 %v5052, 1.0
    %v5066 = vadd.f32 %v5054, 1.0
    %v5067 = vadd.f32 %v5056, 1.0
    %v5068 = vadd.f32 %v5058, 1.0
    %v5069 = vadd.f32 %v5060, 1.0
    %v5070 = vadd.f32 %v5062, 1.0
    %v5071 = vadd.f32 %v5064, 1.0
    %v5072 = vrcp.pop %v5065
    %v5073 = vmul.f32 %v5065, %v5072
    %v5074 = vsub.f32 1.0, %v5073
    %v5075 = vmul.f32 %v5072, %v5074
    %v5076 = vadd.f32 %v5072, %v5075
    %vm5077 = vweird.f32 %v5065
    %vm5078 = vweird.f32 %v5072
    %vm5079 = vmor %vm5077, %vm5078
    %v5080 = vsel %vm5079, %v5072, %v5076
    %v5081 = vand.u32 2147483647, %v5065
    %vm5082 = vcmp.eq.f32.partialorder %v5081, 8.507059e+37
    %v5083 = vand.u32 %v5065, 2147483648
    %v5084 = vor.u32 1.1754944e-38, %v5083
    %v5085 = vsel %vm5082, %v5084, %v5080
    %v5086 = vmul.f32 1.0, %v5085
    %v5087 = vrcp.pop %v5066
    %v5088 = vmul.f32 %v5066, %v5087
    %v5089 = vsub.f32 1.0, %v5088
    %v5090 = vmul.f32 %v5087, %v5089
    %v5091 = vadd.f32 %v5087, %v5090
    %vm5092 = vweird.f32 %v5066
    %vm5093 = vweird.f32 %v5087
    %vm5094 = vmor %vm5092, %vm5093
    %v5095 = vsel %vm5094, %v5087, %v5091
    %v5096 = vand.u32 2147483647, %v5066
    %vm5097 = vcmp.eq.f32.partialorder %v5096, 8.507059e+37
    %v5098 = vand.u32 %v5066, 2147483648
    %v5099 = vor.u32 1.1754944e-38, %v5098
    %v5100 = vsel %vm5097, %v5099, %v5095
    %v5101 = vmul.f32 1.0, %v5100
    %v5102 = vrcp.pop %v5067
    %v5103 = vmul.f32 %v5067, %v5102
    %v5104 = vsub.f32 1.0, %v5103
    %v5105 = vmul.f32 %v5102, %v5104
    %v5106 = vadd.f32 %v5102, %v5105
    %vm5107 = vweird.f32 %v5067
    %vm5108 = vweird.f32 %v5102
    %vm5109 = vmor %vm5107, %vm5108
    %v5110 = vsel %vm5109, %v5102, %v5106
    %v5111 = vand.u32 2147483647, %v5067
    %vm5112 = vcmp.eq.f32.partialorder %v5111, 8.507059e+37
    %v5113 = vand.u32 %v5067, 2147483648
    %v5114 = vor.u32 1.1754944e-38, %v5113
    %v5115 = vsel %vm5112, %v5114, %v5110
    %v5116 = vmul.f32 1.0, %v5115
    %v5117 = vrcp.pop %v5068
    %v5118 = vmul.f32 %v5068, %v5117
    %v5119 = vsub.f32 1.0, %v5118
    %v5120 = vmul.f32 %v5117, %v5119
    %v5121 = vadd.f32 %v5117, %v5120
    %vm5122 = vweird.f32 %v5068
    %vm5123 = vweird.f32 %v5117
    %vm5124 = vmor %vm5122, %vm5123
    %v5125 = vsel %vm5124, %v5117, %v5121
    %v5126 = vand.u32 2147483647, %v5068
    %vm5127 = vcmp.eq.f32.partialorder %v5126, 8.507059e+37
    %v5128 = vand.u32 %v5068, 2147483648
    %v5129 = vor.u32 1.1754944e-38, %v5128
    %v5130 = vsel %vm5127, %v5129, %v5125
    %v5131 = vmul.f32 1.0, %v5130
    %v5132 = vrcp.pop %v5069
    %v5133 = vmul.f32 %v5069, %v5132
    %v5134 = vsub.f32 1.0, %v5133
    %v5135 = vmul.f32 %v5132, %v5134
    %v5136 = vadd.f32 %v5132, %v5135
    %vm5137 = vweird.f32 %v5069
    %vm5138 = vweird.f32 %v5132
    %vm5139 = vmor %vm5137, %vm5138
    %v5140 = vsel %vm5139, %v5132, %v5136
    %v5141 = vand.u32 2147483647, %v5069
    %vm5142 = vcmp.eq.f32.partialorder %v5141, 8.507059e+37
    %v5143 = vand.u32 %v5069, 2147483648
    %v5144 = vor.u32 1.1754944e-38, %v5143
    %v5145 = vsel %vm5142, %v5144, %v5140
    %v5146 = vmul.f32 1.0, %v5145
    %v5147 = vrcp.pop %v5070
    %v5148 = vmul.f32 %v5070, %v5147
    %v5149 = vsub.f32 1.0, %v5148
    %v5150 = vmul.f32 %v5147, %v5149
    %v5151 = vadd.f32 %v5147, %v5150
    %vm5152 = vweird.f32 %v5070
    %vm5153 = vweird.f32 %v5147
    %vm5154 = vmor %vm5152, %vm5153
    %v5155 = vsel %vm5154, %v5147, %v5151
    %v5156 = vand.u32 2147483647, %v5070
    %vm5157 = vcmp.eq.f32.partialorder %v5156, 8.507059e+37
    %v5158 = vand.u32 %v5070, 2147483648
    %v5159 = vor.u32 1.1754944e-38, %v5158
    %v5160 = vsel %vm5157, %v5159, %v5155
    %v5161 = vmul.f32 1.0, %v5160
    %v5162 = vrcp.pop %v5071
    %v5163 = vmul.f32 %v5071, %v5162
    %v5164 = vsub.f32 1.0, %v5163
    %v5165 = vmul.f32 %v5162, %v5164
    %v5166 = vadd.f32 %v5162, %v5165
    %vm5167 = vweird.f32 %v5071
    %vm5168 = vweird.f32 %v5162
    %vm5169 = vmor %vm5167, %vm5168
    %v5170 = vsel %vm5169, %v5162, %v5166
    %v5171 = vand.u32 2147483647, %v5071
    %vm5172 = vcmp.eq.f32.partialorder %v5171, 8.507059e+37
    %v5173 = vand.u32 %v5071, 2147483648
    %v5174 = vor.u32 1.1754944e-38, %v5173
    %v5175 = vsel %vm5172, %v5174, %v5170
    %v5176 = vmul.f32 1.0, %v5175
    %v5177 = vmul.f32 %v5024, %v5086
    %v5178 = vmul.f32 %v5027, %v5101
    %v5179 = vmul.f32 %v5030, %v5116
    %v5180 = vmul.f32 %v5033, %v5131
    %v5181 = vmul.f32 %v5036, %v5146
    %v5182 = vmul.f32 %v5039, %v5161
    %v5183 = vmul.f32 %v5042, %v5176
    %5184 = vmatpush.msra.mxu0 0.0
    %5185 = vmatpush.msra.mxu0 0.0
    %5186 = vmatpush.msra.mxu0 0.0
    %5187 = vmatpush.msra.mxu0 0.0
    %5188 = vmatpush.msra.mxu0 0.0
    %5189 = vmatpush.msra.mxu0 0.0
    %5190 = vmatpush.msra.mxu0 0.0
    %5191 = vmatpush.msra.mxu0 0.0
    %5192 = vmatpush.msra.mxu0 0.0
    %5193 = vmatpush.msra.mxu0 %v5183
    %5194 = vmatpush.msra.mxu0 %v5182
    %5195 = vmatpush.msra.mxu0 %v5181
    %5196 = vmatpush.msra.mxu0 %v5180
    %5197 = vmatpush.msra.mxu0 %v5179
    %5198 = vmatpush.msra.mxu0 %v5178
    %5199 = vmatpush.msra.mxu0 %v5177
    %5200 = vmatmul.f32.gmra.mxu0 %v1204
    %v5201 = vpop.f32.mrf.mxu0
    %v5202 = vadd.f32 0.0, %v5201
    %5203 = vdwg.mxu0
    %s5204 = scalar_lea.vmem %s8, 768
    %v5205 = vld [vmem:[%s5204] sm:$0xff]
    %v5206 = vld [vmem:[%s5204 + $0x8] sm:$0xff]
    %v5207 = vld [vmem:[%s5204 + $0x10] sm:$0xff]
    %v5208 = vld [vmem:[%s5204 + $0x18] sm:$0xff]
    %s5209 = scalar_lea.vmem %s8, 800
    %v5210 = vld [vmem:[%s5209] sm:$0xff]
    %v5211 = vld [vmem:[%s5209 + $0x8] sm:$0xff]
    %v5212 = vld [vmem:[%s5209 + $0x10] sm:$0xff]
    %v5213 = vld [vmem:[%s5209 + $0x18] sm:$0xff]
    %v5215 = vsel %vm518, %v5202, 0
    %5217 = vmatpush.msra.mxu0 0.0
    %5218 = vmatpush.msra.mxu0 0.0
    %5219 = vmatpush.msra.mxu0 0.0
    %5220 = vmatpush.msra.mxu0 0.0
    %5221 = vmatpush.msra.mxu0 0.0
    %5222 = vmatpush.msra.mxu0 0.0
    %5223 = vmatpush.msra.mxu0 0.0
    %5224 = vmatpush.msra.mxu0 0.0
    %5225 = vmatpush.msra.mxu0 0.0
    %5226 = vmatpush.msra.mxu0 0.0
    %5227 = vmatpush.msra.mxu0 0.0
    %5228 = vmatpush.msra.mxu0 0.0
    %5229 = vmatpush.msra.mxu0 %v5213
    %5230 = vmatpush.msra.mxu0 %v5212
    %5231 = vmatpush.msra.mxu0 %v5211
    %5232 = vmatpush.msra.mxu0 %v5210
    %5233 = vmatmul.f32.gmra.mxu0 %v5215
    %v5234 = vpop.f32.mrf.mxu0
    %v5235 = vadd.f32 0.0, %v5234
    %5236 = vdwg.mxu0
    %v5238 = vsel %vm518, %v4420, 0
    %5240 = vmatpush.msra.mxu0 0.0
    %5241 = vmatpush.msra.mxu0 0.0
    %5242 = vmatpush.msra.mxu0 0.0
    %5243 = vmatpush.msra.mxu0 0.0
    %5244 = vmatpush.msra.mxu0 0.0
    %5245 = vmatpush.msra.mxu0 0.0
    %5246 = vmatpush.msra.mxu0 0.0
    %5247 = vmatpush.msra.mxu0 0.0
    %5248 = vmatpush.msra.mxu0 0.0
    %5249 = vmatpush.msra.mxu0 0.0
    %5250 = vmatpush.msra.mxu0 0.0
    %5251 = vmatpush.msra.mxu0 0.0
    %5252 = vmatpush.msra.mxu0 %v5208
    %5253 = vmatpush.msra.mxu0 %v5207
    %5254 = vmatpush.msra.mxu0 %v5206
    %5255 = vmatpush.msra.mxu0 %v5205
    %5256 = vmatmul.f32.gmra.mxu0 %v5238
    %v5257 = vpop.f32.mrf.mxu0
    %v5258 = vadd.f32 %v5235, %v5257
    %5259 = vdwg.mxu0
    %v5260 = vld [vmem:[%s9 + $0x22] sm:$0x1]
    %v5261 = vperm.slane %v5260, 0
    %v5262 = vadd.f32 %v5258, %v5261
    %v5263 = vld [vmem:[%s9 + $0x23] sm:$0x1]
    %v5264 = vld [vmem:[%s9 + $0x24] sm:$0x1]
    %v5265 = vsel %vm518, %v5262, 0.0
    %5266 = vadd.xlane.f32.xlu0 %v5265
    %v5267 = vpop.xlane.xlu0 %5266
    %v5268 = vmul.f32 %v5267, %v706
    %v5269 = vsub.f32 %v5262, %v5268
    %v5270 = vmul.f32 %v5269, %v5269
    %v5271 = vsel %vm518, %v5270, 0.0
    %5272 = vadd.xlane.f32.xlu0 %v5271
    %v5273 = vpop.xlane.xlu0 %5272
    %v5274 = vmul.f32 %v5273, %v706
    %v5275 = vadd.f32 %v5274, 1e-05
    %v5276 = vrsqrt.pop %v5275
    %v5277 = vmul.f32 %v5276, %v5275
    %v5278 = vmul.f32 %v5277, %v5276
    %v5279 = vmul.f32 0.5, %v5278
    %v5280 = vsub.f32 1.5, %v5279
    %v5281 = vmul.f32 %v5276, %v5280
    %vm5282 = vweird.f32 %v5275
    %vm5283 = vweird.f32 %v5276
    %vm5284 = vmor %vm5282, %vm5283
    %v5285 = vsel %vm5284, %v5276, %v5281
    %v5286 = vmul.f32 %v5269, %v5285
    %v5287 = vperm.slane %v5263, 0
    %v5288 = vmul.f32 %v5286, %v5287
    %v5289 = vperm.slane %v5264, 0
    %v5290 = vadd.f32 %v5288, %v5289
    %v5291 = vxor.u32 %v5290, 2147483648
    %v5292 = vmul.f32 %v5291, 1.442695
    %v5293 = vpow.pop %v5292
    %v5294 = vadd.f32 %v5293, 1.0
    %v5295 = vrcp.pop %v5294
    %v5296 = vmul.f32 %v5294, %v5295
    %v5297 = vsub.f32 1.0, %v5296
    %v5298 = vmul.f32 %v5295, %v5297
    %v5299 = vadd.f32 %v5295, %v5298
    %vm5300 = vweird.f32 %v5294
    %vm5301 = vweird.f32 %v5295
    %vm5302 = vmor %vm5300, %vm5301
    %v5303 = vsel %vm5302, %v5295, %v5299
    %v5304 = vand.u32 2147483647, %v5294
    %vm5305 = vcmp.eq.f32.partialorder %v5304, 8.507059e+37
    %v5306 = vand.u32 %v5294, 2147483648
    %v5307 = vor.u32 1.1754944e-38, %v5306
    %v5308 = vsel %vm5305, %v5307, %v5303
    %v5309 = vmul.f32 1.0, %v5308
    %v5310 = vmul.f32 %v5290, %v5309
    %s5311 = scalar_lea.vmem %s8, 832
    %v5312 = vld [vmem:[%s5311] sm:$0xff]
    %v5313 = vld [vmem:[%s5311 + $0x8] sm:$0xff]
    %v5314 = vld [vmem:[%s5311 + $0x10] sm:$0xff]
    %v5315 = vld [vmem:[%s5311 + $0x18] sm:$0xff]
    %v5317 = vsel %vm518, %v5310, 0
    %5319 = vmatpush.msra.mxu0 0.0
    %5320 = vmatpush.msra.mxu0 0.0
    %5321 = vmatpush.msra.mxu0 0.0
    %5322 = vmatpush.msra.mxu0 0.0
    %5323 = vmatpush.msra.mxu0 0.0
    %5324 = vmatpush.msra.mxu0 0.0
    %5325 = vmatpush.msra.mxu0 0.0
    %5326 = vmatpush.msra.mxu0 0.0
    %5327 = vmatpush.msra.mxu0 0.0
    %5328 = vmatpush.msra.mxu0 0.0
    %5329 = vmatpush.msra.mxu0 0.0
    %5330 = vmatpush.msra.mxu0 0.0
    %5331 = vmatpush.msra.mxu0 %v5315
    %5332 = vmatpush.msra.mxu0 %v5314
    %5333 = vmatpush.msra.mxu0 %v5313
    %5334 = vmatpush.msra.mxu0 %v5312
    %5335 = vmatmul.f32.gmra.mxu0 %v5317
    %v5336 = vpop.f32.mrf.mxu0
    %v5337 = vadd.f32 0.0, %v5336
    %5338 = vdwg.mxu0
    %v5339 = vadd.f32 %v4420, %v5337
    %v5340 = vld [vmem:[%s9 + $0x25] sm:$0x1]
    %v5341 = vperm.slane %v5340, 0
    %v5342 = vadd.f32 %v5339, %v5341
    %5343 = vmatpush.msra.mxu0 0.0
    %5344 = vmatpush.msra.mxu0 0.0
    %5345 = vmatpush.msra.mxu0 0.0
    %5346 = vmatpush.msra.mxu0 0.0
    %5347 = vmatpush.msra.mxu0 0.0
    %5348 = vmatpush.msra.mxu0 0.0
    %5349 = vmatpush.msra.mxu0 0.0
    %5350 = vmatpush.msra.mxu0 0.0
    %5351 = vmatpush.msra.mxu0 0.0
    %5352 = vmatpush.msra.mxu0 0.0
    %5353 = vmatpush.msra.mxu0 0.0
    %5354 = vmatpush.msra.mxu0 0.0
    %5355 = vmatpush.msra.mxu0 0.0
    %5356 = vmatpush.msra.mxu0 0.0
    %5357 = vmatpush.msra.mxu0 0.0
    %5358 = vmatpush.msra.mxu0 %v5342
    %5359 = vmatmul.f32.gmra.mxu0 %v392
    %v5360 = vpop.f32.mrf.mxu0
    %v5361 = vadd.f32 0.0, %v5360
    %5362 = vmatmul.f32.gmra.mxu0 %v395
    %v5363 = vpop.f32.mrf.mxu0
    %v5364 = vadd.f32 0.0, %v5363
    %5365 = vmatmul.f32.gmra.mxu0 %v398
    %v5366 = vpop.f32.mrf.mxu0
    %v5367 = vadd.f32 0.0, %v5366
    %5368 = vmatmul.f32.gmra.mxu0 %v401
    %v5369 = vpop.f32.mrf.mxu0
    %v5370 = vadd.f32 0.0, %v5369
    %5371 = vmatmul.f32.gmra.mxu0 %v404
    %v5372 = vpop.f32.mrf.mxu0
    %v5373 = vadd.f32 0.0, %v5372
    %5374 = vmatmul.f32.gmra.mxu0 %v407
    %v5375 = vpop.f32.mrf.mxu0
    %v5376 = vadd.f32 0.0, %v5375
    %5377 = vmatmul.f32.gmra.mxu0 %v410
    %v5378 = vpop.f32.mrf.mxu0
    %v5379 = vadd.f32 0.0, %v5378
    %5380 = vdwg.mxu0
    %5381 = vmatpush.msra.mxu0 0.0
    %5382 = vmatpush.msra.mxu0 0.0
    %5383 = vmatpush.msra.mxu0 0.0
    %5384 = vmatpush.msra.mxu0 0.0
    %5385 = vmatpush.msra.mxu0 0.0
    %5386 = vmatpush.msra.mxu0 0.0
    %5387 = vmatpush.msra.mxu0 0.0
    %5388 = vmatpush.msra.mxu0 0.0
    %5389 = vmatpush.msra.mxu0 0.0
    %5390 = vmatpush.msra.mxu0 0.0
    %5391 = vmatpush.msra.mxu0 0.0
    %5392 = vmatpush.msra.mxu0 0.0
    %5393 = vmatpush.msra.mxu0 0.0
    %5394 = vmatpush.msra.mxu0 0.0
    %5395 = vmatpush.msra.mxu0 0.0
    %5396 = vmatpush.msra.mxu0 %v5342
    %5397 = vmatmul.f32.gmra.mxu0 %v451
    %v5398 = vpop.f32.mrf.mxu0
    %v5399 = vadd.f32 0.0, %v5398
    %5400 = vmatmul.f32.gmra.mxu0 %v454
    %v5401 = vpop.f32.mrf.mxu0
    %v5402 = vadd.f32 0.0, %v5401
    %5403 = vmatmul.f32.gmra.mxu0 %v457
    %v5404 = vpop.f32.mrf.mxu0
    %v5405 = vadd.f32 0.0, %v5404
    %5406 = vmatmul.f32.gmra.mxu0 %v460
    %v5407 = vpop.f32.mrf.mxu0
    %v5408 = vadd.f32 0.0, %v5407
    %5409 = vmatmul.f32.gmra.mxu0 %v463
    %v5410 = vpop.f32.mrf.mxu0
    %v5411 = vadd.f32 0.0, %v5410
    %5412 = vmatmul.f32.gmra.mxu0 %v466
    %v5413 = vpop.f32.mrf.mxu0
    %v5414 = vadd.f32 0.0, %v5413
    %5415 = vmatmul.f32.gmra.mxu0 %v469
    %v5416 = vpop.f32.mrf.mxu0
    %v5417 = vadd.f32 0.0, %v5416
    %5418 = vdwg.mxu0
    %s5419 = scalar_lea.vmem %s8, 864
    %v5420 = vld [vmem:[%s5419] sm:$0xff]
    %v5421 = vld [vmem:[%s5419 + $0x8] sm:$0xff]
    %v5422 = vld [vmem:[%s5419 + $0x10] sm:$0xff]
    %v5423 = vld [vmem:[%s5419 + $0x18] sm:$0xff]
    %s5424 = scalar_lea.vmem %s8, 896
    %v5425 = vld [vmem:[%s5424] sm:$0xff]
    %v5426 = vld [vmem:[%s5424 + $0x8] sm:$0xff]
    %v5427 = vld [vmem:[%s5424 + $0x10] sm:$0xff]
    %v5428 = vld [vmem:[%s5424 + $0x18] sm:$0xff]
    %v5430 = vsel %vm518, %v5399, 0
    %v5433 = vsel %vm518, %v5402, 0
    %v5436 = vsel %vm518, %v5405, 0
    %v5439 = vsel %vm518, %v5408, 0
    %v5442 = vsel %vm518, %v5411, 0
    %v5445 = vsel %vm518, %v5414, 0
    %v5448 = vsel %vm518, %v5417, 0
    %5450 = vmatpush.msra.mxu0 0.0
    %5451 = vmatpush.msra.mxu0 0.0
    %5452 = vmatpush.msra.mxu0 0.0
    %5453 = vmatpush.msra.mxu0 0.0
    %5454 = vmatpush.msra.mxu0 0.0
    %5455 = vmatpush.msra.mxu0 0.0
    %5456 = vmatpush.msra.mxu0 0.0
    %5457 = vmatpush.msra.mxu0 0.0
    %5458 = vmatpush.msra.mxu0 0.0
    %5459 = vmatpush.msra.mxu0 0.0
    %5460 = vmatpush.msra.mxu0 0.0
    %5461 = vmatpush.msra.mxu0 0.0
    %5462 = vmatpush.msra.mxu0 %v5428
    %5463 = vmatpush.msra.mxu0 %v5427
    %5464 = vmatpush.msra.mxu0 %v5426
    %5465 = vmatpush.msra.mxu0 %v5425
    %5466 = vmatmul.f32.gmra.mxu0 %v5430
    %v5467 = vpop.f32.mrf.mxu0
    %v5468 = vadd.f32 0.0, %v5467
    %5469 = vmatmul.f32.gmra.mxu0 %v5433
    %v5470 = vpop.f32.mrf.mxu0
    %v5471 = vadd.f32 0.0, %v5470
    %5472 = vmatmul.f32.gmra.mxu0 %v5436
    %v5473 = vpop.f32.mrf.mxu0
    %v5474 = vadd.f32 0.0, %v5473
    %5475 = vmatmul.f32.gmra.mxu0 %v5439
    %v5476 = vpop.f32.mrf.mxu0
    %v5477 = vadd.f32 0.0, %v5476
    %5478 = vmatmul.f32.gmra.mxu0 %v5442
    %v5479 = vpop.f32.mrf.mxu0
    %v5480 = vadd.f32 0.0, %v5479
    %5481 = vmatmul.f32.gmra.mxu0 %v5445
    %v5482 = vpop.f32.mrf.mxu0
    %v5483 = vadd.f32 0.0, %v5482
    %5484 = vmatmul.f32.gmra.mxu0 %v5448
    %v5485 = vpop.f32.mrf.mxu0
    %v5486 = vadd.f32 0.0, %v5485
    %5487 = vdwg.mxu0
    %v5489 = vsel %vm518, %v5361, 0
    %v5492 = vsel %vm518, %v5364, 0
    %v5495 = vsel %vm518, %v5367, 0
    %v5498 = vsel %vm518, %v5370, 0
    %v5501 = vsel %vm518, %v5373, 0
    %v5504 = vsel %vm518, %v5376, 0
    %v5507 = vsel %vm518, %v5379, 0
    %5509 = vmatpush.msra.mxu0 0.0
    %5510 = vmatpush.msra.mxu0 0.0
    %5511 = vmatpush.msra.mxu0 0.0
    %5512 = vmatpush.msra.mxu0 0.0
    %5513 = vmatpush.msra.mxu0 0.0
    %5514 = vmatpush.msra.mxu0 0.0
    %5515 = vmatpush.msra.mxu0 0.0
    %5516 = vmatpush.msra.mxu0 0.0
    %5517 = vmatpush.msra.mxu0 0.0
    %5518 = vmatpush.msra.mxu0 0.0
    %5519 = vmatpush.msra.mxu0 0.0
    %5520 = vmatpush.msra.mxu0 0.0
    %5521 = vmatpush.msra.mxu0 %v5423
    %5522 = vmatpush.msra.mxu0 %v5422
    %5523 = vmatpush.msra.mxu0 %v5421
    %5524 = vmatpush.msra.mxu0 %v5420
    %5525 = vmatmul.f32.gmra.mxu0 %v5489
    %v5526 = vpop.f32.mrf.mxu0
    %v5527 = vadd.f32 %v5468, %v5526
    %5528 = vmatmul.f32.gmra.mxu0 %v5492
    %v5529 = vpop.f32.mrf.mxu0
    %v5530 = vadd.f32 %v5471, %v5529
    %5531 = vmatmul.f32.gmra.mxu0 %v5495
    %v5532 = vpop.f32.mrf.mxu0
    %v5533 = vadd.f32 %v5474, %v5532
    %5534 = vmatmul.f32.gmra.mxu0 %v5498
    %v5535 = vpop.f32.mrf.mxu0
    %v5536 = vadd.f32 %v5477, %v5535
    %5537 = vmatmul.f32.gmra.mxu0 %v5501
    %v5538 = vpop.f32.mrf.mxu0
    %v5539 = vadd.f32 %v5480, %v5538
    %5540 = vmatmul.f32.gmra.mxu0 %v5504
    %v5541 = vpop.f32.mrf.mxu0
    %v5542 = vadd.f32 %v5483, %v5541
    %5543 = vmatmul.f32.gmra.mxu0 %v5507
    %v5544 = vpop.f32.mrf.mxu0
    %v5545 = vadd.f32 %v5486, %v5544
    %5546 = vdwg.mxu0
    %s5547 = scalar_lea.vmem %s10, 10
    %v5548 = vld [vmem:[%s5547] sm:$0x3]
    %v5549 = vperm.slane %v5548, 0
    %v5550 = vmul.f32 %v3395, %v5549
    %v5551 = vmul.f32 %v3398, %v5549
    %v5552 = vmul.f32 %v3401, %v5549
    %v5553 = vmul.f32 %v3404, %v5549
    %v5554 = vmul.f32 %v3407, %v5549
    %v5555 = vmul.f32 %v3410, %v5549
    %v5556 = vmul.f32 %v3413, %v5549
    %v5557 = vperm.slane %v5548, 1
    %v5558 = vmul.f32 %v137, %v5557
    %v5559 = vmul.f32 %v140, %v5557
    %v5560 = vmul.f32 %v143, %v5557
    %v5561 = vmul.f32 %v146, %v5557
    %v5562 = vmul.f32 %v149, %v5557
    %v5563 = vmul.f32 %v152, %v5557
    %v5564 = vmul.f32 %v155, %v5557
    %v5565 = vadd.f32 %v5550, %v5558
    %v5566 = vadd.f32 %v5551, %v5559
    %v5567 = vadd.f32 %v5552, %v5560
    %v5568 = vadd.f32 %v5553, %v5561
    %v5569 = vadd.f32 %v5554, %v5562
    %v5570 = vadd.f32 %v5555, %v5563
    %v5571 = vadd.f32 %v5556, %v5564
    %v5572 = vadd.f32 %v5527, %v5565
    %v5573 = vadd.f32 %v5530, %v5566
    %v5574 = vadd.f32 %v5533, %v5567
    %v5575 = vadd.f32 %v5536, %v5568
    %v5576 = vadd.f32 %v5539, %v5569
    %v5577 = vadd.f32 %v5542, %v5570
    %v5578 = vadd.f32 %v5545, %v5571
    %v5579 = vld [vmem:[%s9 + $0x26] sm:$0x1]
    %v5580 = vperm.slane %v5579, 0
    %v5581 = vadd.f32 %v5572, %v5580
    %v5582 = vadd.f32 %v5573, %v5580
    %v5583 = vadd.f32 %v5574, %v5580
    %v5584 = vadd.f32 %v5575, %v5580
    %v5585 = vadd.f32 %v5576, %v5580
    %v5586 = vadd.f32 %v5577, %v5580
    %v5587 = vadd.f32 %v5578, %v5580
    %v5588 = vld [vmem:[%s9 + $0x27] sm:$0x1]
    %v5589 = vld [vmem:[%s9 + $0x28] sm:$0x1]
    %v5590 = vsel %vm518, %v5581, 0.0
    %5591 = vadd.xlane.f32.xlu0 %v5590
    %v5592 = vpop.xlane.xlu0 %5591
    %v5593 = vsel %vm518, %v5582, 0.0
    %5594 = vadd.xlane.f32.xlu0 %v5593
    %v5595 = vpop.xlane.xlu0 %5594
    %v5596 = vsel %vm518, %v5583, 0.0
    %5597 = vadd.xlane.f32.xlu0 %v5596
    %v5598 = vpop.xlane.xlu0 %5597
    %v5599 = vsel %vm518, %v5584, 0.0
    %5600 = vadd.xlane.f32.xlu0 %v5599
    %v5601 = vpop.xlane.xlu0 %5600
    %v5602 = vsel %vm518, %v5585, 0.0
    %5603 = vadd.xlane.f32.xlu0 %v5602
    %v5604 = vpop.xlane.xlu0 %5603
    %v5605 = vsel %vm518, %v5586, 0.0
    %5606 = vadd.xlane.f32.xlu0 %v5605
    %v5607 = vpop.xlane.xlu0 %5606
    %v5608 = vsel %vm518, %v5587, 0.0
    %5609 = vadd.xlane.f32.xlu0 %v5608
    %v5610 = vpop.xlane.xlu0 %5609
    %v5611 = vmul.f32 %v5592, %v706
    %v5612 = vmul.f32 %v5595, %v706
    %v5613 = vmul.f32 %v5598, %v706
    %v5614 = vmul.f32 %v5601, %v706
    %v5615 = vmul.f32 %v5604, %v706
    %v5616 = vmul.f32 %v5607, %v706
    %v5617 = vmul.f32 %v5610, %v706
    %v5618 = vsub.f32 %v5581, %v5611
    %v5619 = vsub.f32 %v5582, %v5612
    %v5620 = vsub.f32 %v5583, %v5613
    %v5621 = vsub.f32 %v5584, %v5614
    %v5622 = vsub.f32 %v5585, %v5615
    %v5623 = vsub.f32 %v5586, %v5616
    %v5624 = vsub.f32 %v5587, %v5617
    %v5625 = vmul.f32 %v5618, %v5618
    %v5626 = vmul.f32 %v5619, %v5619
    %v5627 = vmul.f32 %v5620, %v5620
    %v5628 = vmul.f32 %v5621, %v5621
    %v5629 = vmul.f32 %v5622, %v5622
    %v5630 = vmul.f32 %v5623, %v5623
    %v5631 = vmul.f32 %v5624, %v5624
    %v5632 = vsel %vm518, %v5625, 0.0
    %5633 = vadd.xlane.f32.xlu0 %v5632
    %v5634 = vpop.xlane.xlu0 %5633
    %v5635 = vsel %vm518, %v5626, 0.0
    %5636 = vadd.xlane.f32.xlu0 %v5635
    %v5637 = vpop.xlane.xlu0 %5636
    %v5638 = vsel %vm518, %v5627, 0.0
    %5639 = vadd.xlane.f32.xlu0 %v5638
    %v5640 = vpop.xlane.xlu0 %5639
    %v5641 = vsel %vm518, %v5628, 0.0
    %5642 = vadd.xlane.f32.xlu0 %v5641
    %v5643 = vpop.xlane.xlu0 %5642
    %v5644 = vsel %vm518, %v5629, 0.0
    %5645 = vadd.xlane.f32.xlu0 %v5644
    %v5646 = vpop.xlane.xlu0 %5645
    %v5647 = vsel %vm518, %v5630, 0.0
    %5648 = vadd.xlane.f32.xlu0 %v5647
    %v5649 = vpop.xlane.xlu0 %5648
    %v5650 = vsel %vm518, %v5631, 0.0
    %5651 = vadd.xlane.f32.xlu0 %v5650
    %v5652 = vpop.xlane.xlu0 %5651
    %v5653 = vmul.f32 %v5634, %v706
    %v5654 = vmul.f32 %v5637, %v706
    %v5655 = vmul.f32 %v5640, %v706
    %v5656 = vmul.f32 %v5643, %v706
    %v5657 = vmul.f32 %v5646, %v706
    %v5658 = vmul.f32 %v5649, %v706
    %v5659 = vmul.f32 %v5652, %v706
    %v5660 = vadd.f32 %v5653, 1e-05
    %v5661 = vadd.f32 %v5654, 1e-05
    %v5662 = vadd.f32 %v5655, 1e-05
    %v5663 = vadd.f32 %v5656, 1e-05
    %v5664 = vadd.f32 %v5657, 1e-05
    %v5665 = vadd.f32 %v5658, 1e-05
    %v5666 = vadd.f32 %v5659, 1e-05
    %v5667 = vrsqrt.pop %v5660
    %v5668 = vmul.f32 %v5667, %v5660
    %v5669 = vmul.f32 %v5668, %v5667
    %v5670 = vmul.f32 0.5, %v5669
    %v5671 = vsub.f32 1.5, %v5670
    %v5672 = vmul.f32 %v5667, %v5671
    %vm5673 = vweird.f32 %v5660
    %vm5674 = vweird.f32 %v5667
    %vm5675 = vmor %vm5673, %vm5674
    %v5676 = vsel %vm5675, %v5667, %v5672
    %v5677 = vrsqrt.pop %v5661
    %v5678 = vmul.f32 %v5677, %v5661
    %v5679 = vmul.f32 %v5678, %v5677
    %v5680 = vmul.f32 0.5, %v5679
    %v5681 = vsub.f32 1.5, %v5680
    %v5682 = vmul.f32 %v5677, %v5681
    %vm5683 = vweird.f32 %v5661
    %vm5684 = vweird.f32 %v5677
    %vm5685 = vmor %vm5683, %vm5684
    %v5686 = vsel %vm5685, %v5677, %v5682
    %v5687 = vrsqrt.pop %v5662
    %v5688 = vmul.f32 %v5687, %v5662
    %v5689 = vmul.f32 %v5688, %v5687
    %v5690 = vmul.f32 0.5, %v5689
    %v5691 = vsub.f32 1.5, %v5690
    %v5692 = vmul.f32 %v5687, %v5691
    %vm5693 = vweird.f32 %v5662
    %vm5694 = vweird.f32 %v5687
    %vm5695 = vmor %vm5693, %vm5694
    %v5696 = vsel %vm5695, %v5687, %v5692
    %v5697 = vrsqrt.pop %v5663
    %v5698 = vmul.f32 %v5697, %v5663
    %v5699 = vmul.f32 %v5698, %v5697
    %v5700 = vmul.f32 0.5, %v5699
    %v5701 = vsub.f32 1.5, %v5700
    %v5702 = vmul.f32 %v5697, %v5701
    %vm5703 = vweird.f32 %v5663
    %vm5704 = vweird.f32 %v5697
    %vm5705 = vmor %vm5703, %vm5704
    %v5706 = vsel %vm5705, %v5697, %v5702
    %v5707 = vrsqrt.pop %v5664
    %v5708 = vmul.f32 %v5707, %v5664
    %v5709 = vmul.f32 %v5708, %v5707
    %v5710 = vmul.f32 0.5, %v5709
    %v5711 = vsub.f32 1.5, %v5710
    %v5712 = vmul.f32 %v5707, %v5711
    %vm5713 = vweird.f32 %v5664
    %vm5714 = vweird.f32 %v5707
    %vm5715 = vmor %vm5713, %vm5714
    %v5716 = vsel %vm5715, %v5707, %v5712
    %v5717 = vrsqrt.pop %v5665
    %v5718 = vmul.f32 %v5717, %v5665
    %v5719 = vmul.f32 %v5718, %v5717
    %v5720 = vmul.f32 0.5, %v5719
    %v5721 = vsub.f32 1.5, %v5720
    %v5722 = vmul.f32 %v5717, %v5721
    %vm5723 = vweird.f32 %v5665
    %vm5724 = vweird.f32 %v5717
    %vm5725 = vmor %vm5723, %vm5724
    %v5726 = vsel %vm5725, %v5717, %v5722
    %v5727 = vrsqrt.pop %v5666
    %v5728 = vmul.f32 %v5727, %v5666
    %v5729 = vmul.f32 %v5728, %v5727
    %v5730 = vmul.f32 0.5, %v5729
    %v5731 = vsub.f32 1.5, %v5730
    %v5732 = vmul.f32 %v5727, %v5731
    %vm5733 = vweird.f32 %v5666
    %vm5734 = vweird.f32 %v5727
    %vm5735 = vmor %vm5733, %vm5734
    %v5736 = vsel %vm5735, %v5727, %v5732
    %v5737 = vmul.f32 %v5618, %v5676
    %v5738 = vmul.f32 %v5619, %v5686
    %v5739 = vmul.f32 %v5620, %v5696
    %v5740 = vmul.f32 %v5621, %v5706
    %v5741 = vmul.f32 %v5622, %v5716
    %v5742 = vmul.f32 %v5623, %v5726
    %v5743 = vmul.f32 %v5624, %v5736
    %v5744 = vperm.slane %v5588, 0
    %v5745 = vmul.f32 %v5737, %v5744
    %v5746 = vmul.f32 %v5738, %v5744
    %v5747 = vmul.f32 %v5739, %v5744
    %v5748 = vmul.f32 %v5740, %v5744
    %v5749 = vmul.f32 %v5741, %v5744
    %v5750 = vmul.f32 %v5742, %v5744
    %v5751 = vmul.f32 %v5743, %v5744
    %v5752 = vperm.slane %v5589, 0
    %v5753 = vadd.f32 %v5745, %v5752
    %v5754 = vadd.f32 %v5746, %v5752
    %v5755 = vadd.f32 %v5747, %v5752
    %v5756 = vadd.f32 %v5748, %v5752
    %v5757 = vadd.f32 %v5749, %v5752
    %v5758 = vadd.f32 %v5750, %v5752
    %v5759 = vadd.f32 %v5751, %v5752
    %v5760 = vxor.u32 %v5753, 2147483648
    %v5761 = vxor.u32 %v5754, 2147483648
    %v5762 = vxor.u32 %v5755, 2147483648
    %v5763 = vxor.u32 %v5756, 2147483648
    %v5764 = vxor.u32 %v5757, 2147483648
    %v5765 = vxor.u32 %v5758, 2147483648
    %v5766 = vxor.u32 %v5759, 2147483648
    %v5767 = vmul.f32 %v5760, 1.442695
    %v5768 = vpow.pop %v5767
    %v5769 = vmul.f32 %v5761, 1.442695
    %v5770 = vpow.pop %v5769
    %v5771 = vmul.f32 %v5762, 1.442695
    %v5772 = vpow.pop %v5771
    %v5773 = vmul.f32 %v5763, 1.442695
    %v5774 = vpow.pop %v5773
    %v5775 = vmul.f32 %v5764, 1.442695
    %v5776 = vpow.pop %v5775
    %v5777 = vmul.f32 %v5765, 1.442695
    %v5778 = vpow.pop %v5777
    %v5779 = vmul.f32 %v5766, 1.442695
    %v5780 = vpow.pop %v5779
    %v5781 = vadd.f32 %v5768, 1.0
    %v5782 = vadd.f32 %v5770, 1.0
    %v5783 = vadd.f32 %v5772, 1.0
    %v5784 = vadd.f32 %v5774, 1.0
    %v5785 = vadd.f32 %v5776, 1.0
    %v5786 = vadd.f32 %v5778, 1.0
    %v5787 = vadd.f32 %v5780, 1.0
    %v5788 = vrcp.pop %v5781
    %v5789 = vmul.f32 %v5781, %v5788
    %v5790 = vsub.f32 1.0, %v5789
    %v5791 = vmul.f32 %v5788, %v5790
    %v5792 = vadd.f32 %v5788, %v5791
    %vm5793 = vweird.f32 %v5781
    %vm5794 = vweird.f32 %v5788
    %vm5795 = vmor %vm5793, %vm5794
    %v5796 = vsel %vm5795, %v5788, %v5792
    %v5797 = vand.u32 2147483647, %v5781
    %vm5798 = vcmp.eq.f32.partialorder %v5797, 8.507059e+37
    %v5799 = vand.u32 %v5781, 2147483648
    %v5800 = vor.u32 1.1754944e-38, %v5799
    %v5801 = vsel %vm5798, %v5800, %v5796
    %v5802 = vmul.f32 1.0, %v5801
    %v5803 = vrcp.pop %v5782
    %v5804 = vmul.f32 %v5782, %v5803
    %v5805 = vsub.f32 1.0, %v5804
    %v5806 = vmul.f32 %v5803, %v5805
    %v5807 = vadd.f32 %v5803, %v5806
    %vm5808 = vweird.f32 %v5782
    %vm5809 = vweird.f32 %v5803
    %vm5810 = vmor %vm5808, %vm5809
    %v5811 = vsel %vm5810, %v5803, %v5807
    %v5812 = vand.u32 2147483647, %v5782
    %vm5813 = vcmp.eq.f32.partialorder %v5812, 8.507059e+37
    %v5814 = vand.u32 %v5782, 2147483648
    %v5815 = vor.u32 1.1754944e-38, %v5814
    %v5816 = vsel %vm5813, %v5815, %v5811
    %v5817 = vmul.f32 1.0, %v5816
    %v5818 = vrcp.pop %v5783
    %v5819 = vmul.f32 %v5783, %v5818
    %v5820 = vsub.f32 1.0, %v5819
    %v5821 = vmul.f32 %v5818, %v5820
    %v5822 = vadd.f32 %v5818, %v5821
    %vm5823 = vweird.f32 %v5783
    %vm5824 = vweird.f32 %v5818
    %vm5825 = vmor %vm5823, %vm5824
    %v5826 = vsel %vm5825, %v5818, %v5822
    %v5827 = vand.u32 2147483647, %v5783
    %vm5828 = vcmp.eq.f32.partialorder %v5827, 8.507059e+37
    %v5829 = vand.u32 %v5783, 2147483648
    %v5830 = vor.u32 1.1754944e-38, %v5829
    %v5831 = vsel %vm5828, %v5830, %v5826
    %v5832 = vmul.f32 1.0, %v5831
    %v5833 = vrcp.pop %v5784
    %v5834 = vmul.f32 %v5784, %v5833
    %v5835 = vsub.f32 1.0, %v5834
    %v5836 = vmul.f32 %v5833, %v5835
    %v5837 = vadd.f32 %v5833, %v5836
    %vm5838 = vweird.f32 %v5784
    %vm5839 = vweird.f32 %v5833
    %vm5840 = vmor %vm5838, %vm5839
    %v5841 = vsel %vm5840, %v5833, %v5837
    %v5842 = vand.u32 2147483647, %v5784
    %vm5843 = vcmp.eq.f32.partialorder %v5842, 8.507059e+37
    %v5844 = vand.u32 %v5784, 2147483648
    %v5845 = vor.u32 1.1754944e-38, %v5844
    %v5846 = vsel %vm5843, %v5845, %v5841
    %v5847 = vmul.f32 1.0, %v5846
    %v5848 = vrcp.pop %v5785
    %v5849 = vmul.f32 %v5785, %v5848
    %v5850 = vsub.f32 1.0, %v5849
    %v5851 = vmul.f32 %v5848, %v5850
    %v5852 = vadd.f32 %v5848, %v5851
    %vm5853 = vweird.f32 %v5785
    %vm5854 = vweird.f32 %v5848
    %vm5855 = vmor %vm5853, %vm5854
    %v5856 = vsel %vm5855, %v5848, %v5852
    %v5857 = vand.u32 2147483647, %v5785
    %vm5858 = vcmp.eq.f32.partialorder %v5857, 8.507059e+37
    %v5859 = vand.u32 %v5785, 2147483648
    %v5860 = vor.u32 1.1754944e-38, %v5859
    %v5861 = vsel %vm5858, %v5860, %v5856
    %v5862 = vmul.f32 1.0, %v5861
    %v5863 = vrcp.pop %v5786
    %v5864 = vmul.f32 %v5786, %v5863
    %v5865 = vsub.f32 1.0, %v5864
    %v5866 = vmul.f32 %v5863, %v5865
    %v5867 = vadd.f32 %v5863, %v5866
    %vm5868 = vweird.f32 %v5786
    %vm5869 = vweird.f32 %v5863
    %vm5870 = vmor %vm5868, %vm5869
    %v5871 = vsel %vm5870, %v5863, %v5867
    %v5872 = vand.u32 2147483647, %v5786
    %vm5873 = vcmp.eq.f32.partialorder %v5872, 8.507059e+37
    %v5874 = vand.u32 %v5786, 2147483648
    %v5875 = vor.u32 1.1754944e-38, %v5874
    %v5876 = vsel %vm5873, %v5875, %v5871
    %v5877 = vmul.f32 1.0, %v5876
    %v5878 = vrcp.pop %v5787
    %v5879 = vmul.f32 %v5787, %v5878
    %v5880 = vsub.f32 1.0, %v5879
    %v5881 = vmul.f32 %v5878, %v5880
    %v5882 = vadd.f32 %v5878, %v5881
    %vm5883 = vweird.f32 %v5787
    %vm5884 = vweird.f32 %v5878
    %vm5885 = vmor %vm5883, %vm5884
    %v5886 = vsel %vm5885, %v5878, %v5882
    %v5887 = vand.u32 2147483647, %v5787
    %vm5888 = vcmp.eq.f32.partialorder %v5887, 8.507059e+37
    %v5889 = vand.u32 %v5787, 2147483648
    %v5890 = vor.u32 1.1754944e-38, %v5889
    %v5891 = vsel %vm5888, %v5890, %v5886
    %v5892 = vmul.f32 1.0, %v5891
    %v5893 = vmul.f32 %v5753, %v5802
    %v5894 = vmul.f32 %v5754, %v5817
    %v5895 = vmul.f32 %v5755, %v5832
    %v5896 = vmul.f32 %v5756, %v5847
    %v5897 = vmul.f32 %v5757, %v5862
    %v5898 = vmul.f32 %v5758, %v5877
    %v5899 = vmul.f32 %v5759, %v5892
    %s5900 = scalar_lea.vmem %s8, 928
    %v5901 = vld [vmem:[%s5900] sm:$0xff]
    %v5902 = vld [vmem:[%s5900 + $0x8] sm:$0xff]
    %v5903 = vld [vmem:[%s5900 + $0x10] sm:$0xff]
    %v5904 = vld [vmem:[%s5900 + $0x18] sm:$0xff]
    %v5905 = vld [vmem:[%s9 + $0x29] sm:$0x1]
    %v5906 = vperm.slane %v5905, 0
    %v5908 = vsel %vm518, %v5893, 0
    %v5911 = vsel %vm518, %v5894, 0
    %v5914 = vsel %vm518, %v5895, 0
    %v5917 = vsel %vm518, %v5896, 0
    %v5920 = vsel %vm518, %v5897, 0
    %v5923 = vsel %vm518, %v5898, 0
    %v5926 = vsel %vm518, %v5899, 0
    %5928 = vmatpush.msra.mxu0 0.0
    %5929 = vmatpush.msra.mxu0 0.0
    %5930 = vmatpush.msra.mxu0 0.0
    %5931 = vmatpush.msra.mxu0 0.0
    %5932 = vmatpush.msra.mxu0 0.0
    %5933 = vmatpush.msra.mxu0 0.0
    %5934 = vmatpush.msra.mxu0 0.0
    %5935 = vmatpush.msra.mxu0 0.0
    %5936 = vmatpush.msra.mxu0 0.0
    %5937 = vmatpush.msra.mxu0 0.0
    %5938 = vmatpush.msra.mxu0 0.0
    %5939 = vmatpush.msra.mxu0 0.0
    %5940 = vmatpush.msra.mxu0 %v5904
    %5941 = vmatpush.msra.mxu0 %v5903
    %5942 = vmatpush.msra.mxu0 %v5902
    %5943 = vmatpush.msra.mxu0 %v5901
    %5944 = vmatmul.f32.gmra.mxu0 %v5908
    %v5945 = vpop.f32.mrf.mxu0
    %v5946 = vadd.f32 %v5906, %v5945
    %5947 = vmatmul.f32.gmra.mxu0 %v5911
    %v5948 = vpop.f32.mrf.mxu0
    %v5949 = vadd.f32 %v5906, %v5948
    %5950 = vmatmul.f32.gmra.mxu0 %v5914
    %v5951 = vpop.f32.mrf.mxu0
    %v5952 = vadd.f32 %v5906, %v5951
    %5953 = vmatmul.f32.gmra.mxu0 %v5917
    %v5954 = vpop.f32.mrf.mxu0
    %v5955 = vadd.f32 %v5906, %v5954
    %5956 = vmatmul.f32.gmra.mxu0 %v5920
    %v5957 = vpop.f32.mrf.mxu0
    %v5958 = vadd.f32 %v5906, %v5957
    %5959 = vmatmul.f32.gmra.mxu0 %v5923
    %v5960 = vpop.f32.mrf.mxu0
    %v5961 = vadd.f32 %v5906, %v5960
    %5962 = vmatmul.f32.gmra.mxu0 %v5926
    %v5963 = vpop.f32.mrf.mxu0
    %v5964 = vadd.f32 %v5906, %v5963
    %5965 = vdwg.mxu0
    %v5966 = vld [vmem:[%s9 + $0x2a] sm:$0x1]
    %v5967 = vld [vmem:[%s9 + $0x2b] sm:$0x1]
    %v5968 = vsel %vm518, %v5946, 0.0
    %5969 = vadd.xlane.f32.xlu0 %v5968
    %v5970 = vpop.xlane.xlu0 %5969
    %v5971 = vsel %vm518, %v5949, 0.0
    %5972 = vadd.xlane.f32.xlu0 %v5971
    %v5973 = vpop.xlane.xlu0 %5972
    %v5974 = vsel %vm518, %v5952, 0.0
    %5975 = vadd.xlane.f32.xlu0 %v5974
    %v5976 = vpop.xlane.xlu0 %5975
    %v5977 = vsel %vm518, %v5955, 0.0
    %5978 = vadd.xlane.f32.xlu0 %v5977
    %v5979 = vpop.xlane.xlu0 %5978
    %v5980 = vsel %vm518, %v5958, 0.0
    %5981 = vadd.xlane.f32.xlu0 %v5980
    %v5982 = vpop.xlane.xlu0 %5981
    %v5983 = vsel %vm518, %v5961, 0.0
    %5984 = vadd.xlane.f32.xlu0 %v5983
    %v5985 = vpop.xlane.xlu0 %5984
    %v5986 = vsel %vm518, %v5964, 0.0
    %5987 = vadd.xlane.f32.xlu0 %v5986
    %v5988 = vpop.xlane.xlu0 %5987
    %v5989 = vmul.f32 %v5970, %v706
    %v5990 = vmul.f32 %v5973, %v706
    %v5991 = vmul.f32 %v5976, %v706
    %v5992 = vmul.f32 %v5979, %v706
    %v5993 = vmul.f32 %v5982, %v706
    %v5994 = vmul.f32 %v5985, %v706
    %v5995 = vmul.f32 %v5988, %v706
    %v5996 = vsub.f32 %v5946, %v5989
    %v5997 = vsub.f32 %v5949, %v5990
    %v5998 = vsub.f32 %v5952, %v5991
    %v5999 = vsub.f32 %v5955, %v5992
    %v6000 = vsub.f32 %v5958, %v5993
    %v6001 = vsub.f32 %v5961, %v5994
    %v6002 = vsub.f32 %v5964, %v5995
    %v6003 = vmul.f32 %v5996, %v5996
    %v6004 = vmul.f32 %v5997, %v5997
    %v6005 = vmul.f32 %v5998, %v5998
    %v6006 = vmul.f32 %v5999, %v5999
    %v6007 = vmul.f32 %v6000, %v6000
    %v6008 = vmul.f32 %v6001, %v6001
    %v6009 = vmul.f32 %v6002, %v6002
    %v6010 = vsel %vm518, %v6003, 0.0
    %6011 = vadd.xlane.f32.xlu0 %v6010
    %v6012 = vpop.xlane.xlu0 %6011
    %v6013 = vsel %vm518, %v6004, 0.0
    %6014 = vadd.xlane.f32.xlu0 %v6013
    %v6015 = vpop.xlane.xlu0 %6014
    %v6016 = vsel %vm518, %v6005, 0.0
    %6017 = vadd.xlane.f32.xlu0 %v6016
    %v6018 = vpop.xlane.xlu0 %6017
    %v6019 = vsel %vm518, %v6006, 0.0
    %6020 = vadd.xlane.f32.xlu0 %v6019
    %v6021 = vpop.xlane.xlu0 %6020
    %v6022 = vsel %vm518, %v6007, 0.0
    %6023 = vadd.xlane.f32.xlu0 %v6022
    %v6024 = vpop.xlane.xlu0 %6023
    %v6025 = vsel %vm518, %v6008, 0.0
    %6026 = vadd.xlane.f32.xlu0 %v6025
    %v6027 = vpop.xlane.xlu0 %6026
    %v6028 = vsel %vm518, %v6009, 0.0
    %6029 = vadd.xlane.f32.xlu0 %v6028
    %v6030 = vpop.xlane.xlu0 %6029
    %v6031 = vmul.f32 %v6012, %v706
    %v6032 = vmul.f32 %v6015, %v706
    %v6033 = vmul.f32 %v6018, %v706
    %v6034 = vmul.f32 %v6021, %v706
    %v6035 = vmul.f32 %v6024, %v706
    %v6036 = vmul.f32 %v6027, %v706
    %v6037 = vmul.f32 %v6030, %v706
    %v6038 = vadd.f32 %v6031, 1e-05
    %v6039 = vadd.f32 %v6032, 1e-05
    %v6040 = vadd.f32 %v6033, 1e-05
    %v6041 = vadd.f32 %v6034, 1e-05
    %v6042 = vadd.f32 %v6035, 1e-05
    %v6043 = vadd.f32 %v6036, 1e-05
    %v6044 = vadd.f32 %v6037, 1e-05
    %v6045 = vrsqrt.pop %v6038
    %v6046 = vmul.f32 %v6045, %v6038
    %v6047 = vmul.f32 %v6046, %v6045
    %v6048 = vmul.f32 0.5, %v6047
    %v6049 = vsub.f32 1.5, %v6048
    %v6050 = vmul.f32 %v6045, %v6049
    %vm6051 = vweird.f32 %v6038
    %vm6052 = vweird.f32 %v6045
    %vm6053 = vmor %vm6051, %vm6052
    %v6054 = vsel %vm6053, %v6045, %v6050
    %v6055 = vrsqrt.pop %v6039
    %v6056 = vmul.f32 %v6055, %v6039
    %v6057 = vmul.f32 %v6056, %v6055
    %v6058 = vmul.f32 0.5, %v6057
    %v6059 = vsub.f32 1.5, %v6058
    %v6060 = vmul.f32 %v6055, %v6059
    %vm6061 = vweird.f32 %v6039
    %vm6062 = vweird.f32 %v6055
    %vm6063 = vmor %vm6061, %vm6062
    %v6064 = vsel %vm6063, %v6055, %v6060
    %v6065 = vrsqrt.pop %v6040
    %v6066 = vmul.f32 %v6065, %v6040
    %v6067 = vmul.f32 %v6066, %v6065
    %v6068 = vmul.f32 0.5, %v6067
    %v6069 = vsub.f32 1.5, %v6068
    %v6070 = vmul.f32 %v6065, %v6069
    %vm6071 = vweird.f32 %v6040
    %vm6072 = vweird.f32 %v6065
    %vm6073 = vmor %vm6071, %vm6072
    %v6074 = vsel %vm6073, %v6065, %v6070
    %v6075 = vrsqrt.pop %v6041
    %v6076 = vmul.f32 %v6075, %v6041
    %v6077 = vmul.f32 %v6076, %v6075
    %v6078 = vmul.f32 0.5, %v6077
    %v6079 = vsub.f32 1.5, %v6078
    %v6080 = vmul.f32 %v6075, %v6079
    %vm6081 = vweird.f32 %v6041
    %vm6082 = vweird.f32 %v6075
    %vm6083 = vmor %vm6081, %vm6082
    %v6084 = vsel %vm6083, %v6075, %v6080
    %v6085 = vrsqrt.pop %v6042
    %v6086 = vmul.f32 %v6085, %v6042
    %v6087 = vmul.f32 %v6086, %v6085
    %v6088 = vmul.f32 0.5, %v6087
    %v6089 = vsub.f32 1.5, %v6088
    %v6090 = vmul.f32 %v6085, %v6089
    %vm6091 = vweird.f32 %v6042
    %vm6092 = vweird.f32 %v6085
    %vm6093 = vmor %vm6091, %vm6092
    %v6094 = vsel %vm6093, %v6085, %v6090
    %v6095 = vrsqrt.pop %v6043
    %v6096 = vmul.f32 %v6095, %v6043
    %v6097 = vmul.f32 %v6096, %v6095
    %v6098 = vmul.f32 0.5, %v6097
    %v6099 = vsub.f32 1.5, %v6098
    %v6100 = vmul.f32 %v6095, %v6099
    %vm6101 = vweird.f32 %v6043
    %vm6102 = vweird.f32 %v6095
    %vm6103 = vmor %vm6101, %vm6102
    %v6104 = vsel %vm6103, %v6095, %v6100
    %v6105 = vrsqrt.pop %v6044
    %v6106 = vmul.f32 %v6105, %v6044
    %v6107 = vmul.f32 %v6106, %v6105
    %v6108 = vmul.f32 0.5, %v6107
    %v6109 = vsub.f32 1.5, %v6108
    %v6110 = vmul.f32 %v6105, %v6109
    %vm6111 = vweird.f32 %v6044
    %vm6112 = vweird.f32 %v6105
    %vm6113 = vmor %vm6111, %vm6112
    %v6114 = vsel %vm6113, %v6105, %v6110
    %v6115 = vmul.f32 %v5996, %v6054
    %v6116 = vmul.f32 %v5997, %v6064
    %v6117 = vmul.f32 %v5998, %v6074
    %v6118 = vmul.f32 %v5999, %v6084
    %v6119 = vmul.f32 %v6000, %v6094
    %v6120 = vmul.f32 %v6001, %v6104
    %v6121 = vmul.f32 %v6002, %v6114
    %v6122 = vperm.slane %v5966, 0
    %v6123 = vmul.f32 %v6115, %v6122
    %v6124 = vmul.f32 %v6116, %v6122
    %v6125 = vmul.f32 %v6117, %v6122
    %v6126 = vmul.f32 %v6118, %v6122
    %v6127 = vmul.f32 %v6119, %v6122
    %v6128 = vmul.f32 %v6120, %v6122
    %v6129 = vmul.f32 %v6121, %v6122
    %v6130 = vperm.slane %v5967, 0
    %v6131 = vadd.f32 %v6123, %v6130
    %v6132 = vadd.f32 %v6124, %v6130
    %v6133 = vadd.f32 %v6125, %v6130
    %v6134 = vadd.f32 %v6126, %v6130
    %v6135 = vadd.f32 %v6127, %v6130
    %v6136 = vadd.f32 %v6128, %v6130
    %v6137 = vadd.f32 %v6129, %v6130
    %v6138 = vxor.u32 %v6131, 2147483648
    %v6139 = vxor.u32 %v6132, 2147483648
    %v6140 = vxor.u32 %v6133, 2147483648
    %v6141 = vxor.u32 %v6134, 2147483648
    %v6142 = vxor.u32 %v6135, 2147483648
    %v6143 = vxor.u32 %v6136, 2147483648
    %v6144 = vxor.u32 %v6137, 2147483648
    %v6145 = vmul.f32 %v6138, 1.442695
    %v6146 = vpow.pop %v6145
    %v6147 = vmul.f32 %v6139, 1.442695
    %v6148 = vpow.pop %v6147
    %v6149 = vmul.f32 %v6140, 1.442695
    %v6150 = vpow.pop %v6149
    %v6151 = vmul.f32 %v6141, 1.442695
    %v6152 = vpow.pop %v6151
    %v6153 = vmul.f32 %v6142, 1.442695
    %v6154 = vpow.pop %v6153
    %v6155 = vmul.f32 %v6143, 1.442695
    %v6156 = vpow.pop %v6155
    %v6157 = vmul.f32 %v6144, 1.442695
    %v6158 = vpow.pop %v6157
    %v6159 = vadd.f32 %v6146, 1.0
    %v6160 = vadd.f32 %v6148, 1.0
    %v6161 = vadd.f32 %v6150, 1.0
    %v6162 = vadd.f32 %v6152, 1.0
    %v6163 = vadd.f32 %v6154, 1.0
    %v6164 = vadd.f32 %v6156, 1.0
    %v6165 = vadd.f32 %v6158, 1.0
    %v6166 = vrcp.pop %v6159
    %v6167 = vmul.f32 %v6159, %v6166
    %v6168 = vsub.f32 1.0, %v6167
    %v6169 = vmul.f32 %v6166, %v6168
    %v6170 = vadd.f32 %v6166, %v6169
    %vm6171 = vweird.f32 %v6159
    %vm6172 = vweird.f32 %v6166
    %vm6173 = vmor %vm6171, %vm6172
    %v6174 = vsel %vm6173, %v6166, %v6170
    %v6175 = vand.u32 2147483647, %v6159
    %vm6176 = vcmp.eq.f32.partialorder %v6175, 8.507059e+37
    %v6177 = vand.u32 %v6159, 2147483648
    %v6178 = vor.u32 1.1754944e-38, %v6177
    %v6179 = vsel %vm6176, %v6178, %v6174
    %v6180 = vmul.f32 1.0, %v6179
    %v6181 = vrcp.pop %v6160
    %v6182 = vmul.f32 %v6160, %v6181
    %v6183 = vsub.f32 1.0, %v6182
    %v6184 = vmul.f32 %v6181, %v6183
    %v6185 = vadd.f32 %v6181, %v6184
    %vm6186 = vweird.f32 %v6160
    %vm6187 = vweird.f32 %v6181
    %vm6188 = vmor %vm6186, %vm6187
    %v6189 = vsel %vm6188, %v6181, %v6185
    %v6190 = vand.u32 2147483647, %v6160
    %vm6191 = vcmp.eq.f32.partialorder %v6190, 8.507059e+37
    %v6192 = vand.u32 %v6160, 2147483648
    %v6193 = vor.u32 1.1754944e-38, %v6192
    %v6194 = vsel %vm6191, %v6193, %v6189
    %v6195 = vmul.f32 1.0, %v6194
    %v6196 = vrcp.pop %v6161
    %v6197 = vmul.f32 %v6161, %v6196
    %v6198 = vsub.f32 1.0, %v6197
    %v6199 = vmul.f32 %v6196, %v6198
    %v6200 = vadd.f32 %v6196, %v6199
    %vm6201 = vweird.f32 %v6161
    %vm6202 = vweird.f32 %v6196
    %vm6203 = vmor %vm6201, %vm6202
    %v6204 = vsel %vm6203, %v6196, %v6200
    %v6205 = vand.u32 2147483647, %v6161
    %vm6206 = vcmp.eq.f32.partialorder %v6205, 8.507059e+37
    %v6207 = vand.u32 %v6161, 2147483648
    %v6208 = vor.u32 1.1754944e-38, %v6207
    %v6209 = vsel %vm6206, %v6208, %v6204
    %v6210 = vmul.f32 1.0, %v6209
    %v6211 = vrcp.pop %v6162
    %v6212 = vmul.f32 %v6162, %v6211
    %v6213 = vsub.f32 1.0, %v6212
    %v6214 = vmul.f32 %v6211, %v6213
    %v6215 = vadd.f32 %v6211, %v6214
    %vm6216 = vweird.f32 %v6162
    %vm6217 = vweird.f32 %v6211
    %vm6218 = vmor %vm6216, %vm6217
    %v6219 = vsel %vm6218, %v6211, %v6215
    %v6220 = vand.u32 2147483647, %v6162
    %vm6221 = vcmp.eq.f32.partialorder %v6220, 8.507059e+37
    %v6222 = vand.u32 %v6162, 2147483648
    %v6223 = vor.u32 1.1754944e-38, %v6222
    %v6224 = vsel %vm6221, %v6223, %v6219
    %v6225 = vmul.f32 1.0, %v6224
    %v6226 = vrcp.pop %v6163
    %v6227 = vmul.f32 %v6163, %v6226
    %v6228 = vsub.f32 1.0, %v6227
    %v6229 = vmul.f32 %v6226, %v6228
    %v6230 = vadd.f32 %v6226, %v6229
    %vm6231 = vweird.f32 %v6163
    %vm6232 = vweird.f32 %v6226
    %vm6233 = vmor %vm6231, %vm6232
    %v6234 = vsel %vm6233, %v6226, %v6230
    %v6235 = vand.u32 2147483647, %v6163
    %vm6236 = vcmp.eq.f32.partialorder %v6235, 8.507059e+37
    %v6237 = vand.u32 %v6163, 2147483648
    %v6238 = vor.u32 1.1754944e-38, %v6237
    %v6239 = vsel %vm6236, %v6238, %v6234
    %v6240 = vmul.f32 1.0, %v6239
    %v6241 = vrcp.pop %v6164
    %v6242 = vmul.f32 %v6164, %v6241
    %v6243 = vsub.f32 1.0, %v6242
    %v6244 = vmul.f32 %v6241, %v6243
    %v6245 = vadd.f32 %v6241, %v6244
    %vm6246 = vweird.f32 %v6164
    %vm6247 = vweird.f32 %v6241
    %vm6248 = vmor %vm6246, %vm6247
    %v6249 = vsel %vm6248, %v6241, %v6245
    %v6250 = vand.u32 2147483647, %v6164
    %vm6251 = vcmp.eq.f32.partialorder %v6250, 8.507059e+37
    %v6252 = vand.u32 %v6164, 2147483648
    %v6253 = vor.u32 1.1754944e-38, %v6252
    %v6254 = vsel %vm6251, %v6253, %v6249
    %v6255 = vmul.f32 1.0, %v6254
    %v6256 = vrcp.pop %v6165
    %v6257 = vmul.f32 %v6165, %v6256
    %v6258 = vsub.f32 1.0, %v6257
    %v6259 = vmul.f32 %v6256, %v6258
    %v6260 = vadd.f32 %v6256, %v6259
    %vm6261 = vweird.f32 %v6165
    %vm6262 = vweird.f32 %v6256
    %vm6263 = vmor %vm6261, %vm6262
    %v6264 = vsel %vm6263, %v6256, %v6260
    %v6265 = vand.u32 2147483647, %v6165
    %vm6266 = vcmp.eq.f32.partialorder %v6265, 8.507059e+37
    %v6267 = vand.u32 %v6165, 2147483648
    %v6268 = vor.u32 1.1754944e-38, %v6267
    %v6269 = vsel %vm6266, %v6268, %v6264
    %v6270 = vmul.f32 1.0, %v6269
    %v6271 = vmul.f32 %v6131, %v6180
    %v6272 = vmul.f32 %v6132, %v6195
    %v6273 = vmul.f32 %v6133, %v6210
    %v6274 = vmul.f32 %v6134, %v6225
    %v6275 = vmul.f32 %v6135, %v6240
    %v6276 = vmul.f32 %v6136, %v6255
    %v6277 = vmul.f32 %v6137, %v6270
    %6282 = vrot.lane.b32.xlu0 %v3222, 127
    %v6283 = vpop.permute.xlu0 %6282
    %6284 = vrot.lane.b32.xlu0 %v3223, 127
    %v6285 = vpop.permute.xlu0 %6284
    %6286 = vrot.lane.b32.xlu0 %v3224, 127
    %v6287 = vpop.permute.xlu0 %6286
    %6288 = vrot.lane.b32.xlu0 %v3225, 127
    %v6289 = vpop.permute.xlu0 %6288
    %v6295 = vsel %vm518, %v6271, 0
    %v6298 = vsel %vm518, %v6272, 0
    %v6301 = vsel %vm518, %v6273, 0
    %v6304 = vsel %vm518, %v6274, 0
    %v6307 = vsel %vm518, %v6275, 0
    %v6310 = vsel %vm518, %v6276, 0
    %v6313 = vsel %vm518, %v6277, 0
    %6315 = vmatpush.msra.mxu0 0.0
    %6316 = vmatpush.msra.mxu0 0.0
    %6317 = vmatpush.msra.mxu0 0.0
    %6318 = vmatpush.msra.mxu0 0.0
    %6319 = vmatpush.msra.mxu0 0.0
    %6320 = vmatpush.msra.mxu0 0.0
    %6321 = vmatpush.msra.mxu0 0.0
    %6322 = vmatpush.msra.mxu0 0.0
    %6323 = vmatpush.msra.mxu0 0.0
    %6324 = vmatpush.msra.mxu0 0.0
    %6325 = vmatpush.msra.mxu0 0.0
    %6326 = vmatpush.msra.mxu0 0.0
    %6327 = vmatpush.msra.mxu0 %v6289
    %6328 = vmatpush.msra.mxu0 %v6287
    %6329 = vmatpush.msra.mxu0 %v6285
    %6330 = vmatpush.msra.mxu0 %v6283
    %6331 = vmatmul.f32.gmra.mxu0 %v6295
    %v6332 = vpop.f32.mrf.mxu0
    %v6333 = vadd.f32 0.0, %v6332
    %6334 = vmatmul.f32.gmra.mxu0 %v6298
    %v6335 = vpop.f32.mrf.mxu0
    %v6336 = vadd.f32 0.0, %v6335
    %6337 = vmatmul.f32.gmra.mxu0 %v6301
    %v6338 = vpop.f32.mrf.mxu0
    %v6339 = vadd.f32 0.0, %v6338
    %6340 = vmatmul.f32.gmra.mxu0 %v6304
    %v6341 = vpop.f32.mrf.mxu0
    %v6342 = vadd.f32 0.0, %v6341
    %6343 = vmatmul.f32.gmra.mxu0 %v6307
    %v6344 = vpop.f32.mrf.mxu0
    %v6345 = vadd.f32 0.0, %v6344
    %6346 = vmatmul.f32.gmra.mxu0 %v6310
    %v6347 = vpop.f32.mrf.mxu0
    %v6348 = vadd.f32 0.0, %v6347
    %6349 = vmatmul.f32.gmra.mxu0 %v6313
    %v6350 = vpop.f32.mrf.mxu0
    %v6351 = vadd.f32 0.0, %v6350
    %6352 = vdwg.mxu0
    %6354 = vset.pattern.permute.xlu0 0
    %6355 = vperm.xlu0 %6354, %v6333
    %v6356 = vpop.permute.xlu0 %6355
    %6359 = vset.pattern.permute.xlu0 0
    %6360 = vperm.xlu0 %6359, %v6336
    %v6361 = vpop.permute.xlu0 %6360
    %6364 = vset.pattern.permute.xlu0 0
    %6365 = vperm.xlu0 %6364, %v6339
    %v6366 = vpop.permute.xlu0 %6365
    %6369 = vset.pattern.permute.xlu0 0
    %6370 = vperm.xlu0 %6369, %v6342
    %v6371 = vpop.permute.xlu0 %6370
    %6374 = vset.pattern.permute.xlu0 0
    %6375 = vperm.xlu0 %6374, %v6345
    %v6376 = vpop.permute.xlu0 %6375
    %6379 = vset.pattern.permute.xlu0 0
    %6380 = vperm.xlu0 %6379, %v6348
    %v6381 = vpop.permute.xlu0 %6380
    %6384 = vset.pattern.permute.xlu0 0
    %6385 = vperm.xlu0 %6384, %v6351
    %v6386 = vpop.permute.xlu0 %6385
    %v6388 = vmul.f32 %v3526, %v6356
    %v6389 = vmul.f32 %v3541, %v6361
    %v6390 = vmul.f32 %v3556, %v6366
    %v6391 = vmul.f32 %v3571, %v6371
    %v6392 = vmul.f32 %v3586, %v6376
    %v6393 = vmul.f32 %v3601, %v6381
    %v6394 = vmul.f32 %v3616, %v6386
    %6395 = vmatpush.msra.mxu0 0.0
    %6396 = vmatpush.msra.mxu0 0.0
    %6397 = vmatpush.msra.mxu0 0.0
    %6398 = vmatpush.msra.mxu0 0.0
    %6399 = vmatpush.msra.mxu0 0.0
    %6400 = vmatpush.msra.mxu0 0.0
    %6401 = vmatpush.msra.mxu0 0.0
    %6402 = vmatpush.msra.mxu0 0.0
    %6403 = vmatpush.msra.mxu0 0.0
    %6404 = vmatpush.msra.mxu0 %v6394
    %6405 = vmatpush.msra.mxu0 %v6393
    %6406 = vmatpush.msra.mxu0 %v6392
    %6407 = vmatpush.msra.mxu0 %v6391
    %6408 = vmatpush.msra.mxu0 %v6390
    %6409 = vmatpush.msra.mxu0 %v6389
    %6410 = vmatpush.msra.mxu0 %v6388
    %6411 = vmatmul.f32.gmra.mxu0 %v1204
    %v6412 = vpop.f32.mrf.mxu0
    %v6413 = vadd.f32 0.0, %v6412
    %6414 = vdwg.mxu0
    %v6415 = vadd.f32 %v3347, %v6413
    %6416 = vmatpush.msra.mxu0 0.0
    %6417 = vmatpush.msra.mxu0 0.0
    %6418 = vmatpush.msra.mxu0 0.0
    %6419 = vmatpush.msra.mxu0 0.0
    %6420 = vmatpush.msra.mxu0 0.0
    %6421 = vmatpush.msra.mxu0 0.0
    %6422 = vmatpush.msra.mxu0 0.0
    %6423 = vmatpush.msra.mxu0 0.0
    %6424 = vmatpush.msra.mxu0 0.0
    %6425 = vmatpush.msra.mxu0 0.0
    %6426 = vmatpush.msra.mxu0 0.0
    %6427 = vmatpush.msra.mxu0 0.0
    %6428 = vmatpush.msra.mxu0 0.0
    %6429 = vmatpush.msra.mxu0 0.0
    %6430 = vmatpush.msra.mxu0 0.0
    %6431 = vmatpush.msra.mxu0 %v6415
    %6432 = vmatmul.f32.gmra.mxu0 %v69
    %v6433 = vpop.f32.mrf.mxu0
    %v6434 = vadd.f32 0.0, %v6433
    %6435 = vmatmul.f32.gmra.mxu0 %v72
    %v6436 = vpop.f32.mrf.mxu0
    %v6437 = vadd.f32 0.0, %v6436
    %6438 = vmatmul.f32.gmra.mxu0 %v75
    %v6439 = vpop.f32.mrf.mxu0
    %v6440 = vadd.f32 0.0, %v6439
    %6441 = vmatmul.f32.gmra.mxu0 %v78
    %v6442 = vpop.f32.mrf.mxu0
    %v6443 = vadd.f32 0.0, %v6442
    %6444 = vmatmul.f32.gmra.mxu0 %v81
    %v6445 = vpop.f32.mrf.mxu0
    %v6446 = vadd.f32 0.0, %v6445
    %6447 = vmatmul.f32.gmra.mxu0 %v84
    %v6448 = vpop.f32.mrf.mxu0
    %v6449 = vadd.f32 0.0, %v6448
    %6450 = vmatmul.f32.gmra.mxu0 %v87
    %v6451 = vpop.f32.mrf.mxu0
    %v6452 = vadd.f32 0.0, %v6451
    %6453 = vdwg.mxu0
    %v6454 = vmul.f32 %v6434, %v6434
    %v6455 = vmul.f32 %v6437, %v6437
    %v6456 = vmul.f32 %v6440, %v6440
    %v6457 = vmul.f32 %v6443, %v6443
    %v6458 = vmul.f32 %v6446, %v6446
    %v6459 = vmul.f32 %v6449, %v6449
    %v6460 = vmul.f32 %v6452, %v6452
    %v6461 = vsel %vm134, %v6454, 0.0
    %6462 = vadd.xlane.f32.xlu0 %v6461
    %v6463 = vpop.xlane.xlu0 %6462
    %v6464 = vsel %vm134, %v6455, 0.0
    %6465 = vadd.xlane.f32.xlu0 %v6464
    %v6466 = vpop.xlane.xlu0 %6465
    %v6467 = vsel %vm134, %v6456, 0.0
    %6468 = vadd.xlane.f32.xlu0 %v6467
    %v6469 = vpop.xlane.xlu0 %6468
    %v6470 = vsel %vm134, %v6457, 0.0
    %6471 = vadd.xlane.f32.xlu0 %v6470
    %v6472 = vpop.xlane.xlu0 %6471
    %v6473 = vsel %vm134, %v6458, 0.0
    %6474 = vadd.xlane.f32.xlu0 %v6473
    %v6475 = vpop.xlane.xlu0 %6474
    %v6476 = vsel %vm134, %v6459, 0.0
    %6477 = vadd.xlane.f32.xlu0 %v6476
    %v6478 = vpop.xlane.xlu0 %6477
    %v6479 = vsel %vm134, %v6460, 0.0
    %6480 = vadd.xlane.f32.xlu0 %v6479
    %v6481 = vpop.xlane.xlu0 %6480
    %v6482 = vadd.f32 %v6463, 1e-08
    %v6483 = vadd.f32 %v6466, 1e-08
    %v6484 = vadd.f32 %v6469, 1e-08
    %v6485 = vadd.f32 %v6472, 1e-08
    %v6486 = vadd.f32 %v6475, 1e-08
    %v6487 = vadd.f32 %v6478, 1e-08
    %v6488 = vadd.f32 %v6481, 1e-08
    %v6489 = vrsqrt.pop %v6482
    %v6490 = vmul.f32 %v6489, %v6482
    %v6491 = vmul.f32 %v6490, %v6489
    %v6492 = vmul.f32 0.5, %v6491
    %v6493 = vsub.f32 1.5, %v6492
    %v6494 = vmul.f32 %v6489, %v6493
    %v6495 = vmul.f32 %v6482, %v6494
    %vm6496 = vcmp.eq.f32.partialorder %v6482, inf
    %v6497 = vsel %vm6496, %v6482, %v6495
    %vm6498 = vcmp.eq.f32.partialorder %v6482, 0.0
    %v6499 = vand.u32 %v6482, 2147483648
    %v6500 = vsel %vm6498, %v6499, %v6497
    %v6501 = vrsqrt.pop %v6483
    %v6502 = vmul.f32 %v6501, %v6483
    %v6503 = vmul.f32 %v6502, %v6501
    %v6504 = vmul.f32 0.5, %v6503
    %v6505 = vsub.f32 1.5, %v6504
    %v6506 = vmul.f32 %v6501, %v6505
    %v6507 = vmul.f32 %v6483, %v6506
    %vm6508 = vcmp.eq.f32.partialorder %v6483, inf
    %v6509 = vsel %vm6508, %v6483, %v6507
    %vm6510 = vcmp.eq.f32.partialorder %v6483, 0.0
    %v6511 = vand.u32 %v6483, 2147483648
    %v6512 = vsel %vm6510, %v6511, %v6509
    %v6513 = vrsqrt.pop %v6484
    %v6514 = vmul.f32 %v6513, %v6484
    %v6515 = vmul.f32 %v6514, %v6513
    %v6516 = vmul.f32 0.5, %v6515
    %v6517 = vsub.f32 1.5, %v6516
    %v6518 = vmul.f32 %v6513, %v6517
    %v6519 = vmul.f32 %v6484, %v6518
    %vm6520 = vcmp.eq.f32.partialorder %v6484, inf
    %v6521 = vsel %vm6520, %v6484, %v6519
    %vm6522 = vcmp.eq.f32.partialorder %v6484, 0.0
    %v6523 = vand.u32 %v6484, 2147483648
    %v6524 = vsel %vm6522, %v6523, %v6521
    %v6525 = vrsqrt.pop %v6485
    %v6526 = vmul.f32 %v6525, %v6485
    %v6527 = vmul.f32 %v6526, %v6525
    %v6528 = vmul.f32 0.5, %v6527
    %v6529 = vsub.f32 1.5, %v6528
    %v6530 = vmul.f32 %v6525, %v6529
    %v6531 = vmul.f32 %v6485, %v6530
    %vm6532 = vcmp.eq.f32.partialorder %v6485, inf
    %v6533 = vsel %vm6532, %v6485, %v6531
    %vm6534 = vcmp.eq.f32.partialorder %v6485, 0.0
    %v6535 = vand.u32 %v6485, 2147483648
    %v6536 = vsel %vm6534, %v6535, %v6533
    %v6537 = vrsqrt.pop %v6486
    %v6538 = vmul.f32 %v6537, %v6486
    %v6539 = vmul.f32 %v6538, %v6537
    %v6540 = vmul.f32 0.5, %v6539
    %v6541 = vsub.f32 1.5, %v6540
    %v6542 = vmul.f32 %v6537, %v6541
    %v6543 = vmul.f32 %v6486, %v6542
    %vm6544 = vcmp.eq.f32.partialorder %v6486, inf
    %v6545 = vsel %vm6544, %v6486, %v6543
    %vm6546 = vcmp.eq.f32.partialorder %v6486, 0.0
    %v6547 = vand.u32 %v6486, 2147483648
    %v6548 = vsel %vm6546, %v6547, %v6545
    %v6549 = vrsqrt.pop %v6487
    %v6550 = vmul.f32 %v6549, %v6487
    %v6551 = vmul.f32 %v6550, %v6549
    %v6552 = vmul.f32 0.5, %v6551
    %v6553 = vsub.f32 1.5, %v6552
    %v6554 = vmul.f32 %v6549, %v6553
    %v6555 = vmul.f32 %v6487, %v6554
    %vm6556 = vcmp.eq.f32.partialorder %v6487, inf
    %v6557 = vsel %vm6556, %v6487, %v6555
    %vm6558 = vcmp.eq.f32.partialorder %v6487, 0.0
    %v6559 = vand.u32 %v6487, 2147483648
    %v6560 = vsel %vm6558, %v6559, %v6557
    %v6561 = vrsqrt.pop %v6488
    %v6562 = vmul.f32 %v6561, %v6488
    %v6563 = vmul.f32 %v6562, %v6561
    %v6564 = vmul.f32 0.5, %v6563
    %v6565 = vsub.f32 1.5, %v6564
    %v6566 = vmul.f32 %v6561, %v6565
    %v6567 = vmul.f32 %v6488, %v6566
    %vm6568 = vcmp.eq.f32.partialorder %v6488, inf
    %v6569 = vsel %vm6568, %v6488, %v6567
    %vm6570 = vcmp.eq.f32.partialorder %v6488, 0.0
    %v6571 = vand.u32 %v6488, 2147483648
    %v6572 = vsel %vm6570, %v6571, %v6569
    %v6573 = vadd.f32 %v6500, 1.0
    %v6574 = vadd.f32 %v6512, 1.0
    %v6575 = vadd.f32 %v6524, 1.0
    %v6576 = vadd.f32 %v6536, 1.0
    %v6577 = vadd.f32 %v6548, 1.0
    %v6578 = vadd.f32 %v6560, 1.0
    %v6579 = vadd.f32 %v6572, 1.0
    %v6580 = vrcp.pop %v6573
    %v6581 = vmul.f32 %v6573, %v6580
    %v6582 = vsub.f32 1.0, %v6581
    %v6583 = vmul.f32 %v6580, %v6582
    %v6584 = vadd.f32 %v6580, %v6583
    %vm6585 = vweird.f32 %v6573
    %vm6586 = vweird.f32 %v6580
    %vm6587 = vmor %vm6585, %vm6586
    %v6588 = vsel %vm6587, %v6580, %v6584
    %v6589 = vand.u32 2147483647, %v6573
    %vm6590 = vcmp.eq.f32.partialorder %v6589, 8.507059e+37
    %v6591 = vand.u32 %v6573, 2147483648
    %v6592 = vor.u32 1.1754944e-38, %v6591
    %v6593 = vsel %vm6590, %v6592, %v6588
    %v6594 = vmul.f32 %v6434, %v6593
    %v6595 = vrcp.pop %v6574
    %v6596 = vmul.f32 %v6574, %v6595
    %v6597 = vsub.f32 1.0, %v6596
    %v6598 = vmul.f32 %v6595, %v6597
    %v6599 = vadd.f32 %v6595, %v6598
    %vm6600 = vweird.f32 %v6574
    %vm6601 = vweird.f32 %v6595
    %vm6602 = vmor %vm6600, %vm6601
    %v6603 = vsel %vm6602, %v6595, %v6599
    %v6604 = vand.u32 2147483647, %v6574
    %vm6605 = vcmp.eq.f32.partialorder %v6604, 8.507059e+37
    %v6606 = vand.u32 %v6574, 2147483648
    %v6607 = vor.u32 1.1754944e-38, %v6606
    %v6608 = vsel %vm6605, %v6607, %v6603
    %v6609 = vmul.f32 %v6437, %v6608
    %v6610 = vrcp.pop %v6575
    %v6611 = vmul.f32 %v6575, %v6610
    %v6612 = vsub.f32 1.0, %v6611
    %v6613 = vmul.f32 %v6610, %v6612
    %v6614 = vadd.f32 %v6610, %v6613
    %vm6615 = vweird.f32 %v6575
    %vm6616 = vweird.f32 %v6610
    %vm6617 = vmor %vm6615, %vm6616
    %v6618 = vsel %vm6617, %v6610, %v6614
    %v6619 = vand.u32 2147483647, %v6575
    %vm6620 = vcmp.eq.f32.partialorder %v6619, 8.507059e+37
    %v6621 = vand.u32 %v6575, 2147483648
    %v6622 = vor.u32 1.1754944e-38, %v6621
    %v6623 = vsel %vm6620, %v6622, %v6618
    %v6624 = vmul.f32 %v6440, %v6623
    %v6625 = vrcp.pop %v6576
    %v6626 = vmul.f32 %v6576, %v6625
    %v6627 = vsub.f32 1.0, %v6626
    %v6628 = vmul.f32 %v6625, %v6627
    %v6629 = vadd.f32 %v6625, %v6628
    %vm6630 = vweird.f32 %v6576
    %vm6631 = vweird.f32 %v6625
    %vm6632 = vmor %vm6630, %vm6631
    %v6633 = vsel %vm6632, %v6625, %v6629
    %v6634 = vand.u32 2147483647, %v6576
    %vm6635 = vcmp.eq.f32.partialorder %v6634, 8.507059e+37
    %v6636 = vand.u32 %v6576, 2147483648
    %v6637 = vor.u32 1.1754944e-38, %v6636
    %v6638 = vsel %vm6635, %v6637, %v6633
    %v6639 = vmul.f32 %v6443, %v6638
    %v6640 = vrcp.pop %v6577
    %v6641 = vmul.f32 %v6577, %v6640
    %v6642 = vsub.f32 1.0, %v6641
    %v6643 = vmul.f32 %v6640, %v6642
    %v6644 = vadd.f32 %v6640, %v6643
    %vm6645 = vweird.f32 %v6577
    %vm6646 = vweird.f32 %v6640
    %vm6647 = vmor %vm6645, %vm6646
    %v6648 = vsel %vm6647, %v6640, %v6644
    %v6649 = vand.u32 2147483647, %v6577
    %vm6650 = vcmp.eq.f32.partialorder %v6649, 8.507059e+37
    %v6651 = vand.u32 %v6577, 2147483648
    %v6652 = vor.u32 1.1754944e-38, %v6651
    %v6653 = vsel %vm6650, %v6652, %v6648
    %v6654 = vmul.f32 %v6446, %v6653
    %v6655 = vrcp.pop %v6578
    %v6656 = vmul.f32 %v6578, %v6655
    %v6657 = vsub.f32 1.0, %v6656
    %v6658 = vmul.f32 %v6655, %v6657
    %v6659 = vadd.f32 %v6655, %v6658
    %vm6660 = vweird.f32 %v6578
    %vm6661 = vweird.f32 %v6655
    %vm6662 = vmor %vm6660, %vm6661
    %v6663 = vsel %vm6662, %v6655, %v6659
    %v6664 = vand.u32 2147483647, %v6578
    %vm6665 = vcmp.eq.f32.partialorder %v6664, 8.507059e+37
    %v6666 = vand.u32 %v6578, 2147483648
    %v6667 = vor.u32 1.1754944e-38, %v6666
    %v6668 = vsel %vm6665, %v6667, %v6663
    %v6669 = vmul.f32 %v6449, %v6668
    %v6670 = vrcp.pop %v6579
    %v6671 = vmul.f32 %v6579, %v6670
    %v6672 = vsub.f32 1.0, %v6671
    %v6673 = vmul.f32 %v6670, %v6672
    %v6674 = vadd.f32 %v6670, %v6673
    %vm6675 = vweird.f32 %v6579
    %vm6676 = vweird.f32 %v6670
    %vm6677 = vmor %vm6675, %vm6676
    %v6678 = vsel %vm6677, %v6670, %v6674
    %v6679 = vand.u32 2147483647, %v6579
    %vm6680 = vcmp.eq.f32.partialorder %v6679, 8.507059e+37
    %v6681 = vand.u32 %v6579, 2147483648
    %v6682 = vor.u32 1.1754944e-38, %v6681
    %v6683 = vsel %vm6680, %v6682, %v6678
    %v6684 = vmul.f32 %v6452, %v6683
    %s6685 = scalar_lea.vmem %s8, 960
    %v6686 = vld [vmem:[%s6685] sm:$0xff]
    %v6687 = vld [vmem:[%s6685 + $0x8] sm:$0xff]
    %v6688 = vld [vmem:[%s6685 + $0x10] sm:$0xff]
    %v6689 = vld [vmem:[%s6685 + $0x18] sm:$0xff]
    %s6690 = scalar_lea.vmem %s8, 992
    %v6691 = vld [vmem:[%s6690] sm:$0xff]
    %v6692 = vld [vmem:[%s6690 + $0x8] sm:$0xff]
    %v6693 = vld [vmem:[%s6690 + $0x10] sm:$0xff]
    %v6694 = vld [vmem:[%s6690 + $0x18] sm:$0xff]
    %6695 = vmatpush.msra.mxu0 0.0
    %6696 = vmatpush.msra.mxu0 0.0
    %6697 = vmatpush.msra.mxu0 0.0
    %6698 = vmatpush.msra.mxu0 0.0
    %6699 = vmatpush.msra.mxu0 0.0
    %6700 = vmatpush.msra.mxu0 0.0
    %6701 = vmatpush.msra.mxu0 0.0
    %6702 = vmatpush.msra.mxu0 0.0
    %6703 = vmatpush.msra.mxu0 0.0
    %6704 = vmatpush.msra.mxu0 0.0
    %6705 = vmatpush.msra.mxu0 0.0
    %6706 = vmatpush.msra.mxu0 0.0
    %6707 = vmatpush.msra.mxu0 %v6694
    %6708 = vmatpush.msra.mxu0 %v6693
    %6709 = vmatpush.msra.mxu0 %v6692
    %6710 = vmatpush.msra.mxu0 %v6691
    %6711 = vmatmul.f32.gmra.mxu0 %v5430
    %v6712 = vpop.f32.mrf.mxu0
    %v6713 = vadd.f32 0.0, %v6712
    %6714 = vmatmul.f32.gmra.mxu0 %v5433
    %v6715 = vpop.f32.mrf.mxu0
    %v6716 = vadd.f32 0.0, %v6715
    %6717 = vmatmul.f32.gmra.mxu0 %v5436
    %v6718 = vpop.f32.mrf.mxu0
    %v6719 = vadd.f32 0.0, %v6718
    %6720 = vmatmul.f32.gmra.mxu0 %v5439
    %v6721 = vpop.f32.mrf.mxu0
    %v6722 = vadd.f32 0.0, %v6721
    %6723 = vmatmul.f32.gmra.mxu0 %v5442
    %v6724 = vpop.f32.mrf.mxu0
    %v6725 = vadd.f32 0.0, %v6724
    %6726 = vmatmul.f32.gmra.mxu0 %v5445
    %v6727 = vpop.f32.mrf.mxu0
    %v6728 = vadd.f32 0.0, %v6727
    %6729 = vmatmul.f32.gmra.mxu0 %v5448
    %v6730 = vpop.f32.mrf.mxu0
    %v6731 = vadd.f32 0.0, %v6730
    %6732 = vdwg.mxu0
    %6733 = vmatpush.msra.mxu0 0.0
    %6734 = vmatpush.msra.mxu0 0.0
    %6735 = vmatpush.msra.mxu0 0.0
    %6736 = vmatpush.msra.mxu0 0.0
    %6737 = vmatpush.msra.mxu0 0.0
    %6738 = vmatpush.msra.mxu0 0.0
    %6739 = vmatpush.msra.mxu0 0.0
    %6740 = vmatpush.msra.mxu0 0.0
    %6741 = vmatpush.msra.mxu0 0.0
    %6742 = vmatpush.msra.mxu0 0.0
    %6743 = vmatpush.msra.mxu0 0.0
    %6744 = vmatpush.msra.mxu0 0.0
    %6745 = vmatpush.msra.mxu0 %v6689
    %6746 = vmatpush.msra.mxu0 %v6688
    %6747 = vmatpush.msra.mxu0 %v6687
    %6748 = vmatpush.msra.mxu0 %v6686
    %6749 = vmatmul.f32.gmra.mxu0 %v5489
    %v6750 = vpop.f32.mrf.mxu0
    %v6751 = vadd.f32 %v6713, %v6750
    %6752 = vmatmul.f32.gmra.mxu0 %v5492
    %v6753 = vpop.f32.mrf.mxu0
    %v6754 = vadd.f32 %v6716, %v6753
    %6755 = vmatmul.f32.gmra.mxu0 %v5495
    %v6756 = vpop.f32.mrf.mxu0
    %v6757 = vadd.f32 %v6719, %v6756
    %6758 = vmatmul.f32.gmra.mxu0 %v5498
    %v6759 = vpop.f32.mrf.mxu0
    %v6760 = vadd.f32 %v6722, %v6759
    %6761 = vmatmul.f32.gmra.mxu0 %v5501
    %v6762 = vpop.f32.mrf.mxu0
    %v6763 = vadd.f32 %v6725, %v6762
    %6764 = vmatmul.f32.gmra.mxu0 %v5504
    %v6765 = vpop.f32.mrf.mxu0
    %v6766 = vadd.f32 %v6728, %v6765
    %6767 = vmatmul.f32.gmra.mxu0 %v5507
    %v6768 = vpop.f32.mrf.mxu0
    %v6769 = vadd.f32 %v6731, %v6768
    %6770 = vdwg.mxu0
    %s6771 = scalar_lea.vmem %s10, 12
    %v6772 = vld [vmem:[%s6771] sm:$0x3]
    %v6773 = vperm.slane %v6772, 0
    %v6774 = vmul.f32 %v6463, %v6773
    %v6775 = vmul.f32 %v6466, %v6773
    %v6776 = vmul.f32 %v6469, %v6773
    %v6777 = vmul.f32 %v6472, %v6773
    %v6778 = vmul.f32 %v6475, %v6773
    %v6779 = vmul.f32 %v6478, %v6773
    %v6780 = vmul.f32 %v6481, %v6773
    %v6781 = vperm.slane %v6772, 1
    %v6782 = vmul.f32 %v137, %v6781
    %v6783 = vmul.f32 %v140, %v6781
    %v6784 = vmul.f32 %v143, %v6781
    %v6785 = vmul.f32 %v146, %v6781
    %v6786 = vmul.f32 %v149, %v6781
    %v6787 = vmul.f32 %v152, %v6781
    %v6788 = vmul.f32 %v155, %v6781
    %v6789 = vadd.f32 %v6774, %v6782
    %v6790 = vadd.f32 %v6775, %v6783
    %v6791 = vadd.f32 %v6776, %v6784
    %v6792 = vadd.f32 %v6777, %v6785
    %v6793 = vadd.f32 %v6778, %v6786
    %v6794 = vadd.f32 %v6779, %v6787
    %v6795 = vadd.f32 %v6780, %v6788
    %v6796 = vadd.f32 %v6751, %v6789
    %v6797 = vadd.f32 %v6754, %v6790
    %v6798 = vadd.f32 %v6757, %v6791
    %v6799 = vadd.f32 %v6760, %v6792
    %v6800 = vadd.f32 %v6763, %v6793
    %v6801 = vadd.f32 %v6766, %v6794
    %v6802 = vadd.f32 %v6769, %v6795
    %v6803 = vld [vmem:[%s9 + $0x2c] sm:$0x1]
    %v6804 = vperm.slane %v6803, 0
    %v6805 = vadd.f32 %v6796, %v6804
    %v6806 = vadd.f32 %v6797, %v6804
    %v6807 = vadd.f32 %v6798, %v6804
    %v6808 = vadd.f32 %v6799, %v6804
    %v6809 = vadd.f32 %v6800, %v6804
    %v6810 = vadd.f32 %v6801, %v6804
    %v6811 = vadd.f32 %v6802, %v6804
    %v6812 = vld [vmem:[%s9 + $0x2d] sm:$0x1]
    %v6813 = vld [vmem:[%s9 + $0x2e] sm:$0x1]
    %v6814 = vsel %vm518, %v6805, 0.0
    %6815 = vadd.xlane.f32.xlu0 %v6814
    %v6816 = vpop.xlane.xlu0 %6815
    %v6817 = vsel %vm518, %v6806, 0.0
    %6818 = vadd.xlane.f32.xlu0 %v6817
    %v6819 = vpop.xlane.xlu0 %6818
    %v6820 = vsel %vm518, %v6807, 0.0
    %6821 = vadd.xlane.f32.xlu0 %v6820
    %v6822 = vpop.xlane.xlu0 %6821
    %v6823 = vsel %vm518, %v6808, 0.0
    %6824 = vadd.xlane.f32.xlu0 %v6823
    %v6825 = vpop.xlane.xlu0 %6824
    %v6826 = vsel %vm518, %v6809, 0.0
    %6827 = vadd.xlane.f32.xlu0 %v6826
    %v6828 = vpop.xlane.xlu0 %6827
    %v6829 = vsel %vm518, %v6810, 0.0
    %6830 = vadd.xlane.f32.xlu0 %v6829
    %v6831 = vpop.xlane.xlu0 %6830
    %v6832 = vsel %vm518, %v6811, 0.0
    %6833 = vadd.xlane.f32.xlu0 %v6832
    %v6834 = vpop.xlane.xlu0 %6833
    %v6835 = vmul.f32 %v6816, %v706
    %v6836 = vmul.f32 %v6819, %v706
    %v6837 = vmul.f32 %v6822, %v706
    %v6838 = vmul.f32 %v6825, %v706
    %v6839 = vmul.f32 %v6828, %v706
    %v6840 = vmul.f32 %v6831, %v706
    %v6841 = vmul.f32 %v6834, %v706
    %v6842 = vsub.f32 %v6805, %v6835
    %v6843 = vsub.f32 %v6806, %v6836
    %v6844 = vsub.f32 %v6807, %v6837
    %v6845 = vsub.f32 %v6808, %v6838
    %v6846 = vsub.f32 %v6809, %v6839
    %v6847 = vsub.f32 %v6810, %v6840
    %v6848 = vsub.f32 %v6811, %v6841
    %v6849 = vmul.f32 %v6842, %v6842
    %v6850 = vmul.f32 %v6843, %v6843
    %v6851 = vmul.f32 %v6844, %v6844
    %v6852 = vmul.f32 %v6845, %v6845
    %v6853 = vmul.f32 %v6846, %v6846
    %v6854 = vmul.f32 %v6847, %v6847
    %v6855 = vmul.f32 %v6848, %v6848
    %v6856 = vsel %vm518, %v6849, 0.0
    %6857 = vadd.xlane.f32.xlu0 %v6856
    %v6858 = vpop.xlane.xlu0 %6857
    %v6859 = vsel %vm518, %v6850, 0.0
    %6860 = vadd.xlane.f32.xlu0 %v6859
    %v6861 = vpop.xlane.xlu0 %6860
    %v6862 = vsel %vm518, %v6851, 0.0
    %6863 = vadd.xlane.f32.xlu0 %v6862
    %v6864 = vpop.xlane.xlu0 %6863
    %v6865 = vsel %vm518, %v6852, 0.0
    %6866 = vadd.xlane.f32.xlu0 %v6865
    %v6867 = vpop.xlane.xlu0 %6866
    %v6868 = vsel %vm518, %v6853, 0.0
    %6869 = vadd.xlane.f32.xlu0 %v6868
    %v6870 = vpop.xlane.xlu0 %6869
    %v6871 = vsel %vm518, %v6854, 0.0
    %6872 = vadd.xlane.f32.xlu0 %v6871
    %v6873 = vpop.xlane.xlu0 %6872
    %v6874 = vsel %vm518, %v6855, 0.0
    %6875 = vadd.xlane.f32.xlu0 %v6874
    %v6876 = vpop.xlane.xlu0 %6875
    %v6877 = vmul.f32 %v6858, %v706
    %v6878 = vmul.f32 %v6861, %v706
    %v6879 = vmul.f32 %v6864, %v706
    %v6880 = vmul.f32 %v6867, %v706
    %v6881 = vmul.f32 %v6870, %v706
    %v6882 = vmul.f32 %v6873, %v706
    %v6883 = vmul.f32 %v6876, %v706
    %v6884 = vadd.f32 %v6877, 1e-05
    %v6885 = vadd.f32 %v6878, 1e-05
    %v6886 = vadd.f32 %v6879, 1e-05
    %v6887 = vadd.f32 %v6880, 1e-05
    %v6888 = vadd.f32 %v6881, 1e-05
    %v6889 = vadd.f32 %v6882, 1e-05
    %v6890 = vadd.f32 %v6883, 1e-05
    %v6891 = vrsqrt.pop %v6884
    %v6892 = vmul.f32 %v6891, %v6884
    %v6893 = vmul.f32 %v6892, %v6891
    %v6894 = vmul.f32 0.5, %v6893
    %v6895 = vsub.f32 1.5, %v6894
    %v6896 = vmul.f32 %v6891, %v6895
    %vm6897 = vweird.f32 %v6884
    %vm6898 = vweird.f32 %v6891
    %vm6899 = vmor %vm6897, %vm6898
    %v6900 = vsel %vm6899, %v6891, %v6896
    %v6901 = vrsqrt.pop %v6885
    %v6902 = vmul.f32 %v6901, %v6885
    %v6903 = vmul.f32 %v6902, %v6901
    %v6904 = vmul.f32 0.5, %v6903
    %v6905 = vsub.f32 1.5, %v6904
    %v6906 = vmul.f32 %v6901, %v6905
    %vm6907 = vweird.f32 %v6885
    %vm6908 = vweird.f32 %v6901
    %vm6909 = vmor %vm6907, %vm6908
    %v6910 = vsel %vm6909, %v6901, %v6906
    %v6911 = vrsqrt.pop %v6886
    %v6912 = vmul.f32 %v6911, %v6886
    %v6913 = vmul.f32 %v6912, %v6911
    %v6914 = vmul.f32 0.5, %v6913
    %v6915 = vsub.f32 1.5, %v6914
    %v6916 = vmul.f32 %v6911, %v6915
    %vm6917 = vweird.f32 %v6886
    %vm6918 = vweird.f32 %v6911
    %vm6919 = vmor %vm6917, %vm6918
    %v6920 = vsel %vm6919, %v6911, %v6916
    %v6921 = vrsqrt.pop %v6887
    %v6922 = vmul.f32 %v6921, %v6887
    %v6923 = vmul.f32 %v6922, %v6921
    %v6924 = vmul.f32 0.5, %v6923
    %v6925 = vsub.f32 1.5, %v6924
    %v6926 = vmul.f32 %v6921, %v6925
    %vm6927 = vweird.f32 %v6887
    %vm6928 = vweird.f32 %v6921
    %vm6929 = vmor %vm6927, %vm6928
    %v6930 = vsel %vm6929, %v6921, %v6926
    %v6931 = vrsqrt.pop %v6888
    %v6932 = vmul.f32 %v6931, %v6888
    %v6933 = vmul.f32 %v6932, %v6931
    %v6934 = vmul.f32 0.5, %v6933
    %v6935 = vsub.f32 1.5, %v6934
    %v6936 = vmul.f32 %v6931, %v6935
    %vm6937 = vweird.f32 %v6888
    %vm6938 = vweird.f32 %v6931
    %vm6939 = vmor %vm6937, %vm6938
    %v6940 = vsel %vm6939, %v6931, %v6936
    %v6941 = vrsqrt.pop %v6889
    %v6942 = vmul.f32 %v6941, %v6889
    %v6943 = vmul.f32 %v6942, %v6941
    %v6944 = vmul.f32 0.5, %v6943
    %v6945 = vsub.f32 1.5, %v6944
    %v6946 = vmul.f32 %v6941, %v6945
    %vm6947 = vweird.f32 %v6889
    %vm6948 = vweird.f32 %v6941
    %vm6949 = vmor %vm6947, %vm6948
    %v6950 = vsel %vm6949, %v6941, %v6946
    %v6951 = vrsqrt.pop %v6890
    %v6952 = vmul.f32 %v6951, %v6890
    %v6953 = vmul.f32 %v6952, %v6951
    %v6954 = vmul.f32 0.5, %v6953
    %v6955 = vsub.f32 1.5, %v6954
    %v6956 = vmul.f32 %v6951, %v6955
    %vm6957 = vweird.f32 %v6890
    %vm6958 = vweird.f32 %v6951
    %vm6959 = vmor %vm6957, %vm6958
    %v6960 = vsel %vm6959, %v6951, %v6956
    %v6961 = vmul.f32 %v6842, %v6900
    %v6962 = vmul.f32 %v6843, %v6910
    %v6963 = vmul.f32 %v6844, %v6920
    %v6964 = vmul.f32 %v6845, %v6930
    %v6965 = vmul.f32 %v6846, %v6940
    %v6966 = vmul.f32 %v6847, %v6950
    %v6967 = vmul.f32 %v6848, %v6960
    %v6968 = vperm.slane %v6812, 0
    %v6969 = vmul.f32 %v6961, %v6968
    %v6970 = vmul.f32 %v6962, %v6968
    %v6971 = vmul.f32 %v6963, %v6968
    %v6972 = vmul.f32 %v6964, %v6968
    %v6973 = vmul.f32 %v6965, %v6968
    %v6974 = vmul.f32 %v6966, %v6968
    %v6975 = vmul.f32 %v6967, %v6968
    %v6976 = vperm.slane %v6813, 0
    %v6977 = vadd.f32 %v6969, %v6976
    %v6978 = vadd.f32 %v6970, %v6976
    %v6979 = vadd.f32 %v6971, %v6976
    %v6980 = vadd.f32 %v6972, %v6976
    %v6981 = vadd.f32 %v6973, %v6976
    %v6982 = vadd.f32 %v6974, %v6976
    %v6983 = vadd.f32 %v6975, %v6976
    %v6984 = vxor.u32 %v6977, 2147483648
    %v6985 = vxor.u32 %v6978, 2147483648
    %v6986 = vxor.u32 %v6979, 2147483648
    %v6987 = vxor.u32 %v6980, 2147483648
    %v6988 = vxor.u32 %v6981, 2147483648
    %v6989 = vxor.u32 %v6982, 2147483648
    %v6990 = vxor.u32 %v6983, 2147483648
    %v6991 = vmul.f32 %v6984, 1.442695
    %v6992 = vpow.pop %v6991
    %v6993 = vmul.f32 %v6985, 1.442695
    %v6994 = vpow.pop %v6993
    %v6995 = vmul.f32 %v6986, 1.442695
    %v6996 = vpow.pop %v6995
    %v6997 = vmul.f32 %v6987, 1.442695
    %v6998 = vpow.pop %v6997
    %v6999 = vmul.f32 %v6988, 1.442695
    %v7000 = vpow.pop %v6999
    %v7001 = vmul.f32 %v6989, 1.442695
    %v7002 = vpow.pop %v7001
    %v7003 = vmul.f32 %v6990, 1.442695
    %v7004 = vpow.pop %v7003
    %v7005 = vadd.f32 %v6992, 1.0
    %v7006 = vadd.f32 %v6994, 1.0
    %v7007 = vadd.f32 %v6996, 1.0
    %v7008 = vadd.f32 %v6998, 1.0
    %v7009 = vadd.f32 %v7000, 1.0
    %v7010 = vadd.f32 %v7002, 1.0
    %v7011 = vadd.f32 %v7004, 1.0
    %v7012 = vrcp.pop %v7005
    %v7013 = vmul.f32 %v7005, %v7012
    %v7014 = vsub.f32 1.0, %v7013
    %v7015 = vmul.f32 %v7012, %v7014
    %v7016 = vadd.f32 %v7012, %v7015
    %vm7017 = vweird.f32 %v7005
    %vm7018 = vweird.f32 %v7012
    %vm7019 = vmor %vm7017, %vm7018
    %v7020 = vsel %vm7019, %v7012, %v7016
    %v7021 = vand.u32 2147483647, %v7005
    %vm7022 = vcmp.eq.f32.partialorder %v7021, 8.507059e+37
    %v7023 = vand.u32 %v7005, 2147483648
    %v7024 = vor.u32 1.1754944e-38, %v7023
    %v7025 = vsel %vm7022, %v7024, %v7020
    %v7026 = vmul.f32 1.0, %v7025
    %v7027 = vrcp.pop %v7006
    %v7028 = vmul.f32 %v7006, %v7027
    %v7029 = vsub.f32 1.0, %v7028
    %v7030 = vmul.f32 %v7027, %v7029
    %v7031 = vadd.f32 %v7027, %v7030
    %vm7032 = vweird.f32 %v7006
    %vm7033 = vweird.f32 %v7027
    %vm7034 = vmor %vm7032, %vm7033
    %v7035 = vsel %vm7034, %v7027, %v7031
    %v7036 = vand.u32 2147483647, %v7006
    %vm7037 = vcmp.eq.f32.partialorder %v7036, 8.507059e+37
    %v7038 = vand.u32 %v7006, 2147483648
    %v7039 = vor.u32 1.1754944e-38, %v7038
    %v7040 = vsel %vm7037, %v7039, %v7035
    %v7041 = vmul.f32 1.0, %v7040
    %v7042 = vrcp.pop %v7007
    %v7043 = vmul.f32 %v7007, %v7042
    %v7044 = vsub.f32 1.0, %v7043
    %v7045 = vmul.f32 %v7042, %v7044
    %v7046 = vadd.f32 %v7042, %v7045
    %vm7047 = vweird.f32 %v7007
    %vm7048 = vweird.f32 %v7042
    %vm7049 = vmor %vm7047, %vm7048
    %v7050 = vsel %vm7049, %v7042, %v7046
    %v7051 = vand.u32 2147483647, %v7007
    %vm7052 = vcmp.eq.f32.partialorder %v7051, 8.507059e+37
    %v7053 = vand.u32 %v7007, 2147483648
    %v7054 = vor.u32 1.1754944e-38, %v7053
    %v7055 = vsel %vm7052, %v7054, %v7050
    %v7056 = vmul.f32 1.0, %v7055
    %v7057 = vrcp.pop %v7008
    %v7058 = vmul.f32 %v7008, %v7057
    %v7059 = vsub.f32 1.0, %v7058
    %v7060 = vmul.f32 %v7057, %v7059
    %v7061 = vadd.f32 %v7057, %v7060
    %vm7062 = vweird.f32 %v7008
    %vm7063 = vweird.f32 %v7057
    %vm7064 = vmor %vm7062, %vm7063
    %v7065 = vsel %vm7064, %v7057, %v7061
    %v7066 = vand.u32 2147483647, %v7008
    %vm7067 = vcmp.eq.f32.partialorder %v7066, 8.507059e+37
    %v7068 = vand.u32 %v7008, 2147483648
    %v7069 = vor.u32 1.1754944e-38, %v7068
    %v7070 = vsel %vm7067, %v7069, %v7065
    %v7071 = vmul.f32 1.0, %v7070
    %v7072 = vrcp.pop %v7009
    %v7073 = vmul.f32 %v7009, %v7072
    %v7074 = vsub.f32 1.0, %v7073
    %v7075 = vmul.f32 %v7072, %v7074
    %v7076 = vadd.f32 %v7072, %v7075
    %vm7077 = vweird.f32 %v7009
    %vm7078 = vweird.f32 %v7072
    %vm7079 = vmor %vm7077, %vm7078
    %v7080 = vsel %vm7079, %v7072, %v7076
    %v7081 = vand.u32 2147483647, %v7009
    %vm7082 = vcmp.eq.f32.partialorder %v7081, 8.507059e+37
    %v7083 = vand.u32 %v7009, 2147483648
    %v7084 = vor.u32 1.1754944e-38, %v7083
    %v7085 = vsel %vm7082, %v7084, %v7080
    %v7086 = vmul.f32 1.0, %v7085
    %v7087 = vrcp.pop %v7010
    %v7088 = vmul.f32 %v7010, %v7087
    %v7089 = vsub.f32 1.0, %v7088
    %v7090 = vmul.f32 %v7087, %v7089
    %v7091 = vadd.f32 %v7087, %v7090
    %vm7092 = vweird.f32 %v7010
    %vm7093 = vweird.f32 %v7087
    %vm7094 = vmor %vm7092, %vm7093
    %v7095 = vsel %vm7094, %v7087, %v7091
    %v7096 = vand.u32 2147483647, %v7010
    %vm7097 = vcmp.eq.f32.partialorder %v7096, 8.507059e+37
    %v7098 = vand.u32 %v7010, 2147483648
    %v7099 = vor.u32 1.1754944e-38, %v7098
    %v7100 = vsel %vm7097, %v7099, %v7095
    %v7101 = vmul.f32 1.0, %v7100
    %v7102 = vrcp.pop %v7011
    %v7103 = vmul.f32 %v7011, %v7102
    %v7104 = vsub.f32 1.0, %v7103
    %v7105 = vmul.f32 %v7102, %v7104
    %v7106 = vadd.f32 %v7102, %v7105
    %vm7107 = vweird.f32 %v7011
    %vm7108 = vweird.f32 %v7102
    %vm7109 = vmor %vm7107, %vm7108
    %v7110 = vsel %vm7109, %v7102, %v7106
    %v7111 = vand.u32 2147483647, %v7011
    %vm7112 = vcmp.eq.f32.partialorder %v7111, 8.507059e+37
    %v7113 = vand.u32 %v7011, 2147483648
    %v7114 = vor.u32 1.1754944e-38, %v7113
    %v7115 = vsel %vm7112, %v7114, %v7110
    %v7116 = vmul.f32 1.0, %v7115
    %v7117 = vmul.f32 %v6977, %v7026
    %v7118 = vmul.f32 %v6978, %v7041
    %v7119 = vmul.f32 %v6979, %v7056
    %v7120 = vmul.f32 %v6980, %v7071
    %v7121 = vmul.f32 %v6981, %v7086
    %v7122 = vmul.f32 %v6982, %v7101
    %v7123 = vmul.f32 %v6983, %v7116
    %s7124 = scalar_lea.vmem %s8, 1024
    %v7125 = vld [vmem:[%s7124] sm:$0xff]
    %v7126 = vld [vmem:[%s7124 + $0x8] sm:$0xff]
    %v7127 = vld [vmem:[%s7124 + $0x10] sm:$0xff]
    %v7128 = vld [vmem:[%s7124 + $0x18] sm:$0xff]
    %v7129 = vld [vmem:[%s9 + $0x2f] sm:$0x1]
    %v7130 = vperm.slane %v7129, 0
    %v7132 = vsel %vm518, %v7117, 0
    %v7135 = vsel %vm518, %v7118, 0
    %v7138 = vsel %vm518, %v7119, 0
    %v7141 = vsel %vm518, %v7120, 0
    %v7144 = vsel %vm518, %v7121, 0
    %v7147 = vsel %vm518, %v7122, 0
    %v7150 = vsel %vm518, %v7123, 0
    %7152 = vmatpush.msra.mxu0 0.0
    %7153 = vmatpush.msra.mxu0 0.0
    %7154 = vmatpush.msra.mxu0 0.0
    %7155 = vmatpush.msra.mxu0 0.0
    %7156 = vmatpush.msra.mxu0 0.0
    %7157 = vmatpush.msra.mxu0 0.0
    %7158 = vmatpush.msra.mxu0 0.0
    %7159 = vmatpush.msra.mxu0 0.0
    %7160 = vmatpush.msra.mxu0 0.0
    %7161 = vmatpush.msra.mxu0 0.0
    %7162 = vmatpush.msra.mxu0 0.0
    %7163 = vmatpush.msra.mxu0 0.0
    %7164 = vmatpush.msra.mxu0 %v7128
    %7165 = vmatpush.msra.mxu0 %v7127
    %7166 = vmatpush.msra.mxu0 %v7126
    %7167 = vmatpush.msra.mxu0 %v7125
    %7168 = vmatmul.f32.gmra.mxu0 %v7132
    %v7169 = vpop.f32.mrf.mxu0
    %v7170 = vadd.f32 %v7130, %v7169
    %7171 = vmatmul.f32.gmra.mxu0 %v7135
    %v7172 = vpop.f32.mrf.mxu0
    %v7173 = vadd.f32 %v7130, %v7172
    %7174 = vmatmul.f32.gmra.mxu0 %v7138
    %v7175 = vpop.f32.mrf.mxu0
    %v7176 = vadd.f32 %v7130, %v7175
    %7177 = vmatmul.f32.gmra.mxu0 %v7141
    %v7178 = vpop.f32.mrf.mxu0
    %v7179 = vadd.f32 %v7130, %v7178
    %7180 = vmatmul.f32.gmra.mxu0 %v7144
    %v7181 = vpop.f32.mrf.mxu0
    %v7182 = vadd.f32 %v7130, %v7181
    %7183 = vmatmul.f32.gmra.mxu0 %v7147
    %v7184 = vpop.f32.mrf.mxu0
    %v7185 = vadd.f32 %v7130, %v7184
    %7186 = vmatmul.f32.gmra.mxu0 %v7150
    %v7187 = vpop.f32.mrf.mxu0
    %v7188 = vadd.f32 %v7130, %v7187
    %7189 = vdwg.mxu0
    %v7190 = vxor.u32 %v7170, 2147483648
    %v7191 = vxor.u32 %v7173, 2147483648
    %v7192 = vxor.u32 %v7176, 2147483648
    %v7193 = vxor.u32 %v7179, 2147483648
    %v7194 = vxor.u32 %v7182, 2147483648
    %v7195 = vxor.u32 %v7185, 2147483648
    %v7196 = vxor.u32 %v7188, 2147483648
    %v7197 = vmul.f32 %v7190, 1.442695
    %v7198 = vpow.pop %v7197
    %v7199 = vmul.f32 %v7191, 1.442695
    %v7200 = vpow.pop %v7199
    %v7201 = vmul.f32 %v7192, 1.442695
    %v7202 = vpow.pop %v7201
    %v7203 = vmul.f32 %v7193, 1.442695
    %v7204 = vpow.pop %v7203
    %v7205 = vmul.f32 %v7194, 1.442695
    %v7206 = vpow.pop %v7205
    %v7207 = vmul.f32 %v7195, 1.442695
    %v7208 = vpow.pop %v7207
    %v7209 = vmul.f32 %v7196, 1.442695
    %v7210 = vpow.pop %v7209
    %v7211 = vadd.f32 %v7198, 1.0
    %v7212 = vadd.f32 %v7200, 1.0
    %v7213 = vadd.f32 %v7202, 1.0
    %v7214 = vadd.f32 %v7204, 1.0
    %v7215 = vadd.f32 %v7206, 1.0
    %v7216 = vadd.f32 %v7208, 1.0
    %v7217 = vadd.f32 %v7210, 1.0
    %v7218 = vrcp.pop %v7211
    %v7219 = vmul.f32 %v7211, %v7218
    %v7220 = vsub.f32 1.0, %v7219
    %v7221 = vmul.f32 %v7218, %v7220
    %v7222 = vadd.f32 %v7218, %v7221
    %vm7223 = vweird.f32 %v7211
    %vm7224 = vweird.f32 %v7218
    %vm7225 = vmor %vm7223, %vm7224
    %v7226 = vsel %vm7225, %v7218, %v7222
    %v7227 = vand.u32 2147483647, %v7211
    %vm7228 = vcmp.eq.f32.partialorder %v7227, 8.507059e+37
    %v7229 = vand.u32 %v7211, 2147483648
    %v7230 = vor.u32 1.1754944e-38, %v7229
    %v7231 = vsel %vm7228, %v7230, %v7226
    %v7232 = vmul.f32 1.0, %v7231
    %v7233 = vrcp.pop %v7212
    %v7234 = vmul.f32 %v7212, %v7233
    %v7235 = vsub.f32 1.0, %v7234
    %v7236 = vmul.f32 %v7233, %v7235
    %v7237 = vadd.f32 %v7233, %v7236
    %vm7238 = vweird.f32 %v7212
    %vm7239 = vweird.f32 %v7233
    %vm7240 = vmor %vm7238, %vm7239
    %v7241 = vsel %vm7240, %v7233, %v7237
    %v7242 = vand.u32 2147483647, %v7212
    %vm7243 = vcmp.eq.f32.partialorder %v7242, 8.507059e+37
    %v7244 = vand.u32 %v7212, 2147483648
    %v7245 = vor.u32 1.1754944e-38, %v7244
    %v7246 = vsel %vm7243, %v7245, %v7241
    %v7247 = vmul.f32 1.0, %v7246
    %v7248 = vrcp.pop %v7213
    %v7249 = vmul.f32 %v7213, %v7248
    %v7250 = vsub.f32 1.0, %v7249
    %v7251 = vmul.f32 %v7248, %v7250
    %v7252 = vadd.f32 %v7248, %v7251
    %vm7253 = vweird.f32 %v7213
    %vm7254 = vweird.f32 %v7248
    %vm7255 = vmor %vm7253, %vm7254
    %v7256 = vsel %vm7255, %v7248, %v7252
    %v7257 = vand.u32 2147483647, %v7213
    %vm7258 = vcmp.eq.f32.partialorder %v7257, 8.507059e+37
    %v7259 = vand.u32 %v7213, 2147483648
    %v7260 = vor.u32 1.1754944e-38, %v7259
    %v7261 = vsel %vm7258, %v7260, %v7256
    %v7262 = vmul.f32 1.0, %v7261
    %v7263 = vrcp.pop %v7214
    %v7264 = vmul.f32 %v7214, %v7263
    %v7265 = vsub.f32 1.0, %v7264
    %v7266 = vmul.f32 %v7263, %v7265
    %v7267 = vadd.f32 %v7263, %v7266
    %vm7268 = vweird.f32 %v7214
    %vm7269 = vweird.f32 %v7263
    %vm7270 = vmor %vm7268, %vm7269
    %v7271 = vsel %vm7270, %v7263, %v7267
    %v7272 = vand.u32 2147483647, %v7214
    %vm7273 = vcmp.eq.f32.partialorder %v7272, 8.507059e+37
    %v7274 = vand.u32 %v7214, 2147483648
    %v7275 = vor.u32 1.1754944e-38, %v7274
    %v7276 = vsel %vm7273, %v7275, %v7271
    %v7277 = vmul.f32 1.0, %v7276
    %v7278 = vrcp.pop %v7215
    %v7279 = vmul.f32 %v7215, %v7278
    %v7280 = vsub.f32 1.0, %v7279
    %v7281 = vmul.f32 %v7278, %v7280
    %v7282 = vadd.f32 %v7278, %v7281
    %vm7283 = vweird.f32 %v7215
    %vm7284 = vweird.f32 %v7278
    %vm7285 = vmor %vm7283, %vm7284
    %v7286 = vsel %vm7285, %v7278, %v7282
    %v7287 = vand.u32 2147483647, %v7215
    %vm7288 = vcmp.eq.f32.partialorder %v7287, 8.507059e+37
    %v7289 = vand.u32 %v7215, 2147483648
    %v7290 = vor.u32 1.1754944e-38, %v7289
    %v7291 = vsel %vm7288, %v7290, %v7286
    %v7292 = vmul.f32 1.0, %v7291
    %v7293 = vrcp.pop %v7216
    %v7294 = vmul.f32 %v7216, %v7293
    %v7295 = vsub.f32 1.0, %v7294
    %v7296 = vmul.f32 %v7293, %v7295
    %v7297 = vadd.f32 %v7293, %v7296
    %vm7298 = vweird.f32 %v7216
    %vm7299 = vweird.f32 %v7293
    %vm7300 = vmor %vm7298, %vm7299
    %v7301 = vsel %vm7300, %v7293, %v7297
    %v7302 = vand.u32 2147483647, %v7216
    %vm7303 = vcmp.eq.f32.partialorder %v7302, 8.507059e+37
    %v7304 = vand.u32 %v7216, 2147483648
    %v7305 = vor.u32 1.1754944e-38, %v7304
    %v7306 = vsel %vm7303, %v7305, %v7301
    %v7307 = vmul.f32 1.0, %v7306
    %v7308 = vrcp.pop %v7217
    %v7309 = vmul.f32 %v7217, %v7308
    %v7310 = vsub.f32 1.0, %v7309
    %v7311 = vmul.f32 %v7308, %v7310
    %v7312 = vadd.f32 %v7308, %v7311
    %vm7313 = vweird.f32 %v7217
    %vm7314 = vweird.f32 %v7308
    %vm7315 = vmor %vm7313, %vm7314
    %v7316 = vsel %vm7315, %v7308, %v7312
    %v7317 = vand.u32 2147483647, %v7217
    %vm7318 = vcmp.eq.f32.partialorder %v7317, 8.507059e+37
    %v7319 = vand.u32 %v7217, 2147483648
    %v7320 = vor.u32 1.1754944e-38, %v7319
    %v7321 = vsel %vm7318, %v7320, %v7316
    %v7322 = vmul.f32 1.0, %v7321
    %v7323 = vmul.f32 %v7170, %v7232
    %v7324 = vmul.f32 %v7173, %v7247
    %v7325 = vmul.f32 %v7176, %v7262
    %v7326 = vmul.f32 %v7179, %v7277
    %v7327 = vmul.f32 %v7182, %v7292
    %v7328 = vmul.f32 %v7185, %v7307
    %v7329 = vmul.f32 %v7188, %v7322
    %7330 = vmatpush.msra.mxu0 0.0
    %7331 = vmatpush.msra.mxu0 0.0
    %7332 = vmatpush.msra.mxu0 0.0
    %7333 = vmatpush.msra.mxu0 0.0
    %7334 = vmatpush.msra.mxu0 0.0
    %7335 = vmatpush.msra.mxu0 0.0
    %7336 = vmatpush.msra.mxu0 0.0
    %7337 = vmatpush.msra.mxu0 0.0
    %7338 = vmatpush.msra.mxu0 0.0
    %7339 = vmatpush.msra.mxu0 %v7329
    %7340 = vmatpush.msra.mxu0 %v7328
    %7341 = vmatpush.msra.mxu0 %v7327
    %7342 = vmatpush.msra.mxu0 %v7326
    %7343 = vmatpush.msra.mxu0 %v7325
    %7344 = vmatpush.msra.mxu0 %v7324
    %7345 = vmatpush.msra.mxu0 %v7323
    %7346 = vmatmul.f32.gmra.mxu0 %v1204
    %v7347 = vpop.f32.mrf.mxu0
    %v7348 = vadd.f32 0.0, %v7347
    %7349 = vdwg.mxu0
    %s7350 = scalar_lea.vmem %s8, 1056
    %v7351 = vld [vmem:[%s7350] sm:$0xff]
    %v7352 = vld [vmem:[%s7350 + $0x8] sm:$0xff]
    %v7353 = vld [vmem:[%s7350 + $0x10] sm:$0xff]
    %v7354 = vld [vmem:[%s7350 + $0x18] sm:$0xff]
    %s7355 = scalar_lea.vmem %s8, 1088
    %v7356 = vld [vmem:[%s7355] sm:$0xff]
    %v7357 = vld [vmem:[%s7355 + $0x8] sm:$0xff]
    %v7358 = vld [vmem:[%s7355 + $0x10] sm:$0xff]
    %v7359 = vld [vmem:[%s7355 + $0x18] sm:$0xff]
    %v7361 = vsel %vm518, %v7348, 0
    %7363 = vmatpush.msra.mxu0 0.0
    %7364 = vmatpush.msra.mxu0 0.0
    %7365 = vmatpush.msra.mxu0 0.0
    %7366 = vmatpush.msra.mxu0 0.0
    %7367 = vmatpush.msra.mxu0 0.0
    %7368 = vmatpush.msra.mxu0 0.0
    %7369 = vmatpush.msra.mxu0 0.0
    %7370 = vmatpush.msra.mxu0 0.0
    %7371 = vmatpush.msra.mxu0 0.0
    %7372 = vmatpush.msra.mxu0 0.0
    %7373 = vmatpush.msra.mxu0 0.0
    %7374 = vmatpush.msra.mxu0 0.0
    %7375 = vmatpush.msra.mxu0 %v7359
    %7376 = vmatpush.msra.mxu0 %v7358
    %7377 = vmatpush.msra.mxu0 %v7357
    %7378 = vmatpush.msra.mxu0 %v7356
    %7379 = vmatmul.f32.gmra.mxu0 %v7361
    %v7380 = vpop.f32.mrf.mxu0
    %v7381 = vadd.f32 0.0, %v7380
    %7382 = vdwg.mxu0
    %v7384 = vsel %vm518, %v5342, 0
    %7386 = vmatpush.msra.mxu0 0.0
    %7387 = vmatpush.msra.mxu0 0.0
    %7388 = vmatpush.msra.mxu0 0.0
    %7389 = vmatpush.msra.mxu0 0.0
    %7390 = vmatpush.msra.mxu0 0.0
    %7391 = vmatpush.msra.mxu0 0.0
    %7392 = vmatpush.msra.mxu0 0.0
    %7393 = vmatpush.msra.mxu0 0.0
    %7394 = vmatpush.msra.mxu0 0.0
    %7395 = vmatpush.msra.mxu0 0.0
    %7396 = vmatpush.msra.mxu0 0.0
    %7397 = vmatpush.msra.mxu0 0.0
    %7398 = vmatpush.msra.mxu0 %v7354
    %7399 = vmatpush.msra.mxu0 %v7353
    %7400 = vmatpush.msra.mxu0 %v7352
    %7401 = vmatpush.msra.mxu0 %v7351
    %7402 = vmatmul.f32.gmra.mxu0 %v7384
    %v7403 = vpop.f32.mrf.mxu0
    %v7404 = vadd.f32 %v7381, %v7403
    %7405 = vdwg.mxu0
    %v7406 = vld [vmem:[%s9 + $0x30] sm:$0x1]
    %v7407 = vperm.slane %v7406, 0
    %v7408 = vadd.f32 %v7404, %v7407
    %v7409 = vld [vmem:[%s9 + $0x31] sm:$0x1]
    %v7410 = vld [vmem:[%s9 + $0x32] sm:$0x1]
    %v7411 = vsel %vm518, %v7408, 0.0
    %7412 = vadd.xlane.f32.xlu0 %v7411
    %v7413 = vpop.xlane.xlu0 %7412
    %v7414 = vmul.f32 %v7413, %v706
    %v7415 = vsub.f32 %v7408, %v7414
    %v7416 = vmul.f32 %v7415, %v7415
    %v7417 = vsel %vm518, %v7416, 0.0
    %7418 = vadd.xlane.f32.xlu0 %v7417
    %v7419 = vpop.xlane.xlu0 %7418
    %v7420 = vmul.f32 %v7419, %v706
    %v7421 = vadd.f32 %v7420, 1e-05
    %v7422 = vrsqrt.pop %v7421
    %v7423 = vmul.f32 %v7422, %v7421
    %v7424 = vmul.f32 %v7423, %v7422
    %v7425 = vmul.f32 0.5, %v7424
    %v7426 = vsub.f32 1.5, %v7425
    %v7427 = vmul.f32 %v7422, %v7426
    %vm7428 = vweird.f32 %v7421
    %vm7429 = vweird.f32 %v7422
    %vm7430 = vmor %vm7428, %vm7429
    %v7431 = vsel %vm7430, %v7422, %v7427
    %v7432 = vmul.f32 %v7415, %v7431
    %v7433 = vperm.slane %v7409, 0
    %v7434 = vmul.f32 %v7432, %v7433
    %v7435 = vperm.slane %v7410, 0
    %v7436 = vadd.f32 %v7434, %v7435
    %v7437 = vxor.u32 %v7436, 2147483648
    %v7438 = vmul.f32 %v7437, 1.442695
    %v7439 = vpow.pop %v7438
    %v7440 = vadd.f32 %v7439, 1.0
    %v7441 = vrcp.pop %v7440
    %v7442 = vmul.f32 %v7440, %v7441
    %v7443 = vsub.f32 1.0, %v7442
    %v7444 = vmul.f32 %v7441, %v7443
    %v7445 = vadd.f32 %v7441, %v7444
    %vm7446 = vweird.f32 %v7440
    %vm7447 = vweird.f32 %v7441
    %vm7448 = vmor %vm7446, %vm7447
    %v7449 = vsel %vm7448, %v7441, %v7445
    %v7450 = vand.u32 2147483647, %v7440
    %vm7451 = vcmp.eq.f32.partialorder %v7450, 8.507059e+37
    %v7452 = vand.u32 %v7440, 2147483648
    %v7453 = vor.u32 1.1754944e-38, %v7452
    %v7454 = vsel %vm7451, %v7453, %v7449
    %v7455 = vmul.f32 1.0, %v7454
    %v7456 = vmul.f32 %v7436, %v7455
    %s7457 = scalar_lea.vmem %s8, 1120
    %v7458 = vld [vmem:[%s7457] sm:$0xff]
    %v7459 = vld [vmem:[%s7457 + $0x8] sm:$0xff]
    %v7460 = vld [vmem:[%s7457 + $0x10] sm:$0xff]
    %v7461 = vld [vmem:[%s7457 + $0x18] sm:$0xff]
    %v7463 = vsel %vm518, %v7456, 0
    %7465 = vmatpush.msra.mxu0 0.0
    %7466 = vmatpush.msra.mxu0 0.0
    %7467 = vmatpush.msra.mxu0 0.0
    %7468 = vmatpush.msra.mxu0 0.0
    %7469 = vmatpush.msra.mxu0 0.0
    %7470 = vmatpush.msra.mxu0 0.0
    %7471 = vmatpush.msra.mxu0 0.0
    %7472 = vmatpush.msra.mxu0 0.0
    %7473 = vmatpush.msra.mxu0 0.0
    %7474 = vmatpush.msra.mxu0 0.0
    %7475 = vmatpush.msra.mxu0 0.0
    %7476 = vmatpush.msra.mxu0 0.0
    %7477 = vmatpush.msra.mxu0 %v7461
    %7478 = vmatpush.msra.mxu0 %v7460
    %7479 = vmatpush.msra.mxu0 %v7459
    %7480 = vmatpush.msra.mxu0 %v7458
    %7481 = vmatmul.f32.gmra.mxu0 %v7463
    %v7482 = vpop.f32.mrf.mxu0
    %v7483 = vadd.f32 0.0, %v7482
    %7484 = vdwg.mxu0
    %v7485 = vadd.f32 %v5342, %v7483
    %v7486 = vld [vmem:[%s9 + $0x33] sm:$0x1]
    %v7487 = vperm.slane %v7486, 0
    %v7488 = vadd.f32 %v7485, %v7487
    %7489 = vmatpush.msra.mxu0 0.0
    %7490 = vmatpush.msra.mxu0 0.0
    %7491 = vmatpush.msra.mxu0 0.0
    %7492 = vmatpush.msra.mxu0 0.0
    %7493 = vmatpush.msra.mxu0 0.0
    %7494 = vmatpush.msra.mxu0 0.0
    %7495 = vmatpush.msra.mxu0 0.0
    %7496 = vmatpush.msra.mxu0 0.0
    %7497 = vmatpush.msra.mxu0 0.0
    %7498 = vmatpush.msra.mxu0 0.0
    %7499 = vmatpush.msra.mxu0 0.0
    %7500 = vmatpush.msra.mxu0 0.0
    %7501 = vmatpush.msra.mxu0 0.0
    %7502 = vmatpush.msra.mxu0 0.0
    %7503 = vmatpush.msra.mxu0 0.0
    %7504 = vmatpush.msra.mxu0 %v7488
    %7505 = vmatmul.f32.gmra.mxu0 %v392
    %v7506 = vpop.f32.mrf.mxu0
    %v7507 = vadd.f32 0.0, %v7506
    %7508 = vmatmul.f32.gmra.mxu0 %v395
    %v7509 = vpop.f32.mrf.mxu0
    %v7510 = vadd.f32 0.0, %v7509
    %7511 = vmatmul.f32.gmra.mxu0 %v398
    %v7512 = vpop.f32.mrf.mxu0
    %v7513 = vadd.f32 0.0, %v7512
    %7514 = vmatmul.f32.gmra.mxu0 %v401
    %v7515 = vpop.f32.mrf.mxu0
    %v7516 = vadd.f32 0.0, %v7515
    %7517 = vmatmul.f32.gmra.mxu0 %v404
    %v7518 = vpop.f32.mrf.mxu0
    %v7519 = vadd.f32 0.0, %v7518
    %7520 = vmatmul.f32.gmra.mxu0 %v407
    %v7521 = vpop.f32.mrf.mxu0
    %v7522 = vadd.f32 0.0, %v7521
    %7523 = vmatmul.f32.gmra.mxu0 %v410
    %v7524 = vpop.f32.mrf.mxu0
    %v7525 = vadd.f32 0.0, %v7524
    %7526 = vdwg.mxu0
    %7527 = vmatpush.msra.mxu0 0.0
    %7528 = vmatpush.msra.mxu0 0.0
    %7529 = vmatpush.msra.mxu0 0.0
    %7530 = vmatpush.msra.mxu0 0.0
    %7531 = vmatpush.msra.mxu0 0.0
    %7532 = vmatpush.msra.mxu0 0.0
    %7533 = vmatpush.msra.mxu0 0.0
    %7534 = vmatpush.msra.mxu0 0.0
    %7535 = vmatpush.msra.mxu0 0.0
    %7536 = vmatpush.msra.mxu0 0.0
    %7537 = vmatpush.msra.mxu0 0.0
    %7538 = vmatpush.msra.mxu0 0.0
    %7539 = vmatpush.msra.mxu0 0.0
    %7540 = vmatpush.msra.mxu0 0.0
    %7541 = vmatpush.msra.mxu0 0.0
    %7542 = vmatpush.msra.mxu0 %v7488
    %7543 = vmatmul.f32.gmra.mxu0 %v451
    %v7544 = vpop.f32.mrf.mxu0
    %v7545 = vadd.f32 0.0, %v7544
    %7546 = vmatmul.f32.gmra.mxu0 %v454
    %v7547 = vpop.f32.mrf.mxu0
    %v7548 = vadd.f32 0.0, %v7547
    %7549 = vmatmul.f32.gmra.mxu0 %v457
    %v7550 = vpop.f32.mrf.mxu0
    %v7551 = vadd.f32 0.0, %v7550
    %7552 = vmatmul.f32.gmra.mxu0 %v460
    %v7553 = vpop.f32.mrf.mxu0
    %v7554 = vadd.f32 0.0, %v7553
    %7555 = vmatmul.f32.gmra.mxu0 %v463
    %v7556 = vpop.f32.mrf.mxu0
    %v7557 = vadd.f32 0.0, %v7556
    %7558 = vmatmul.f32.gmra.mxu0 %v466
    %v7559 = vpop.f32.mrf.mxu0
    %v7560 = vadd.f32 0.0, %v7559
    %7561 = vmatmul.f32.gmra.mxu0 %v469
    %v7562 = vpop.f32.mrf.mxu0
    %v7563 = vadd.f32 0.0, %v7562
    %7564 = vdwg.mxu0
    %s7565 = scalar_lea.vmem %s8, 1152
    %v7566 = vld [vmem:[%s7565] sm:$0xff]
    %v7567 = vld [vmem:[%s7565 + $0x8] sm:$0xff]
    %v7568 = vld [vmem:[%s7565 + $0x10] sm:$0xff]
    %v7569 = vld [vmem:[%s7565 + $0x18] sm:$0xff]
    %s7570 = scalar_lea.vmem %s8, 1184
    %v7571 = vld [vmem:[%s7570] sm:$0xff]
    %v7572 = vld [vmem:[%s7570 + $0x8] sm:$0xff]
    %v7573 = vld [vmem:[%s7570 + $0x10] sm:$0xff]
    %v7574 = vld [vmem:[%s7570 + $0x18] sm:$0xff]
    %v7576 = vsel %vm518, %v7545, 0
    %v7579 = vsel %vm518, %v7548, 0
    %v7582 = vsel %vm518, %v7551, 0
    %v7585 = vsel %vm518, %v7554, 0
    %v7588 = vsel %vm518, %v7557, 0
    %v7591 = vsel %vm518, %v7560, 0
    %v7594 = vsel %vm518, %v7563, 0
    %7596 = vmatpush.msra.mxu0 0.0
    %7597 = vmatpush.msra.mxu0 0.0
    %7598 = vmatpush.msra.mxu0 0.0
    %7599 = vmatpush.msra.mxu0 0.0
    %7600 = vmatpush.msra.mxu0 0.0
    %7601 = vmatpush.msra.mxu0 0.0
    %7602 = vmatpush.msra.mxu0 0.0
    %7603 = vmatpush.msra.mxu0 0.0
    %7604 = vmatpush.msra.mxu0 0.0
    %7605 = vmatpush.msra.mxu0 0.0
    %7606 = vmatpush.msra.mxu0 0.0
    %7607 = vmatpush.msra.mxu0 0.0
    %7608 = vmatpush.msra.mxu0 %v7574
    %7609 = vmatpush.msra.mxu0 %v7573
    %7610 = vmatpush.msra.mxu0 %v7572
    %7611 = vmatpush.msra.mxu0 %v7571
    %7612 = vmatmul.f32.gmra.mxu0 %v7576
    %v7613 = vpop.f32.mrf.mxu0
    %v7614 = vadd.f32 0.0, %v7613
    %7615 = vmatmul.f32.gmra.mxu0 %v7579
    %v7616 = vpop.f32.mrf.mxu0
    %v7617 = vadd.f32 0.0, %v7616
    %7618 = vmatmul.f32.gmra.mxu0 %v7582
    %v7619 = vpop.f32.mrf.mxu0
    %v7620 = vadd.f32 0.0, %v7619
    %7621 = vmatmul.f32.gmra.mxu0 %v7585
    %v7622 = vpop.f32.mrf.mxu0
    %v7623 = vadd.f32 0.0, %v7622
    %7624 = vmatmul.f32.gmra.mxu0 %v7588
    %v7625 = vpop.f32.mrf.mxu0
    %v7626 = vadd.f32 0.0, %v7625
    %7627 = vmatmul.f32.gmra.mxu0 %v7591
    %v7628 = vpop.f32.mrf.mxu0
    %v7629 = vadd.f32 0.0, %v7628
    %7630 = vmatmul.f32.gmra.mxu0 %v7594
    %v7631 = vpop.f32.mrf.mxu0
    %v7632 = vadd.f32 0.0, %v7631
    %7633 = vdwg.mxu0
    %v7635 = vsel %vm518, %v7507, 0
    %v7638 = vsel %vm518, %v7510, 0
    %v7641 = vsel %vm518, %v7513, 0
    %v7644 = vsel %vm518, %v7516, 0
    %v7647 = vsel %vm518, %v7519, 0
    %v7650 = vsel %vm518, %v7522, 0
    %v7653 = vsel %vm518, %v7525, 0
    %7655 = vmatpush.msra.mxu0 0.0
    %7656 = vmatpush.msra.mxu0 0.0
    %7657 = vmatpush.msra.mxu0 0.0
    %7658 = vmatpush.msra.mxu0 0.0
    %7659 = vmatpush.msra.mxu0 0.0
    %7660 = vmatpush.msra.mxu0 0.0
    %7661 = vmatpush.msra.mxu0 0.0
    %7662 = vmatpush.msra.mxu0 0.0
    %7663 = vmatpush.msra.mxu0 0.0
    %7664 = vmatpush.msra.mxu0 0.0
    %7665 = vmatpush.msra.mxu0 0.0
    %7666 = vmatpush.msra.mxu0 0.0
    %7667 = vmatpush.msra.mxu0 %v7569
    %7668 = vmatpush.msra.mxu0 %v7568
    %7669 = vmatpush.msra.mxu0 %v7567
    %7670 = vmatpush.msra.mxu0 %v7566
    %7671 = vmatmul.f32.gmra.mxu0 %v7635
    %v7672 = vpop.f32.mrf.mxu0
    %v7673 = vadd.f32 %v7614, %v7672
    %7674 = vmatmul.f32.gmra.mxu0 %v7638
    %v7675 = vpop.f32.mrf.mxu0
    %v7676 = vadd.f32 %v7617, %v7675
    %7677 = vmatmul.f32.gmra.mxu0 %v7641
    %v7678 = vpop.f32.mrf.mxu0
    %v7679 = vadd.f32 %v7620, %v7678
    %7680 = vmatmul.f32.gmra.mxu0 %v7644
    %v7681 = vpop.f32.mrf.mxu0
    %v7682 = vadd.f32 %v7623, %v7681
    %7683 = vmatmul.f32.gmra.mxu0 %v7647
    %v7684 = vpop.f32.mrf.mxu0
    %v7685 = vadd.f32 %v7626, %v7684
    %7686 = vmatmul.f32.gmra.mxu0 %v7650
    %v7687 = vpop.f32.mrf.mxu0
    %v7688 = vadd.f32 %v7629, %v7687
    %7689 = vmatmul.f32.gmra.mxu0 %v7653
    %v7690 = vpop.f32.mrf.mxu0
    %v7691 = vadd.f32 %v7632, %v7690
    %7692 = vdwg.mxu0
    %s7693 = scalar_lea.vmem %s10, 14
    %v7694 = vld [vmem:[%s7693] sm:$0x3]
    %v7695 = vperm.slane %v7694, 0
    %v7696 = vmul.f32 %v6463, %v7695
    %v7697 = vmul.f32 %v6466, %v7695
    %v7698 = vmul.f32 %v6469, %v7695
    %v7699 = vmul.f32 %v6472, %v7695
    %v7700 = vmul.f32 %v6475, %v7695
    %v7701 = vmul.f32 %v6478, %v7695
    %v7702 = vmul.f32 %v6481, %v7695
    %v7703 = vperm.slane %v7694, 1
    %v7704 = vmul.f32 %v137, %v7703
    %v7705 = vmul.f32 %v140, %v7703
    %v7706 = vmul.f32 %v143, %v7703
    %v7707 = vmul.f32 %v146, %v7703
    %v7708 = vmul.f32 %v149, %v7703
    %v7709 = vmul.f32 %v152, %v7703
    %v7710 = vmul.f32 %v155, %v7703
    %v7711 = vadd.f32 %v7696, %v7704
    %v7712 = vadd.f32 %v7697, %v7705
    %v7713 = vadd.f32 %v7698, %v7706
    %v7714 = vadd.f32 %v7699, %v7707
    %v7715 = vadd.f32 %v7700, %v7708
    %v7716 = vadd.f32 %v7701, %v7709
    %v7717 = vadd.f32 %v7702, %v7710
    %v7718 = vadd.f32 %v7673, %v7711
    %v7719 = vadd.f32 %v7676, %v7712
    %v7720 = vadd.f32 %v7679, %v7713
    %v7721 = vadd.f32 %v7682, %v7714
    %v7722 = vadd.f32 %v7685, %v7715
    %v7723 = vadd.f32 %v7688, %v7716
    %v7724 = vadd.f32 %v7691, %v7717
    %v7725 = vld [vmem:[%s9 + $0x34] sm:$0x1]
    %v7726 = vperm.slane %v7725, 0
    %v7727 = vadd.f32 %v7718, %v7726
    %v7728 = vadd.f32 %v7719, %v7726
    %v7729 = vadd.f32 %v7720, %v7726
    %v7730 = vadd.f32 %v7721, %v7726
    %v7731 = vadd.f32 %v7722, %v7726
    %v7732 = vadd.f32 %v7723, %v7726
    %v7733 = vadd.f32 %v7724, %v7726
    %v7734 = vld [vmem:[%s9 + $0x35] sm:$0x1]
    %v7735 = vld [vmem:[%s9 + $0x36] sm:$0x1]
    %v7736 = vsel %vm518, %v7727, 0.0
    %7737 = vadd.xlane.f32.xlu0 %v7736
    %v7738 = vpop.xlane.xlu0 %7737
    %v7739 = vsel %vm518, %v7728, 0.0
    %7740 = vadd.xlane.f32.xlu0 %v7739
    %v7741 = vpop.xlane.xlu0 %7740
    %v7742 = vsel %vm518, %v7729, 0.0
    %7743 = vadd.xlane.f32.xlu0 %v7742
    %v7744 = vpop.xlane.xlu0 %7743
    %v7745 = vsel %vm518, %v7730, 0.0
    %7746 = vadd.xlane.f32.xlu0 %v7745
    %v7747 = vpop.xlane.xlu0 %7746
    %v7748 = vsel %vm518, %v7731, 0.0
    %7749 = vadd.xlane.f32.xlu0 %v7748
    %v7750 = vpop.xlane.xlu0 %7749
    %v7751 = vsel %vm518, %v7732, 0.0
    %7752 = vadd.xlane.f32.xlu0 %v7751
    %v7753 = vpop.xlane.xlu0 %7752
    %v7754 = vsel %vm518, %v7733, 0.0
    %7755 = vadd.xlane.f32.xlu0 %v7754
    %v7756 = vpop.xlane.xlu0 %7755
    %v7757 = vmul.f32 %v7738, %v706
    %v7758 = vmul.f32 %v7741, %v706
    %v7759 = vmul.f32 %v7744, %v706
    %v7760 = vmul.f32 %v7747, %v706
    %v7761 = vmul.f32 %v7750, %v706
    %v7762 = vmul.f32 %v7753, %v706
    %v7763 = vmul.f32 %v7756, %v706
    %v7764 = vsub.f32 %v7727, %v7757
    %v7765 = vsub.f32 %v7728, %v7758
    %v7766 = vsub.f32 %v7729, %v7759
    %v7767 = vsub.f32 %v7730, %v7760
    %v7768 = vsub.f32 %v7731, %v7761
    %v7769 = vsub.f32 %v7732, %v7762
    %v7770 = vsub.f32 %v7733, %v7763
    %v7771 = vmul.f32 %v7764, %v7764
    %v7772 = vmul.f32 %v7765, %v7765
    %v7773 = vmul.f32 %v7766, %v7766
    %v7774 = vmul.f32 %v7767, %v7767
    %v7775 = vmul.f32 %v7768, %v7768
    %v7776 = vmul.f32 %v7769, %v7769
    %v7777 = vmul.f32 %v7770, %v7770
    %v7778 = vsel %vm518, %v7771, 0.0
    %7779 = vadd.xlane.f32.xlu0 %v7778
    %v7780 = vpop.xlane.xlu0 %7779
    %v7781 = vsel %vm518, %v7772, 0.0
    %7782 = vadd.xlane.f32.xlu0 %v7781
    %v7783 = vpop.xlane.xlu0 %7782
    %v7784 = vsel %vm518, %v7773, 0.0
    %7785 = vadd.xlane.f32.xlu0 %v7784
    %v7786 = vpop.xlane.xlu0 %7785
    %v7787 = vsel %vm518, %v7774, 0.0
    %7788 = vadd.xlane.f32.xlu0 %v7787
    %v7789 = vpop.xlane.xlu0 %7788
    %v7790 = vsel %vm518, %v7775, 0.0
    %7791 = vadd.xlane.f32.xlu0 %v7790
    %v7792 = vpop.xlane.xlu0 %7791
    %v7793 = vsel %vm518, %v7776, 0.0
    %7794 = vadd.xlane.f32.xlu0 %v7793
    %v7795 = vpop.xlane.xlu0 %7794
    %v7796 = vsel %vm518, %v7777, 0.0
    %7797 = vadd.xlane.f32.xlu0 %v7796
    %v7798 = vpop.xlane.xlu0 %7797
    %v7799 = vmul.f32 %v7780, %v706
    %v7800 = vmul.f32 %v7783, %v706
    %v7801 = vmul.f32 %v7786, %v706
    %v7802 = vmul.f32 %v7789, %v706
    %v7803 = vmul.f32 %v7792, %v706
    %v7804 = vmul.f32 %v7795, %v706
    %v7805 = vmul.f32 %v7798, %v706
    %v7806 = vadd.f32 %v7799, 1e-05
    %v7807 = vadd.f32 %v7800, 1e-05
    %v7808 = vadd.f32 %v7801, 1e-05
    %v7809 = vadd.f32 %v7802, 1e-05
    %v7810 = vadd.f32 %v7803, 1e-05
    %v7811 = vadd.f32 %v7804, 1e-05
    %v7812 = vadd.f32 %v7805, 1e-05
    %v7813 = vrsqrt.pop %v7806
    %v7814 = vmul.f32 %v7813, %v7806
    %v7815 = vmul.f32 %v7814, %v7813
    %v7816 = vmul.f32 0.5, %v7815
    %v7817 = vsub.f32 1.5, %v7816
    %v7818 = vmul.f32 %v7813, %v7817
    %vm7819 = vweird.f32 %v7806
    %vm7820 = vweird.f32 %v7813
    %vm7821 = vmor %vm7819, %vm7820
    %v7822 = vsel %vm7821, %v7813, %v7818
    %v7823 = vrsqrt.pop %v7807
    %v7824 = vmul.f32 %v7823, %v7807
    %v7825 = vmul.f32 %v7824, %v7823
    %v7826 = vmul.f32 0.5, %v7825
    %v7827 = vsub.f32 1.5, %v7826
    %v7828 = vmul.f32 %v7823, %v7827
    %vm7829 = vweird.f32 %v7807
    %vm7830 = vweird.f32 %v7823
    %vm7831 = vmor %vm7829, %vm7830
    %v7832 = vsel %vm7831, %v7823, %v7828
    %v7833 = vrsqrt.pop %v7808
    %v7834 = vmul.f32 %v7833, %v7808
    %v7835 = vmul.f32 %v7834, %v7833
    %v7836 = vmul.f32 0.5, %v7835
    %v7837 = vsub.f32 1.5, %v7836
    %v7838 = vmul.f32 %v7833, %v7837
    %vm7839 = vweird.f32 %v7808
    %vm7840 = vweird.f32 %v7833
    %vm7841 = vmor %vm7839, %vm7840
    %v7842 = vsel %vm7841, %v7833, %v7838
    %v7843 = vrsqrt.pop %v7809
    %v7844 = vmul.f32 %v7843, %v7809
    %v7845 = vmul.f32 %v7844, %v7843
    %v7846 = vmul.f32 0.5, %v7845
    %v7847 = vsub.f32 1.5, %v7846
    %v7848 = vmul.f32 %v7843, %v7847
    %vm7849 = vweird.f32 %v7809
    %vm7850 = vweird.f32 %v7843
    %vm7851 = vmor %vm7849, %vm7850
    %v7852 = vsel %vm7851, %v7843, %v7848
    %v7853 = vrsqrt.pop %v7810
    %v7854 = vmul.f32 %v7853, %v7810
    %v7855 = vmul.f32 %v7854, %v7853
    %v7856 = vmul.f32 0.5, %v7855
    %v7857 = vsub.f32 1.5, %v7856
    %v7858 = vmul.f32 %v7853, %v7857
    %vm7859 = vweird.f32 %v7810
    %vm7860 = vweird.f32 %v7853
    %vm7861 = vmor %vm7859, %vm7860
    %v7862 = vsel %vm7861, %v7853, %v7858
    %v7863 = vrsqrt.pop %v7811
    %v7864 = vmul.f32 %v7863, %v7811
    %v7865 = vmul.f32 %v7864, %v7863
    %v7866 = vmul.f32 0.5, %v7865
    %v7867 = vsub.f32 1.5, %v7866
    %v7868 = vmul.f32 %v7863, %v7867
    %vm7869 = vweird.f32 %v7811
    %vm7870 = vweird.f32 %v7863
    %vm7871 = vmor %vm7869, %vm7870
    %v7872 = vsel %vm7871, %v7863, %v7868
    %v7873 = vrsqrt.pop %v7812
    %v7874 = vmul.f32 %v7873, %v7812
    %v7875 = vmul.f32 %v7874, %v7873
    %v7876 = vmul.f32 0.5, %v7875
    %v7877 = vsub.f32 1.5, %v7876
    %v7878 = vmul.f32 %v7873, %v7877
    %vm7879 = vweird.f32 %v7812
    %vm7880 = vweird.f32 %v7873
    %vm7881 = vmor %vm7879, %vm7880
    %v7882 = vsel %vm7881, %v7873, %v7878
    %v7883 = vmul.f32 %v7764, %v7822
    %v7884 = vmul.f32 %v7765, %v7832
    %v7885 = vmul.f32 %v7766, %v7842
    %v7886 = vmul.f32 %v7767, %v7852
    %v7887 = vmul.f32 %v7768, %v7862
    %v7888 = vmul.f32 %v7769, %v7872
    %v7889 = vmul.f32 %v7770, %v7882
    %v7890 = vperm.slane %v7734, 0
    %v7891 = vmul.f32 %v7883, %v7890
    %v7892 = vmul.f32 %v7884, %v7890
    %v7893 = vmul.f32 %v7885, %v7890
    %v7894 = vmul.f32 %v7886, %v7890
    %v7895 = vmul.f32 %v7887, %v7890
    %v7896 = vmul.f32 %v7888, %v7890
    %v7897 = vmul.f32 %v7889, %v7890
    %v7898 = vperm.slane %v7735, 0
    %v7899 = vadd.f32 %v7891, %v7898
    %v7900 = vadd.f32 %v7892, %v7898
    %v7901 = vadd.f32 %v7893, %v7898
    %v7902 = vadd.f32 %v7894, %v7898
    %v7903 = vadd.f32 %v7895, %v7898
    %v7904 = vadd.f32 %v7896, %v7898
    %v7905 = vadd.f32 %v7897, %v7898
    %v7906 = vxor.u32 %v7899, 2147483648
    %v7907 = vxor.u32 %v7900, 2147483648
    %v7908 = vxor.u32 %v7901, 2147483648
    %v7909 = vxor.u32 %v7902, 2147483648
    %v7910 = vxor.u32 %v7903, 2147483648
    %v7911 = vxor.u32 %v7904, 2147483648
    %v7912 = vxor.u32 %v7905, 2147483648
    %v7913 = vmul.f32 %v7906, 1.442695
    %v7914 = vpow.pop %v7913
    %v7915 = vmul.f32 %v7907, 1.442695
    %v7916 = vpow.pop %v7915
    %v7917 = vmul.f32 %v7908, 1.442695
    %v7918 = vpow.pop %v7917
    %v7919 = vmul.f32 %v7909, 1.442695
    %v7920 = vpow.pop %v7919
    %v7921 = vmul.f32 %v7910, 1.442695
    %v7922 = vpow.pop %v7921
    %v7923 = vmul.f32 %v7911, 1.442695
    %v7924 = vpow.pop %v7923
    %v7925 = vmul.f32 %v7912, 1.442695
    %v7926 = vpow.pop %v7925
    %v7927 = vadd.f32 %v7914, 1.0
    %v7928 = vadd.f32 %v7916, 1.0
    %v7929 = vadd.f32 %v7918, 1.0
    %v7930 = vadd.f32 %v7920, 1.0
    %v7931 = vadd.f32 %v7922, 1.0
    %v7932 = vadd.f32 %v7924, 1.0
    %v7933 = vadd.f32 %v7926, 1.0
    %v7934 = vrcp.pop %v7927
    %v7935 = vmul.f32 %v7927, %v7934
    %v7936 = vsub.f32 1.0, %v7935
    %v7937 = vmul.f32 %v7934, %v7936
    %v7938 = vadd.f32 %v7934, %v7937
    %vm7939 = vweird.f32 %v7927
    %vm7940 = vweird.f32 %v7934
    %vm7941 = vmor %vm7939, %vm7940
    %v7942 = vsel %vm7941, %v7934, %v7938
    %v7943 = vand.u32 2147483647, %v7927
    %vm7944 = vcmp.eq.f32.partialorder %v7943, 8.507059e+37
    %v7945 = vand.u32 %v7927, 2147483648
    %v7946 = vor.u32 1.1754944e-38, %v7945
    %v7947 = vsel %vm7944, %v7946, %v7942
    %v7948 = vmul.f32 1.0, %v7947
    %v7949 = vrcp.pop %v7928
    %v7950 = vmul.f32 %v7928, %v7949
    %v7951 = vsub.f32 1.0, %v7950
    %v7952 = vmul.f32 %v7949, %v7951
    %v7953 = vadd.f32 %v7949, %v7952
    %vm7954 = vweird.f32 %v7928
    %vm7955 = vweird.f32 %v7949
    %vm7956 = vmor %vm7954, %vm7955
    %v7957 = vsel %vm7956, %v7949, %v7953
    %v7958 = vand.u32 2147483647, %v7928
    %vm7959 = vcmp.eq.f32.partialorder %v7958, 8.507059e+37
    %v7960 = vand.u32 %v7928, 2147483648
    %v7961 = vor.u32 1.1754944e-38, %v7960
    %v7962 = vsel %vm7959, %v7961, %v7957
    %v7963 = vmul.f32 1.0, %v7962
    %v7964 = vrcp.pop %v7929
    %v7965 = vmul.f32 %v7929, %v7964
    %v7966 = vsub.f32 1.0, %v7965
    %v7967 = vmul.f32 %v7964, %v7966
    %v7968 = vadd.f32 %v7964, %v7967
    %vm7969 = vweird.f32 %v7929
    %vm7970 = vweird.f32 %v7964
    %vm7971 = vmor %vm7969, %vm7970
    %v7972 = vsel %vm7971, %v7964, %v7968
    %v7973 = vand.u32 2147483647, %v7929
    %vm7974 = vcmp.eq.f32.partialorder %v7973, 8.507059e+37
    %v7975 = vand.u32 %v7929, 2147483648
    %v7976 = vor.u32 1.1754944e-38, %v7975
    %v7977 = vsel %vm7974, %v7976, %v7972
    %v7978 = vmul.f32 1.0, %v7977
    %v7979 = vrcp.pop %v7930
    %v7980 = vmul.f32 %v7930, %v7979
    %v7981 = vsub.f32 1.0, %v7980
    %v7982 = vmul.f32 %v7979, %v7981
    %v7983 = vadd.f32 %v7979, %v7982
    %vm7984 = vweird.f32 %v7930
    %vm7985 = vweird.f32 %v7979
    %vm7986 = vmor %vm7984, %vm7985
    %v7987 = vsel %vm7986, %v7979, %v7983
    %v7988 = vand.u32 2147483647, %v7930
    %vm7989 = vcmp.eq.f32.partialorder %v7988, 8.507059e+37
    %v7990 = vand.u32 %v7930, 2147483648
    %v7991 = vor.u32 1.1754944e-38, %v7990
    %v7992 = vsel %vm7989, %v7991, %v7987
    %v7993 = vmul.f32 1.0, %v7992
    %v7994 = vrcp.pop %v7931
    %v7995 = vmul.f32 %v7931, %v7994
    %v7996 = vsub.f32 1.0, %v7995
    %v7997 = vmul.f32 %v7994, %v7996
    %v7998 = vadd.f32 %v7994, %v7997
    %vm7999 = vweird.f32 %v7931
    %vm8000 = vweird.f32 %v7994
    %vm8001 = vmor %vm7999, %vm8000
    %v8002 = vsel %vm8001, %v7994, %v7998
    %v8003 = vand.u32 2147483647, %v7931
    %vm8004 = vcmp.eq.f32.partialorder %v8003, 8.507059e+37
    %v8005 = vand.u32 %v7931, 2147483648
    %v8006 = vor.u32 1.1754944e-38, %v8005
    %v8007 = vsel %vm8004, %v8006, %v8002
    %v8008 = vmul.f32 1.0, %v8007
    %v8009 = vrcp.pop %v7932
    %v8010 = vmul.f32 %v7932, %v8009
    %v8011 = vsub.f32 1.0, %v8010
    %v8012 = vmul.f32 %v8009, %v8011
    %v8013 = vadd.f32 %v8009, %v8012
    %vm8014 = vweird.f32 %v7932
    %vm8015 = vweird.f32 %v8009
    %vm8016 = vmor %vm8014, %vm8015
    %v8017 = vsel %vm8016, %v8009, %v8013
    %v8018 = vand.u32 2147483647, %v7932
    %vm8019 = vcmp.eq.f32.partialorder %v8018, 8.507059e+37
    %v8020 = vand.u32 %v7932, 2147483648
    %v8021 = vor.u32 1.1754944e-38, %v8020
    %v8022 = vsel %vm8019, %v8021, %v8017
    %v8023 = vmul.f32 1.0, %v8022
    %v8024 = vrcp.pop %v7933
    %v8025 = vmul.f32 %v7933, %v8024
    %v8026 = vsub.f32 1.0, %v8025
    %v8027 = vmul.f32 %v8024, %v8026
    %v8028 = vadd.f32 %v8024, %v8027
    %vm8029 = vweird.f32 %v7933
    %vm8030 = vweird.f32 %v8024
    %vm8031 = vmor %vm8029, %vm8030
    %v8032 = vsel %vm8031, %v8024, %v8028
    %v8033 = vand.u32 2147483647, %v7933
    %vm8034 = vcmp.eq.f32.partialorder %v8033, 8.507059e+37
    %v8035 = vand.u32 %v7933, 2147483648
    %v8036 = vor.u32 1.1754944e-38, %v8035
    %v8037 = vsel %vm8034, %v8036, %v8032
    %v8038 = vmul.f32 1.0, %v8037
    %v8039 = vmul.f32 %v7899, %v7948
    %v8040 = vmul.f32 %v7900, %v7963
    %v8041 = vmul.f32 %v7901, %v7978
    %v8042 = vmul.f32 %v7902, %v7993
    %v8043 = vmul.f32 %v7903, %v8008
    %v8044 = vmul.f32 %v7904, %v8023
    %v8045 = vmul.f32 %v7905, %v8038
    %s8046 = scalar_lea.vmem %s8, 1216
    %v8047 = vld [vmem:[%s8046] sm:$0xff]
    %v8048 = vld [vmem:[%s8046 + $0x8] sm:$0xff]
    %v8049 = vld [vmem:[%s8046 + $0x10] sm:$0xff]
    %v8050 = vld [vmem:[%s8046 + $0x18] sm:$0xff]
    %v8051 = vld [vmem:[%s9 + $0x37] sm:$0x1]
    %v8052 = vperm.slane %v8051, 0
    %v8054 = vsel %vm518, %v8039, 0
    %v8057 = vsel %vm518, %v8040, 0
    %v8060 = vsel %vm518, %v8041, 0
    %v8063 = vsel %vm518, %v8042, 0
    %v8066 = vsel %vm518, %v8043, 0
    %v8069 = vsel %vm518, %v8044, 0
    %v8072 = vsel %vm518, %v8045, 0
    %8074 = vmatpush.msra.mxu0 0.0
    %8075 = vmatpush.msra.mxu0 0.0
    %8076 = vmatpush.msra.mxu0 0.0
    %8077 = vmatpush.msra.mxu0 0.0
    %8078 = vmatpush.msra.mxu0 0.0
    %8079 = vmatpush.msra.mxu0 0.0
    %8080 = vmatpush.msra.mxu0 0.0
    %8081 = vmatpush.msra.mxu0 0.0
    %8082 = vmatpush.msra.mxu0 0.0
    %8083 = vmatpush.msra.mxu0 0.0
    %8084 = vmatpush.msra.mxu0 0.0
    %8085 = vmatpush.msra.mxu0 0.0
    %8086 = vmatpush.msra.mxu0 %v8050
    %8087 = vmatpush.msra.mxu0 %v8049
    %8088 = vmatpush.msra.mxu0 %v8048
    %8089 = vmatpush.msra.mxu0 %v8047
    %8090 = vmatmul.f32.gmra.mxu0 %v8054
    %v8091 = vpop.f32.mrf.mxu0
    %v8092 = vadd.f32 %v8052, %v8091
    %8093 = vmatmul.f32.gmra.mxu0 %v8057
    %v8094 = vpop.f32.mrf.mxu0
    %v8095 = vadd.f32 %v8052, %v8094
    %8096 = vmatmul.f32.gmra.mxu0 %v8060
    %v8097 = vpop.f32.mrf.mxu0
    %v8098 = vadd.f32 %v8052, %v8097
    %8099 = vmatmul.f32.gmra.mxu0 %v8063
    %v8100 = vpop.f32.mrf.mxu0
    %v8101 = vadd.f32 %v8052, %v8100
    %8102 = vmatmul.f32.gmra.mxu0 %v8066
    %v8103 = vpop.f32.mrf.mxu0
    %v8104 = vadd.f32 %v8052, %v8103
    %8105 = vmatmul.f32.gmra.mxu0 %v8069
    %v8106 = vpop.f32.mrf.mxu0
    %v8107 = vadd.f32 %v8052, %v8106
    %8108 = vmatmul.f32.gmra.mxu0 %v8072
    %v8109 = vpop.f32.mrf.mxu0
    %v8110 = vadd.f32 %v8052, %v8109
    %8111 = vdwg.mxu0
    %v8112 = vxor.u32 %v8092, 2147483648
    %v8113 = vxor.u32 %v8095, 2147483648
    %v8114 = vxor.u32 %v8098, 2147483648
    %v8115 = vxor.u32 %v8101, 2147483648
    %v8116 = vxor.u32 %v8104, 2147483648
    %v8117 = vxor.u32 %v8107, 2147483648
    %v8118 = vxor.u32 %v8110, 2147483648
    %v8119 = vmul.f32 %v8112, 1.442695
    %v8120 = vpow.pop %v8119
    %v8121 = vmul.f32 %v8113, 1.442695
    %v8122 = vpow.pop %v8121
    %v8123 = vmul.f32 %v8114, 1.442695
    %v8124 = vpow.pop %v8123
    %v8125 = vmul.f32 %v8115, 1.442695
    %v8126 = vpow.pop %v8125
    %v8127 = vmul.f32 %v8116, 1.442695
    %v8128 = vpow.pop %v8127
    %v8129 = vmul.f32 %v8117, 1.442695
    %v8130 = vpow.pop %v8129
    %v8131 = vmul.f32 %v8118, 1.442695
    %v8132 = vpow.pop %v8131
    %v8133 = vadd.f32 %v8120, 1.0
    %v8134 = vadd.f32 %v8122, 1.0
    %v8135 = vadd.f32 %v8124, 1.0
    %v8136 = vadd.f32 %v8126, 1.0
    %v8137 = vadd.f32 %v8128, 1.0
    %v8138 = vadd.f32 %v8130, 1.0
    %v8139 = vadd.f32 %v8132, 1.0
    %v8140 = vrcp.pop %v8133
    %v8141 = vmul.f32 %v8133, %v8140
    %v8142 = vsub.f32 1.0, %v8141
    %v8143 = vmul.f32 %v8140, %v8142
    %v8144 = vadd.f32 %v8140, %v8143
    %vm8145 = vweird.f32 %v8133
    %vm8146 = vweird.f32 %v8140
    %vm8147 = vmor %vm8145, %vm8146
    %v8148 = vsel %vm8147, %v8140, %v8144
    %v8149 = vand.u32 2147483647, %v8133
    %vm8150 = vcmp.eq.f32.partialorder %v8149, 8.507059e+37
    %v8151 = vand.u32 %v8133, 2147483648
    %v8152 = vor.u32 1.1754944e-38, %v8151
    %v8153 = vsel %vm8150, %v8152, %v8148
    %v8154 = vmul.f32 1.0, %v8153
    %v8155 = vrcp.pop %v8134
    %v8156 = vmul.f32 %v8134, %v8155
    %v8157 = vsub.f32 1.0, %v8156
    %v8158 = vmul.f32 %v8155, %v8157
    %v8159 = vadd.f32 %v8155, %v8158
    %vm8160 = vweird.f32 %v8134
    %vm8161 = vweird.f32 %v8155
    %vm8162 = vmor %vm8160, %vm8161
    %v8163 = vsel %vm8162, %v8155, %v8159
    %v8164 = vand.u32 2147483647, %v8134
    %vm8165 = vcmp.eq.f32.partialorder %v8164, 8.507059e+37
    %v8166 = vand.u32 %v8134, 2147483648
    %v8167 = vor.u32 1.1754944e-38, %v8166
    %v8168 = vsel %vm8165, %v8167, %v8163
    %v8169 = vmul.f32 1.0, %v8168
    %v8170 = vrcp.pop %v8135
    %v8171 = vmul.f32 %v8135, %v8170
    %v8172 = vsub.f32 1.0, %v8171
    %v8173 = vmul.f32 %v8170, %v8172
    %v8174 = vadd.f32 %v8170, %v8173
    %vm8175 = vweird.f32 %v8135
    %vm8176 = vweird.f32 %v8170
    %vm8177 = vmor %vm8175, %vm8176
    %v8178 = vsel %vm8177, %v8170, %v8174
    %v8179 = vand.u32 2147483647, %v8135
    %vm8180 = vcmp.eq.f32.partialorder %v8179, 8.507059e+37
    %v8181 = vand.u32 %v8135, 2147483648
    %v8182 = vor.u32 1.1754944e-38, %v8181
    %v8183 = vsel %vm8180, %v8182, %v8178
    %v8184 = vmul.f32 1.0, %v8183
    %v8185 = vrcp.pop %v8136
    %v8186 = vmul.f32 %v8136, %v8185
    %v8187 = vsub.f32 1.0, %v8186
    %v8188 = vmul.f32 %v8185, %v8187
    %v8189 = vadd.f32 %v8185, %v8188
    %vm8190 = vweird.f32 %v8136
    %vm8191 = vweird.f32 %v8185
    %vm8192 = vmor %vm8190, %vm8191
    %v8193 = vsel %vm8192, %v8185, %v8189
    %v8194 = vand.u32 2147483647, %v8136
    %vm8195 = vcmp.eq.f32.partialorder %v8194, 8.507059e+37
    %v8196 = vand.u32 %v8136, 2147483648
    %v8197 = vor.u32 1.1754944e-38, %v8196
    %v8198 = vsel %vm8195, %v8197, %v8193
    %v8199 = vmul.f32 1.0, %v8198
    %v8200 = vrcp.pop %v8137
    %v8201 = vmul.f32 %v8137, %v8200
    %v8202 = vsub.f32 1.0, %v8201
    %v8203 = vmul.f32 %v8200, %v8202
    %v8204 = vadd.f32 %v8200, %v8203
    %vm8205 = vweird.f32 %v8137
    %vm8206 = vweird.f32 %v8200
    %vm8207 = vmor %vm8205, %vm8206
    %v8208 = vsel %vm8207, %v8200, %v8204
    %v8209 = vand.u32 2147483647, %v8137
    %vm8210 = vcmp.eq.f32.partialorder %v8209, 8.507059e+37
    %v8211 = vand.u32 %v8137, 2147483648
    %v8212 = vor.u32 1.1754944e-38, %v8211
    %v8213 = vsel %vm8210, %v8212, %v8208
    %v8214 = vmul.f32 1.0, %v8213
    %v8215 = vrcp.pop %v8138
    %v8216 = vmul.f32 %v8138, %v8215
    %v8217 = vsub.f32 1.0, %v8216
    %v8218 = vmul.f32 %v8215, %v8217
    %v8219 = vadd.f32 %v8215, %v8218
    %vm8220 = vweird.f32 %v8138
    %vm8221 = vweird.f32 %v8215
    %vm8222 = vmor %vm8220, %vm8221
    %v8223 = vsel %vm8222, %v8215, %v8219
    %v8224 = vand.u32 2147483647, %v8138
    %vm8225 = vcmp.eq.f32.partialorder %v8224, 8.507059e+37
    %v8226 = vand.u32 %v8138, 2147483648
    %v8227 = vor.u32 1.1754944e-38, %v8226
    %v8228 = vsel %vm8225, %v8227, %v8223
    %v8229 = vmul.f32 1.0, %v8228
    %v8230 = vrcp.pop %v8139
    %v8231 = vmul.f32 %v8139, %v8230
    %v8232 = vsub.f32 1.0, %v8231
    %v8233 = vmul.f32 %v8230, %v8232
    %v8234 = vadd.f32 %v8230, %v8233
    %vm8235 = vweird.f32 %v8139
    %vm8236 = vweird.f32 %v8230
    %vm8237 = vmor %vm8235, %vm8236
    %v8238 = vsel %vm8237, %v8230, %v8234
    %v8239 = vand.u32 2147483647, %v8139
    %vm8240 = vcmp.eq.f32.partialorder %v8239, 8.507059e+37
    %v8241 = vand.u32 %v8139, 2147483648
    %v8242 = vor.u32 1.1754944e-38, %v8241
    %v8243 = vsel %vm8240, %v8242, %v8238
    %v8244 = vmul.f32 1.0, %v8243
    %v8245 = vmul.f32 %v8092, %v8154
    %v8246 = vmul.f32 %v8095, %v8169
    %v8247 = vmul.f32 %v8098, %v8184
    %v8248 = vmul.f32 %v8101, %v8199
    %v8249 = vmul.f32 %v8104, %v8214
    %v8250 = vmul.f32 %v8107, %v8229
    %v8251 = vmul.f32 %v8110, %v8244
    %8252 = vmatpush.msra.mxu0 0.0
    %8253 = vmatpush.msra.mxu0 0.0
    %8254 = vmatpush.msra.mxu0 0.0
    %8255 = vmatpush.msra.mxu0 0.0
    %8256 = vmatpush.msra.mxu0 0.0
    %8257 = vmatpush.msra.mxu0 0.0
    %8258 = vmatpush.msra.mxu0 0.0
    %8259 = vmatpush.msra.mxu0 0.0
    %8260 = vmatpush.msra.mxu0 0.0
    %8261 = vmatpush.msra.mxu0 %v8251
    %8262 = vmatpush.msra.mxu0 %v8250
    %8263 = vmatpush.msra.mxu0 %v8249
    %8264 = vmatpush.msra.mxu0 %v8248
    %8265 = vmatpush.msra.mxu0 %v8247
    %8266 = vmatpush.msra.mxu0 %v8246
    %8267 = vmatpush.msra.mxu0 %v8245
    %8268 = vmatmul.f32.gmra.mxu0 %v1204
    %v8269 = vpop.f32.mrf.mxu0
    %v8270 = vadd.f32 0.0, %v8269
    %8271 = vdwg.mxu0
    %s8272 = scalar_lea.vmem %s8, 1248
    %v8273 = vld [vmem:[%s8272] sm:$0xff]
    %v8274 = vld [vmem:[%s8272 + $0x8] sm:$0xff]
    %v8275 = vld [vmem:[%s8272 + $0x10] sm:$0xff]
    %v8276 = vld [vmem:[%s8272 + $0x18] sm:$0xff]
    %s8277 = scalar_lea.vmem %s8, 1280
    %v8278 = vld [vmem:[%s8277] sm:$0xff]
    %v8279 = vld [vmem:[%s8277 + $0x8] sm:$0xff]
    %v8280 = vld [vmem:[%s8277 + $0x10] sm:$0xff]
    %v8281 = vld [vmem:[%s8277 + $0x18] sm:$0xff]
    %v8283 = vsel %vm518, %v8270, 0
    %8285 = vmatpush.msra.mxu0 0.0
    %8286 = vmatpush.msra.mxu0 0.0
    %8287 = vmatpush.msra.mxu0 0.0
    %8288 = vmatpush.msra.mxu0 0.0
    %8289 = vmatpush.msra.mxu0 0.0
    %8290 = vmatpush.msra.mxu0 0.0
    %8291 = vmatpush.msra.mxu0 0.0
    %8292 = vmatpush.msra.mxu0 0.0
    %8293 = vmatpush.msra.mxu0 0.0
    %8294 = vmatpush.msra.mxu0 0.0
    %8295 = vmatpush.msra.mxu0 0.0
    %8296 = vmatpush.msra.mxu0 0.0
    %8297 = vmatpush.msra.mxu0 %v8281
    %8298 = vmatpush.msra.mxu0 %v8280
    %8299 = vmatpush.msra.mxu0 %v8279
    %8300 = vmatpush.msra.mxu0 %v8278
    %8301 = vmatmul.f32.gmra.mxu0 %v8283
    %v8302 = vpop.f32.mrf.mxu0
    %v8303 = vadd.f32 0.0, %v8302
    %8304 = vdwg.mxu0
    %v8306 = vsel %vm518, %v7488, 0
    %8308 = vmatpush.msra.mxu0 0.0
    %8309 = vmatpush.msra.mxu0 0.0
    %8310 = vmatpush.msra.mxu0 0.0
    %8311 = vmatpush.msra.mxu0 0.0
    %8312 = vmatpush.msra.mxu0 0.0
    %8313 = vmatpush.msra.mxu0 0.0
    %8314 = vmatpush.msra.mxu0 0.0
    %8315 = vmatpush.msra.mxu0 0.0
    %8316 = vmatpush.msra.mxu0 0.0
    %8317 = vmatpush.msra.mxu0 0.0
    %8318 = vmatpush.msra.mxu0 0.0
    %8319 = vmatpush.msra.mxu0 0.0
    %8320 = vmatpush.msra.mxu0 %v8276
    %8321 = vmatpush.msra.mxu0 %v8275
    %8322 = vmatpush.msra.mxu0 %v8274
    %8323 = vmatpush.msra.mxu0 %v8273
    %8324 = vmatmul.f32.gmra.mxu0 %v8306
    %v8325 = vpop.f32.mrf.mxu0
    %v8326 = vadd.f32 %v8303, %v8325
    %8327 = vdwg.mxu0
    %v8328 = vld [vmem:[%s9 + $0x38] sm:$0x1]
    %v8329 = vperm.slane %v8328, 0
    %v8330 = vadd.f32 %v8326, %v8329
    %v8331 = vld [vmem:[%s9 + $0x39] sm:$0x1]
    %v8332 = vld [vmem:[%s9 + $0x3a] sm:$0x1]
    %v8333 = vsel %vm518, %v8330, 0.0
    %8334 = vadd.xlane.f32.xlu0 %v8333
    %v8335 = vpop.xlane.xlu0 %8334
    %v8336 = vmul.f32 %v8335, %v706
    %v8337 = vsub.f32 %v8330, %v8336
    %v8338 = vmul.f32 %v8337, %v8337
    %v8339 = vsel %vm518, %v8338, 0.0
    %8340 = vadd.xlane.f32.xlu0 %v8339
    %v8341 = vpop.xlane.xlu0 %8340
    %v8342 = vmul.f32 %v8341, %v706
    %v8343 = vadd.f32 %v8342, 1e-05
    %v8344 = vrsqrt.pop %v8343
    %v8345 = vmul.f32 %v8344, %v8343
    %v8346 = vmul.f32 %v8345, %v8344
    %v8347 = vmul.f32 0.5, %v8346
    %v8348 = vsub.f32 1.5, %v8347
    %v8349 = vmul.f32 %v8344, %v8348
    %vm8350 = vweird.f32 %v8343
    %vm8351 = vweird.f32 %v8344
    %vm8352 = vmor %vm8350, %vm8351
    %v8353 = vsel %vm8352, %v8344, %v8349
    %v8354 = vmul.f32 %v8337, %v8353
    %v8355 = vperm.slane %v8331, 0
    %v8356 = vmul.f32 %v8354, %v8355
    %v8357 = vperm.slane %v8332, 0
    %v8358 = vadd.f32 %v8356, %v8357
    %v8359 = vxor.u32 %v8358, 2147483648
    %v8360 = vmul.f32 %v8359, 1.442695
    %v8361 = vpow.pop %v8360
    %v8362 = vadd.f32 %v8361, 1.0
    %v8363 = vrcp.pop %v8362
    %v8364 = vmul.f32 %v8362, %v8363
    %v8365 = vsub.f32 1.0, %v8364
    %v8366 = vmul.f32 %v8363, %v8365
    %v8367 = vadd.f32 %v8363, %v8366
    %vm8368 = vweird.f32 %v8362
    %vm8369 = vweird.f32 %v8363
    %vm8370 = vmor %vm8368, %vm8369
    %v8371 = vsel %vm8370, %v8363, %v8367
    %v8372 = vand.u32 2147483647, %v8362
    %vm8373 = vcmp.eq.f32.partialorder %v8372, 8.507059e+37
    %v8374 = vand.u32 %v8362, 2147483648
    %v8375 = vor.u32 1.1754944e-38, %v8374
    %v8376 = vsel %vm8373, %v8375, %v8371
    %v8377 = vmul.f32 1.0, %v8376
    %v8378 = vmul.f32 %v8358, %v8377
    %s8379 = scalar_lea.vmem %s8, 1312
    %v8380 = vld [vmem:[%s8379] sm:$0xff]
    %v8381 = vld [vmem:[%s8379 + $0x8] sm:$0xff]
    %v8382 = vld [vmem:[%s8379 + $0x10] sm:$0xff]
    %v8383 = vld [vmem:[%s8379 + $0x18] sm:$0xff]
    %v8385 = vsel %vm518, %v8378, 0
    %8387 = vmatpush.msra.mxu0 0.0
    %8388 = vmatpush.msra.mxu0 0.0
    %8389 = vmatpush.msra.mxu0 0.0
    %8390 = vmatpush.msra.mxu0 0.0
    %8391 = vmatpush.msra.mxu0 0.0
    %8392 = vmatpush.msra.mxu0 0.0
    %8393 = vmatpush.msra.mxu0 0.0
    %8394 = vmatpush.msra.mxu0 0.0
    %8395 = vmatpush.msra.mxu0 0.0
    %8396 = vmatpush.msra.mxu0 0.0
    %8397 = vmatpush.msra.mxu0 0.0
    %8398 = vmatpush.msra.mxu0 0.0
    %8399 = vmatpush.msra.mxu0 %v8383
    %8400 = vmatpush.msra.mxu0 %v8382
    %8401 = vmatpush.msra.mxu0 %v8381
    %8402 = vmatpush.msra.mxu0 %v8380
    %8403 = vmatmul.f32.gmra.mxu0 %v8385
    %v8404 = vpop.f32.mrf.mxu0
    %v8405 = vadd.f32 0.0, %v8404
    %8406 = vdwg.mxu0
    %v8407 = vadd.f32 %v7488, %v8405
    %v8408 = vld [vmem:[%s9 + $0x3b] sm:$0x1]
    %v8409 = vperm.slane %v8408, 0
    %v8410 = vadd.f32 %v8407, %v8409
    %8411 = vmatpush.msra.mxu0 0.0
    %8412 = vmatpush.msra.mxu0 0.0
    %8413 = vmatpush.msra.mxu0 0.0
    %8414 = vmatpush.msra.mxu0 0.0
    %8415 = vmatpush.msra.mxu0 0.0
    %8416 = vmatpush.msra.mxu0 0.0
    %8417 = vmatpush.msra.mxu0 0.0
    %8418 = vmatpush.msra.mxu0 0.0
    %8419 = vmatpush.msra.mxu0 0.0
    %8420 = vmatpush.msra.mxu0 0.0
    %8421 = vmatpush.msra.mxu0 0.0
    %8422 = vmatpush.msra.mxu0 0.0
    %8423 = vmatpush.msra.mxu0 0.0
    %8424 = vmatpush.msra.mxu0 0.0
    %8425 = vmatpush.msra.mxu0 0.0
    %8426 = vmatpush.msra.mxu0 %v8410
    %8427 = vmatmul.f32.gmra.mxu0 %v392
    %v8428 = vpop.f32.mrf.mxu0
    %v8429 = vadd.f32 0.0, %v8428
    %8430 = vmatmul.f32.gmra.mxu0 %v395
    %v8431 = vpop.f32.mrf.mxu0
    %v8432 = vadd.f32 0.0, %v8431
    %8433 = vmatmul.f32.gmra.mxu0 %v398
    %v8434 = vpop.f32.mrf.mxu0
    %v8435 = vadd.f32 0.0, %v8434
    %8436 = vmatmul.f32.gmra.mxu0 %v401
    %v8437 = vpop.f32.mrf.mxu0
    %v8438 = vadd.f32 0.0, %v8437
    %8439 = vmatmul.f32.gmra.mxu0 %v404
    %v8440 = vpop.f32.mrf.mxu0
    %v8441 = vadd.f32 0.0, %v8440
    %8442 = vmatmul.f32.gmra.mxu0 %v407
    %v8443 = vpop.f32.mrf.mxu0
    %v8444 = vadd.f32 0.0, %v8443
    %8445 = vmatmul.f32.gmra.mxu0 %v410
    %v8446 = vpop.f32.mrf.mxu0
    %v8447 = vadd.f32 0.0, %v8446
    %8448 = vdwg.mxu0
    %8449 = vmatpush.msra.mxu0 0.0
    %8450 = vmatpush.msra.mxu0 0.0
    %8451 = vmatpush.msra.mxu0 0.0
    %8452 = vmatpush.msra.mxu0 0.0
    %8453 = vmatpush.msra.mxu0 0.0
    %8454 = vmatpush.msra.mxu0 0.0
    %8455 = vmatpush.msra.mxu0 0.0
    %8456 = vmatpush.msra.mxu0 0.0
    %8457 = vmatpush.msra.mxu0 0.0
    %8458 = vmatpush.msra.mxu0 0.0
    %8459 = vmatpush.msra.mxu0 0.0
    %8460 = vmatpush.msra.mxu0 0.0
    %8461 = vmatpush.msra.mxu0 0.0
    %8462 = vmatpush.msra.mxu0 0.0
    %8463 = vmatpush.msra.mxu0 0.0
    %8464 = vmatpush.msra.mxu0 %v8410
    %8465 = vmatmul.f32.gmra.mxu0 %v451
    %v8466 = vpop.f32.mrf.mxu0
    %v8467 = vadd.f32 0.0, %v8466
    %8468 = vmatmul.f32.gmra.mxu0 %v454
    %v8469 = vpop.f32.mrf.mxu0
    %v8470 = vadd.f32 0.0, %v8469
    %8471 = vmatmul.f32.gmra.mxu0 %v457
    %v8472 = vpop.f32.mrf.mxu0
    %v8473 = vadd.f32 0.0, %v8472
    %8474 = vmatmul.f32.gmra.mxu0 %v460
    %v8475 = vpop.f32.mrf.mxu0
    %v8476 = vadd.f32 0.0, %v8475
    %8477 = vmatmul.f32.gmra.mxu0 %v463
    %v8478 = vpop.f32.mrf.mxu0
    %v8479 = vadd.f32 0.0, %v8478
    %8480 = vmatmul.f32.gmra.mxu0 %v466
    %v8481 = vpop.f32.mrf.mxu0
    %v8482 = vadd.f32 0.0, %v8481
    %8483 = vmatmul.f32.gmra.mxu0 %v469
    %v8484 = vpop.f32.mrf.mxu0
    %v8485 = vadd.f32 0.0, %v8484
    %8486 = vdwg.mxu0
    %s8487 = scalar_lea.vmem %s8, 1344
    %v8488 = vld [vmem:[%s8487] sm:$0xff]
    %v8489 = vld [vmem:[%s8487 + $0x8] sm:$0xff]
    %v8490 = vld [vmem:[%s8487 + $0x10] sm:$0xff]
    %v8491 = vld [vmem:[%s8487 + $0x18] sm:$0xff]
    %s8492 = scalar_lea.vmem %s8, 1376
    %v8493 = vld [vmem:[%s8492] sm:$0xff]
    %v8494 = vld [vmem:[%s8492 + $0x8] sm:$0xff]
    %v8495 = vld [vmem:[%s8492 + $0x10] sm:$0xff]
    %v8496 = vld [vmem:[%s8492 + $0x18] sm:$0xff]
    %v8498 = vsel %vm518, %v8467, 0
    %v8501 = vsel %vm518, %v8470, 0
    %v8504 = vsel %vm518, %v8473, 0
    %v8507 = vsel %vm518, %v8476, 0
    %v8510 = vsel %vm518, %v8479, 0
    %v8513 = vsel %vm518, %v8482, 0
    %v8516 = vsel %vm518, %v8485, 0
    %8518 = vmatpush.msra.mxu0 0.0
    %8519 = vmatpush.msra.mxu0 0.0
    %8520 = vmatpush.msra.mxu0 0.0
    %8521 = vmatpush.msra.mxu0 0.0
    %8522 = vmatpush.msra.mxu0 0.0
    %8523 = vmatpush.msra.mxu0 0.0
    %8524 = vmatpush.msra.mxu0 0.0
    %8525 = vmatpush.msra.mxu0 0.0
    %8526 = vmatpush.msra.mxu0 0.0
    %8527 = vmatpush.msra.mxu0 0.0
    %8528 = vmatpush.msra.mxu0 0.0
    %8529 = vmatpush.msra.mxu0 0.0
    %8530 = vmatpush.msra.mxu0 %v8496
    %8531 = vmatpush.msra.mxu0 %v8495
    %8532 = vmatpush.msra.mxu0 %v8494
    %8533 = vmatpush.msra.mxu0 %v8493
    %8534 = vmatmul.f32.gmra.mxu0 %v8498
    %v8535 = vpop.f32.mrf.mxu0
    %v8536 = vadd.f32 0.0, %v8535
    %8537 = vmatmul.f32.gmra.mxu0 %v8501
    %v8538 = vpop.f32.mrf.mxu0
    %v8539 = vadd.f32 0.0, %v8538
    %8540 = vmatmul.f32.gmra.mxu0 %v8504
    %v8541 = vpop.f32.mrf.mxu0
    %v8542 = vadd.f32 0.0, %v8541
    %8543 = vmatmul.f32.gmra.mxu0 %v8507
    %v8544 = vpop.f32.mrf.mxu0
    %v8545 = vadd.f32 0.0, %v8544
    %8546 = vmatmul.f32.gmra.mxu0 %v8510
    %v8547 = vpop.f32.mrf.mxu0
    %v8548 = vadd.f32 0.0, %v8547
    %8549 = vmatmul.f32.gmra.mxu0 %v8513
    %v8550 = vpop.f32.mrf.mxu0
    %v8551 = vadd.f32 0.0, %v8550
    %8552 = vmatmul.f32.gmra.mxu0 %v8516
    %v8553 = vpop.f32.mrf.mxu0
    %v8554 = vadd.f32 0.0, %v8553
    %8555 = vdwg.mxu0
    %v8557 = vsel %vm518, %v8429, 0
    %v8560 = vsel %vm518, %v8432, 0
    %v8563 = vsel %vm518, %v8435, 0
    %v8566 = vsel %vm518, %v8438, 0
    %v8569 = vsel %vm518, %v8441, 0
    %v8572 = vsel %vm518, %v8444, 0
    %v8575 = vsel %vm518, %v8447, 0
    %8577 = vmatpush.msra.mxu0 0.0
    %8578 = vmatpush.msra.mxu0 0.0
    %8579 = vmatpush.msra.mxu0 0.0
    %8580 = vmatpush.msra.mxu0 0.0
    %8581 = vmatpush.msra.mxu0 0.0
    %8582 = vmatpush.msra.mxu0 0.0
    %8583 = vmatpush.msra.mxu0 0.0
    %8584 = vmatpush.msra.mxu0 0.0
    %8585 = vmatpush.msra.mxu0 0.0
    %8586 = vmatpush.msra.mxu0 0.0
    %8587 = vmatpush.msra.mxu0 0.0
    %8588 = vmatpush.msra.mxu0 0.0
    %8589 = vmatpush.msra.mxu0 %v8491
    %8590 = vmatpush.msra.mxu0 %v8490
    %8591 = vmatpush.msra.mxu0 %v8489
    %8592 = vmatpush.msra.mxu0 %v8488
    %8593 = vmatmul.f32.gmra.mxu0 %v8557
    %v8594 = vpop.f32.mrf.mxu0
    %v8595 = vadd.f32 %v8536, %v8594
    %8596 = vmatmul.f32.gmra.mxu0 %v8560
    %v8597 = vpop.f32.mrf.mxu0
    %v8598 = vadd.f32 %v8539, %v8597
    %8599 = vmatmul.f32.gmra.mxu0 %v8563
    %v8600 = vpop.f32.mrf.mxu0
    %v8601 = vadd.f32 %v8542, %v8600
    %8602 = vmatmul.f32.gmra.mxu0 %v8566
    %v8603 = vpop.f32.mrf.mxu0
    %v8604 = vadd.f32 %v8545, %v8603
    %8605 = vmatmul.f32.gmra.mxu0 %v8569
    %v8606 = vpop.f32.mrf.mxu0
    %v8607 = vadd.f32 %v8548, %v8606
    %8608 = vmatmul.f32.gmra.mxu0 %v8572
    %v8609 = vpop.f32.mrf.mxu0
    %v8610 = vadd.f32 %v8551, %v8609
    %8611 = vmatmul.f32.gmra.mxu0 %v8575
    %v8612 = vpop.f32.mrf.mxu0
    %v8613 = vadd.f32 %v8554, %v8612
    %8614 = vdwg.mxu0
    %s8615 = scalar_lea.vmem %s10, 16
    %v8616 = vld [vmem:[%s8615] sm:$0x3]
    %v8617 = vperm.slane %v8616, 0
    %v8618 = vmul.f32 %v6463, %v8617
    %v8619 = vmul.f32 %v6466, %v8617
    %v8620 = vmul.f32 %v6469, %v8617
    %v8621 = vmul.f32 %v6472, %v8617
    %v8622 = vmul.f32 %v6475, %v8617
    %v8623 = vmul.f32 %v6478, %v8617
    %v8624 = vmul.f32 %v6481, %v8617
    %v8625 = vperm.slane %v8616, 1
    %v8626 = vmul.f32 %v137, %v8625
    %v8627 = vmul.f32 %v140, %v8625
    %v8628 = vmul.f32 %v143, %v8625
    %v8629 = vmul.f32 %v146, %v8625
    %v8630 = vmul.f32 %v149, %v8625
    %v8631 = vmul.f32 %v152, %v8625
    %v8632 = vmul.f32 %v155, %v8625
    %v8633 = vadd.f32 %v8618, %v8626
    %v8634 = vadd.f32 %v8619, %v8627
    %v8635 = vadd.f32 %v8620, %v8628
    %v8636 = vadd.f32 %v8621, %v8629
    %v8637 = vadd.f32 %v8622, %v8630
    %v8638 = vadd.f32 %v8623, %v8631
    %v8639 = vadd.f32 %v8624, %v8632
    %v8640 = vadd.f32 %v8595, %v8633
    %v8641 = vadd.f32 %v8598, %v8634
    %v8642 = vadd.f32 %v8601, %v8635
    %v8643 = vadd.f32 %v8604, %v8636
    %v8644 = vadd.f32 %v8607, %v8637
    %v8645 = vadd.f32 %v8610, %v8638
    %v8646 = vadd.f32 %v8613, %v8639
    %v8647 = vld [vmem:[%s9 + $0x3c] sm:$0x1]
    %v8648 = vperm.slane %v8647, 0
    %v8649 = vadd.f32 %v8640, %v8648
    %v8650 = vadd.f32 %v8641, %v8648
    %v8651 = vadd.f32 %v8642, %v8648
    %v8652 = vadd.f32 %v8643, %v8648
    %v8653 = vadd.f32 %v8644, %v8648
    %v8654 = vadd.f32 %v8645, %v8648
    %v8655 = vadd.f32 %v8646, %v8648
    %v8656 = vld [vmem:[%s9 + $0x3d] sm:$0x1]
    %v8657 = vld [vmem:[%s9 + $0x3e] sm:$0x1]
    %v8658 = vsel %vm518, %v8649, 0.0
    %8659 = vadd.xlane.f32.xlu0 %v8658
    %v8660 = vpop.xlane.xlu0 %8659
    %v8661 = vsel %vm518, %v8650, 0.0
    %8662 = vadd.xlane.f32.xlu0 %v8661
    %v8663 = vpop.xlane.xlu0 %8662
    %v8664 = vsel %vm518, %v8651, 0.0
    %8665 = vadd.xlane.f32.xlu0 %v8664
    %v8666 = vpop.xlane.xlu0 %8665
    %v8667 = vsel %vm518, %v8652, 0.0
    %8668 = vadd.xlane.f32.xlu0 %v8667
    %v8669 = vpop.xlane.xlu0 %8668
    %v8670 = vsel %vm518, %v8653, 0.0
    %8671 = vadd.xlane.f32.xlu0 %v8670
    %v8672 = vpop.xlane.xlu0 %8671
    %v8673 = vsel %vm518, %v8654, 0.0
    %8674 = vadd.xlane.f32.xlu0 %v8673
    %v8675 = vpop.xlane.xlu0 %8674
    %v8676 = vsel %vm518, %v8655, 0.0
    %8677 = vadd.xlane.f32.xlu0 %v8676
    %v8678 = vpop.xlane.xlu0 %8677
    %v8679 = vmul.f32 %v8660, %v706
    %v8680 = vmul.f32 %v8663, %v706
    %v8681 = vmul.f32 %v8666, %v706
    %v8682 = vmul.f32 %v8669, %v706
    %v8683 = vmul.f32 %v8672, %v706
    %v8684 = vmul.f32 %v8675, %v706
    %v8685 = vmul.f32 %v8678, %v706
    %v8686 = vsub.f32 %v8649, %v8679
    %v8687 = vsub.f32 %v8650, %v8680
    %v8688 = vsub.f32 %v8651, %v8681
    %v8689 = vsub.f32 %v8652, %v8682
    %v8690 = vsub.f32 %v8653, %v8683
    %v8691 = vsub.f32 %v8654, %v8684
    %v8692 = vsub.f32 %v8655, %v8685
    %v8693 = vmul.f32 %v8686, %v8686
    %v8694 = vmul.f32 %v8687, %v8687
    %v8695 = vmul.f32 %v8688, %v8688
    %v8696 = vmul.f32 %v8689, %v8689
    %v8697 = vmul.f32 %v8690, %v8690
    %v8698 = vmul.f32 %v8691, %v8691
    %v8699 = vmul.f32 %v8692, %v8692
    %v8700 = vsel %vm518, %v8693, 0.0
    %8701 = vadd.xlane.f32.xlu0 %v8700
    %v8702 = vpop.xlane.xlu0 %8701
    %v8703 = vsel %vm518, %v8694, 0.0
    %8704 = vadd.xlane.f32.xlu0 %v8703
    %v8705 = vpop.xlane.xlu0 %8704
    %v8706 = vsel %vm518, %v8695, 0.0
    %8707 = vadd.xlane.f32.xlu0 %v8706
    %v8708 = vpop.xlane.xlu0 %8707
    %v8709 = vsel %vm518, %v8696, 0.0
    %8710 = vadd.xlane.f32.xlu0 %v8709
    %v8711 = vpop.xlane.xlu0 %8710
    %v8712 = vsel %vm518, %v8697, 0.0
    %8713 = vadd.xlane.f32.xlu0 %v8712
    %v8714 = vpop.xlane.xlu0 %8713
    %v8715 = vsel %vm518, %v8698, 0.0
    %8716 = vadd.xlane.f32.xlu0 %v8715
    %v8717 = vpop.xlane.xlu0 %8716
    %v8718 = vsel %vm518, %v8699, 0.0
    %8719 = vadd.xlane.f32.xlu0 %v8718
    %v8720 = vpop.xlane.xlu0 %8719
    %v8721 = vmul.f32 %v8702, %v706
    %v8722 = vmul.f32 %v8705, %v706
    %v8723 = vmul.f32 %v8708, %v706
    %v8724 = vmul.f32 %v8711, %v706
    %v8725 = vmul.f32 %v8714, %v706
    %v8726 = vmul.f32 %v8717, %v706
    %v8727 = vmul.f32 %v8720, %v706
    %v8728 = vadd.f32 %v8721, 1e-05
    %v8729 = vadd.f32 %v8722, 1e-05
    %v8730 = vadd.f32 %v8723, 1e-05
    %v8731 = vadd.f32 %v8724, 1e-05
    %v8732 = vadd.f32 %v8725, 1e-05
    %v8733 = vadd.f32 %v8726, 1e-05
    %v8734 = vadd.f32 %v8727, 1e-05
    %v8735 = vrsqrt.pop %v8728
    %v8736 = vmul.f32 %v8735, %v8728
    %v8737 = vmul.f32 %v8736, %v8735
    %v8738 = vmul.f32 0.5, %v8737
    %v8739 = vsub.f32 1.5, %v8738
    %v8740 = vmul.f32 %v8735, %v8739
    %vm8741 = vweird.f32 %v8728
    %vm8742 = vweird.f32 %v8735
    %vm8743 = vmor %vm8741, %vm8742
    %v8744 = vsel %vm8743, %v8735, %v8740
    %v8745 = vrsqrt.pop %v8729
    %v8746 = vmul.f32 %v8745, %v8729
    %v8747 = vmul.f32 %v8746, %v8745
    %v8748 = vmul.f32 0.5, %v8747
    %v8749 = vsub.f32 1.5, %v8748
    %v8750 = vmul.f32 %v8745, %v8749
    %vm8751 = vweird.f32 %v8729
    %vm8752 = vweird.f32 %v8745
    %vm8753 = vmor %vm8751, %vm8752
    %v8754 = vsel %vm8753, %v8745, %v8750
    %v8755 = vrsqrt.pop %v8730
    %v8756 = vmul.f32 %v8755, %v8730
    %v8757 = vmul.f32 %v8756, %v8755
    %v8758 = vmul.f32 0.5, %v8757
    %v8759 = vsub.f32 1.5, %v8758
    %v8760 = vmul.f32 %v8755, %v8759
    %vm8761 = vweird.f32 %v8730
    %vm8762 = vweird.f32 %v8755
    %vm8763 = vmor %vm8761, %vm8762
    %v8764 = vsel %vm8763, %v8755, %v8760
    %v8765 = vrsqrt.pop %v8731
    %v8766 = vmul.f32 %v8765, %v8731
    %v8767 = vmul.f32 %v8766, %v8765
    %v8768 = vmul.f32 0.5, %v8767
    %v8769 = vsub.f32 1.5, %v8768
    %v8770 = vmul.f32 %v8765, %v8769
    %vm8771 = vweird.f32 %v8731
    %vm8772 = vweird.f32 %v8765
    %vm8773 = vmor %vm8771, %vm8772
    %v8774 = vsel %vm8773, %v8765, %v8770
    %v8775 = vrsqrt.pop %v8732
    %v8776 = vmul.f32 %v8775, %v8732
    %v8777 = vmul.f32 %v8776, %v8775
    %v8778 = vmul.f32 0.5, %v8777
    %v8779 = vsub.f32 1.5, %v8778
    %v8780 = vmul.f32 %v8775, %v8779
    %vm8781 = vweird.f32 %v8732
    %vm8782 = vweird.f32 %v8775
    %vm8783 = vmor %vm8781, %vm8782
    %v8784 = vsel %vm8783, %v8775, %v8780
    %v8785 = vrsqrt.pop %v8733
    %v8786 = vmul.f32 %v8785, %v8733
    %v8787 = vmul.f32 %v8786, %v8785
    %v8788 = vmul.f32 0.5, %v8787
    %v8789 = vsub.f32 1.5, %v8788
    %v8790 = vmul.f32 %v8785, %v8789
    %vm8791 = vweird.f32 %v8733
    %vm8792 = vweird.f32 %v8785
    %vm8793 = vmor %vm8791, %vm8792
    %v8794 = vsel %vm8793, %v8785, %v8790
    %v8795 = vrsqrt.pop %v8734
    %v8796 = vmul.f32 %v8795, %v8734
    %v8797 = vmul.f32 %v8796, %v8795
    %v8798 = vmul.f32 0.5, %v8797
    %v8799 = vsub.f32 1.5, %v8798
    %v8800 = vmul.f32 %v8795, %v8799
    %vm8801 = vweird.f32 %v8734
    %vm8802 = vweird.f32 %v8795
    %vm8803 = vmor %vm8801, %vm8802
    %v8804 = vsel %vm8803, %v8795, %v8800
    %v8805 = vmul.f32 %v8686, %v8744
    %v8806 = vmul.f32 %v8687, %v8754
    %v8807 = vmul.f32 %v8688, %v8764
    %v8808 = vmul.f32 %v8689, %v8774
    %v8809 = vmul.f32 %v8690, %v8784
    %v8810 = vmul.f32 %v8691, %v8794
    %v8811 = vmul.f32 %v8692, %v8804
    %v8812 = vperm.slane %v8656, 0
    %v8813 = vmul.f32 %v8805, %v8812
    %v8814 = vmul.f32 %v8806, %v8812
    %v8815 = vmul.f32 %v8807, %v8812
    %v8816 = vmul.f32 %v8808, %v8812
    %v8817 = vmul.f32 %v8809, %v8812
    %v8818 = vmul.f32 %v8810, %v8812
    %v8819 = vmul.f32 %v8811, %v8812
    %v8820 = vperm.slane %v8657, 0
    %v8821 = vadd.f32 %v8813, %v8820
    %v8822 = vadd.f32 %v8814, %v8820
    %v8823 = vadd.f32 %v8815, %v8820
    %v8824 = vadd.f32 %v8816, %v8820
    %v8825 = vadd.f32 %v8817, %v8820
    %v8826 = vadd.f32 %v8818, %v8820
    %v8827 = vadd.f32 %v8819, %v8820
    %v8828 = vxor.u32 %v8821, 2147483648
    %v8829 = vxor.u32 %v8822, 2147483648
    %v8830 = vxor.u32 %v8823, 2147483648
    %v8831 = vxor.u32 %v8824, 2147483648
    %v8832 = vxor.u32 %v8825, 2147483648
    %v8833 = vxor.u32 %v8826, 2147483648
    %v8834 = vxor.u32 %v8827, 2147483648
    %v8835 = vmul.f32 %v8828, 1.442695
    %v8836 = vpow.pop %v8835
    %v8837 = vmul.f32 %v8829, 1.442695
    %v8838 = vpow.pop %v8837
    %v8839 = vmul.f32 %v8830, 1.442695
    %v8840 = vpow.pop %v8839
    %v8841 = vmul.f32 %v8831, 1.442695
    %v8842 = vpow.pop %v8841
    %v8843 = vmul.f32 %v8832, 1.442695
    %v8844 = vpow.pop %v8843
    %v8845 = vmul.f32 %v8833, 1.442695
    %v8846 = vpow.pop %v8845
    %v8847 = vmul.f32 %v8834, 1.442695
    %v8848 = vpow.pop %v8847
    %v8849 = vadd.f32 %v8836, 1.0
    %v8850 = vadd.f32 %v8838, 1.0
    %v8851 = vadd.f32 %v8840, 1.0
    %v8852 = vadd.f32 %v8842, 1.0
    %v8853 = vadd.f32 %v8844, 1.0
    %v8854 = vadd.f32 %v8846, 1.0
    %v8855 = vadd.f32 %v8848, 1.0
    %v8856 = vrcp.pop %v8849
    %v8857 = vmul.f32 %v8849, %v8856
    %v8858 = vsub.f32 1.0, %v8857
    %v8859 = vmul.f32 %v8856, %v8858
    %v8860 = vadd.f32 %v8856, %v8859
    %vm8861 = vweird.f32 %v8849
    %vm8862 = vweird.f32 %v8856
    %vm8863 = vmor %vm8861, %vm8862
    %v8864 = vsel %vm8863, %v8856, %v8860
    %v8865 = vand.u32 2147483647, %v8849
    %vm8866 = vcmp.eq.f32.partialorder %v8865, 8.507059e+37
    %v8867 = vand.u32 %v8849, 2147483648
    %v8868 = vor.u32 1.1754944e-38, %v8867
    %v8869 = vsel %vm8866, %v8868, %v8864
    %v8870 = vmul.f32 1.0, %v8869
    %v8871 = vrcp.pop %v8850
    %v8872 = vmul.f32 %v8850, %v8871
    %v8873 = vsub.f32 1.0, %v8872
    %v8874 = vmul.f32 %v8871, %v8873
    %v8875 = vadd.f32 %v8871, %v8874
    %vm8876 = vweird.f32 %v8850
    %vm8877 = vweird.f32 %v8871
    %vm8878 = vmor %vm8876, %vm8877
    %v8879 = vsel %vm8878, %v8871, %v8875
    %v8880 = vand.u32 2147483647, %v8850
    %vm8881 = vcmp.eq.f32.partialorder %v8880, 8.507059e+37
    %v8882 = vand.u32 %v8850, 2147483648
    %v8883 = vor.u32 1.1754944e-38, %v8882
    %v8884 = vsel %vm8881, %v8883, %v8879
    %v8885 = vmul.f32 1.0, %v8884
    %v8886 = vrcp.pop %v8851
    %v8887 = vmul.f32 %v8851, %v8886
    %v8888 = vsub.f32 1.0, %v8887
    %v8889 = vmul.f32 %v8886, %v8888
    %v8890 = vadd.f32 %v8886, %v8889
    %vm8891 = vweird.f32 %v8851
    %vm8892 = vweird.f32 %v8886
    %vm8893 = vmor %vm8891, %vm8892
    %v8894 = vsel %vm8893, %v8886, %v8890
    %v8895 = vand.u32 2147483647, %v8851
    %vm8896 = vcmp.eq.f32.partialorder %v8895, 8.507059e+37
    %v8897 = vand.u32 %v8851, 2147483648
    %v8898 = vor.u32 1.1754944e-38, %v8897
    %v8899 = vsel %vm8896, %v8898, %v8894
    %v8900 = vmul.f32 1.0, %v8899
    %v8901 = vrcp.pop %v8852
    %v8902 = vmul.f32 %v8852, %v8901
    %v8903 = vsub.f32 1.0, %v8902
    %v8904 = vmul.f32 %v8901, %v8903
    %v8905 = vadd.f32 %v8901, %v8904
    %vm8906 = vweird.f32 %v8852
    %vm8907 = vweird.f32 %v8901
    %vm8908 = vmor %vm8906, %vm8907
    %v8909 = vsel %vm8908, %v8901, %v8905
    %v8910 = vand.u32 2147483647, %v8852
    %vm8911 = vcmp.eq.f32.partialorder %v8910, 8.507059e+37
    %v8912 = vand.u32 %v8852, 2147483648
    %v8913 = vor.u32 1.1754944e-38, %v8912
    %v8914 = vsel %vm8911, %v8913, %v8909
    %v8915 = vmul.f32 1.0, %v8914
    %v8916 = vrcp.pop %v8853
    %v8917 = vmul.f32 %v8853, %v8916
    %v8918 = vsub.f32 1.0, %v8917
    %v8919 = vmul.f32 %v8916, %v8918
    %v8920 = vadd.f32 %v8916, %v8919
    %vm8921 = vweird.f32 %v8853
    %vm8922 = vweird.f32 %v8916
    %vm8923 = vmor %vm8921, %vm8922
    %v8924 = vsel %vm8923, %v8916, %v8920
    %v8925 = vand.u32 2147483647, %v8853
    %vm8926 = vcmp.eq.f32.partialorder %v8925, 8.507059e+37
    %v8927 = vand.u32 %v8853, 2147483648
    %v8928 = vor.u32 1.1754944e-38, %v8927
    %v8929 = vsel %vm8926, %v8928, %v8924
    %v8930 = vmul.f32 1.0, %v8929
    %v8931 = vrcp.pop %v8854
    %v8932 = vmul.f32 %v8854, %v8931
    %v8933 = vsub.f32 1.0, %v8932
    %v8934 = vmul.f32 %v8931, %v8933
    %v8935 = vadd.f32 %v8931, %v8934
    %vm8936 = vweird.f32 %v8854
    %vm8937 = vweird.f32 %v8931
    %vm8938 = vmor %vm8936, %vm8937
    %v8939 = vsel %vm8938, %v8931, %v8935
    %v8940 = vand.u32 2147483647, %v8854
    %vm8941 = vcmp.eq.f32.partialorder %v8940, 8.507059e+37
    %v8942 = vand.u32 %v8854, 2147483648
    %v8943 = vor.u32 1.1754944e-38, %v8942
    %v8944 = vsel %vm8941, %v8943, %v8939
    %v8945 = vmul.f32 1.0, %v8944
    %v8946 = vrcp.pop %v8855
    %v8947 = vmul.f32 %v8855, %v8946
    %v8948 = vsub.f32 1.0, %v8947
    %v8949 = vmul.f32 %v8946, %v8948
    %v8950 = vadd.f32 %v8946, %v8949
    %vm8951 = vweird.f32 %v8855
    %vm8952 = vweird.f32 %v8946
    %vm8953 = vmor %vm8951, %vm8952
    %v8954 = vsel %vm8953, %v8946, %v8950
    %v8955 = vand.u32 2147483647, %v8855
    %vm8956 = vcmp.eq.f32.partialorder %v8955, 8.507059e+37
    %v8957 = vand.u32 %v8855, 2147483648
    %v8958 = vor.u32 1.1754944e-38, %v8957
    %v8959 = vsel %vm8956, %v8958, %v8954
    %v8960 = vmul.f32 1.0, %v8959
    %v8961 = vmul.f32 %v8821, %v8870
    %v8962 = vmul.f32 %v8822, %v8885
    %v8963 = vmul.f32 %v8823, %v8900
    %v8964 = vmul.f32 %v8824, %v8915
    %v8965 = vmul.f32 %v8825, %v8930
    %v8966 = vmul.f32 %v8826, %v8945
    %v8967 = vmul.f32 %v8827, %v8960
    %s8968 = scalar_lea.vmem %s8, 1408
    %v8969 = vld [vmem:[%s8968] sm:$0xff]
    %v8970 = vld [vmem:[%s8968 + $0x8] sm:$0xff]
    %v8971 = vld [vmem:[%s8968 + $0x10] sm:$0xff]
    %v8972 = vld [vmem:[%s8968 + $0x18] sm:$0xff]
    %v8973 = vld [vmem:[%s9 + $0x3f] sm:$0x1]
    %v8974 = vperm.slane %v8973, 0
    %v8976 = vsel %vm518, %v8961, 0
    %v8979 = vsel %vm518, %v8962, 0
    %v8982 = vsel %vm518, %v8963, 0
    %v8985 = vsel %vm518, %v8964, 0
    %v8988 = vsel %vm518, %v8965, 0
    %v8991 = vsel %vm518, %v8966, 0
    %v8994 = vsel %vm518, %v8967, 0
    %8996 = vmatpush.msra.mxu0 0.0
    %8997 = vmatpush.msra.mxu0 0.0
    %8998 = vmatpush.msra.mxu0 0.0
    %8999 = vmatpush.msra.mxu0 0.0
    %9000 = vmatpush.msra.mxu0 0.0
    %9001 = vmatpush.msra.mxu0 0.0
    %9002 = vmatpush.msra.mxu0 0.0
    %9003 = vmatpush.msra.mxu0 0.0
    %9004 = vmatpush.msra.mxu0 0.0
    %9005 = vmatpush.msra.mxu0 0.0
    %9006 = vmatpush.msra.mxu0 0.0
    %9007 = vmatpush.msra.mxu0 0.0
    %9008 = vmatpush.msra.mxu0 %v8972
    %9009 = vmatpush.msra.mxu0 %v8971
    %9010 = vmatpush.msra.mxu0 %v8970
    %9011 = vmatpush.msra.mxu0 %v8969
    %9012 = vmatmul.f32.gmra.mxu0 %v8976
    %v9013 = vpop.f32.mrf.mxu0
    %v9014 = vadd.f32 %v8974, %v9013
    %9015 = vmatmul.f32.gmra.mxu0 %v8979
    %v9016 = vpop.f32.mrf.mxu0
    %v9017 = vadd.f32 %v8974, %v9016
    %9018 = vmatmul.f32.gmra.mxu0 %v8982
    %v9019 = vpop.f32.mrf.mxu0
    %v9020 = vadd.f32 %v8974, %v9019
    %9021 = vmatmul.f32.gmra.mxu0 %v8985
    %v9022 = vpop.f32.mrf.mxu0
    %v9023 = vadd.f32 %v8974, %v9022
    %9024 = vmatmul.f32.gmra.mxu0 %v8988
    %v9025 = vpop.f32.mrf.mxu0
    %v9026 = vadd.f32 %v8974, %v9025
    %9027 = vmatmul.f32.gmra.mxu0 %v8991
    %v9028 = vpop.f32.mrf.mxu0
    %v9029 = vadd.f32 %v8974, %v9028
    %9030 = vmatmul.f32.gmra.mxu0 %v8994
    %v9031 = vpop.f32.mrf.mxu0
    %v9032 = vadd.f32 %v8974, %v9031
    %9033 = vdwg.mxu0
    %v9034 = vld [vmem:[%s9 + $0x40] sm:$0x1]
    %v9035 = vld [vmem:[%s9 + $0x41] sm:$0x1]
    %v9036 = vsel %vm518, %v9014, 0.0
    %9037 = vadd.xlane.f32.xlu0 %v9036
    %v9038 = vpop.xlane.xlu0 %9037
    %v9039 = vsel %vm518, %v9017, 0.0
    %9040 = vadd.xlane.f32.xlu0 %v9039
    %v9041 = vpop.xlane.xlu0 %9040
    %v9042 = vsel %vm518, %v9020, 0.0
    %9043 = vadd.xlane.f32.xlu0 %v9042
    %v9044 = vpop.xlane.xlu0 %9043
    %v9045 = vsel %vm518, %v9023, 0.0
    %9046 = vadd.xlane.f32.xlu0 %v9045
    %v9047 = vpop.xlane.xlu0 %9046
    %v9048 = vsel %vm518, %v9026, 0.0
    %9049 = vadd.xlane.f32.xlu0 %v9048
    %v9050 = vpop.xlane.xlu0 %9049
    %v9051 = vsel %vm518, %v9029, 0.0
    %9052 = vadd.xlane.f32.xlu0 %v9051
    %v9053 = vpop.xlane.xlu0 %9052
    %v9054 = vsel %vm518, %v9032, 0.0
    %9055 = vadd.xlane.f32.xlu0 %v9054
    %v9056 = vpop.xlane.xlu0 %9055
    %v9057 = vmul.f32 %v9038, %v706
    %v9058 = vmul.f32 %v9041, %v706
    %v9059 = vmul.f32 %v9044, %v706
    %v9060 = vmul.f32 %v9047, %v706
    %v9061 = vmul.f32 %v9050, %v706
    %v9062 = vmul.f32 %v9053, %v706
    %v9063 = vmul.f32 %v9056, %v706
    %v9064 = vsub.f32 %v9014, %v9057
    %v9065 = vsub.f32 %v9017, %v9058
    %v9066 = vsub.f32 %v9020, %v9059
    %v9067 = vsub.f32 %v9023, %v9060
    %v9068 = vsub.f32 %v9026, %v9061
    %v9069 = vsub.f32 %v9029, %v9062
    %v9070 = vsub.f32 %v9032, %v9063
    %v9071 = vmul.f32 %v9064, %v9064
    %v9072 = vmul.f32 %v9065, %v9065
    %v9073 = vmul.f32 %v9066, %v9066
    %v9074 = vmul.f32 %v9067, %v9067
    %v9075 = vmul.f32 %v9068, %v9068
    %v9076 = vmul.f32 %v9069, %v9069
    %v9077 = vmul.f32 %v9070, %v9070
    %v9078 = vsel %vm518, %v9071, 0.0
    %9079 = vadd.xlane.f32.xlu0 %v9078
    %v9080 = vpop.xlane.xlu0 %9079
    %v9081 = vsel %vm518, %v9072, 0.0
    %9082 = vadd.xlane.f32.xlu0 %v9081
    %v9083 = vpop.xlane.xlu0 %9082
    %v9084 = vsel %vm518, %v9073, 0.0
    %9085 = vadd.xlane.f32.xlu0 %v9084
    %v9086 = vpop.xlane.xlu0 %9085
    %v9087 = vsel %vm518, %v9074, 0.0
    %9088 = vadd.xlane.f32.xlu0 %v9087
    %v9089 = vpop.xlane.xlu0 %9088
    %v9090 = vsel %vm518, %v9075, 0.0
    %9091 = vadd.xlane.f32.xlu0 %v9090
    %v9092 = vpop.xlane.xlu0 %9091
    %v9093 = vsel %vm518, %v9076, 0.0
    %9094 = vadd.xlane.f32.xlu0 %v9093
    %v9095 = vpop.xlane.xlu0 %9094
    %v9096 = vsel %vm518, %v9077, 0.0
    %9097 = vadd.xlane.f32.xlu0 %v9096
    %v9098 = vpop.xlane.xlu0 %9097
    %v9099 = vmul.f32 %v9080, %v706
    %v9100 = vmul.f32 %v9083, %v706
    %v9101 = vmul.f32 %v9086, %v706
    %v9102 = vmul.f32 %v9089, %v706
    %v9103 = vmul.f32 %v9092, %v706
    %v9104 = vmul.f32 %v9095, %v706
    %v9105 = vmul.f32 %v9098, %v706
    %v9106 = vadd.f32 %v9099, 1e-05
    %v9107 = vadd.f32 %v9100, 1e-05
    %v9108 = vadd.f32 %v9101, 1e-05
    %v9109 = vadd.f32 %v9102, 1e-05
    %v9110 = vadd.f32 %v9103, 1e-05
    %v9111 = vadd.f32 %v9104, 1e-05
    %v9112 = vadd.f32 %v9105, 1e-05
    %v9113 = vrsqrt.pop %v9106
    %v9114 = vmul.f32 %v9113, %v9106
    %v9115 = vmul.f32 %v9114, %v9113
    %v9116 = vmul.f32 0.5, %v9115
    %v9117 = vsub.f32 1.5, %v9116
    %v9118 = vmul.f32 %v9113, %v9117
    %vm9119 = vweird.f32 %v9106
    %vm9120 = vweird.f32 %v9113
    %vm9121 = vmor %vm9119, %vm9120
    %v9122 = vsel %vm9121, %v9113, %v9118
    %v9123 = vrsqrt.pop %v9107
    %v9124 = vmul.f32 %v9123, %v9107
    %v9125 = vmul.f32 %v9124, %v9123
    %v9126 = vmul.f32 0.5, %v9125
    %v9127 = vsub.f32 1.5, %v9126
    %v9128 = vmul.f32 %v9123, %v9127
    %vm9129 = vweird.f32 %v9107
    %vm9130 = vweird.f32 %v9123
    %vm9131 = vmor %vm9129, %vm9130
    %v9132 = vsel %vm9131, %v9123, %v9128
    %v9133 = vrsqrt.pop %v9108
    %v9134 = vmul.f32 %v9133, %v9108
    %v9135 = vmul.f32 %v9134, %v9133
    %v9136 = vmul.f32 0.5, %v9135
    %v9137 = vsub.f32 1.5, %v9136
    %v9138 = vmul.f32 %v9133, %v9137
    %vm9139 = vweird.f32 %v9108
    %vm9140 = vweird.f32 %v9133
    %vm9141 = vmor %vm9139, %vm9140
    %v9142 = vsel %vm9141, %v9133, %v9138
    %v9143 = vrsqrt.pop %v9109
    %v9144 = vmul.f32 %v9143, %v9109
    %v9145 = vmul.f32 %v9144, %v9143
    %v9146 = vmul.f32 0.5, %v9145
    %v9147 = vsub.f32 1.5, %v9146
    %v9148 = vmul.f32 %v9143, %v9147
    %vm9149 = vweird.f32 %v9109
    %vm9150 = vweird.f32 %v9143
    %vm9151 = vmor %vm9149, %vm9150
    %v9152 = vsel %vm9151, %v9143, %v9148
    %v9153 = vrsqrt.pop %v9110
    %v9154 = vmul.f32 %v9153, %v9110
    %v9155 = vmul.f32 %v9154, %v9153
    %v9156 = vmul.f32 0.5, %v9155
    %v9157 = vsub.f32 1.5, %v9156
    %v9158 = vmul.f32 %v9153, %v9157
    %vm9159 = vweird.f32 %v9110
    %vm9160 = vweird.f32 %v9153
    %vm9161 = vmor %vm9159, %vm9160
    %v9162 = vsel %vm9161, %v9153, %v9158
    %v9163 = vrsqrt.pop %v9111
    %v9164 = vmul.f32 %v9163, %v9111
    %v9165 = vmul.f32 %v9164, %v9163
    %v9166 = vmul.f32 0.5, %v9165
    %v9167 = vsub.f32 1.5, %v9166
    %v9168 = vmul.f32 %v9163, %v9167
    %vm9169 = vweird.f32 %v9111
    %vm9170 = vweird.f32 %v9163
    %vm9171 = vmor %vm9169, %vm9170
    %v9172 = vsel %vm9171, %v9163, %v9168
    %v9173 = vrsqrt.pop %v9112
    %v9174 = vmul.f32 %v9173, %v9112
    %v9175 = vmul.f32 %v9174, %v9173
    %v9176 = vmul.f32 0.5, %v9175
    %v9177 = vsub.f32 1.5, %v9176
    %v9178 = vmul.f32 %v9173, %v9177
    %vm9179 = vweird.f32 %v9112
    %vm9180 = vweird.f32 %v9173
    %vm9181 = vmor %vm9179, %vm9180
    %v9182 = vsel %vm9181, %v9173, %v9178
    %v9183 = vmul.f32 %v9064, %v9122
    %v9184 = vmul.f32 %v9065, %v9132
    %v9185 = vmul.f32 %v9066, %v9142
    %v9186 = vmul.f32 %v9067, %v9152
    %v9187 = vmul.f32 %v9068, %v9162
    %v9188 = vmul.f32 %v9069, %v9172
    %v9189 = vmul.f32 %v9070, %v9182
    %v9190 = vperm.slane %v9034, 0
    %v9191 = vmul.f32 %v9183, %v9190
    %v9192 = vmul.f32 %v9184, %v9190
    %v9193 = vmul.f32 %v9185, %v9190
    %v9194 = vmul.f32 %v9186, %v9190
    %v9195 = vmul.f32 %v9187, %v9190
    %v9196 = vmul.f32 %v9188, %v9190
    %v9197 = vmul.f32 %v9189, %v9190
    %v9198 = vperm.slane %v9035, 0
    %v9199 = vadd.f32 %v9191, %v9198
    %v9200 = vadd.f32 %v9192, %v9198
    %v9201 = vadd.f32 %v9193, %v9198
    %v9202 = vadd.f32 %v9194, %v9198
    %v9203 = vadd.f32 %v9195, %v9198
    %v9204 = vadd.f32 %v9196, %v9198
    %v9205 = vadd.f32 %v9197, %v9198
    %v9206 = vxor.u32 %v9199, 2147483648
    %v9207 = vxor.u32 %v9200, 2147483648
    %v9208 = vxor.u32 %v9201, 2147483648
    %v9209 = vxor.u32 %v9202, 2147483648
    %v9210 = vxor.u32 %v9203, 2147483648
    %v9211 = vxor.u32 %v9204, 2147483648
    %v9212 = vxor.u32 %v9205, 2147483648
    %v9213 = vmul.f32 %v9206, 1.442695
    %v9214 = vpow.pop %v9213
    %v9215 = vmul.f32 %v9207, 1.442695
    %v9216 = vpow.pop %v9215
    %v9217 = vmul.f32 %v9208, 1.442695
    %v9218 = vpow.pop %v9217
    %v9219 = vmul.f32 %v9209, 1.442695
    %v9220 = vpow.pop %v9219
    %v9221 = vmul.f32 %v9210, 1.442695
    %v9222 = vpow.pop %v9221
    %v9223 = vmul.f32 %v9211, 1.442695
    %v9224 = vpow.pop %v9223
    %v9225 = vmul.f32 %v9212, 1.442695
    %v9226 = vpow.pop %v9225
    %v9227 = vadd.f32 %v9214, 1.0
    %v9228 = vadd.f32 %v9216, 1.0
    %v9229 = vadd.f32 %v9218, 1.0
    %v9230 = vadd.f32 %v9220, 1.0
    %v9231 = vadd.f32 %v9222, 1.0
    %v9232 = vadd.f32 %v9224, 1.0
    %v9233 = vadd.f32 %v9226, 1.0
    %v9234 = vrcp.pop %v9227
    %v9235 = vmul.f32 %v9227, %v9234
    %v9236 = vsub.f32 1.0, %v9235
    %v9237 = vmul.f32 %v9234, %v9236
    %v9238 = vadd.f32 %v9234, %v9237
    %vm9239 = vweird.f32 %v9227
    %vm9240 = vweird.f32 %v9234
    %vm9241 = vmor %vm9239, %vm9240
    %v9242 = vsel %vm9241, %v9234, %v9238
    %v9243 = vand.u32 2147483647, %v9227
    %vm9244 = vcmp.eq.f32.partialorder %v9243, 8.507059e+37
    %v9245 = vand.u32 %v9227, 2147483648
    %v9246 = vor.u32 1.1754944e-38, %v9245
    %v9247 = vsel %vm9244, %v9246, %v9242
    %v9248 = vmul.f32 1.0, %v9247
    %v9249 = vrcp.pop %v9228
    %v9250 = vmul.f32 %v9228, %v9249
    %v9251 = vsub.f32 1.0, %v9250
    %v9252 = vmul.f32 %v9249, %v9251
    %v9253 = vadd.f32 %v9249, %v9252
    %vm9254 = vweird.f32 %v9228
    %vm9255 = vweird.f32 %v9249
    %vm9256 = vmor %vm9254, %vm9255
    %v9257 = vsel %vm9256, %v9249, %v9253
    %v9258 = vand.u32 2147483647, %v9228
    %vm9259 = vcmp.eq.f32.partialorder %v9258, 8.507059e+37
    %v9260 = vand.u32 %v9228, 2147483648
    %v9261 = vor.u32 1.1754944e-38, %v9260
    %v9262 = vsel %vm9259, %v9261, %v9257
    %v9263 = vmul.f32 1.0, %v9262
    %v9264 = vrcp.pop %v9229
    %v9265 = vmul.f32 %v9229, %v9264
    %v9266 = vsub.f32 1.0, %v9265
    %v9267 = vmul.f32 %v9264, %v9266
    %v9268 = vadd.f32 %v9264, %v9267
    %vm9269 = vweird.f32 %v9229
    %vm9270 = vweird.f32 %v9264
    %vm9271 = vmor %vm9269, %vm9270
    %v9272 = vsel %vm9271, %v9264, %v9268
    %v9273 = vand.u32 2147483647, %v9229
    %vm9274 = vcmp.eq.f32.partialorder %v9273, 8.507059e+37
    %v9275 = vand.u32 %v9229, 2147483648
    %v9276 = vor.u32 1.1754944e-38, %v9275
    %v9277 = vsel %vm9274, %v9276, %v9272
    %v9278 = vmul.f32 1.0, %v9277
    %v9279 = vrcp.pop %v9230
    %v9280 = vmul.f32 %v9230, %v9279
    %v9281 = vsub.f32 1.0, %v9280
    %v9282 = vmul.f32 %v9279, %v9281
    %v9283 = vadd.f32 %v9279, %v9282
    %vm9284 = vweird.f32 %v9230
    %vm9285 = vweird.f32 %v9279
    %vm9286 = vmor %vm9284, %vm9285
    %v9287 = vsel %vm9286, %v9279, %v9283
    %v9288 = vand.u32 2147483647, %v9230
    %vm9289 = vcmp.eq.f32.partialorder %v9288, 8.507059e+37
    %v9290 = vand.u32 %v9230, 2147483648
    %v9291 = vor.u32 1.1754944e-38, %v9290
    %v9292 = vsel %vm9289, %v9291, %v9287
    %v9293 = vmul.f32 1.0, %v9292
    %v9294 = vrcp.pop %v9231
    %v9295 = vmul.f32 %v9231, %v9294
    %v9296 = vsub.f32 1.0, %v9295
    %v9297 = vmul.f32 %v9294, %v9296
    %v9298 = vadd.f32 %v9294, %v9297
    %vm9299 = vweird.f32 %v9231
    %vm9300 = vweird.f32 %v9294
    %vm9301 = vmor %vm9299, %vm9300
    %v9302 = vsel %vm9301, %v9294, %v9298
    %v9303 = vand.u32 2147483647, %v9231
    %vm9304 = vcmp.eq.f32.partialorder %v9303, 8.507059e+37
    %v9305 = vand.u32 %v9231, 2147483648
    %v9306 = vor.u32 1.1754944e-38, %v9305
    %v9307 = vsel %vm9304, %v9306, %v9302
    %v9308 = vmul.f32 1.0, %v9307
    %v9309 = vrcp.pop %v9232
    %v9310 = vmul.f32 %v9232, %v9309
    %v9311 = vsub.f32 1.0, %v9310
    %v9312 = vmul.f32 %v9309, %v9311
    %v9313 = vadd.f32 %v9309, %v9312
    %vm9314 = vweird.f32 %v9232
    %vm9315 = vweird.f32 %v9309
    %vm9316 = vmor %vm9314, %vm9315
    %v9317 = vsel %vm9316, %v9309, %v9313
    %v9318 = vand.u32 2147483647, %v9232
    %vm9319 = vcmp.eq.f32.partialorder %v9318, 8.507059e+37
    %v9320 = vand.u32 %v9232, 2147483648
    %v9321 = vor.u32 1.1754944e-38, %v9320
    %v9322 = vsel %vm9319, %v9321, %v9317
    %v9323 = vmul.f32 1.0, %v9322
    %v9324 = vrcp.pop %v9233
    %v9325 = vmul.f32 %v9233, %v9324
    %v9326 = vsub.f32 1.0, %v9325
    %v9327 = vmul.f32 %v9324, %v9326
    %v9328 = vadd.f32 %v9324, %v9327
    %vm9329 = vweird.f32 %v9233
    %vm9330 = vweird.f32 %v9324
    %vm9331 = vmor %vm9329, %vm9330
    %v9332 = vsel %vm9331, %v9324, %v9328
    %v9333 = vand.u32 2147483647, %v9233
    %vm9334 = vcmp.eq.f32.partialorder %v9333, 8.507059e+37
    %v9335 = vand.u32 %v9233, 2147483648
    %v9336 = vor.u32 1.1754944e-38, %v9335
    %v9337 = vsel %vm9334, %v9336, %v9332
    %v9338 = vmul.f32 1.0, %v9337
    %v9339 = vmul.f32 %v9199, %v9248
    %v9340 = vmul.f32 %v9200, %v9263
    %v9341 = vmul.f32 %v9201, %v9278
    %v9342 = vmul.f32 %v9202, %v9293
    %v9343 = vmul.f32 %v9203, %v9308
    %v9344 = vmul.f32 %v9204, %v9323
    %v9345 = vmul.f32 %v9205, %v9338
    %9346 = vrot.lane.b32.xlu0 %v3222, 126
    %v9347 = vpop.permute.xlu0 %9346
    %9348 = vrot.lane.b32.xlu0 %v3223, 126
    %v9349 = vpop.permute.xlu0 %9348
    %9350 = vrot.lane.b32.xlu0 %v3224, 126
    %v9351 = vpop.permute.xlu0 %9350
    %9352 = vrot.lane.b32.xlu0 %v3225, 126
    %v9353 = vpop.permute.xlu0 %9352
    %v9359 = vsel %vm518, %v9339, 0
    %v9362 = vsel %vm518, %v9340, 0
    %v9365 = vsel %vm518, %v9341, 0
    %v9368 = vsel %vm518, %v9342, 0
    %v9371 = vsel %vm518, %v9343, 0
    %v9374 = vsel %vm518, %v9344, 0
    %v9377 = vsel %vm518, %v9345, 0
    %9379 = vmatpush.msra.mxu0 0.0
    %9380 = vmatpush.msra.mxu0 0.0
    %9381 = vmatpush.msra.mxu0 0.0
    %9382 = vmatpush.msra.mxu0 0.0
    %9383 = vmatpush.msra.mxu0 0.0
    %9384 = vmatpush.msra.mxu0 0.0
    %9385 = vmatpush.msra.mxu0 0.0
    %9386 = vmatpush.msra.mxu0 0.0
    %9387 = vmatpush.msra.mxu0 0.0
    %9388 = vmatpush.msra.mxu0 0.0
    %9389 = vmatpush.msra.mxu0 0.0
    %9390 = vmatpush.msra.mxu0 0.0
    %9391 = vmatpush.msra.mxu0 %v9353
    %9392 = vmatpush.msra.mxu0 %v9351
    %9393 = vmatpush.msra.mxu0 %v9349
    %9394 = vmatpush.msra.mxu0 %v9347
    %9395 = vmatmul.f32.gmra.mxu0 %v9359
    %v9396 = vpop.f32.mrf.mxu0
    %v9397 = vadd.f32 0.0, %v9396
    %9398 = vmatmul.f32.gmra.mxu0 %v9362
    %v9399 = vpop.f32.mrf.mxu0
    %v9400 = vadd.f32 0.0, %v9399
    %9401 = vmatmul.f32.gmra.mxu0 %v9365
    %v9402 = vpop.f32.mrf.mxu0
    %v9403 = vadd.f32 0.0, %v9402
    %9404 = vmatmul.f32.gmra.mxu0 %v9368
    %v9405 = vpop.f32.mrf.mxu0
    %v9406 = vadd.f32 0.0, %v9405
    %9407 = vmatmul.f32.gmra.mxu0 %v9371
    %v9408 = vpop.f32.mrf.mxu0
    %v9409 = vadd.f32 0.0, %v9408
    %9410 = vmatmul.f32.gmra.mxu0 %v9374
    %v9411 = vpop.f32.mrf.mxu0
    %v9412 = vadd.f32 0.0, %v9411
    %9413 = vmatmul.f32.gmra.mxu0 %v9377
    %v9414 = vpop.f32.mrf.mxu0
    %v9415 = vadd.f32 0.0, %v9414
    %9416 = vdwg.mxu0
    %9418 = vset.pattern.permute.xlu0 0
    %9419 = vperm.xlu0 %9418, %v9397
    %v9420 = vpop.permute.xlu0 %9419
    %9423 = vset.pattern.permute.xlu0 0
    %9424 = vperm.xlu0 %9423, %v9400
    %v9425 = vpop.permute.xlu0 %9424
    %9428 = vset.pattern.permute.xlu0 0
    %9429 = vperm.xlu0 %9428, %v9403
    %v9430 = vpop.permute.xlu0 %9429
    %9433 = vset.pattern.permute.xlu0 0
    %9434 = vperm.xlu0 %9433, %v9406
    %v9435 = vpop.permute.xlu0 %9434
    %9438 = vset.pattern.permute.xlu0 0
    %9439 = vperm.xlu0 %9438, %v9409
    %v9440 = vpop.permute.xlu0 %9439
    %9443 = vset.pattern.permute.xlu0 0
    %9444 = vperm.xlu0 %9443, %v9412
    %v9445 = vpop.permute.xlu0 %9444
    %9448 = vset.pattern.permute.xlu0 0
    %9449 = vperm.xlu0 %9448, %v9415
    %v9450 = vpop.permute.xlu0 %9449
    %v9452 = vmul.f32 %v6594, %v9420
    %v9453 = vmul.f32 %v6609, %v9425
    %v9454 = vmul.f32 %v6624, %v9430
    %v9455 = vmul.f32 %v6639, %v9435
    %v9456 = vmul.f32 %v6654, %v9440
    %v9457 = vmul.f32 %v6669, %v9445
    %v9458 = vmul.f32 %v6684, %v9450
    %9459 = vmatpush.msra.mxu0 0.0
    %9460 = vmatpush.msra.mxu0 0.0
    %9461 = vmatpush.msra.mxu0 0.0
    %9462 = vmatpush.msra.mxu0 0.0
    %9463 = vmatpush.msra.mxu0 0.0
    %9464 = vmatpush.msra.mxu0 0.0
    %9465 = vmatpush.msra.mxu0 0.0
    %9466 = vmatpush.msra.mxu0 0.0
    %9467 = vmatpush.msra.mxu0 0.0
    %9468 = vmatpush.msra.mxu0 %v9458
    %9469 = vmatpush.msra.mxu0 %v9457
    %9470 = vmatpush.msra.mxu0 %v9456
    %9471 = vmatpush.msra.mxu0 %v9455
    %9472 = vmatpush.msra.mxu0 %v9454
    %9473 = vmatpush.msra.mxu0 %v9453
    %9474 = vmatpush.msra.mxu0 %v9452
    %9475 = vmatmul.f32.gmra.mxu0 %v1204
    %v9476 = vpop.f32.mrf.mxu0
    %v9477 = vadd.f32 0.0, %v9476
    %9478 = vdwg.mxu0
    %v9479 = vadd.f32 %v6415, %v9477
    %v9480 = vld [vmem:[%s6] sm:$0xff]
    %v9481 = vld [vmem:[%s6 + $0x8] sm:$0xff]
    %v9482 = vld [vmem:[%s6 + $0x10] sm:$0xff]
    %v9483 = vld [vmem:[%s6 + $0x18] sm:$0xff]
    %v9484 = vld [vmem:[%s7] sm:$0x1]
    %v9486 = vperm.slane %v9484, 0
    %v9489 = vsel %vm518, %v8410, 0
    %9491 = vmatpush.msra.mxu0 0.0
    %9492 = vmatpush.msra.mxu0 0.0
    %9493 = vmatpush.msra.mxu0 0.0
    %9494 = vmatpush.msra.mxu0 0.0
    %9495 = vmatpush.msra.mxu0 0.0
    %9496 = vmatpush.msra.mxu0 0.0
    %9497 = vmatpush.msra.mxu0 0.0
    %9498 = vmatpush.msra.mxu0 0.0
    %9499 = vmatpush.msra.mxu0 0.0
    %9500 = vmatpush.msra.mxu0 0.0
    %9501 = vmatpush.msra.mxu0 0.0
    %9502 = vmatpush.msra.mxu0 0.0
    %9503 = vmatpush.msra.mxu0 %v9483
    %9504 = vmatpush.msra.mxu0 %v9482
    %9505 = vmatpush.msra.mxu0 %v9481
    %9506 = vmatpush.msra.mxu0 %v9480
    %9507 = vmatmul.f32.gmra.mxu0 %v9489
    %v9508 = vpop.f32.mrf.mxu0
    %v9509 = vadd.f32 %v9486, %v9508
    %9510 = vdwg.mxu0
    %9511 = vst.msk [vmem:[#allocation2] sm:$0xff] %vm160, %v9509
    %9512 = vst.msk [vmem:[%s13] sm:$0xff] %vm134, %v9479
    // Predicated region
    $region50: #{egnn_forward.1} parent=1 // pred_check
      _
    $region51: #{egnn_forward.1} parent=1 // pred_check_branch
      %9514 = sbr.rel (0) target = $region53
    $region52: #{egnn_forward.1} parent=1 // pred_region
      %9516 = vsyncadd [#allocation3], 0
      %s9518 = sshll.u32 [#allocation2], 4
      %s9519 = int_to_ptr.vmem [resolvable:$true] %s9518
      %s9520 = sshll.u32 %s12, 4
      %s9521 = int_to_ptr.hbm [resolvable:$true] %s9520
      %9523 = dma.vmem_to_hbm [thread:$0]  %s9519, 128, %s9521, [#allocation3]
    $region53: #{egnn_forward.1} parent=1 // pred_fallthru
      _
    // Predicated region
    $region54: #{egnn_forward.1} parent=1 // pred_check
      _
    $region55: #{egnn_forward.1} parent=1 // pred_check_branch
      %9525 = sbr.rel (0) target = $region57
    $region56: #{egnn_forward.1} parent=1 // pred_region
      _
    $region57: #{egnn_forward.1} parent=1 // pred_fallthru
      _
    // Predicated region
    $region58: #{egnn_forward.1} parent=1 // pred_check
      _
    $region59: #{egnn_forward.1} parent=1 // pred_check_branch
      %9527 = sbr.rel (0) target = $region61
    $region60: #{egnn_forward.1} parent=1 // pred_region
      %9529 = dma.done [#allocation3], 128
    $region61: #{egnn_forward.1} parent=1 // pred_fallthru
      _
    // Predicated region
    $region62: #{egnn_forward.1} parent=1 // pred_check
      _
    $region63: #{egnn_forward.1} parent=1 // pred_check_branch
      %9531 = sbr.rel (0) target = $region65
    $region64: #{egnn_forward.1} parent=1 // pred_region
      _
    $region65: #{egnn_forward.1} parent=1 // pred_fallthru
      _
    %9532 = vsyncpa [#allocation3], 1

</llo_original>
